<compile_context>
chip_gen: v7x
topology: tpu7x:2x2x1
jax: 0.10.0
libtpu: 0.0.40
codegen_flags: <defaults>
</compile_context>

<pallas_src>
import functools

import numpy as np
import jax
import jax.numpy as jnp
from jax.experimental import pallas as pl
from jax.experimental.pallas import tpu as pltpu

EPS = 1e-5


def _round_up(x, m):
    return (x + m - 1) // m * m


def _out_hw(x, stride):
    # Conv2d with kernel=3, padding=1.
    return (x - 1) // stride + 1


# ---------------------------------------------------------------------------
# Fused whole-network kernel (single grid step; all 25 layers unrolled inside)
# ---------------------------------------------------------------------------
def _make_kernel(n_mid, n_tail):
    def kernel(*refs):
        p1_ref, w1_ref, b1_ref = refs[0], refs[1], refs[2]
        mid_refs = refs[3:3 + 3 * n_mid]
        wt_ref = refs[3 + 3 * n_mid]
        bt_ref = refs[4 + 3 * n_mid]
        o_ref = refs[5 + 3 * n_mid]

        # Layer 1: host-built im2col patches @ flattened (BN-folded) weights.
        a = jnp.dot(p1_ref[...], w1_ref[...], preferred_element_type=jnp.float32)
        a = jnp.maximum(a + b1_ref[...], 0.0)

        # Spatial layers 2..: sum of 9 tap matmuls via constant 0/1 selection matrices.
        for li in range(n_mid):
            t_ref = mid_refs[3 * li]       # [9, M_out, M_in]
            w_ref = mid_refs[3 * li + 1]   # [9, Cin, Cout]
            b_ref = mid_refs[3 * li + 2]   # [1, Cout]
            acc = None
            for t in range(9):
                xt = jnp.dot(t_ref[t], a, preferred_element_type=jnp.float32)
                term = jnp.dot(xt, w_ref[t], preferred_element_type=jnp.float32)
                acc = term if acc is None else acc + term
            a = jnp.maximum(acc + b_ref[...], 0.0)

        # 1x1-spatial layers: only the centre tap ever touches real data.
        for l in range(n_tail):
            a = jnp.dot(a, wt_ref[l], preferred_element_type=jnp.float32)
            a = jnp.maximum(a + bt_ref[l], 0.0)

        o_ref[...] = a

    return kernel


# ---------------------------------------------------------------------------
# One-time (init-level) parameter preprocessing
# ---------------------------------------------------------------------------
def _build_tap_matrices(n, hi, wi, ho, wo, stride, rows_in_pad, rows_out_pad):
    """Constant 0/1 matrices T_t: (T_t @ A)[r] = A[input row that tap t reads for
    output row r]; zero row where the tap reads the conv zero-padding."""
    T = np.zeros((9, rows_out_pad, rows_in_pad), np.float32)
    for kh in range(3):
        for kw in range(3):
            t = kh * 3 + kw
            for b in range(n):
                for oh in range(ho):
                    ih = stride * oh + kh - 1
                    if ih < 0 or ih >= hi:
                        continue
                    for ow in range(wo):
                        iw = stride * ow + kw - 1
                        if iw < 0 or iw >= wi:
                            continue
                        T[t, (b * ho + oh) * wo + ow, (b * hi + ih) * wi + iw] = 1.0
    return jnp.asarray(T)


def prepare_params(params, n, h, w):
    """Fold BN into weights/bias, flatten, build tap matrices, extract centre taps.
    Called ONCE at init time (hoisted out of the traced forward)."""
    folded = []
    for (s, wgt, b, gamma, beta, mean, var) in params:
        inv = gamma / jnp.sqrt(var + EPS)
        folded.append((s, wgt * inv, (b - mean) * inv + beta))

    s0, wgt0, bias0 = folded[0]
    cin0, cout = wgt0.shape[2], wgt0.shape[3]
    k1 = 9 * cin0
    k1_pad = _round_up(k1, 128)
    w1_mat = jnp.pad(wgt0.reshape(k1, cout), ((0, k1_pad - k1), (0, 0)))
    b1_row = bias0.reshape(1, cout)

    h_cur, w_cur = _out_hw(h, s0), _out_hw(w, s0)
    rows_real = n * h_cur * w_cur
    rows_pad = _round_up(rows_real, 8)
    rows1_pad = rows_pad

    mids = []
    i = 1
    while i < len(folded) and (h_cur > 1 or w_cur > 1):
        s, wf, bf = folded[i]
        h_out, w_out = _out_hw(h_cur, s), _out_hw(w_cur, s)
        out_real = n * h_out * w_out
        out_pad = _round_up(out_real, 8)
        T = _build_tap_matrices(n, h_cur, w_cur, h_out, w_out, s, rows_pad, out_pad)
        W = wf.reshape(9, wf.shape[2], cout)       # tap-major, matches T ordering
        mids.append((T, W, bf.reshape(1, cout)))
        h_cur, w_cur = h_out, w_out
        rows_real, rows_pad = out_real, out_pad
        i += 1

    # Remaining layers see a 1x1 spatial input -> only the centre tap matters.
    wt = jnp.stack([folded[j][1][1, 1] for j in range(i, len(folded))], axis=0)
    bt = jnp.stack([folded[j][2].reshape(1, cout) for j in range(i, len(folded))], axis=0)

    meta = dict(n=n, stride1=s0, k1_pad=k1_pad, rows1_pad=rows1_pad,
                fh=h_cur, fw=w_cur, cout=cout,
                rows_last_real=rows_real, rows_last_pad=rows_pad,
                n_mid=len(mids), n_tail=int(wt.shape[0]))
    return dict(w1=w1_mat, b1=b1_row, mids=mids, wt=wt, bt=bt, meta=meta)


# ---------------------------------------------------------------------------
# Forward
# ---------------------------------------------------------------------------
def _im2col3x3(x, stride):
    n, h, w, c = x.shape
    xp = jnp.pad(x, ((0, 0), (1, 1), (1, 1), (0, 0)))
    ho, wo = _out_hw(h, stride), _out_hw(w, stride)
    cols = []
    for kh in range(3):
        for kw in range(3):
            cols.append(xp[:, kh:kh + stride * (ho - 1) + 1:stride,
                            kw:kw + stride * (wo - 1) + 1:stride, :])
    return jnp.stack(cols, axis=3).reshape(n * ho * wo, 9 * c)


def map_encoder_forward(x_nchw, prep):
    meta = prep["meta"]
    n, cout = meta["n"], meta["cout"]

    x = jnp.transpose(x_nchw, (0, 2, 3, 1))                 # NCHW -> NHWC
    patches = _im2col3x3(x, meta["stride1"])                # [n*h1*w1, 9*cin]
    patches = jnp.pad(patches,
                      ((0, meta["rows1_pad"] - patches.shape[0]),
                       (0, meta["k1_pad"] - patches.shape[1])))

    inputs = [patches, prep["w1"], prep["b1"]]
    for (T, W, b) in prep["mids"]:
        inputs.extend([T, W, b])
    inputs.extend([prep["wt"], prep["bt"]])

    out = pl.pallas_call(
        _make_kernel(meta["n_mid"], meta["n_tail"]),
        out_shape=jax.ShapeDtypeStruct((meta["rows_last_pad"], cout), jnp.float32),
        grid=(1,),
        in_specs=[pl.BlockSpec(a.shape, lambda i, nd=a.ndim: (0,) * nd)
                  for a in inputs],
        out_specs=pl.BlockSpec((meta["rows_last_pad"], cout), lambda i: (0, 0)),
        compiler_params=pltpu.CompilerParams(dimension_semantics=("arbitrary",)),
    )(*inputs)

    y = out[:meta["rows_last_real"]].reshape(n, meta["fh"], meta["fw"], cout)
    return jnp.transpose(y, (0, 3, 1, 2))                   # NHWC -> NCHW


# ---------------------------------------------------------------------------
# Deterministic synthetic parameters (matches the torch module's shapes)
# ---------------------------------------------------------------------------
def init_params(key, input_size, hidden_size):
    cins = [input_size] + [hidden_size] * 24
    strides = [2] * 9 + [1] * 16
    layers = []
    for cin, s in zip(cins, strides):
        key, kw_, kb, kg, kbe = jax.random.split(key, 5)
        cout = hidden_size
        w = jax.random.normal(kw_, (3, 3, cin, cout), jnp.float32) / np.sqrt(9 * cin)
        b = 0.01 * jax.random.normal(kb, (cout,), jnp.float32)
        gamma = 1.0 + 0.1 * jax.random.normal(kg, (cout,), jnp.float32)
        beta = 0.05 * jax.random.normal(kbe, (cout,), jnp.float32)
        mean = jnp.zeros((cout,), jnp.float32)   # fresh BN running stats
        var = jnp.ones((cout,), jnp.float32)
        layers.append((s, w, b, gamma, beta, mean, var))
    return layers


# Pure-JAX reference (same eval-mode BN semantics) for validation.
def ref_forward(x_nhwc, params):
    x = x_nhwc
    for (stride, w, b, gamma, beta, mean, var) in params:
        y = jax.lax.conv_general_dilated(
            x, w, (stride, stride), ((1, 1), (1, 1)),
            dimension_numbers=("NHWC", "HWIO", "NHWC")) + b
        y = gamma * (y - mean) / jnp.sqrt(var + EPS) + beta
        x = jnp.maximum(y, 0.0)
    return x


if __name__ == "__main__":
    input_size, hidden_size = 4, 32
    N, H, W = 2, 16, 16

    key = jax.random.PRNGKey(0)
    key, kx = jax.random.split(key)
    x_nchw = jax.random.normal(kx, (N, input_size, H, W), dtype=jnp.float32)
    params = init_params(key, input_size, hidden_size)

    prep = prepare_params(params, N, H, W)      # one-time, init-level work
    fwd = jax.jit(functools.partial(map_encoder_forward, prep=prep))

    out_nchw = fwd(x_nchw)
    jax.block_until_ready(out_nchw)

    ref_nhwc = ref_forward(jnp.transpose(x_nchw, (0, 2, 3, 1)), params)
    ref_nchw = jnp.transpose(ref_nhwc, (0, 3, 1, 2))
    err = float(jnp.max(jnp.abs(out_nchw - ref_nchw)) /
                (jnp.max(jnp.abs(ref_nchw)) + 1e-6))
    assert out_nchw.shape == (N, hidden_size, 1, 1), out_nchw.shape
    assert err < 1e-2, f"mismatch vs reference: rel err {err}"
    print("KERNEL_OK")
</pallas_src>

<mosaic_0001>
module attributes {stable_mosaic.version = 11 : i64} {
  func.func @kernel(%arg0: i32, %arg1: memref<128x128xf32, #tpu.memory_space<vmem>>, %arg2: memref<128x32xf32, #tpu.memory_space<vmem>>, %arg3: memref<1x32xf32, #tpu.memory_space<vmem>>, %arg4: memref<9x32x128xf32, #tpu.memory_space<vmem>>, %arg5: memref<9x32x32xf32, #tpu.memory_space<vmem>>, %arg6: memref<1x32xf32, #tpu.memory_space<vmem>>, %arg7: memref<9x8x32xf32, #tpu.memory_space<vmem>>, %arg8: memref<9x32x32xf32, #tpu.memory_space<vmem>>, %arg9: memref<1x32xf32, #tpu.memory_space<vmem>>, %arg10: memref<9x8x8xf32, #tpu.memory_space<vmem>>, %arg11: memref<9x32x32xf32, #tpu.memory_space<vmem>>, %arg12: memref<1x32xf32, #tpu.memory_space<vmem>>, %arg13: memref<21x32x32xf32, #tpu.memory_space<vmem>>, %arg14: memref<21x1x32xf32, #tpu.memory_space<vmem>>, %arg15: memref<8x32xf32, #tpu.memory_space<vmem>>) attributes {dimension_semantics = [#tpu.dimension_semantics<arbitrary>], iteration_bounds = array<i64: 1>, scalar_prefetch = 0 : i64, scratch_operands = 0 : i64, tpu.core_type = #tpu.core_type<tc>, window_params = [{pipeline_mode = #tpu.pipeline_mode<synchronous>, transform_indices = @transform_0, window_bounds = array<i64: 128, 128>}, {pipeline_mode = #tpu.pipeline_mode<synchronous>, transform_indices = @transform_1, window_bounds = array<i64: 128, 32>}, {pipeline_mode = #tpu.pipeline_mode<synchronous>, transform_indices = @transform_2, window_bounds = array<i64: 1, 32>}, {pipeline_mode = #tpu.pipeline_mode<synchronous>, transform_indices = @transform_3, window_bounds = array<i64: 9, 32, 128>}, {pipeline_mode = #tpu.pipeline_mode<synchronous>, transform_indices = @transform_4, window_bounds = array<i64: 9, 32, 32>}, {pipeline_mode = #tpu.pipeline_mode<synchronous>, transform_indices = @transform_5, window_bounds = array<i64: 1, 32>}, {pipeline_mode = #tpu.pipeline_mode<synchronous>, transform_indices = @transform_6, window_bounds = array<i64: 9, 8, 32>}, {pipeline_mode = #tpu.pipeline_mode<synchronous>, transform_indices = @transform_7, window_bounds = array<i64: 9, 32, 32>}, {pipeline_mode = #tpu.pipeline_mode<synchronous>, transform_indices = @transform_8, window_bounds = array<i64: 1, 32>}, {pipeline_mode = #tpu.pipeline_mode<synchronous>, transform_indices = @transform_9, window_bounds = array<i64: 9, 8, 8>}, {pipeline_mode = #tpu.pipeline_mode<synchronous>, transform_indices = @transform_10, window_bounds = array<i64: 9, 32, 32>}, {pipeline_mode = #tpu.pipeline_mode<synchronous>, transform_indices = @transform_11, window_bounds = array<i64: 1, 32>}, {pipeline_mode = #tpu.pipeline_mode<synchronous>, transform_indices = @transform_12, window_bounds = array<i64: 21, 32, 32>}, {pipeline_mode = #tpu.pipeline_mode<synchronous>, transform_indices = @transform_13, window_bounds = array<i64: 21, 1, 32>}, {pipeline_mode = #tpu.pipeline_mode<synchronous>, transform_indices = @transform_14, window_bounds = array<i64: 8, 32>}]} {
    %c0 = arith.constant 0 : index
    %c0_0 = arith.constant 0 : index
    %0 = vector.load %arg1[%c0, %c0_0] : memref<128x128xf32, #tpu.memory_space<vmem>>, vector<128x128xf32>
    %c0_1 = arith.constant 0 : index
    %c0_2 = arith.constant 0 : index
    %1 = vector.load %arg2[%c0_1, %c0_2] : memref<128x32xf32, #tpu.memory_space<vmem>>, vector<128x32xf32>
    %cst = arith.constant dense<0.000000e+00> : vector<128x32xf32>
    %2 = tpu.matmul %0, %1, %cst {dimension_numbers = #tpu.dot_dimension_numbers<[1], [0], [0], [1], [0, 0, 1, 1], [], []>} : vector<128x128xf32>, vector<128x32xf32>, vector<128x32xf32> -> vector<128x32xf32>
    %c0_3 = arith.constant 0 : index
    %c0_4 = arith.constant 0 : index
    %3 = vector.load %arg3[%c0_3, %c0_4] : memref<1x32xf32, #tpu.memory_space<vmem>>, vector<1x32xf32>
    %4 = vector.broadcast %3 : vector<1x32xf32> to vector<128x32xf32>
    %5 = arith.addf %2, %4 : vector<128x32xf32>
    %cst_5 = arith.constant 0.000000e+00 : f32
    %6 = vector.broadcast %cst_5 : f32 to vector<128x32xf32>
    %7 = arith.maximumf %5, %6 : vector<128x32xf32>
    %c0_6 = arith.constant 0 : index
    %c0_7 = arith.constant 0 : index
    %c0_8 = arith.constant 0 : index
    %8 = vector.load %arg4[%c0_6, %c0_7, %c0_8] : memref<9x32x128xf32, #tpu.memory_space<vmem>>, vector<1x32x128xf32>
    %9 = vector.shape_cast %8 : vector<1x32x128xf32> to vector<32x128xf32>
    %cst_9 = arith.constant dense<0.000000e+00> : vector<32x32xf32>
    %10 = tpu.matmul %9, %7, %cst_9 {dimension_numbers = #tpu.dot_dimension_numbers<[1], [0], [0], [1], [0, 0, 1, 1], [], []>} : vector<32x128xf32>, vector<128x32xf32>, vector<32x32xf32> -> vector<32x32xf32>
    %c0_10 = arith.constant 0 : index
    %c0_11 = arith.constant 0 : index
    %c0_12 = arith.constant 0 : index
    %11 = vector.load %arg5[%c0_10, %c0_11, %c0_12] : memref<9x32x32xf32, #tpu.memory_space<vmem>>, vector<1x32x32xf32>
    %12 = vector.shape_cast %11 : vector<1x32x32xf32> to vector<32x32xf32>
    %cst_13 = arith.constant dense<0.000000e+00> : vector<32x32xf32>
    %13 = tpu.matmul %10, %12, %cst_13 {dimension_numbers = #tpu.dot_dimension_numbers<[1], [0], [0], [1], [0, 0, 1, 1], [], []>} : vector<32x32xf32>, vector<32x32xf32>, vector<32x32xf32> -> vector<32x32xf32>
    %c1 = arith.constant 1 : index
    %c0_14 = arith.constant 0 : index
    %c0_15 = arith.constant 0 : index
    %14 = vector.load %arg4[%c1, %c0_14, %c0_15] : memref<9x32x128xf32, #tpu.memory_space<vmem>>, vector<1x32x128xf32>
    %15 = vector.shape_cast %14 : vector<1x32x128xf32> to vector<32x128xf32>
    %cst_16 = arith.constant dense<0.000000e+00> : vector<32x32xf32>
    %16 = tpu.matmul %15, %7, %cst_16 {dimension_numbers = #tpu.dot_dimension_numbers<[1], [0], [0], [1], [0, 0, 1, 1], [], []>} : vector<32x128xf32>, vector<128x32xf32>, vector<32x32xf32> -> vector<32x32xf32>
    %c1_17 = arith.constant 1 : index
    %c0_18 = arith.constant 0 : index
    %c0_19 = arith.constant 0 : index
    %17 = vector.load %arg5[%c1_17, %c0_18, %c0_19] : memref<9x32x32xf32, #tpu.memory_space<vmem>>, vector<1x32x32xf32>
    %18 = vector.shape_cast %17 : vector<1x32x32xf32> to vector<32x32xf32>
    %cst_20 = arith.constant dense<0.000000e+00> : vector<32x32xf32>
    %19 = tpu.matmul %16, %18, %cst_20 {dimension_numbers = #tpu.dot_dimension_numbers<[1], [0], [0], [1], [0, 0, 1, 1], [], []>} : vector<32x32xf32>, vector<32x32xf32>, vector<32x32xf32> -> vector<32x32xf32>
    %20 = arith.addf %13, %19 : vector<32x32xf32>
    %c2 = arith.constant 2 : index
    %c0_21 = arith.constant 0 : index
    %c0_22 = arith.constant 0 : index
    %21 = vector.load %arg4[%c2, %c0_21, %c0_22] : memref<9x32x128xf32, #tpu.memory_space<vmem>>, vector<1x32x128xf32>
    %22 = vector.shape_cast %21 : vector<1x32x128xf32> to vector<32x128xf32>
    %cst_23 = arith.constant dense<0.000000e+00> : vector<32x32xf32>
    %23 = tpu.matmul %22, %7, %cst_23 {dimension_numbers = #tpu.dot_dimension_numbers<[1], [0], [0], [1], [0, 0, 1, 1], [], []>} : vector<32x128xf32>, vector<128x32xf32>, vector<32x32xf32> -> vector<32x32xf32>
    %c2_24 = arith.constant 2 : index
    %c0_25 = arith.constant 0 : index
    %c0_26 = arith.constant 0 : index
    %24 = vector.load %arg5[%c2_24, %c0_25, %c0_26] : memref<9x32x32xf32, #tpu.memory_space<vmem>>, vector<1x32x32xf32>
    %25 = vector.shape_cast %24 : vector<1x32x32xf32> to vector<32x32xf32>
    %cst_27 = arith.constant dense<0.000000e+00> : vector<32x32xf32>
    %26 = tpu.matmul %23, %25, %cst_27 {dimension_numbers = #tpu.dot_dimension_numbers<[1], [0], [0], [1], [0, 0, 1, 1], [], []>} : vector<32x32xf32>, vector<32x32xf32>, vector<32x32xf32> -> vector<32x32xf32>
    %27 = arith.addf %20, %26 : vector<32x32xf32>
    %c3 = arith.constant 3 : index
    %c0_28 = arith.constant 0 : index
    %c0_29 = arith.constant 0 : index
    %28 = vector.load %arg4[%c3, %c0_28, %c0_29] : memref<9x32x128xf32, #tpu.memory_space<vmem>>, vector<1x32x128xf32>
    %29 = vector.shape_cast %28 : vector<1x32x128xf32> to vector<32x128xf32>
    %cst_30 = arith.constant dense<0.000000e+00> : vector<32x32xf32>
    %30 = tpu.matmul %29, %7, %cst_30 {dimension_numbers = #tpu.dot_dimension_numbers<[1], [0], [0], [1], [0, 0, 1, 1], [], []>} : vector<32x128xf32>, vector<128x32xf32>, vector<32x32xf32> -> vector<32x32xf32>
    %c3_31 = arith.constant 3 : index
    %c0_32 = arith.constant 0 : index
    %c0_33 = arith.constant 0 : index
    %31 = vector.load %arg5[%c3_31, %c0_32, %c0_33] : memref<9x32x32xf32, #tpu.memory_space<vmem>>, vector<1x32x32xf32>
    %32 = vector.shape_cast %31 : vector<1x32x32xf32> to vector<32x32xf32>
    %cst_34 = arith.constant dense<0.000000e+00> : vector<32x32xf32>
    %33 = tpu.matmul %30, %32, %cst_34 {dimension_numbers = #tpu.dot_dimension_numbers<[1], [0], [0], [1], [0, 0, 1, 1], [], []>} : vector<32x32xf32>, vector<32x32xf32>, vector<32x32xf32> -> vector<32x32xf32>
    %34 = arith.addf %27, %33 : vector<32x32xf32>
    %c4 = arith.constant 4 : index
    %c0_35 = arith.constant 0 : index
    %c0_36 = arith.constant 0 : index
    %35 = vector.load %arg4[%c4, %c0_35, %c0_36] : memref<9x32x128xf32, #tpu.memory_space<vmem>>, vector<1x32x128xf32>
    %36 = vector.shape_cast %35 : vector<1x32x128xf32> to vector<32x128xf32>
    %cst_37 = arith.constant dense<0.000000e+00> : vector<32x32xf32>
    %37 = tpu.matmul %36, %7, %cst_37 {dimension_numbers = #tpu.dot_dimension_numbers<[1], [0], [0], [1], [0, 0, 1, 1], [], []>} : vector<32x128xf32>, vector<128x32xf32>, vector<32x32xf32> -> vector<32x32xf32>
    %c4_38 = arith.constant 4 : index
    %c0_39 = arith.constant 0 : index
    %c0_40 = arith.constant 0 : index
    %38 = vector.load %arg5[%c4_38, %c0_39, %c0_40] : memref<9x32x32xf32, #tpu.memory_space<vmem>>, vector<1x32x32xf32>
    %39 = vector.shape_cast %38 : vector<1x32x32xf32> to vector<32x32xf32>
    %cst_41 = arith.constant dense<0.000000e+00> : vector<32x32xf32>
    %40 = tpu.matmul %37, %39, %cst_41 {dimension_numbers = #tpu.dot_dimension_numbers<[1], [0], [0], [1], [0, 0, 1, 1], [], []>} : vector<32x32xf32>, vector<32x32xf32>, vector<32x32xf32> -> vector<32x32xf32>
    %41 = arith.addf %34, %40 : vector<32x32xf32>
    %c5 = arith.constant 5 : index
    %c0_42 = arith.constant 0 : index
    %c0_43 = arith.constant 0 : index
    %42 = vector.load %arg4[%c5, %c0_42, %c0_43] : memref<9x32x128xf32, #tpu.memory_space<vmem>>, vector<1x32x128xf32>
    %43 = vector.shape_cast %42 : vector<1x32x128xf32> to vector<32x128xf32>
    %cst_44 = arith.constant dense<0.000000e+00> : vector<32x32xf32>
    %44 = tpu.matmul %43, %7, %cst_44 {dimension_numbers = #tpu.dot_dimension_numbers<[1], [0], [0], [1], [0, 0, 1, 1], [], []>} : vector<32x128xf32>, vector<128x32xf32>, vector<32x32xf32> -> vector<32x32xf32>
    %c5_45 = arith.constant 5 : index
    %c0_46 = arith.constant 0 : index
    %c0_47 = arith.constant 0 : index
    %45 = vector.load %arg5[%c5_45, %c0_46, %c0_47] : memref<9x32x32xf32, #tpu.memory_space<vmem>>, vector<1x32x32xf32>
    %46 = vector.shape_cast %45 : vector<1x32x32xf32> to vector<32x32xf32>
    %cst_48 = arith.constant dense<0.000000e+00> : vector<32x32xf32>
    %47 = tpu.matmul %44, %46, %cst_48 {dimension_numbers = #tpu.dot_dimension_numbers<[1], [0], [0], [1], [0, 0, 1, 1], [], []>} : vector<32x32xf32>, vector<32x32xf32>, vector<32x32xf32> -> vector<32x32xf32>
    %48 = arith.addf %41, %47 : vector<32x32xf32>
    %c6 = arith.constant 6 : index
    %c0_49 = arith.constant 0 : index
    %c0_50 = arith.constant 0 : index
    %49 = vector.load %arg4[%c6, %c0_49, %c0_50] : memref<9x32x128xf32, #tpu.memory_space<vmem>>, vector<1x32x128xf32>
    %50 = vector.shape_cast %49 : vector<1x32x128xf32> to vector<32x128xf32>
    %cst_51 = arith.constant dense<0.000000e+00> : vector<32x32xf32>
    %51 = tpu.matmul %50, %7, %cst_51 {dimension_numbers = #tpu.dot_dimension_numbers<[1], [0], [0], [1], [0, 0, 1, 1], [], []>} : vector<32x128xf32>, vector<128x32xf32>, vector<32x32xf32> -> vector<32x32xf32>
    %c6_52 = arith.constant 6 : index
    %c0_53 = arith.constant 0 : index
    %c0_54 = arith.constant 0 : index
    %52 = vector.load %arg5[%c6_52, %c0_53, %c0_54] : memref<9x32x32xf32, #tpu.memory_space<vmem>>, vector<1x32x32xf32>
    %53 = vector.shape_cast %52 : vector<1x32x32xf32> to vector<32x32xf32>
    %cst_55 = arith.constant dense<0.000000e+00> : vector<32x32xf32>
    %54 = tpu.matmul %51, %53, %cst_55 {dimension_numbers = #tpu.dot_dimension_numbers<[1], [0], [0], [1], [0, 0, 1, 1], [], []>} : vector<32x32xf32>, vector<32x32xf32>, vector<32x32xf32> -> vector<32x32xf32>
    %55 = arith.addf %48, %54 : vector<32x32xf32>
    %c7 = arith.constant 7 : index
    %c0_56 = arith.constant 0 : index
    %c0_57 = arith.constant 0 : index
    %56 = vector.load %arg4[%c7, %c0_56, %c0_57] : memref<9x32x128xf32, #tpu.memory_space<vmem>>, vector<1x32x128xf32>
    %57 = vector.shape_cast %56 : vector<1x32x128xf32> to vector<32x128xf32>
    %cst_58 = arith.constant dense<0.000000e+00> : vector<32x32xf32>
    %58 = tpu.matmul %57, %7, %cst_58 {dimension_numbers = #tpu.dot_dimension_numbers<[1], [0], [0], [1], [0, 0, 1, 1], [], []>} : vector<32x128xf32>, vector<128x32xf32>, vector<32x32xf32> -> vector<32x32xf32>
    %c7_59 = arith.constant 7 : index
    %c0_60 = arith.constant 0 : index
    %c0_61 = arith.constant 0 : index
    %59 = vector.load %arg5[%c7_59, %c0_60, %c0_61] : memref<9x32x32xf32, #tpu.memory_space<vmem>>, vector<1x32x32xf32>
    %60 = vector.shape_cast %59 : vector<1x32x32xf32> to vector<32x32xf32>
    %cst_62 = arith.constant dense<0.000000e+00> : vector<32x32xf32>
    %61 = tpu.matmul %58, %60, %cst_62 {dimension_numbers = #tpu.dot_dimension_numbers<[1], [0], [0], [1], [0, 0, 1, 1], [], []>} : vector<32x32xf32>, vector<32x32xf32>, vector<32x32xf32> -> vector<32x32xf32>
    %62 = arith.addf %55, %61 : vector<32x32xf32>
    %c8 = arith.constant 8 : index
    %c0_63 = arith.constant 0 : index
    %c0_64 = arith.constant 0 : index
    %63 = vector.load %arg4[%c8, %c0_63, %c0_64] : memref<9x32x128xf32, #tpu.memory_space<vmem>>, vector<1x32x128xf32>
    %64 = vector.shape_cast %63 : vector<1x32x128xf32> to vector<32x128xf32>
    %cst_65 = arith.constant dense<0.000000e+00> : vector<32x32xf32>
    %65 = tpu.matmul %64, %7, %cst_65 {dimension_numbers = #tpu.dot_dimension_numbers<[1], [0], [0], [1], [0, 0, 1, 1], [], []>} : vector<32x128xf32>, vector<128x32xf32>, vector<32x32xf32> -> vector<32x32xf32>
    %c8_66 = arith.constant 8 : index
    %c0_67 = arith.constant 0 : index
    %c0_68 = arith.constant 0 : index
    %66 = vector.load %arg5[%c8_66, %c0_67, %c0_68] : memref<9x32x32xf32, #tpu.memory_space<vmem>>, vector<1x32x32xf32>
    %67 = vector.shape_cast %66 : vector<1x32x32xf32> to vector<32x32xf32>
    %cst_69 = arith.constant dense<0.000000e+00> : vector<32x32xf32>
    %68 = tpu.matmul %65, %67, %cst_69 {dimension_numbers = #tpu.dot_dimension_numbers<[1], [0], [0], [1], [0, 0, 1, 1], [], []>} : vector<32x32xf32>, vector<32x32xf32>, vector<32x32xf32> -> vector<32x32xf32>
    %69 = arith.addf %62, %68 : vector<32x32xf32>
    %c0_70 = arith.constant 0 : index
    %c0_71 = arith.constant 0 : index
    %70 = vector.load %arg6[%c0_70, %c0_71] : memref<1x32xf32, #tpu.memory_space<vmem>>, vector<1x32xf32>
    %71 = vector.broadcast %70 : vector<1x32xf32> to vector<32x32xf32>
    %72 = arith.addf %69, %71 : vector<32x32xf32>
    %cst_72 = arith.constant 0.000000e+00 : f32
    %73 = vector.broadcast %cst_72 : f32 to vector<32x32xf32>
    %74 = arith.maximumf %72, %73 : vector<32x32xf32>
    %c0_73 = arith.constant 0 : index
    %c0_74 = arith.constant 0 : index
    %c0_75 = arith.constant 0 : index
    %75 = vector.load %arg7[%c0_73, %c0_74, %c0_75] : memref<9x8x32xf32, #tpu.memory_space<vmem>>, vector<1x8x32xf32>
    %76 = vector.shape_cast %75 : vector<1x8x32xf32> to vector<8x32xf32>
    %cst_76 = arith.constant dense<0.000000e+00> : vector<8x32xf32>
    %77 = tpu.matmul %76, %74, %cst_76 {dimension_numbers = #tpu.dot_dimension_numbers<[1], [0], [0], [1], [0, 0, 1, 1], [], []>} : vector<8x32xf32>, vector<32x32xf32>, vector<8x32xf32> -> vector<8x32xf32>
    %c0_77 = arith.constant 0 : index
    %c0_78 = arith.constant 0 : index
    %c0_79 = arith.constant 0 : index
    %78 = vector.load %arg8[%c0_77, %c0_78, %c0_79] : memref<9x32x32xf32, #tpu.memory_space<vmem>>, vector<1x32x32xf32>
    %79 = vector.shape_cast %78 : vector<1x32x32xf32> to vector<32x32xf32>
    %cst_80 = arith.constant dense<0.000000e+00> : vector<8x32xf32>
    %80 = tpu.matmul %77, %79, %cst_80 {dimension_numbers = #tpu.dot_dimension_numbers<[1], [0], [0], [1], [0, 0, 1, 1], [], []>} : vector<8x32xf32>, vector<32x32xf32>, vector<8x32xf32> -> vector<8x32xf32>
    %c1_81 = arith.constant 1 : index
    %c0_82 = arith.constant 0 : index
    %c0_83 = arith.constant 0 : index
    %81 = vector.load %arg7[%c1_81, %c0_82, %c0_83] : memref<9x8x32xf32, #tpu.memory_space<vmem>>, vector<1x8x32xf32>
    %82 = vector.shape_cast %81 : vector<1x8x32xf32> to vector<8x32xf32>
    %cst_84 = arith.constant dense<0.000000e+00> : vector<8x32xf32>
    %83 = tpu.matmul %82, %74, %cst_84 {dimension_numbers = #tpu.dot_dimension_numbers<[1], [0], [0], [1], [0, 0, 1, 1], [], []>} : vector<8x32xf32>, vector<32x32xf32>, vector<8x32xf32> -> vector<8x32xf32>
    %c1_85 = arith.constant 1 : index
    %c0_86 = arith.constant 0 : index
    %c0_87 = arith.constant 0 : index
    %84 = vector.load %arg8[%c1_85, %c0_86, %c0_87] : memref<9x32x32xf32, #tpu.memory_space<vmem>>, vector<1x32x32xf32>
    %85 = vector.shape_cast %84 : vector<1x32x32xf32> to vector<32x32xf32>
    %cst_88 = arith.constant dense<0.000000e+00> : vector<8x32xf32>
    %86 = tpu.matmul %83, %85, %cst_88 {dimension_numbers = #tpu.dot_dimension_numbers<[1], [0], [0], [1], [0, 0, 1, 1], [], []>} : vector<8x32xf32>, vector<32x32xf32>, vector<8x32xf32> -> vector<8x32xf32>
    %87 = arith.addf %80, %86 : vector<8x32xf32>
    %c2_89 = arith.constant 2 : index
    %c0_90 = arith.constant 0 : index
    %c0_91 = arith.constant 0 : index
    %88 = vector.load %arg7[%c2_89, %c0_90, %c0_91] : memref<9x8x32xf32, #tpu.memory_space<vmem>>, vector<1x8x32xf32>
    %89 = vector.shape_cast %88 : vector<1x8x32xf32> to vector<8x32xf32>
    %cst_92 = arith.constant dense<0.000000e+00> : vector<8x32xf32>
    %90 = tpu.matmul %89, %74, %cst_92 {dimension_numbers = #tpu.dot_dimension_numbers<[1], [0], [0], [1], [0, 0, 1, 1], [], []>} : vector<8x32xf32>, vector<32x32xf32>, vector<8x32xf32> -> vector<8x32xf32>
    %c2_93 = arith.constant 2 : index
    %c0_94 = arith.constant 0 : index
    %c0_95 = arith.constant 0 : index
    %91 = vector.load %arg8[%c2_93, %c0_94, %c0_95] : memref<9x32x32xf32, #tpu.memory_space<vmem>>, vector<1x32x32xf32>
    %92 = vector.shape_cast %91 : vector<1x32x32xf32> to vector<32x32xf32>
    %cst_96 = arith.constant dense<0.000000e+00> : vector<8x32xf32>
    %93 = tpu.matmul %90, %92, %cst_96 {dimension_numbers = #tpu.dot_dimension_numbers<[1], [0], [0], [1], [0, 0, 1, 1], [], []>} : vector<8x32xf32>, vector<32x32xf32>, vector<8x32xf32> -> vector<8x32xf32>
    %94 = arith.addf %87, %93 : vector<8x32xf32>
    %c3_97 = arith.constant 3 : index
    %c0_98 = arith.constant 0 : index
    %c0_99 = arith.constant 0 : index
    %95 = vector.load %arg7[%c3_97, %c0_98, %c0_99] : memref<9x8x32xf32, #tpu.memory_space<vmem>>, vector<1x8x32xf32>
    %96 = vector.shape_cast %95 : vector<1x8x32xf32> to vector<8x32xf32>
    %cst_100 = arith.constant dense<0.000000e+00> : vector<8x32xf32>
    %97 = tpu.matmul %96, %74, %cst_100 {dimension_numbers = #tpu.dot_dimension_numbers<[1], [0], [0], [1], [0, 0, 1, 1], [], []>} : vector<8x32xf32>, vector<32x32xf32>, vector<8x32xf32> -> vector<8x32xf32>
    %c3_101 = arith.constant 3 : index
    %c0_102 = arith.constant 0 : index
    %c0_103 = arith.constant 0 : index
    %98 = vector.load %arg8[%c3_101, %c0_102, %c0_103] : memref<9x32x32xf32, #tpu.memory_space<vmem>>, vector<1x32x32xf32>
    %99 = vector.shape_cast %98 : vector<1x32x32xf32> to vector<32x32xf32>
    %cst_104 = arith.constant dense<0.000000e+00> : vector<8x32xf32>
    %100 = tpu.matmul %97, %99, %cst_104 {dimension_numbers = #tpu.dot_dimension_numbers<[1], [0], [0], [1], [0, 0, 1, 1], [], []>} : vector<8x32xf32>, vector<32x32xf32>, vector<8x32xf32> -> vector<8x32xf32>
    %101 = arith.addf %94, %100 : vector<8x32xf32>
    %c4_105 = arith.constant 4 : index
    %c0_106 = arith.constant 0 : index
    %c0_107 = arith.constant 0 : index
    %102 = vector.load %arg7[%c4_105, %c0_106, %c0_107] : memref<9x8x32xf32, #tpu.memory_space<vmem>>, vector<1x8x32xf32>
    %103 = vector.shape_cast %102 : vector<1x8x32xf32> to vector<8x32xf32>
    %cst_108 = arith.constant dense<0.000000e+00> : vector<8x32xf32>
    %104 = tpu.matmul %103, %74, %cst_108 {dimension_numbers = #tpu.dot_dimension_numbers<[1], [0], [0], [1], [0, 0, 1, 1], [], []>} : vector<8x32xf32>, vector<32x32xf32>, vector<8x32xf32> -> vector<8x32xf32>
    %c4_109 = arith.constant 4 : index
    %c0_110 = arith.constant 0 : index
    %c0_111 = arith.constant 0 : index
    %105 = vector.load %arg8[%c4_109, %c0_110, %c0_111] : memref<9x32x32xf32, #tpu.memory_space<vmem>>, vector<1x32x32xf32>
    %106 = vector.shape_cast %105 : vector<1x32x32xf32> to vector<32x32xf32>
    %cst_112 = arith.constant dense<0.000000e+00> : vector<8x32xf32>
    %107 = tpu.matmul %104, %106, %cst_112 {dimension_numbers = #tpu.dot_dimension_numbers<[1], [0], [0], [1], [0, 0, 1, 1], [], []>} : vector<8x32xf32>, vector<32x32xf32>, vector<8x32xf32> -> vector<8x32xf32>
    %108 = arith.addf %101, %107 : vector<8x32xf32>
    %c5_113 = arith.constant 5 : index
    %c0_114 = arith.constant 0 : index
    %c0_115 = arith.constant 0 : index
    %109 = vector.load %arg7[%c5_113, %c0_114, %c0_115] : memref<9x8x32xf32, #tpu.memory_space<vmem>>, vector<1x8x32xf32>
    %110 = vector.shape_cast %109 : vector<1x8x32xf32> to vector<8x32xf32>
    %cst_116 = arith.constant dense<0.000000e+00> : vector<8x32xf32>
    %111 = tpu.matmul %110, %74, %cst_116 {dimension_numbers = #tpu.dot_dimension_numbers<[1], [0], [0], [1], [0, 0, 1, 1], [], []>} : vector<8x32xf32>, vector<32x32xf32>, vector<8x32xf32> -> vector<8x32xf32>
    %c5_117 = arith.constant 5 : index
    %c0_118 = arith.constant 0 : index
    %c0_119 = arith.constant 0 : index
    %112 = vector.load %arg8[%c5_117, %c0_118, %c0_119] : memref<9x32x32xf32, #tpu.memory_space<vmem>>, vector<1x32x32xf32>
    %113 = vector.shape_cast %112 : vector<1x32x32xf32> to vector<32x32xf32>
    %cst_120 = arith.constant dense<0.000000e+00> : vector<8x32xf32>
    %114 = tpu.matmul %111, %113, %cst_120 {dimension_numbers = #tpu.dot_dimension_numbers<[1], [0], [0], [1], [0, 0, 1, 1], [], []>} : vector<8x32xf32>, vector<32x32xf32>, vector<8x32xf32> -> vector<8x32xf32>
    %115 = arith.addf %108, %114 : vector<8x32xf32>
    %c6_121 = arith.constant 6 : index
    %c0_122 = arith.constant 0 : index
    %c0_123 = arith.constant 0 : index
    %116 = vector.load %arg7[%c6_121, %c0_122, %c0_123] : memref<9x8x32xf32, #tpu.memory_space<vmem>>, vector<1x8x32xf32>
    %117 = vector.shape_cast %116 : vector<1x8x32xf32> to vector<8x32xf32>
    %cst_124 = arith.constant dense<0.000000e+00> : vector<8x32xf32>
    %118 = tpu.matmul %117, %74, %cst_124 {dimension_numbers = #tpu.dot_dimension_numbers<[1], [0], [0], [1], [0, 0, 1, 1], [], []>} : vector<8x32xf32>, vector<32x32xf32>, vector<8x32xf32> -> vector<8x32xf32>
    %c6_125 = arith.constant 6 : index
    %c0_126 = arith.constant 0 : index
    %c0_127 = arith.constant 0 : index
    %119 = vector.load %arg8[%c6_125, %c0_126, %c0_127] : memref<9x32x32xf32, #tpu.memory_space<vmem>>, vector<1x32x32xf32>
    %120 = vector.shape_cast %119 : vector<1x32x32xf32> to vector<32x32xf32>
    %cst_128 = arith.constant dense<0.000000e+00> : vector<8x32xf32>
    %121 = tpu.matmul %118, %120, %cst_128 {dimension_numbers = #tpu.dot_dimension_numbers<[1], [0], [0], [1], [0, 0, 1, 1], [], []>} : vector<8x32xf32>, vector<32x32xf32>, vector<8x32xf32> -> vector<8x32xf32>
    %122 = arith.addf %115, %121 : vector<8x32xf32>
    %c7_129 = arith.constant 7 : index
    %c0_130 = arith.constant 0 : index
    %c0_131 = arith.constant 0 : index
    %123 = vector.load %arg7[%c7_129, %c0_130, %c0_131] : memref<9x8x32xf32, #tpu.memory_space<vmem>>, vector<1x8x32xf32>
    %124 = vector.shape_cast %123 : vector<1x8x32xf32> to vector<8x32xf32>
    %cst_132 = arith.constant dense<0.000000e+00> : vector<8x32xf32>
    %125 = tpu.matmul %124, %74, %cst_132 {dimension_numbers = #tpu.dot_dimension_numbers<[1], [0], [0], [1], [0, 0, 1, 1], [], []>} : vector<8x32xf32>, vector<32x32xf32>, vector<8x32xf32> -> vector<8x32xf32>
    %c7_133 = arith.constant 7 : index
    %c0_134 = arith.constant 0 : index
    %c0_135 = arith.constant 0 : index
    %126 = vector.load %arg8[%c7_133, %c0_134, %c0_135] : memref<9x32x32xf32, #tpu.memory_space<vmem>>, vector<1x32x32xf32>
    %127 = vector.shape_cast %126 : vector<1x32x32xf32> to vector<32x32xf32>
    %cst_136 = arith.constant dense<0.000000e+00> : vector<8x32xf32>
    %128 = tpu.matmul %125, %127, %cst_136 {dimension_numbers = #tpu.dot_dimension_numbers<[1], [0], [0], [1], [0, 0, 1, 1], [], []>} : vector<8x32xf32>, vector<32x32xf32>, vector<8x32xf32> -> vector<8x32xf32>
    %129 = arith.addf %122, %128 : vector<8x32xf32>
    %c8_137 = arith.constant 8 : index
    %c0_138 = arith.constant 0 : index
    %c0_139 = arith.constant 0 : index
    %130 = vector.load %arg7[%c8_137, %c0_138, %c0_139] : memref<9x8x32xf32, #tpu.memory_space<vmem>>, vector<1x8x32xf32>
    %131 = vector.shape_cast %130 : vector<1x8x32xf32> to vector<8x32xf32>
    %cst_140 = arith.constant dense<0.000000e+00> : vector<8x32xf32>
    %132 = tpu.matmul %131, %74, %cst_140 {dimension_numbers = #tpu.dot_dimension_numbers<[1], [0], [0], [1], [0, 0, 1, 1], [], []>} : vector<8x32xf32>, vector<32x32xf32>, vector<8x32xf32> -> vector<8x32xf32>
    %c8_141 = arith.constant 8 : index
    %c0_142 = arith.constant 0 : index
    %c0_143 = arith.constant 0 : index
    %133 = vector.load %arg8[%c8_141, %c0_142, %c0_143] : memref<9x32x32xf32, #tpu.memory_space<vmem>>, vector<1x32x32xf32>
    %134 = vector.shape_cast %133 : vector<1x32x32xf32> to vector<32x32xf32>
    %cst_144 = arith.constant dense<0.000000e+00> : vector<8x32xf32>
    %135 = tpu.matmul %132, %134, %cst_144 {dimension_numbers = #tpu.dot_dimension_numbers<[1], [0], [0], [1], [0, 0, 1, 1], [], []>} : vector<8x32xf32>, vector<32x32xf32>, vector<8x32xf32> -> vector<8x32xf32>
    %136 = arith.addf %129, %135 : vector<8x32xf32>
    %c0_145 = arith.constant 0 : index
    %c0_146 = arith.constant 0 : index
    %137 = vector.load %arg9[%c0_145, %c0_146] : memref<1x32xf32, #tpu.memory_space<vmem>>, vector<1x32xf32>
    %138 = vector.broadcast %137 : vector<1x32xf32> to vector<8x32xf32>
    %139 = arith.addf %136, %138 : vector<8x32xf32>
    %cst_147 = arith.constant 0.000000e+00 : f32
    %140 = vector.broadcast %cst_147 : f32 to vector<8x32xf32>
    %141 = arith.maximumf %139, %140 : vector<8x32xf32>
    %c0_148 = arith.constant 0 : index
    %c0_149 = arith.constant 0 : index
    %c0_150 = arith.constant 0 : index
    %142 = vector.load %arg10[%c0_148, %c0_149, %c0_150] : memref<9x8x8xf32, #tpu.memory_space<vmem>>, vector<1x8x8xf32>
    %143 = vector.shape_cast %142 : vector<1x8x8xf32> to vector<8x8xf32>
    %cst_151 = arith.constant dense<0.000000e+00> : vector<8x32xf32>
    %144 = tpu.matmul %143, %141, %cst_151 {dimension_numbers = #tpu.dot_dimension_numbers<[1], [0], [0], [1], [0, 0, 1, 1], [], []>} : vector<8x8xf32>, vector<8x32xf32>, vector<8x32xf32> -> vector<8x32xf32>
    %c0_152 = arith.constant 0 : index
    %c0_153 = arith.constant 0 : index
    %c0_154 = arith.constant 0 : index
    %145 = vector.load %arg11[%c0_152, %c0_153, %c0_154] : memref<9x32x32xf32, #tpu.memory_space<vmem>>, vector<1x32x32xf32>
    %146 = vector.shape_cast %145 : vector<1x32x32xf32> to vector<32x32xf32>
    %cst_155 = arith.constant dense<0.000000e+00> : vector<8x32xf32>
    %147 = tpu.matmul %144, %146, %cst_155 {dimension_numbers = #tpu.dot_dimension_numbers<[1], [0], [0], [1], [0, 0, 1, 1], [], []>} : vector<8x32xf32>, vector<32x32xf32>, vector<8x32xf32> -> vector<8x32xf32>
    %c1_156 = arith.constant 1 : index
    %c0_157 = arith.constant 0 : index
    %c0_158 = arith.constant 0 : index
    %148 = vector.load %arg10[%c1_156, %c0_157, %c0_158] : memref<9x8x8xf32, #tpu.memory_space<vmem>>, vector<1x8x8xf32>
    %149 = vector.shape_cast %148 : vector<1x8x8xf32> to vector<8x8xf32>
    %cst_159 = arith.constant dense<0.000000e+00> : vector<8x32xf32>
    %150 = tpu.matmul %149, %141, %cst_159 {dimension_numbers = #tpu.dot_dimension_numbers<[1], [0], [0], [1], [0, 0, 1, 1], [], []>} : vector<8x8xf32>, vector<8x32xf32>, vector<8x32xf32> -> vector<8x32xf32>
    %c1_160 = arith.constant 1 : index
    %c0_161 = arith.constant 0 : index
    %c0_162 = arith.constant 0 : index
    %151 = vector.load %arg11[%c1_160, %c0_161, %c0_162] : memref<9x32x32xf32, #tpu.memory_space<vmem>>, vector<1x32x32xf32>
    %152 = vector.shape_cast %151 : vector<1x32x32xf32> to vector<32x32xf32>
    %cst_163 = arith.constant dense<0.000000e+00> : vector<8x32xf32>
    %153 = tpu.matmul %150, %152, %cst_163 {dimension_numbers = #tpu.dot_dimension_numbers<[1], [0], [0], [1], [0, 0, 1, 1], [], []>} : vector<8x32xf32>, vector<32x32xf32>, vector<8x32xf32> -> vector<8x32xf32>
    %154 = arith.addf %147, %153 : vector<8x32xf32>
    %c2_164 = arith.constant 2 : index
    %c0_165 = arith.constant 0 : index
    %c0_166 = arith.constant 0 : index
    %155 = vector.load %arg10[%c2_164, %c0_165, %c0_166] : memref<9x8x8xf32, #tpu.memory_space<vmem>>, vector<1x8x8xf32>
    %156 = vector.shape_cast %155 : vector<1x8x8xf32> to vector<8x8xf32>
    %cst_167 = arith.constant dense<0.000000e+00> : vector<8x32xf32>
    %157 = tpu.matmul %156, %141, %cst_167 {dimension_numbers = #tpu.dot_dimension_numbers<[1], [0], [0], [1], [0, 0, 1, 1], [], []>} : vector<8x8xf32>, vector<8x32xf32>, vector<8x32xf32> -> vector<8x32xf32>
    %c2_168 = arith.constant 2 : index
    %c0_169 = arith.constant 0 : index
    %c0_170 = arith.constant 0 : index
    %158 = vector.load %arg11[%c2_168, %c0_169, %c0_170] : memref<9x32x32xf32, #tpu.memory_space<vmem>>, vector<1x32x32xf32>
    %159 = vector.shape_cast %158 : vector<1x32x32xf32> to vector<32x32xf32>
    %cst_171 = arith.constant dense<0.000000e+00> : vector<8x32xf32>
    %160 = tpu.matmul %157, %159, %cst_171 {dimension_numbers = #tpu.dot_dimension_numbers<[1], [0], [0], [1], [0, 0, 1, 1], [], []>} : vector<8x32xf32>, vector<32x32xf32>, vector<8x32xf32> -> vector<8x32xf32>
    %161 = arith.addf %154, %160 : vector<8x32xf32>
    %c3_172 = arith.constant 3 : index
    %c0_173 = arith.constant 0 : index
    %c0_174 = arith.constant 0 : index
    %162 = vector.load %arg10[%c3_172, %c0_173, %c0_174] : memref<9x8x8xf32, #tpu.memory_space<vmem>>, vector<1x8x8xf32>
    %163 = vector.shape_cast %162 : vector<1x8x8xf32> to vector<8x8xf32>
    %cst_175 = arith.constant dense<0.000000e+00> : vector<8x32xf32>
    %164 = tpu.matmul %163, %141, %cst_175 {dimension_numbers = #tpu.dot_dimension_numbers<[1], [0], [0], [1], [0, 0, 1, 1], [], []>} : vector<8x8xf32>, vector<8x32xf32>, vector<8x32xf32> -> vector<8x32xf32>
    %c3_176 = arith.constant 3 : index
    %c0_177 = arith.constant 0 : index
    %c0_178 = arith.constant 0 : index
    %165 = vector.load %arg11[%c3_176, %c0_177, %c0_178] : memref<9x32x32xf32, #tpu.memory_space<vmem>>, vector<1x32x32xf32>
    %166 = vector.shape_cast %165 : vector<1x32x32xf32> to vector<32x32xf32>
    %cst_179 = arith.constant dense<0.000000e+00> : vector<8x32xf32>
    %167 = tpu.matmul %164, %166, %cst_179 {dimension_numbers = #tpu.dot_dimension_numbers<[1], [0], [0], [1], [0, 0, 1, 1], [], []>} : vector<8x32xf32>, vector<32x32xf32>, vector<8x32xf32> -> vector<8x32xf32>
    %168 = arith.addf %161, %167 : vector<8x32xf32>
    %c4_180 = arith.constant 4 : index
    %c0_181 = arith.constant 0 : index
    %c0_182 = arith.constant 0 : index
    %169 = vector.load %arg10[%c4_180, %c0_181, %c0_182] : memref<9x8x8xf32, #tpu.memory_space<vmem>>, vector<1x8x8xf32>
    %170 = vector.shape_cast %169 : vector<1x8x8xf32> to vector<8x8xf32>
    %cst_183 = arith.constant dense<0.000000e+00> : vector<8x32xf32>
    %171 = tpu.matmul %170, %141, %cst_183 {dimension_numbers = #tpu.dot_dimension_numbers<[1], [0], [0], [1], [0, 0, 1, 1], [], []>} : vector<8x8xf32>, vector<8x32xf32>, vector<8x32xf32> -> vector<8x32xf32>
    %c4_184 = arith.constant 4 : index
    %c0_185 = arith.constant 0 : index
    %c0_186 = arith.constant 0 : index
    %172 = vector.load %arg11[%c4_184, %c0_185, %c0_186] : memref<9x32x32xf32, #tpu.memory_space<vmem>>, vector<1x32x32xf32>
    %173 = vector.shape_cast %172 : vector<1x32x32xf32> to vector<32x32xf32>
    %cst_187 = arith.constant dense<0.000000e+00> : vector<8x32xf32>
    %174 = tpu.matmul %171, %173, %cst_187 {dimension_numbers = #tpu.dot_dimension_numbers<[1], [0], [0], [1], [0, 0, 1, 1], [], []>} : vector<8x32xf32>, vector<32x32xf32>, vector<8x32xf32> -> vector<8x32xf32>
    %175 = arith.addf %168, %174 : vector<8x32xf32>
    %c5_188 = arith.constant 5 : index
    %c0_189 = arith.constant 0 : index
    %c0_190 = arith.constant 0 : index
    %176 = vector.load %arg10[%c5_188, %c0_189, %c0_190] : memref<9x8x8xf32, #tpu.memory_space<vmem>>, vector<1x8x8xf32>
    %177 = vector.shape_cast %176 : vector<1x8x8xf32> to vector<8x8xf32>
    %cst_191 = arith.constant dense<0.000000e+00> : vector<8x32xf32>
    %178 = tpu.matmul %177, %141, %cst_191 {dimension_numbers = #tpu.dot_dimension_numbers<[1], [0], [0], [1], [0, 0, 1, 1], [], []>} : vector<8x8xf32>, vector<8x32xf32>, vector<8x32xf32> -> vector<8x32xf32>
    %c5_192 = arith.constant 5 : index
    %c0_193 = arith.constant 0 : index
    %c0_194 = arith.constant 0 : index
    %179 = vector.load %arg11[%c5_192, %c0_193, %c0_194] : memref<9x32x32xf32, #tpu.memory_space<vmem>>, vector<1x32x32xf32>
    %180 = vector.shape_cast %179 : vector<1x32x32xf32> to vector<32x32xf32>
    %cst_195 = arith.constant dense<0.000000e+00> : vector<8x32xf32>
    %181 = tpu.matmul %178, %180, %cst_195 {dimension_numbers = #tpu.dot_dimension_numbers<[1], [0], [0], [1], [0, 0, 1, 1], [], []>} : vector<8x32xf32>, vector<32x32xf32>, vector<8x32xf32> -> vector<8x32xf32>
    %182 = arith.addf %175, %181 : vector<8x32xf32>
    %c6_196 = arith.constant 6 : index
    %c0_197 = arith.constant 0 : index
    %c0_198 = arith.constant 0 : index
    %183 = vector.load %arg10[%c6_196, %c0_197, %c0_198] : memref<9x8x8xf32, #tpu.memory_space<vmem>>, vector<1x8x8xf32>
    %184 = vector.shape_cast %183 : vector<1x8x8xf32> to vector<8x8xf32>
    %cst_199 = arith.constant dense<0.000000e+00> : vector<8x32xf32>
    %185 = tpu.matmul %184, %141, %cst_199 {dimension_numbers = #tpu.dot_dimension_numbers<[1], [0], [0], [1], [0, 0, 1, 1], [], []>} : vector<8x8xf32>, vector<8x32xf32>, vector<8x32xf32> -> vector<8x32xf32>
    %c6_200 = arith.constant 6 : index
    %c0_201 = arith.constant 0 : index
    %c0_202 = arith.constant 0 : index
    %186 = vector.load %arg11[%c6_200, %c0_201, %c0_202] : memref<9x32x32xf32, #tpu.memory_space<vmem>>, vector<1x32x32xf32>
    %187 = vector.shape_cast %186 : vector<1x32x32xf32> to vector<32x32xf32>
    %cst_203 = arith.constant dense<0.000000e+00> : vector<8x32xf32>
    %188 = tpu.matmul %185, %187, %cst_203 {dimension_numbers = #tpu.dot_dimension_numbers<[1], [0], [0], [1], [0, 0, 1, 1], [], []>} : vector<8x32xf32>, vector<32x32xf32>, vector<8x32xf32> -> vector<8x32xf32>
    %189 = arith.addf %182, %188 : vector<8x32xf32>
    %c7_204 = arith.constant 7 : index
    %c0_205 = arith.constant 0 : index
    %c0_206 = arith.constant 0 : index
    %190 = vector.load %arg10[%c7_204, %c0_205, %c0_206] : memref<9x8x8xf32, #tpu.memory_space<vmem>>, vector<1x8x8xf32>
    %191 = vector.shape_cast %190 : vector<1x8x8xf32> to vector<8x8xf32>
    %cst_207 = arith.constant dense<0.000000e+00> : vector<8x32xf32>
    %192 = tpu.matmul %191, %141, %cst_207 {dimension_numbers = #tpu.dot_dimension_numbers<[1], [0], [0], [1], [0, 0, 1, 1], [], []>} : vector<8x8xf32>, vector<8x32xf32>, vector<8x32xf32> -> vector<8x32xf32>
    %c7_208 = arith.constant 7 : index
    %c0_209 = arith.constant 0 : index
    %c0_210 = arith.constant 0 : index
    %193 = vector.load %arg11[%c7_208, %c0_209, %c0_210] : memref<9x32x32xf32, #tpu.memory_space<vmem>>, vector<1x32x32xf32>
    %194 = vector.shape_cast %193 : vector<1x32x32xf32> to vector<32x32xf32>
    %cst_211 = arith.constant dense<0.000000e+00> : vector<8x32xf32>
    %195 = tpu.matmul %192, %194, %cst_211 {dimension_numbers = #tpu.dot_dimension_numbers<[1], [0], [0], [1], [0, 0, 1, 1], [], []>} : vector<8x32xf32>, vector<32x32xf32>, vector<8x32xf32> -> vector<8x32xf32>
    %196 = arith.addf %189, %195 : vector<8x32xf32>
    %c8_212 = arith.constant 8 : index
    %c0_213 = arith.constant 0 : index
    %c0_214 = arith.constant 0 : index
    %197 = vector.load %arg10[%c8_212, %c0_213, %c0_214] : memref<9x8x8xf32, #tpu.memory_space<vmem>>, vector<1x8x8xf32>
    %198 = vector.shape_cast %197 : vector<1x8x8xf32> to vector<8x8xf32>
    %cst_215 = arith.constant dense<0.000000e+00> : vector<8x32xf32>
    %199 = tpu.matmul %198, %141, %cst_215 {dimension_numbers = #tpu.dot_dimension_numbers<[1], [0], [0], [1], [0, 0, 1, 1], [], []>} : vector<8x8xf32>, vector<8x32xf32>, vector<8x32xf32> -> vector<8x32xf32>
    %c8_216 = arith.constant 8 : index
    %c0_217 = arith.constant 0 : index
    %c0_218 = arith.constant 0 : index
    %200 = vector.load %arg11[%c8_216, %c0_217, %c0_218] : memref<9x32x32xf32, #tpu.memory_space<vmem>>, vector<1x32x32xf32>
    %201 = vector.shape_cast %200 : vector<1x32x32xf32> to vector<32x32xf32>
    %cst_219 = arith.constant dense<0.000000e+00> : vector<8x32xf32>
    %202 = tpu.matmul %199, %201, %cst_219 {dimension_numbers = #tpu.dot_dimension_numbers<[1], [0], [0], [1], [0, 0, 1, 1], [], []>} : vector<8x32xf32>, vector<32x32xf32>, vector<8x32xf32> -> vector<8x32xf32>
    %203 = arith.addf %196, %202 : vector<8x32xf32>
    %c0_220 = arith.constant 0 : index
    %c0_221 = arith.constant 0 : index
    %204 = vector.load %arg12[%c0_220, %c0_221] : memref<1x32xf32, #tpu.memory_space<vmem>>, vector<1x32xf32>
    %205 = vector.broadcast %204 : vector<1x32xf32> to vector<8x32xf32>
    %206 = arith.addf %203, %205 : vector<8x32xf32>
    %cst_222 = arith.constant 0.000000e+00 : f32
    %207 = vector.broadcast %cst_222 : f32 to vector<8x32xf32>
    %208 = arith.maximumf %206, %207 : vector<8x32xf32>
    %c0_223 = arith.constant 0 : index
    %c0_224 = arith.constant 0 : index
    %c0_225 = arith.constant 0 : index
    %209 = vector.load %arg13[%c0_223, %c0_224, %c0_225] : memref<21x32x32xf32, #tpu.memory_space<vmem>>, vector<1x32x32xf32>
    %210 = vector.shape_cast %209 : vector<1x32x32xf32> to vector<32x32xf32>
    %cst_226 = arith.constant dense<0.000000e+00> : vector<8x32xf32>
    %211 = tpu.matmul %208, %210, %cst_226 {dimension_numbers = #tpu.dot_dimension_numbers<[1], [0], [0], [1], [0, 0, 1, 1], [], []>} : vector<8x32xf32>, vector<32x32xf32>, vector<8x32xf32> -> vector<8x32xf32>
    %c0_227 = arith.constant 0 : index
    %c0_228 = arith.constant 0 : index
    %c0_229 = arith.constant 0 : index
    %212 = vector.load %arg14[%c0_227, %c0_228, %c0_229] : memref<21x1x32xf32, #tpu.memory_space<vmem>>, vector<1x1x32xf32>
    %213 = vector.shape_cast %212 : vector<1x1x32xf32> to vector<1x32xf32>
    %214 = vector.broadcast %213 : vector<1x32xf32> to vector<8x32xf32>
    %215 = arith.addf %211, %214 : vector<8x32xf32>
    %cst_230 = arith.constant 0.000000e+00 : f32
    %216 = vector.broadcast %cst_230 : f32 to vector<8x32xf32>
    %217 = arith.maximumf %215, %216 : vector<8x32xf32>
    %c1_231 = arith.constant 1 : index
    %c0_232 = arith.constant 0 : index
    %c0_233 = arith.constant 0 : index
    %218 = vector.load %arg13[%c1_231, %c0_232, %c0_233] : memref<21x32x32xf32, #tpu.memory_space<vmem>>, vector<1x32x32xf32>
    %219 = vector.shape_cast %218 : vector<1x32x32xf32> to vector<32x32xf32>
    %cst_234 = arith.constant dense<0.000000e+00> : vector<8x32xf32>
    %220 = tpu.matmul %217, %219, %cst_234 {dimension_numbers = #tpu.dot_dimension_numbers<[1], [0], [0], [1], [0, 0, 1, 1], [], []>} : vector<8x32xf32>, vector<32x32xf32>, vector<8x32xf32> -> vector<8x32xf32>
    %c1_235 = arith.constant 1 : index
    %c0_236 = arith.constant 0 : index
    %c0_237 = arith.constant 0 : index
    %221 = vector.load %arg14[%c1_235, %c0_236, %c0_237] : memref<21x1x32xf32, #tpu.memory_space<vmem>>, vector<1x1x32xf32>
    %222 = vector.shape_cast %221 : vector<1x1x32xf32> to vector<1x32xf32>
    %223 = vector.broadcast %222 : vector<1x32xf32> to vector<8x32xf32>
    %224 = arith.addf %220, %223 : vector<8x32xf32>
    %cst_238 = arith.constant 0.000000e+00 : f32
    %225 = vector.broadcast %cst_238 : f32 to vector<8x32xf32>
    %226 = arith.maximumf %224, %225 : vector<8x32xf32>
    %c2_239 = arith.constant 2 : index
    %c0_240 = arith.constant 0 : index
    %c0_241 = arith.constant 0 : index
    %227 = vector.load %arg13[%c2_239, %c0_240, %c0_241] : memref<21x32x32xf32, #tpu.memory_space<vmem>>, vector<1x32x32xf32>
    %228 = vector.shape_cast %227 : vector<1x32x32xf32> to vector<32x32xf32>
    %cst_242 = arith.constant dense<0.000000e+00> : vector<8x32xf32>
    %229 = tpu.matmul %226, %228, %cst_242 {dimension_numbers = #tpu.dot_dimension_numbers<[1], [0], [0], [1], [0, 0, 1, 1], [], []>} : vector<8x32xf32>, vector<32x32xf32>, vector<8x32xf32> -> vector<8x32xf32>
    %c2_243 = arith.constant 2 : index
    %c0_244 = arith.constant 0 : index
    %c0_245 = arith.constant 0 : index
    %230 = vector.load %arg14[%c2_243, %c0_244, %c0_245] : memref<21x1x32xf32, #tpu.memory_space<vmem>>, vector<1x1x32xf32>
    %231 = vector.shape_cast %230 : vector<1x1x32xf32> to vector<1x32xf32>
    %232 = vector.broadcast %231 : vector<1x32xf32> to vector<8x32xf32>
    %233 = arith.addf %229, %232 : vector<8x32xf32>
    %cst_246 = arith.constant 0.000000e+00 : f32
    %234 = vector.broadcast %cst_246 : f32 to vector<8x32xf32>
    %235 = arith.maximumf %233, %234 : vector<8x32xf32>
    %c3_247 = arith.constant 3 : index
    %c0_248 = arith.constant 0 : index
    %c0_249 = arith.constant 0 : index
    %236 = vector.load %arg13[%c3_247, %c0_248, %c0_249] : memref<21x32x32xf32, #tpu.memory_space<vmem>>, vector<1x32x32xf32>
    %237 = vector.shape_cast %236 : vector<1x32x32xf32> to vector<32x32xf32>
    %cst_250 = arith.constant dense<0.000000e+00> : vector<8x32xf32>
    %238 = tpu.matmul %235, %237, %cst_250 {dimension_numbers = #tpu.dot_dimension_numbers<[1], [0], [0], [1], [0, 0, 1, 1], [], []>} : vector<8x32xf32>, vector<32x32xf32>, vector<8x32xf32> -> vector<8x32xf32>
    %c3_251 = arith.constant 3 : index
    %c0_252 = arith.constant 0 : index
    %c0_253 = arith.constant 0 : index
    %239 = vector.load %arg14[%c3_251, %c0_252, %c0_253] : memref<21x1x32xf32, #tpu.memory_space<vmem>>, vector<1x1x32xf32>
    %240 = vector.shape_cast %239 : vector<1x1x32xf32> to vector<1x32xf32>
    %241 = vector.broadcast %240 : vector<1x32xf32> to vector<8x32xf32>
    %242 = arith.addf %238, %241 : vector<8x32xf32>
    %cst_254 = arith.constant 0.000000e+00 : f32
    %243 = vector.broadcast %cst_254 : f32 to vector<8x32xf32>
    %244 = arith.maximumf %242, %243 : vector<8x32xf32>
    %c4_255 = arith.constant 4 : index
    %c0_256 = arith.constant 0 : index
    %c0_257 = arith.constant 0 : index
    %245 = vector.load %arg13[%c4_255, %c0_256, %c0_257] : memref<21x32x32xf32, #tpu.memory_space<vmem>>, vector<1x32x32xf32>
    %246 = vector.shape_cast %245 : vector<1x32x32xf32> to vector<32x32xf32>
    %cst_258 = arith.constant dense<0.000000e+00> : vector<8x32xf32>
    %247 = tpu.matmul %244, %246, %cst_258 {dimension_numbers = #tpu.dot_dimension_numbers<[1], [0], [0], [1], [0, 0, 1, 1], [], []>} : vector<8x32xf32>, vector<32x32xf32>, vector<8x32xf32> -> vector<8x32xf32>
    %c4_259 = arith.constant 4 : index
    %c0_260 = arith.constant 0 : index
    %c0_261 = arith.constant 0 : index
    %248 = vector.load %arg14[%c4_259, %c0_260, %c0_261] : memref<21x1x32xf32, #tpu.memory_space<vmem>>, vector<1x1x32xf32>
    %249 = vector.shape_cast %248 : vector<1x1x32xf32> to vector<1x32xf32>
    %250 = vector.broadcast %249 : vector<1x32xf32> to vector<8x32xf32>
    %251 = arith.addf %247, %250 : vector<8x32xf32>
    %cst_262 = arith.constant 0.000000e+00 : f32
    %252 = vector.broadcast %cst_262 : f32 to vector<8x32xf32>
    %253 = arith.maximumf %251, %252 : vector<8x32xf32>
    %c5_263 = arith.constant 5 : index
    %c0_264 = arith.constant 0 : index
    %c0_265 = arith.constant 0 : index
    %254 = vector.load %arg13[%c5_263, %c0_264, %c0_265] : memref<21x32x32xf32, #tpu.memory_space<vmem>>, vector<1x32x32xf32>
    %255 = vector.shape_cast %254 : vector<1x32x32xf32> to vector<32x32xf32>
    %cst_266 = arith.constant dense<0.000000e+00> : vector<8x32xf32>
    %256 = tpu.matmul %253, %255, %cst_266 {dimension_numbers = #tpu.dot_dimension_numbers<[1], [0], [0], [1], [0, 0, 1, 1], [], []>} : vector<8x32xf32>, vector<32x32xf32>, vector<8x32xf32> -> vector<8x32xf32>
    %c5_267 = arith.constant 5 : index
    %c0_268 = arith.constant 0 : index
    %c0_269 = arith.constant 0 : index
    %257 = vector.load %arg14[%c5_267, %c0_268, %c0_269] : memref<21x1x32xf32, #tpu.memory_space<vmem>>, vector<1x1x32xf32>
    %258 = vector.shape_cast %257 : vector<1x1x32xf32> to vector<1x32xf32>
    %259 = vector.broadcast %258 : vector<1x32xf32> to vector<8x32xf32>
    %260 = arith.addf %256, %259 : vector<8x32xf32>
    %cst_270 = arith.constant 0.000000e+00 : f32
    %261 = vector.broadcast %cst_270 : f32 to vector<8x32xf32>
    %262 = arith.maximumf %260, %261 : vector<8x32xf32>
    %c6_271 = arith.constant 6 : index
    %c0_272 = arith.constant 0 : index
    %c0_273 = arith.constant 0 : index
    %263 = vector.load %arg13[%c6_271, %c0_272, %c0_273] : memref<21x32x32xf32, #tpu.memory_space<vmem>>, vector<1x32x32xf32>
    %264 = vector.shape_cast %263 : vector<1x32x32xf32> to vector<32x32xf32>
    %cst_274 = arith.constant dense<0.000000e+00> : vector<8x32xf32>
    %265 = tpu.matmul %262, %264, %cst_274 {dimension_numbers = #tpu.dot_dimension_numbers<[1], [0], [0], [1], [0, 0, 1, 1], [], []>} : vector<8x32xf32>, vector<32x32xf32>, vector<8x32xf32> -> vector<8x32xf32>
    %c6_275 = arith.constant 6 : index
    %c0_276 = arith.constant 0 : index
    %c0_277 = arith.constant 0 : index
    %266 = vector.load %arg14[%c6_275, %c0_276, %c0_277] : memref<21x1x32xf32, #tpu.memory_space<vmem>>, vector<1x1x32xf32>
    %267 = vector.shape_cast %266 : vector<1x1x32xf32> to vector<1x32xf32>
    %268 = vector.broadcast %267 : vector<1x32xf32> to vector<8x32xf32>
    %269 = arith.addf %265, %268 : vector<8x32xf32>
    %cst_278 = arith.constant 0.000000e+00 : f32
    %270 = vector.broadcast %cst_278 : f32 to vector<8x32xf32>
    %271 = arith.maximumf %269, %270 : vector<8x32xf32>
    %c7_279 = arith.constant 7 : index
    %c0_280 = arith.constant 0 : index
    %c0_281 = arith.constant 0 : index
    %272 = vector.load %arg13[%c7_279, %c0_280, %c0_281] : memref<21x32x32xf32, #tpu.memory_space<vmem>>, vector<1x32x32xf32>
    %273 = vector.shape_cast %272 : vector<1x32x32xf32> to vector<32x32xf32>
    %cst_282 = arith.constant dense<0.000000e+00> : vector<8x32xf32>
    %274 = tpu.matmul %271, %273, %cst_282 {dimension_numbers = #tpu.dot_dimension_numbers<[1], [0], [0], [1], [0, 0, 1, 1], [], []>} : vector<8x32xf32>, vector<32x32xf32>, vector<8x32xf32> -> vector<8x32xf32>
    %c7_283 = arith.constant 7 : index
    %c0_284 = arith.constant 0 : index
    %c0_285 = arith.constant 0 : index
    %275 = vector.load %arg14[%c7_283, %c0_284, %c0_285] : memref<21x1x32xf32, #tpu.memory_space<vmem>>, vector<1x1x32xf32>
    %276 = vector.shape_cast %275 : vector<1x1x32xf32> to vector<1x32xf32>
    %277 = vector.broadcast %276 : vector<1x32xf32> to vector<8x32xf32>
    %278 = arith.addf %274, %277 : vector<8x32xf32>
    %cst_286 = arith.constant 0.000000e+00 : f32
    %279 = vector.broadcast %cst_286 : f32 to vector<8x32xf32>
    %280 = arith.maximumf %278, %279 : vector<8x32xf32>
    %c8_287 = arith.constant 8 : index
    %c0_288 = arith.constant 0 : index
    %c0_289 = arith.constant 0 : index
    %281 = vector.load %arg13[%c8_287, %c0_288, %c0_289] : memref<21x32x32xf32, #tpu.memory_space<vmem>>, vector<1x32x32xf32>
    %282 = vector.shape_cast %281 : vector<1x32x32xf32> to vector<32x32xf32>
    %cst_290 = arith.constant dense<0.000000e+00> : vector<8x32xf32>
    %283 = tpu.matmul %280, %282, %cst_290 {dimension_numbers = #tpu.dot_dimension_numbers<[1], [0], [0], [1], [0, 0, 1, 1], [], []>} : vector<8x32xf32>, vector<32x32xf32>, vector<8x32xf32> -> vector<8x32xf32>
    %c8_291 = arith.constant 8 : index
    %c0_292 = arith.constant 0 : index
    %c0_293 = arith.constant 0 : index
    %284 = vector.load %arg14[%c8_291, %c0_292, %c0_293] : memref<21x1x32xf32, #tpu.memory_space<vmem>>, vector<1x1x32xf32>
    %285 = vector.shape_cast %284 : vector<1x1x32xf32> to vector<1x32xf32>
    %286 = vector.broadcast %285 : vector<1x32xf32> to vector<8x32xf32>
    %287 = arith.addf %283, %286 : vector<8x32xf32>
    %cst_294 = arith.constant 0.000000e+00 : f32
    %288 = vector.broadcast %cst_294 : f32 to vector<8x32xf32>
    %289 = arith.maximumf %287, %288 : vector<8x32xf32>
    %c9 = arith.constant 9 : index
    %c0_295 = arith.constant 0 : index
    %c0_296 = arith.constant 0 : index
    %290 = vector.load %arg13[%c9, %c0_295, %c0_296] : memref<21x32x32xf32, #tpu.memory_space<vmem>>, vector<1x32x32xf32>
    %291 = vector.shape_cast %290 : vector<1x32x32xf32> to vector<32x32xf32>
    %cst_297 = arith.constant dense<0.000000e+00> : vector<8x32xf32>
    %292 = tpu.matmul %289, %291, %cst_297 {dimension_numbers = #tpu.dot_dimension_numbers<[1], [0], [0], [1], [0, 0, 1, 1], [], []>} : vector<8x32xf32>, vector<32x32xf32>, vector<8x32xf32> -> vector<8x32xf32>
    %c9_298 = arith.constant 9 : index
    %c0_299 = arith.constant 0 : index
    %c0_300 = arith.constant 0 : index
    %293 = vector.load %arg14[%c9_298, %c0_299, %c0_300] : memref<21x1x32xf32, #tpu.memory_space<vmem>>, vector<1x1x32xf32>
    %294 = vector.shape_cast %293 : vector<1x1x32xf32> to vector<1x32xf32>
    %295 = vector.broadcast %294 : vector<1x32xf32> to vector<8x32xf32>
    %296 = arith.addf %292, %295 : vector<8x32xf32>
    %cst_301 = arith.constant 0.000000e+00 : f32
    %297 = vector.broadcast %cst_301 : f32 to vector<8x32xf32>
    %298 = arith.maximumf %296, %297 : vector<8x32xf32>
    %c10 = arith.constant 10 : index
    %c0_302 = arith.constant 0 : index
    %c0_303 = arith.constant 0 : index
    %299 = vector.load %arg13[%c10, %c0_302, %c0_303] : memref<21x32x32xf32, #tpu.memory_space<vmem>>, vector<1x32x32xf32>
    %300 = vector.shape_cast %299 : vector<1x32x32xf32> to vector<32x32xf32>
    %cst_304 = arith.constant dense<0.000000e+00> : vector<8x32xf32>
    %301 = tpu.matmul %298, %300, %cst_304 {dimension_numbers = #tpu.dot_dimension_numbers<[1], [0], [0], [1], [0, 0, 1, 1], [], []>} : vector<8x32xf32>, vector<32x32xf32>, vector<8x32xf32> -> vector<8x32xf32>
    %c10_305 = arith.constant 10 : index
    %c0_306 = arith.constant 0 : index
    %c0_307 = arith.constant 0 : index
    %302 = vector.load %arg14[%c10_305, %c0_306, %c0_307] : memref<21x1x32xf32, #tpu.memory_space<vmem>>, vector<1x1x32xf32>
    %303 = vector.shape_cast %302 : vector<1x1x32xf32> to vector<1x32xf32>
    %304 = vector.broadcast %303 : vector<1x32xf32> to vector<8x32xf32>
    %305 = arith.addf %301, %304 : vector<8x32xf32>
    %cst_308 = arith.constant 0.000000e+00 : f32
    %306 = vector.broadcast %cst_308 : f32 to vector<8x32xf32>
    %307 = arith.maximumf %305, %306 : vector<8x32xf32>
    %c11 = arith.constant 11 : index
    %c0_309 = arith.constant 0 : index
    %c0_310 = arith.constant 0 : index
    %308 = vector.load %arg13[%c11, %c0_309, %c0_310] : memref<21x32x32xf32, #tpu.memory_space<vmem>>, vector<1x32x32xf32>
    %309 = vector.shape_cast %308 : vector<1x32x32xf32> to vector<32x32xf32>
    %cst_311 = arith.constant dense<0.000000e+00> : vector<8x32xf32>
    %310 = tpu.matmul %307, %309, %cst_311 {dimension_numbers = #tpu.dot_dimension_numbers<[1], [0], [0], [1], [0, 0, 1, 1], [], []>} : vector<8x32xf32>, vector<32x32xf32>, vector<8x32xf32> -> vector<8x32xf32>
    %c11_312 = arith.constant 11 : index
    %c0_313 = arith.constant 0 : index
    %c0_314 = arith.constant 0 : index
    %311 = vector.load %arg14[%c11_312, %c0_313, %c0_314] : memref<21x1x32xf32, #tpu.memory_space<vmem>>, vector<1x1x32xf32>
    %312 = vector.shape_cast %311 : vector<1x1x32xf32> to vector<1x32xf32>
    %313 = vector.broadcast %312 : vector<1x32xf32> to vector<8x32xf32>
    %314 = arith.addf %310, %313 : vector<8x32xf32>
    %cst_315 = arith.constant 0.000000e+00 : f32
    %315 = vector.broadcast %cst_315 : f32 to vector<8x32xf32>
    %316 = arith.maximumf %314, %315 : vector<8x32xf32>
    %c12 = arith.constant 12 : index
    %c0_316 = arith.constant 0 : index
    %c0_317 = arith.constant 0 : index
    %317 = vector.load %arg13[%c12, %c0_316, %c0_317] : memref<21x32x32xf32, #tpu.memory_space<vmem>>, vector<1x32x32xf32>
    %318 = vector.shape_cast %317 : vector<1x32x32xf32> to vector<32x32xf32>
    %cst_318 = arith.constant dense<0.000000e+00> : vector<8x32xf32>
    %319 = tpu.matmul %316, %318, %cst_318 {dimension_numbers = #tpu.dot_dimension_numbers<[1], [0], [0], [1], [0, 0, 1, 1], [], []>} : vector<8x32xf32>, vector<32x32xf32>, vector<8x32xf32> -> vector<8x32xf32>
    %c12_319 = arith.constant 12 : index
    %c0_320 = arith.constant 0 : index
    %c0_321 = arith.constant 0 : index
    %320 = vector.load %arg14[%c12_319, %c0_320, %c0_321] : memref<21x1x32xf32, #tpu.memory_space<vmem>>, vector<1x1x32xf32>
    %321 = vector.shape_cast %320 : vector<1x1x32xf32> to vector<1x32xf32>
    %322 = vector.broadcast %321 : vector<1x32xf32> to vector<8x32xf32>
    %323 = arith.addf %319, %322 : vector<8x32xf32>
    %cst_322 = arith.constant 0.000000e+00 : f32
    %324 = vector.broadcast %cst_322 : f32 to vector<8x32xf32>
    %325 = arith.maximumf %323, %324 : vector<8x32xf32>
    %c13 = arith.constant 13 : index
    %c0_323 = arith.constant 0 : index
    %c0_324 = arith.constant 0 : index
    %326 = vector.load %arg13[%c13, %c0_323, %c0_324] : memref<21x32x32xf32, #tpu.memory_space<vmem>>, vector<1x32x32xf32>
    %327 = vector.shape_cast %326 : vector<1x32x32xf32> to vector<32x32xf32>
    %cst_325 = arith.constant dense<0.000000e+00> : vector<8x32xf32>
    %328 = tpu.matmul %325, %327, %cst_325 {dimension_numbers = #tpu.dot_dimension_numbers<[1], [0], [0], [1], [0, 0, 1, 1], [], []>} : vector<8x32xf32>, vector<32x32xf32>, vector<8x32xf32> -> vector<8x32xf32>
    %c13_326 = arith.constant 13 : index
    %c0_327 = arith.constant 0 : index
    %c0_328 = arith.constant 0 : index
    %329 = vector.load %arg14[%c13_326, %c0_327, %c0_328] : memref<21x1x32xf32, #tpu.memory_space<vmem>>, vector<1x1x32xf32>
    %330 = vector.shape_cast %329 : vector<1x1x32xf32> to vector<1x32xf32>
    %331 = vector.broadcast %330 : vector<1x32xf32> to vector<8x32xf32>
    %332 = arith.addf %328, %331 : vector<8x32xf32>
    %cst_329 = arith.constant 0.000000e+00 : f32
    %333 = vector.broadcast %cst_329 : f32 to vector<8x32xf32>
    %334 = arith.maximumf %332, %333 : vector<8x32xf32>
    %c14 = arith.constant 14 : index
    %c0_330 = arith.constant 0 : index
    %c0_331 = arith.constant 0 : index
    %335 = vector.load %arg13[%c14, %c0_330, %c0_331] : memref<21x32x32xf32, #tpu.memory_space<vmem>>, vector<1x32x32xf32>
    %336 = vector.shape_cast %335 : vector<1x32x32xf32> to vector<32x32xf32>
    %cst_332 = arith.constant dense<0.000000e+00> : vector<8x32xf32>
    %337 = tpu.matmul %334, %336, %cst_332 {dimension_numbers = #tpu.dot_dimension_numbers<[1], [0], [0], [1], [0, 0, 1, 1], [], []>} : vector<8x32xf32>, vector<32x32xf32>, vector<8x32xf32> -> vector<8x32xf32>
    %c14_333 = arith.constant 14 : index
    %c0_334 = arith.constant 0 : index
    %c0_335 = arith.constant 0 : index
    %338 = vector.load %arg14[%c14_333, %c0_334, %c0_335] : memref<21x1x32xf32, #tpu.memory_space<vmem>>, vector<1x1x32xf32>
    %339 = vector.shape_cast %338 : vector<1x1x32xf32> to vector<1x32xf32>
    %340 = vector.broadcast %339 : vector<1x32xf32> to vector<8x32xf32>
    %341 = arith.addf %337, %340 : vector<8x32xf32>
    %cst_336 = arith.constant 0.000000e+00 : f32
    %342 = vector.broadcast %cst_336 : f32 to vector<8x32xf32>
    %343 = arith.maximumf %341, %342 : vector<8x32xf32>
    %c15 = arith.constant 15 : index
    %c0_337 = arith.constant 0 : index
    %c0_338 = arith.constant 0 : index
    %344 = vector.load %arg13[%c15, %c0_337, %c0_338] : memref<21x32x32xf32, #tpu.memory_space<vmem>>, vector<1x32x32xf32>
    %345 = vector.shape_cast %344 : vector<1x32x32xf32> to vector<32x32xf32>
    %cst_339 = arith.constant dense<0.000000e+00> : vector<8x32xf32>
    %346 = tpu.matmul %343, %345, %cst_339 {dimension_numbers = #tpu.dot_dimension_numbers<[1], [0], [0], [1], [0, 0, 1, 1], [], []>} : vector<8x32xf32>, vector<32x32xf32>, vector<8x32xf32> -> vector<8x32xf32>
    %c15_340 = arith.constant 15 : index
    %c0_341 = arith.constant 0 : index
    %c0_342 = arith.constant 0 : index
    %347 = vector.load %arg14[%c15_340, %c0_341, %c0_342] : memref<21x1x32xf32, #tpu.memory_space<vmem>>, vector<1x1x32xf32>
    %348 = vector.shape_cast %347 : vector<1x1x32xf32> to vector<1x32xf32>
    %349 = vector.broadcast %348 : vector<1x32xf32> to vector<8x32xf32>
    %350 = arith.addf %346, %349 : vector<8x32xf32>
    %cst_343 = arith.constant 0.000000e+00 : f32
    %351 = vector.broadcast %cst_343 : f32 to vector<8x32xf32>
    %352 = arith.maximumf %350, %351 : vector<8x32xf32>
    %c16 = arith.constant 16 : index
    %c0_344 = arith.constant 0 : index
    %c0_345 = arith.constant 0 : index
    %353 = vector.load %arg13[%c16, %c0_344, %c0_345] : memref<21x32x32xf32, #tpu.memory_space<vmem>>, vector<1x32x32xf32>
    %354 = vector.shape_cast %353 : vector<1x32x32xf32> to vector<32x32xf32>
    %cst_346 = arith.constant dense<0.000000e+00> : vector<8x32xf32>
    %355 = tpu.matmul %352, %354, %cst_346 {dimension_numbers = #tpu.dot_dimension_numbers<[1], [0], [0], [1], [0, 0, 1, 1], [], []>} : vector<8x32xf32>, vector<32x32xf32>, vector<8x32xf32> -> vector<8x32xf32>
    %c16_347 = arith.constant 16 : index
    %c0_348 = arith.constant 0 : index
    %c0_349 = arith.constant 0 : index
    %356 = vector.load %arg14[%c16_347, %c0_348, %c0_349] : memref<21x1x32xf32, #tpu.memory_space<vmem>>, vector<1x1x32xf32>
    %357 = vector.shape_cast %356 : vector<1x1x32xf32> to vector<1x32xf32>
    %358 = vector.broadcast %357 : vector<1x32xf32> to vector<8x32xf32>
    %359 = arith.addf %355, %358 : vector<8x32xf32>
    %cst_350 = arith.constant 0.000000e+00 : f32
    %360 = vector.broadcast %cst_350 : f32 to vector<8x32xf32>
    %361 = arith.maximumf %359, %360 : vector<8x32xf32>
    %c17 = arith.constant 17 : index
    %c0_351 = arith.constant 0 : index
    %c0_352 = arith.constant 0 : index
    %362 = vector.load %arg13[%c17, %c0_351, %c0_352] : memref<21x32x32xf32, #tpu.memory_space<vmem>>, vector<1x32x32xf32>
    %363 = vector.shape_cast %362 : vector<1x32x32xf32> to vector<32x32xf32>
    %cst_353 = arith.constant dense<0.000000e+00> : vector<8x32xf32>
    %364 = tpu.matmul %361, %363, %cst_353 {dimension_numbers = #tpu.dot_dimension_numbers<[1], [0], [0], [1], [0, 0, 1, 1], [], []>} : vector<8x32xf32>, vector<32x32xf32>, vector<8x32xf32> -> vector<8x32xf32>
    %c17_354 = arith.constant 17 : index
    %c0_355 = arith.constant 0 : index
    %c0_356 = arith.constant 0 : index
    %365 = vector.load %arg14[%c17_354, %c0_355, %c0_356] : memref<21x1x32xf32, #tpu.memory_space<vmem>>, vector<1x1x32xf32>
    %366 = vector.shape_cast %365 : vector<1x1x32xf32> to vector<1x32xf32>
    %367 = vector.broadcast %366 : vector<1x32xf32> to vector<8x32xf32>
    %368 = arith.addf %364, %367 : vector<8x32xf32>
    %cst_357 = arith.constant 0.000000e+00 : f32
    %369 = vector.broadcast %cst_357 : f32 to vector<8x32xf32>
    %370 = arith.maximumf %368, %369 : vector<8x32xf32>
    %c18 = arith.constant 18 : index
    %c0_358 = arith.constant 0 : index
    %c0_359 = arith.constant 0 : index
    %371 = vector.load %arg13[%c18, %c0_358, %c0_359] : memref<21x32x32xf32, #tpu.memory_space<vmem>>, vector<1x32x32xf32>
    %372 = vector.shape_cast %371 : vector<1x32x32xf32> to vector<32x32xf32>
    %cst_360 = arith.constant dense<0.000000e+00> : vector<8x32xf32>
    %373 = tpu.matmul %370, %372, %cst_360 {dimension_numbers = #tpu.dot_dimension_numbers<[1], [0], [0], [1], [0, 0, 1, 1], [], []>} : vector<8x32xf32>, vector<32x32xf32>, vector<8x32xf32> -> vector<8x32xf32>
    %c18_361 = arith.constant 18 : index
    %c0_362 = arith.constant 0 : index
    %c0_363 = arith.constant 0 : index
    %374 = vector.load %arg14[%c18_361, %c0_362, %c0_363] : memref<21x1x32xf32, #tpu.memory_space<vmem>>, vector<1x1x32xf32>
    %375 = vector.shape_cast %374 : vector<1x1x32xf32> to vector<1x32xf32>
    %376 = vector.broadcast %375 : vector<1x32xf32> to vector<8x32xf32>
    %377 = arith.addf %373, %376 : vector<8x32xf32>
    %cst_364 = arith.constant 0.000000e+00 : f32
    %378 = vector.broadcast %cst_364 : f32 to vector<8x32xf32>
    %379 = arith.maximumf %377, %378 : vector<8x32xf32>
    %c19 = arith.constant 19 : index
    %c0_365 = arith.constant 0 : index
    %c0_366 = arith.constant 0 : index
    %380 = vector.load %arg13[%c19, %c0_365, %c0_366] : memref<21x32x32xf32, #tpu.memory_space<vmem>>, vector<1x32x32xf32>
    %381 = vector.shape_cast %380 : vector<1x32x32xf32> to vector<32x32xf32>
    %cst_367 = arith.constant dense<0.000000e+00> : vector<8x32xf32>
    %382 = tpu.matmul %379, %381, %cst_367 {dimension_numbers = #tpu.dot_dimension_numbers<[1], [0], [0], [1], [0, 0, 1, 1], [], []>} : vector<8x32xf32>, vector<32x32xf32>, vector<8x32xf32> -> vector<8x32xf32>
    %c19_368 = arith.constant 19 : index
    %c0_369 = arith.constant 0 : index
    %c0_370 = arith.constant 0 : index
    %383 = vector.load %arg14[%c19_368, %c0_369, %c0_370] : memref<21x1x32xf32, #tpu.memory_space<vmem>>, vector<1x1x32xf32>
    %384 = vector.shape_cast %383 : vector<1x1x32xf32> to vector<1x32xf32>
    %385 = vector.broadcast %384 : vector<1x32xf32> to vector<8x32xf32>
    %386 = arith.addf %382, %385 : vector<8x32xf32>
    %cst_371 = arith.constant 0.000000e+00 : f32
    %387 = vector.broadcast %cst_371 : f32 to vector<8x32xf32>
    %388 = arith.maximumf %386, %387 : vector<8x32xf32>
    %c20 = arith.constant 20 : index
    %c0_372 = arith.constant 0 : index
    %c0_373 = arith.constant 0 : index
    %389 = vector.load %arg13[%c20, %c0_372, %c0_373] : memref<21x32x32xf32, #tpu.memory_space<vmem>>, vector<1x32x32xf32>
    %390 = vector.shape_cast %389 : vector<1x32x32xf32> to vector<32x32xf32>
    %cst_374 = arith.constant dense<0.000000e+00> : vector<8x32xf32>
    %391 = tpu.matmul %388, %390, %cst_374 {dimension_numbers = #tpu.dot_dimension_numbers<[1], [0], [0], [1], [0, 0, 1, 1], [], []>} : vector<8x32xf32>, vector<32x32xf32>, vector<8x32xf32> -> vector<8x32xf32>
    %c20_375 = arith.constant 20 : index
    %c0_376 = arith.constant 0 : index
    %c0_377 = arith.constant 0 : index
    %392 = vector.load %arg14[%c20_375, %c0_376, %c0_377] : memref<21x1x32xf32, #tpu.memory_space<vmem>>, vector<1x1x32xf32>
    %393 = vector.shape_cast %392 : vector<1x1x32xf32> to vector<1x32xf32>
    %394 = vector.broadcast %393 : vector<1x32xf32> to vector<8x32xf32>
    %395 = arith.addf %391, %394 : vector<8x32xf32>
    %cst_378 = arith.constant 0.000000e+00 : f32
    %396 = vector.broadcast %cst_378 : f32 to vector<8x32xf32>
    %397 = arith.maximumf %395, %396 : vector<8x32xf32>
    %c0_379 = arith.constant 0 : index
    %c0_380 = arith.constant 0 : index
    %398 = vector.load %arg15[%c0_379, %c0_380] : memref<8x32xf32, #tpu.memory_space<vmem>>, vector<8x32xf32>
    tpu.vector_store %arg15[%c0_379, %c0_380], %397 {strides = array<i32>} : memref<8x32xf32, #tpu.memory_space<vmem>>, vector<8x32xf32>,
    return
  }
  func.func @transform_0(%arg0: i32) -> (i32, i32) {
    %c0_i32 = arith.constant 0 : i32
    %c0_i32_0 = arith.constant 0 : i32
    %c0_i32_1 = arith.constant 0 : i32
    return %c0_i32, %c0_i32_0 : i32, i32
  }
  func.func @transform_1(%arg0: i32) -> (i32, i32) {
    %c0_i32 = arith.constant 0 : i32
    %c0_i32_0 = arith.constant 0 : i32
    %c0_i32_1 = arith.constant 0 : i32
    return %c0_i32, %c0_i32_0 : i32, i32
  }
  func.func @transform_2(%arg0: i32) -> (i32, i32) {
    %c0_i32 = arith.constant 0 : i32
    %c0_i32_0 = arith.constant 0 : i32
    %c0_i32_1 = arith.constant 0 : i32
    return %c0_i32, %c0_i32_0 : i32, i32
  }
  func.func @transform_3(%arg0: i32) -> (i32, i32, i32) {
    %c0_i32 = arith.constant 0 : i32
    %c0_i32_0 = arith.constant 0 : i32
    %c0_i32_1 = arith.constant 0 : i32
    %c0_i32_2 = arith.constant 0 : i32
    return %c0_i32, %c0_i32_0, %c0_i32_1 : i32, i32, i32
  }
  func.func @transform_4(%arg0: i32) -> (i32, i32, i32) {
    %c0_i32 = arith.constant 0 : i32
    %c0_i32_0 = arith.constant 0 : i32
    %c0_i32_1 = arith.constant 0 : i32
    %c0_i32_2 = arith.constant 0 : i32
    return %c0_i32, %c0_i32_0, %c0_i32_1 : i32, i32, i32
  }
  func.func @transform_5(%arg0: i32) -> (i32, i32) {
    %c0_i32 = arith.constant 0 : i32
    %c0_i32_0 = arith.constant 0 : i32
    %c0_i32_1 = arith.constant 0 : i32
    return %c0_i32, %c0_i32_0 : i32, i32
  }
  func.func @transform_6(%arg0: i32) -> (i32, i32, i32) {
    %c0_i32 = arith.constant 0 : i32
    %c0_i32_0 = arith.constant 0 : i32
    %c0_i32_1 = arith.constant 0 : i32
    %c0_i32_2 = arith.constant 0 : i32
    return %c0_i32, %c0_i32_0, %c0_i32_1 : i32, i32, i32
  }
  func.func @transform_7(%arg0: i32) -> (i32, i32, i32) {
    %c0_i32 = arith.constant 0 : i32
    %c0_i32_0 = arith.constant 0 : i32
    %c0_i32_1 = arith.constant 0 : i32
    %c0_i32_2 = arith.constant 0 : i32
    return %c0_i32, %c0_i32_0, %c0_i32_1 : i32, i32, i32
  }
  func.func @transform_8(%arg0: i32) -> (i32, i32) {
    %c0_i32 = arith.constant 0 : i32
    %c0_i32_0 = arith.constant 0 : i32
    %c0_i32_1 = arith.constant 0 : i32
    return %c0_i32, %c0_i32_0 : i32, i32
  }
  func.func @transform_9(%arg0: i32) -> (i32, i32, i32) {
    %c0_i32 = arith.constant 0 : i32
    %c0_i32_0 = arith.constant 0 : i32
    %c0_i32_1 = arith.constant 0 : i32
    %c0_i32_2 = arith.constant 0 : i32
    return %c0_i32, %c0_i32_0, %c0_i32_1 : i32, i32, i32
  }
  func.func @transform_10(%arg0: i32) -> (i32, i32, i32) {
    %c0_i32 = arith.constant 0 : i32
    %c0_i32_0 = arith.constant 0 : i32
    %c0_i32_1 = arith.constant 0 : i32
    %c0_i32_2 = arith.constant 0 : i32
    return %c0_i32, %c0_i32_0, %c0_i32_1 : i32, i32, i32
  }
  func.func @transform_11(%arg0: i32) -> (i32, i32) {
    %c0_i32 = arith.constant 0 : i32
    %c0_i32_0 = arith.constant 0 : i32
    %c0_i32_1 = arith.constant 0 : i32
    return %c0_i32, %c0_i32_0 : i32, i32
  }
  func.func @transform_12(%arg0: i32) -> (i32, i32, i32) {
    %c0_i32 = arith.constant 0 : i32
    %c0_i32_0 = arith.constant 0 : i32
    %c0_i32_1 = arith.constant 0 : i32
    %c0_i32_2 = arith.constant 0 : i32
    return %c0_i32, %c0_i32_0, %c0_i32_1 : i32, i32, i32
  }
  func.func @transform_13(%arg0: i32) -> (i32, i32, i32) {
    %c0_i32 = arith.constant 0 : i32
    %c0_i32_0 = arith.constant 0 : i32
    %c0_i32_1 = arith.constant 0 : i32
    %c0_i32_2 = arith.constant 0 : i32
    return %c0_i32, %c0_i32_0, %c0_i32_1 : i32, i32, i32
  }
  func.func @transform_14(%arg0: i32) -> (i32, i32) {
    %c0_i32 = arith.constant 0 : i32
    %c0_i32_0 = arith.constant 0 : i32
    %c0_i32_1 = arith.constant 0 : i32
    return %c0_i32, %c0_i32_0 : i32, i32
  }
}

</mosaic_0001>

<llo_original>
// kernel: map_encoder_forward.1
$region0: #{map_encoder_forward.1}
  #allocation0 [shape = 'u32[]', space=smem, size = 0x4, offset = 0x4, fixed_abs, tag = 'smem constant byte address 0x4 - core index']
  #allocation1 [shape = 'u32[144,128]{1,0:T(1,128)}', space=vmem, size = 0x12000, scoped, tag = 'internal scratch']
  %s0 = inlined_call_operand.vmem [shape: f32[128,128], index: 0, kind: input, shape index: {}]
  %s1 = inlined_call_operand.vmem [shape: f32[128,32], index: 1, kind: input, shape index: {}]
  %s2 = inlined_call_operand.vmem [shape: f32[1,32], index: 2, kind: input, shape index: {}]
  %s3 = inlined_call_operand.vmem [shape: f32[9,32,128], index: 3, kind: input, shape index: {}]
  %s4 = inlined_call_operand.vmem [shape: f32[9,32,32], index: 4, kind: input, shape index: {}]
  %s5 = inlined_call_operand.vmem [shape: f32[1,32], index: 5, kind: input, shape index: {}]
  %s6 = inlined_call_operand.vmem [shape: f32[9,8,32], index: 6, kind: input, shape index: {}]
  %s7 = inlined_call_operand.vmem [shape: f32[9,32,32], index: 7, kind: input, shape index: {}]
  %s8 = inlined_call_operand.vmem [shape: f32[1,32], index: 8, kind: input, shape index: {}]
  %s9 = inlined_call_operand.vmem [shape: f32[9,8,8], index: 9, kind: input, shape index: {}]
  %s10 = inlined_call_operand.vmem [shape: f32[9,32,32], index: 10, kind: input, shape index: {}]
  %s11 = inlined_call_operand.vmem [shape: f32[1,32], index: 11, kind: input, shape index: {}]
  %s12 = inlined_call_operand.vmem [shape: f32[21,32,32], index: 12, kind: input, shape index: {}]
  %s13 = inlined_call_operand.vmem [shape: f32[21,1,32], index: 13, kind: input, shape index: {}]
  %s14 = inlined_call_operand.vmem [shape: f32[8,32], index: 14, kind: output, shape index: {}]
  %s15 = sld [smem:[#allocation0]]
  $region66: #{map_encoder_forward.1} parent=0
    _
  %s17 = ssub.s32 1, %s15
  %s18 = scalar_select 0, %s17, %s15
  // Predicated region
  $region2: #{map_encoder_forward.1} parent=0 // pred_check
    _
  $region3: #{map_encoder_forward.1} parent=0 // pred_check_branch
    %20 = sbr.rel (0) target = $region5
  $region4: #{map_encoder_forward.1} parent=0 // pred_region
    _
  $region5: #{map_encoder_forward.1} parent=0 // pred_fallthru
    _
  // Predicated region
  $region6: #{map_encoder_forward.1} parent=0 // pred_check
    _
  $region7: #{map_encoder_forward.1} parent=0 // pred_check_branch
    %22 = sbr.rel (0) target = $region9
  $region8: #{map_encoder_forward.1} parent=0 // pred_region
    _
  $region9: #{map_encoder_forward.1} parent=0 // pred_fallthru
    _
  // Predicated region
  $region10: #{map_encoder_forward.1} parent=0 // pred_check
    _
  $region11: #{map_encoder_forward.1} parent=0 // pred_check_branch
    %24 = sbr.rel (0) target = $region13
  $region12: #{map_encoder_forward.1} parent=0 // pred_region
    _
  $region13: #{map_encoder_forward.1} parent=0 // pred_fallthru
    _
  // Predicated region
  $region14: #{map_encoder_forward.1} parent=0 // pred_check
    _
  $region15: #{map_encoder_forward.1} parent=0 // pred_check_branch
    %26 = sbr.rel (0) target = $region17
  $region16: #{map_encoder_forward.1} parent=0 // pred_region
    _
  $region17: #{map_encoder_forward.1} parent=0 // pred_fallthru
    _
  // Predicated region
  $region18: #{map_encoder_forward.1} parent=0 // pred_check
    _
  $region19: #{map_encoder_forward.1} parent=0 // pred_check_branch
    %28 = sbr.rel (0) target = $region21
  $region20: #{map_encoder_forward.1} parent=0 // pred_region
    _
  $region21: #{map_encoder_forward.1} parent=0 // pred_fallthru
    _
  // Predicated region
  $region22: #{map_encoder_forward.1} parent=0 // pred_check
    _
  $region23: #{map_encoder_forward.1} parent=0 // pred_check_branch
    %30 = sbr.rel (0) target = $region25
  $region24: #{map_encoder_forward.1} parent=0 // pred_region
    _
  $region25: #{map_encoder_forward.1} parent=0 // pred_fallthru
    _
  // Predicated region
  $region26: #{map_encoder_forward.1} parent=0 // pred_check
    _
  $region27: #{map_encoder_forward.1} parent=0 // pred_check_branch
    %32 = sbr.rel (0) target = $region29
  $region28: #{map_encoder_forward.1} parent=0 // pred_region
    _
  $region29: #{map_encoder_forward.1} parent=0 // pred_fallthru
    _
  // Predicated region
  $region30: #{map_encoder_forward.1} parent=0 // pred_check
    _
  $region31: #{map_encoder_forward.1} parent=0 // pred_check_branch
    %34 = sbr.rel (0) target = $region33
  $region32: #{map_encoder_forward.1} parent=0 // pred_region
    _
  $region33: #{map_encoder_forward.1} parent=0 // pred_fallthru
    _
  // Predicated region
  $region34: #{map_encoder_forward.1} parent=0 // pred_check
    _
  $region35: #{map_encoder_forward.1} parent=0 // pred_check_branch
    %36 = sbr.rel (0) target = $region37
  $region36: #{map_encoder_forward.1} parent=0 // pred_region
    _
  $region37: #{map_encoder_forward.1} parent=0 // pred_fallthru
    _
  // Predicated region
  $region38: #{map_encoder_forward.1} parent=0 // pred_check
    _
  $region39: #{map_encoder_forward.1} parent=0 // pred_check_branch
    %38 = sbr.rel (0) target = $region41
  $region40: #{map_encoder_forward.1} parent=0 // pred_region
    _
  $region41: #{map_encoder_forward.1} parent=0 // pred_fallthru
    _
  // Predicated region
  $region42: #{map_encoder_forward.1} parent=0 // pred_check
    _
  $region43: #{map_encoder_forward.1} parent=0 // pred_check_branch
    %40 = sbr.rel (0) target = $region45
  $region44: #{map_encoder_forward.1} parent=0 // pred_region
    _
  $region45: #{map_encoder_forward.1} parent=0 // pred_fallthru
    _
  // Predicated region
  $region46: #{map_encoder_forward.1} parent=0 // pred_check
    _
  $region47: #{map_encoder_forward.1} parent=0 // pred_check_branch
    %42 = sbr.rel (0) target = $region49
  $region48: #{map_encoder_forward.1} parent=0 // pred_region
    _
  $region49: #{map_encoder_forward.1} parent=0 // pred_fallthru
    _
  // Predicated region
  $region50: #{map_encoder_forward.1} parent=0 // pred_check
    _
  $region51: #{map_encoder_forward.1} parent=0 // pred_check_branch
    %44 = sbr.rel (0) target = $region53
  $region52: #{map_encoder_forward.1} parent=0 // pred_region
    _
  $region53: #{map_encoder_forward.1} parent=0 // pred_fallthru
    _
  // Predicated region
  $region54: #{map_encoder_forward.1} parent=0 // pred_check
    _
  $region55: #{map_encoder_forward.1} parent=0 // pred_check_branch
    %46 = sbr.rel (0) target = $region57
  $region56: #{map_encoder_forward.1} parent=0 // pred_region
    _
  $region57: #{map_encoder_forward.1} parent=0 // pred_fallthru
    _
  %v47 = vld [vmem:[%s0] sm:$0xff]
  %v48 = vld [vmem:[%s0 + $0x8] sm:$0xff]
  %v49 = vld [vmem:[%s0 + $0x10] sm:$0xff]
  %v50 = vld [vmem:[%s0 + $0x18] sm:$0xff]
  %v51 = vld [vmem:[%s0 + $0x20] sm:$0xff]
  %v52 = vld [vmem:[%s0 + $0x28] sm:$0xff]
  %v53 = vld [vmem:[%s0 + $0x30] sm:$0xff]
  %v54 = vld [vmem:[%s0 + $0x38] sm:$0xff]
  %v55 = vld [vmem:[%s0 + $0x40] sm:$0xff]
  %v56 = vld [vmem:[%s0 + $0x48] sm:$0xff]
  %v57 = vld [vmem:[%s0 + $0x50] sm:$0xff]
  %v58 = vld [vmem:[%s0 + $0x58] sm:$0xff]
  %v59 = vld [vmem:[%s0 + $0x60] sm:$0xff]
  %v60 = vld [vmem:[%s0 + $0x68] sm:$0xff]
  %v61 = vld [vmem:[%s0 + $0x70] sm:$0xff]
  %v62 = vld [vmem:[%s0 + $0x78] sm:$0xff]
  %v63 = vld [vmem:[%s1] sm:$0xff]
  %v64 = vld [vmem:[%s1 + $0x8] sm:$0xff]
  %v65 = vld [vmem:[%s1 + $0x10] sm:$0xff]
  %v66 = vld [vmem:[%s1 + $0x18] sm:$0xff]
  %v67 = vld [vmem:[%s1 + $0x20] sm:$0xff]
  %v68 = vld [vmem:[%s1 + $0x28] sm:$0xff]
  %v69 = vld [vmem:[%s1 + $0x30] sm:$0xff]
  %v70 = vld [vmem:[%s1 + $0x38] sm:$0xff]
  %v71 = vld [vmem:[%s1 + $0x40] sm:$0xff]
  %v72 = vld [vmem:[%s1 + $0x48] sm:$0xff]
  %v73 = vld [vmem:[%s1 + $0x50] sm:$0xff]
  %v74 = vld [vmem:[%s1 + $0x58] sm:$0xff]
  %v75 = vld [vmem:[%s1 + $0x60] sm:$0xff]
  %v76 = vld [vmem:[%s1 + $0x68] sm:$0xff]
  %v77 = vld [vmem:[%s1 + $0x70] sm:$0xff]
  %v78 = vld [vmem:[%s1 + $0x78] sm:$0xff]
  %v79 = vld [vmem:[%s2] sm:$0x1]
  %v81 = vlaneseq
  %v82 = vshrl.u32 %v81, 7
  %v83 = vsub.s32 0, %v82
  %v84 = vrot.slane %v79, %v83
  %86 = vmatprep.subr.mxu0 0.0
  %87 = vmatpush1.msra.mxu0 %v63
  %88 = vmatprep.subr.mxu0 0.0
  %89 = vmatpush1.msra.mxu0 %v64
  %90 = vmatprep.subr.mxu0 0.0
  %91 = vmatpush1.msra.mxu0 %v65
  %92 = vmatprep.subr.mxu0 0.0
  %93 = vmatpush1.msra.mxu0 %v66
  %94 = vmatprep.subr.mxu0 0.0
  %95 = vmatpush1.msra.mxu0 %v67
  %96 = vmatprep.subr.mxu0 0.0
  %97 = vmatpush1.msra.mxu0 %v68
  %98 = vmatprep.subr.mxu0 0.0
  %99 = vmatpush1.msra.mxu0 %v69
  %100 = vmatprep.subr.mxu0 0.0
  %101 = vmatpush1.msra.mxu0 %v70
  %102 = vmatprep.subr.mxu0 0.0
  %103 = vmatpush1.msra.mxu0 %v71
  %104 = vmatprep.subr.mxu0 0.0
  %105 = vmatpush1.msra.mxu0 %v72
  %106 = vmatprep.subr.mxu0 0.0
  %107 = vmatpush1.msra.mxu0 %v73
  %108 = vmatprep.subr.mxu0 0.0
  %109 = vmatpush1.msra.mxu0 %v74
  %110 = vmatprep.subr.mxu0 0.0
  %111 = vmatpush1.msra.mxu0 %v75
  %112 = vmatprep.subr.mxu0 0.0
  %113 = vmatpush1.msra.mxu0 %v76
  %114 = vmatprep.subr.mxu0 0.0
  %115 = vmatpush1.msra.mxu0 %v77
  %116 = vmatprep.subr.mxu0 0.0
  %117 = vmatpush1.msra.mxu0 %v78
  %118 = vmatprep.subr.mxu0 0.0
  %119 = vmatpush1.msra.mxu0 0.0
  %120 = vmatprep.subr.mxu0 0.0
  %121 = vmatpush1.msra.mxu0 0.0
  %122 = vmatprep.subr.mxu0 0.0
  %123 = vmatpush1.msra.mxu0 0.0
  %124 = vmatprep.subr.mxu0 0.0
  %125 = vmatpush1.msra.mxu0 0.0
  %126 = vmatprep.subr.mxu0 0.0
  %127 = vmatpush1.msra.mxu0 0.0
  %128 = vmatprep.subr.mxu0 0.0
  %129 = vmatpush1.msra.mxu0 0.0
  %130 = vmatprep.subr.mxu0 0.0
  %131 = vmatpush1.msra.mxu0 0.0
  %132 = vmatprep.subr.mxu0 0.0
  %133 = vmatpush1.msra.mxu0 0.0
  %134 = vmatprep.subr.mxu0 0.0
  %135 = vmatpush1.msra.mxu0 0.0
  %136 = vmatprep.subr.mxu0 0.0
  %137 = vmatpush1.msra.mxu0 0.0
  %138 = vmatprep.subr.mxu0 0.0
  %139 = vmatpush1.msra.mxu0 0.0
  %140 = vmatprep.subr.mxu0 0.0
  %141 = vmatpush1.msra.mxu0 0.0
  %142 = vmatprep.subr.mxu0 0.0
  %143 = vmatpush1.msra.mxu0 0.0
  %144 = vmatprep.subr.mxu0 0.0
  %145 = vmatpush1.msra.mxu0 0.0
  %146 = vmatprep.subr.mxu0 0.0
  %147 = vmatpush1.msra.mxu0 0.0
  %148 = vmatprep.subr.mxu0 0.0
  %149 = vmatpush1.msra.mxu0 0.0
  %150 = vmatprep.mubr.f32.mxu0 0.0
  %151 = vmatmul.mubr.f32.gmra.mrb[0].mxu0 %v47
  %v152 = vpop.f32.mrb[0].mxu0
  %v153 = vadd.f32 %v84, %v152
  %v154 = vpop.f32.mrb[0].mxu0
  %155 = vmatprep.mubr.f32.mxu0 0.0
  %156 = vmatmul.mubr.f32.gmra.mrb[0].mxu0 %v48
  %v157 = vpop.f32.mrb[0].mxu0
  %v158 = vadd.f32 %v84, %v157
  %v159 = vpop.f32.mrb[0].mxu0
  %160 = vmatprep.mubr.f32.mxu0 0.0
  %161 = vmatmul.mubr.f32.gmra.mrb[0].mxu0 %v49
  %v162 = vpop.f32.mrb[0].mxu0
  %v163 = vadd.f32 %v84, %v162
  %v164 = vpop.f32.mrb[0].mxu0
  %165 = vmatprep.mubr.f32.mxu0 0.0
  %166 = vmatmul.mubr.f32.gmra.mrb[0].mxu0 %v50
  %v167 = vpop.f32.mrb[0].mxu0
  %v168 = vadd.f32 %v84, %v167
  %v169 = vpop.f32.mrb[0].mxu0
  %170 = vmatprep.mubr.f32.mxu0 0.0
  %171 = vmatmul.mubr.f32.gmra.mrb[0].mxu0 %v51
  %v172 = vpop.f32.mrb[0].mxu0
  %v173 = vadd.f32 %v84, %v172
  %v174 = vpop.f32.mrb[0].mxu0
  %175 = vmatprep.mubr.f32.mxu0 0.0
  %176 = vmatmul.mubr.f32.gmra.mrb[0].mxu0 %v52
  %v177 = vpop.f32.mrb[0].mxu0
  %v178 = vadd.f32 %v84, %v177
  %v179 = vpop.f32.mrb[0].mxu0
  %180 = vmatprep.mubr.f32.mxu0 0.0
  %181 = vmatmul.mubr.f32.gmra.mrb[0].mxu0 %v53
  %v182 = vpop.f32.mrb[0].mxu0
  %v183 = vadd.f32 %v84, %v182
  %v184 = vpop.f32.mrb[0].mxu0
  %185 = vmatprep.mubr.f32.mxu0 0.0
  %186 = vmatmul.mubr.f32.gmra.mrb[0].mxu0 %v54
  %v187 = vpop.f32.mrb[0].mxu0
  %v188 = vadd.f32 %v84, %v187
  %v189 = vpop.f32.mrb[0].mxu0
  %190 = vmatprep.mubr.f32.mxu0 0.0
  %191 = vmatmul.mubr.f32.gmra.mrb[0].mxu0 %v55
  %v192 = vpop.f32.mrb[0].mxu0
  %v193 = vadd.f32 %v84, %v192
  %v194 = vpop.f32.mrb[0].mxu0
  %195 = vmatprep.mubr.f32.mxu0 0.0
  %196 = vmatmul.mubr.f32.gmra.mrb[0].mxu0 %v56
  %v197 = vpop.f32.mrb[0].mxu0
  %v198 = vadd.f32 %v84, %v197
  %v199 = vpop.f32.mrb[0].mxu0
  %200 = vmatprep.mubr.f32.mxu0 0.0
  %201 = vmatmul.mubr.f32.gmra.mrb[0].mxu0 %v57
  %v202 = vpop.f32.mrb[0].mxu0
  %v203 = vadd.f32 %v84, %v202
  %v204 = vpop.f32.mrb[0].mxu0
  %205 = vmatprep.mubr.f32.mxu0 0.0
  %206 = vmatmul.mubr.f32.gmra.mrb[0].mxu0 %v58
  %v207 = vpop.f32.mrb[0].mxu0
  %v208 = vadd.f32 %v84, %v207
  %v209 = vpop.f32.mrb[0].mxu0
  %210 = vmatprep.mubr.f32.mxu0 0.0
  %211 = vmatmul.mubr.f32.gmra.mrb[0].mxu0 %v59
  %v212 = vpop.f32.mrb[0].mxu0
  %v213 = vadd.f32 %v84, %v212
  %v214 = vpop.f32.mrb[0].mxu0
  %215 = vmatprep.mubr.f32.mxu0 0.0
  %216 = vmatmul.mubr.f32.gmra.mrb[0].mxu0 %v60
  %v217 = vpop.f32.mrb[0].mxu0
  %v218 = vadd.f32 %v84, %v217
  %v219 = vpop.f32.mrb[0].mxu0
  %220 = vmatprep.mubr.f32.mxu0 0.0
  %221 = vmatmul.mubr.f32.gmra.mrb[0].mxu0 %v61
  %v222 = vpop.f32.mrb[0].mxu0
  %v223 = vadd.f32 %v84, %v222
  %v224 = vpop.f32.mrb[0].mxu0
  %225 = vmatprep.mubr.f32.mxu0 0.0
  %226 = vmatmul.mubr.f32.gmra.mrb[0].mxu0 %v62
  %v227 = vpop.f32.mrb[0].mxu0
  %v228 = vadd.f32 %v84, %v227
  %v229 = vpop.f32.mrb[0].mxu0
  %230 = vdwg.mxu0
  %v231 = vmax.f32 %v153, 0.0
  %v232 = vmax.f32 %v158, 0.0
  %v233 = vmax.f32 %v163, 0.0
  %v234 = vmax.f32 %v168, 0.0
  %v235 = vmax.f32 %v173, 0.0
  %v236 = vmax.f32 %v178, 0.0
  %v237 = vmax.f32 %v183, 0.0
  %v238 = vmax.f32 %v188, 0.0
  %v239 = vmax.f32 %v193, 0.0
  %v240 = vmax.f32 %v198, 0.0
  %v241 = vmax.f32 %v203, 0.0
  %v242 = vmax.f32 %v208, 0.0
  %v243 = vmax.f32 %v213, 0.0
  %v244 = vmax.f32 %v218, 0.0
  %v245 = vmax.f32 %v223, 0.0
  %v246 = vmax.f32 %v228, 0.0
  %v247 = vld [vmem:[%s3] sm:$0xff]
  %v248 = vld [vmem:[%s3 + $0x8] sm:$0xff]
  %v249 = vld [vmem:[%s3 + $0x10] sm:$0xff]
  %v250 = vld [vmem:[%s3 + $0x18] sm:$0xff]
  %251 = vmatprep.subr.mxu0 0.0
  %252 = vmatpush1.msra.mxu0 %v231
  %253 = vmatprep.subr.mxu0 0.0
  %254 = vmatpush1.msra.mxu0 %v232
  %255 = vmatprep.subr.mxu0 0.0
  %256 = vmatpush1.msra.mxu0 %v233
  %257 = vmatprep.subr.mxu0 0.0
  %258 = vmatpush1.msra.mxu0 %v234
  %259 = vmatprep.subr.mxu0 0.0
  %260 = vmatpush1.msra.mxu0 %v235
  %261 = vmatprep.subr.mxu0 0.0
  %262 = vmatpush1.msra.mxu0 %v236
  %263 = vmatprep.subr.mxu0 0.0
  %264 = vmatpush1.msra.mxu0 %v237
  %265 = vmatprep.subr.mxu0 0.0
  %266 = vmatpush1.msra.mxu0 %v238
  %267 = vmatprep.subr.mxu0 0.0
  %268 = vmatpush1.msra.mxu0 %v239
  %269 = vmatprep.subr.mxu0 0.0
  %270 = vmatpush1.msra.mxu0 %v240
  %271 = vmatprep.subr.mxu0 0.0
  %272 = vmatpush1.msra.mxu0 %v241
  %273 = vmatprep.subr.mxu0 0.0
  %274 = vmatpush1.msra.mxu0 %v242
  %275 = vmatprep.subr.mxu0 0.0
  %276 = vmatpush1.msra.mxu0 %v243
  %277 = vmatprep.subr.mxu0 0.0
  %278 = vmatpush1.msra.mxu0 %v244
  %279 = vmatprep.subr.mxu0 0.0
  %280 = vmatpush1.msra.mxu0 %v245
  %281 = vmatprep.subr.mxu0 0.0
  %282 = vmatpush1.msra.mxu0 %v246
  %283 = vmatprep.subr.mxu0 0.0
  %284 = vmatpush1.msra.mxu0 0.0
  %285 = vmatprep.subr.mxu0 0.0
  %286 = vmatpush1.msra.mxu0 0.0
  %287 = vmatprep.subr.mxu0 0.0
  %288 = vmatpush1.msra.mxu0 0.0
  %289 = vmatprep.subr.mxu0 0.0
  %290 = vmatpush1.msra.mxu0 0.0
  %291 = vmatprep.subr.mxu0 0.0
  %292 = vmatpush1.msra.mxu0 0.0
  %293 = vmatprep.subr.mxu0 0.0
  %294 = vmatpush1.msra.mxu0 0.0
  %295 = vmatprep.subr.mxu0 0.0
  %296 = vmatpush1.msra.mxu0 0.0
  %297 = vmatprep.subr.mxu0 0.0
  %298 = vmatpush1.msra.mxu0 0.0
  %299 = vmatprep.subr.mxu0 0.0
  %300 = vmatpush1.msra.mxu0 0.0
  %301 = vmatprep.subr.mxu0 0.0
  %302 = vmatpush1.msra.mxu0 0.0
  %303 = vmatprep.subr.mxu0 0.0
  %304 = vmatpush1.msra.mxu0 0.0
  %305 = vmatprep.subr.mxu0 0.0
  %306 = vmatpush1.msra.mxu0 0.0
  %307 = vmatprep.subr.mxu0 0.0
  %308 = vmatpush1.msra.mxu0 0.0
  %309 = vmatprep.subr.mxu0 0.0
  %310 = vmatpush1.msra.mxu0 0.0
  %311 = vmatprep.subr.mxu0 0.0
  %312 = vmatpush1.msra.mxu0 0.0
  %313 = vmatprep.subr.mxu0 0.0
  %314 = vmatpush1.msra.mxu0 0.0
  %315 = vmatprep.mubr.f32.mxu0 0.0
  %316 = vmatmul.mubr.f32.gmra.mrb[0].mxu0 %v247
  %v317 = vpop.f32.mrb[0].mxu0
  %v318 = vadd.f32 0.0, %v317
  %v319 = vpop.f32.mrb[0].mxu0
  %320 = vmatprep.mubr.f32.mxu0 0.0
  %321 = vmatmul.mubr.f32.gmra.mrb[0].mxu0 %v248
  %v322 = vpop.f32.mrb[0].mxu0
  %v323 = vadd.f32 0.0, %v322
  %v324 = vpop.f32.mrb[0].mxu0
  %325 = vmatprep.mubr.f32.mxu0 0.0
  %326 = vmatmul.mubr.f32.gmra.mrb[0].mxu0 %v249
  %v327 = vpop.f32.mrb[0].mxu0
  %v328 = vadd.f32 0.0, %v327
  %v329 = vpop.f32.mrb[0].mxu0
  %330 = vmatprep.mubr.f32.mxu0 0.0
  %331 = vmatmul.mubr.f32.gmra.mrb[0].mxu0 %v250
  %v332 = vpop.f32.mrb[0].mxu0
  %v333 = vadd.f32 0.0, %v332
  %v334 = vpop.f32.mrb[0].mxu0
  %335 = vdwg.mxu0
  %v336 = vld [vmem:[%s4] sm:$0xff]
  %v337 = vld [vmem:[%s4 + $0x8] sm:$0xff]
  %v338 = vld [vmem:[%s4 + $0x10] sm:$0xff]
  %v339 = vld [vmem:[%s4 + $0x18] sm:$0xff]
  %s340 = scalar_lea.vmem %s3, 32
  %v341 = vld [vmem:[%s340] sm:$0xff]
  %v342 = vld [vmem:[%s340 + $0x8] sm:$0xff]
  %v343 = vld [vmem:[%s340 + $0x10] sm:$0xff]
  %v344 = vld [vmem:[%s340 + $0x18] sm:$0xff]
  %345 = vmatprep.subr.mxu0 0.0
  %346 = vmatpush1.msra.mxu0 %v231
  %347 = vmatprep.subr.mxu0 0.0
  %348 = vmatpush1.msra.mxu0 %v232
  %349 = vmatprep.subr.mxu0 0.0
  %350 = vmatpush1.msra.mxu0 %v233
  %351 = vmatprep.subr.mxu0 0.0
  %352 = vmatpush1.msra.mxu0 %v234
  %353 = vmatprep.subr.mxu0 0.0
  %354 = vmatpush1.msra.mxu0 %v235
  %355 = vmatprep.subr.mxu0 0.0
  %356 = vmatpush1.msra.mxu0 %v236
  %357 = vmatprep.subr.mxu0 0.0
  %358 = vmatpush1.msra.mxu0 %v237
  %359 = vmatprep.subr.mxu0 0.0
  %360 = vmatpush1.msra.mxu0 %v238
  %361 = vmatprep.subr.mxu0 0.0
  %362 = vmatpush1.msra.mxu0 %v239
  %363 = vmatprep.subr.mxu0 0.0
  %364 = vmatpush1.msra.mxu0 %v240
  %365 = vmatprep.subr.mxu0 0.0
  %366 = vmatpush1.msra.mxu0 %v241
  %367 = vmatprep.subr.mxu0 0.0
  %368 = vmatpush1.msra.mxu0 %v242
  %369 = vmatprep.subr.mxu0 0.0
  %370 = vmatpush1.msra.mxu0 %v243
  %371 = vmatprep.subr.mxu0 0.0
  %372 = vmatpush1.msra.mxu0 %v244
  %373 = vmatprep.subr.mxu0 0.0
  %374 = vmatpush1.msra.mxu0 %v245
  %375 = vmatprep.subr.mxu0 0.0
  %376 = vmatpush1.msra.mxu0 %v246
  %377 = vmatprep.subr.mxu0 0.0
  %378 = vmatpush1.msra.mxu0 0.0
  %379 = vmatprep.subr.mxu0 0.0
  %380 = vmatpush1.msra.mxu0 0.0
  %381 = vmatprep.subr.mxu0 0.0
  %382 = vmatpush1.msra.mxu0 0.0
  %383 = vmatprep.subr.mxu0 0.0
  %384 = vmatpush1.msra.mxu0 0.0
  %385 = vmatprep.subr.mxu0 0.0
  %386 = vmatpush1.msra.mxu0 0.0
  %387 = vmatprep.subr.mxu0 0.0
  %388 = vmatpush1.msra.mxu0 0.0
  %389 = vmatprep.subr.mxu0 0.0
  %390 = vmatpush1.msra.mxu0 0.0
  %391 = vmatprep.subr.mxu0 0.0
  %392 = vmatpush1.msra.mxu0 0.0
  %393 = vmatprep.subr.mxu0 0.0
  %394 = vmatpush1.msra.mxu0 0.0
  %395 = vmatprep.subr.mxu0 0.0
  %396 = vmatpush1.msra.mxu0 0.0
  %397 = vmatprep.subr.mxu0 0.0
  %398 = vmatpush1.msra.mxu0 0.0
  %399 = vmatprep.subr.mxu0 0.0
  %400 = vmatpush1.msra.mxu0 0.0
  %401 = vmatprep.subr.mxu0 0.0
  %402 = vmatpush1.msra.mxu0 0.0
  %403 = vmatprep.subr.mxu0 0.0
  %404 = vmatpush1.msra.mxu0 0.0
  %405 = vmatprep.subr.mxu0 0.0
  %406 = vmatpush1.msra.mxu0 0.0
  %407 = vmatprep.subr.mxu0 0.0
  %408 = vmatpush1.msra.mxu0 0.0
  %409 = vmatprep.mubr.f32.mxu0 0.0
  %410 = vmatmul.mubr.f32.gmra.mrb[0].mxu0 %v341
  %v411 = vpop.f32.mrb[0].mxu0
  %v412 = vadd.f32 0.0, %v411
  %v413 = vpop.f32.mrb[0].mxu0
  %414 = vmatprep.mubr.f32.mxu0 0.0
  %415 = vmatmul.mubr.f32.gmra.mrb[0].mxu0 %v342
  %v416 = vpop.f32.mrb[0].mxu0
  %v417 = vadd.f32 0.0, %v416
  %v418 = vpop.f32.mrb[0].mxu0
  %419 = vmatprep.mubr.f32.mxu0 0.0
  %420 = vmatmul.mubr.f32.gmra.mrb[0].mxu0 %v343
  %v421 = vpop.f32.mrb[0].mxu0
  %v422 = vadd.f32 0.0, %v421
  %v423 = vpop.f32.mrb[0].mxu0
  %424 = vmatprep.mubr.f32.mxu0 0.0
  %425 = vmatmul.mubr.f32.gmra.mrb[0].mxu0 %v344
  %v426 = vpop.f32.mrb[0].mxu0
  %v427 = vadd.f32 0.0, %v426
  %v428 = vpop.f32.mrb[0].mxu0
  %429 = vdwg.mxu0
  %s430 = scalar_lea.vmem %s4, 32
  %v431 = vld [vmem:[%s430] sm:$0xff]
  %v432 = vld [vmem:[%s430 + $0x8] sm:$0xff]
  %v433 = vld [vmem:[%s430 + $0x10] sm:$0xff]
  %v434 = vld [vmem:[%s430 + $0x18] sm:$0xff]
  %vm435 = vcmask 261120
  %v437 = vsel %vm435, %v412, 0
  %v440 = vsel %vm435, %v417, 0
  %v443 = vsel %vm435, %v422, 0
  %v446 = vsel %vm435, %v427, 0
  %448 = vmatprep.subr.mxu0 0.0
  %449 = vmatpush1.msra.mxu0 %v431
  %450 = vmatprep.subr.mxu0 0.0
  %451 = vmatpush1.msra.mxu0 %v432
  %452 = vmatprep.subr.mxu0 0.0
  %453 = vmatpush1.msra.mxu0 %v433
  %454 = vmatprep.subr.mxu0 0.0
  %455 = vmatpush1.msra.mxu0 %v434
  %456 = vmatprep.subr.mxu0 0.0
  %457 = vmatpush1.msra.mxu0 0.0
  %458 = vmatprep.subr.mxu0 0.0
  %459 = vmatpush1.msra.mxu0 0.0
  %460 = vmatprep.subr.mxu0 0.0
  %461 = vmatpush1.msra.mxu0 0.0
  %462 = vmatprep.subr.mxu0 0.0
  %463 = vmatpush1.msra.mxu0 0.0
  %464 = vmatprep.subr.mxu0 0.0
  %465 = vmatpush1.msra.mxu0 0.0
  %466 = vmatprep.subr.mxu0 0.0
  %467 = vmatpush1.msra.mxu0 0.0
  %468 = vmatprep.subr.mxu0 0.0
  %469 = vmatpush1.msra.mxu0 0.0
  %470 = vmatprep.subr.mxu0 0.0
  %471 = vmatpush1.msra.mxu0 0.0
  %472 = vmatprep.subr.mxu0 0.0
  %473 = vmatpush1.msra.mxu0 0.0
  %474 = vmatprep.subr.mxu0 0.0
  %475 = vmatpush1.msra.mxu0 0.0
  %476 = vmatprep.subr.mxu0 0.0
  %477 = vmatpush1.msra.mxu0 0.0
  %478 = vmatprep.subr.mxu0 0.0
  %479 = vmatpush1.msra.mxu0 0.0
  %480 = vmatprep.subr.mxu0 0.0
  %481 = vmatpush1.msra.mxu0 0.0
  %482 = vmatprep.subr.mxu0 0.0
  %483 = vmatpush1.msra.mxu0 0.0
  %484 = vmatprep.subr.mxu0 0.0
  %485 = vmatpush1.msra.mxu0 0.0
  %486 = vmatprep.subr.mxu0 0.0
  %487 = vmatpush1.msra.mxu0 0.0
  %488 = vmatprep.subr.mxu0 0.0
  %489 = vmatpush1.msra.mxu0 0.0
  %490 = vmatprep.subr.mxu0 0.0
  %491 = vmatpush1.msra.mxu0 0.0
  %492 = vmatprep.subr.mxu0 0.0
  %493 = vmatpush1.msra.mxu0 0.0
  %494 = vmatprep.subr.mxu0 0.0
  %495 = vmatpush1.msra.mxu0 0.0
  %496 = vmatprep.subr.mxu0 0.0
  %497 = vmatpush1.msra.mxu0 0.0
  %498 = vmatprep.subr.mxu0 0.0
  %499 = vmatpush1.msra.mxu0 0.0
  %500 = vmatprep.subr.mxu0 0.0
  %501 = vmatpush1.msra.mxu0 0.0
  %502 = vmatprep.subr.mxu0 0.0
  %503 = vmatpush1.msra.mxu0 0.0
  %504 = vmatprep.subr.mxu0 0.0
  %505 = vmatpush1.msra.mxu0 0.0
  %506 = vmatprep.subr.mxu0 0.0
  %507 = vmatpush1.msra.mxu0 0.0
  %508 = vmatprep.subr.mxu0 0.0
  %509 = vmatpush1.msra.mxu0 0.0
  %510 = vmatprep.subr.mxu0 0.0
  %511 = vmatpush1.msra.mxu0 0.0
  %512 = vmatprep.mubr.f32.mxu0 0.0
  %513 = vmatmul.mubr.f32.gmra.mrb[0].mxu0 %v437
  %v514 = vpop.f32.mrb[0].mxu0
  %v515 = vadd.f32 0.0, %v514
  %v516 = vpop.f32.mrb[0].mxu0
  %517 = vmatprep.mubr.f32.mxu0 0.0
  %518 = vmatmul.mubr.f32.gmra.mrb[0].mxu0 %v440
  %v519 = vpop.f32.mrb[0].mxu0
  %v520 = vadd.f32 0.0, %v519
  %v521 = vpop.f32.mrb[0].mxu0
  %522 = vmatprep.mubr.f32.mxu0 0.0
  %523 = vmatmul.mubr.f32.gmra.mrb[0].mxu0 %v443
  %v524 = vpop.f32.mrb[0].mxu0
  %v525 = vadd.f32 0.0, %v524
  %v526 = vpop.f32.mrb[0].mxu0
  %527 = vmatprep.mubr.f32.mxu0 0.0
  %528 = vmatmul.mubr.f32.gmra.mrb[0].mxu0 %v446
  %v529 = vpop.f32.mrb[0].mxu0
  %v530 = vadd.f32 0.0, %v529
  %v531 = vpop.f32.mrb[0].mxu0
  %532 = vdwg.mxu0
  %v534 = vsel %vm435, %v318, 0
  %v537 = vsel %vm435, %v323, 0
  %v540 = vsel %vm435, %v328, 0
  %v543 = vsel %vm435, %v333, 0
  %545 = vmatprep.subr.mxu0 0.0
  %546 = vmatpush1.msra.mxu0 %v336
  %547 = vmatprep.subr.mxu0 0.0
  %548 = vmatpush1.msra.mxu0 %v337
  %549 = vmatprep.subr.mxu0 0.0
  %550 = vmatpush1.msra.mxu0 %v338
  %551 = vmatprep.subr.mxu0 0.0
  %552 = vmatpush1.msra.mxu0 %v339
  %553 = vmatprep.subr.mxu0 0.0
  %554 = vmatpush1.msra.mxu0 0.0
  %555 = vmatprep.subr.mxu0 0.0
  %556 = vmatpush1.msra.mxu0 0.0
  %557 = vmatprep.subr.mxu0 0.0
  %558 = vmatpush1.msra.mxu0 0.0
  %559 = vmatprep.subr.mxu0 0.0
  %560 = vmatpush1.msra.mxu0 0.0
  %561 = vmatprep.subr.mxu0 0.0
  %562 = vmatpush1.msra.mxu0 0.0
  %563 = vmatprep.subr.mxu0 0.0
  %564 = vmatpush1.msra.mxu0 0.0
  %565 = vmatprep.subr.mxu0 0.0
  %566 = vmatpush1.msra.mxu0 0.0
  %567 = vmatprep.subr.mxu0 0.0
  %568 = vmatpush1.msra.mxu0 0.0
  %569 = vmatprep.subr.mxu0 0.0
  %570 = vmatpush1.msra.mxu0 0.0
  %571 = vmatprep.subr.mxu0 0.0
  %572 = vmatpush1.msra.mxu0 0.0
  %573 = vmatprep.subr.mxu0 0.0
  %574 = vmatpush1.msra.mxu0 0.0
  %575 = vmatprep.subr.mxu0 0.0
  %576 = vmatpush1.msra.mxu0 0.0
  %577 = vmatprep.subr.mxu0 0.0
  %578 = vmatpush1.msra.mxu0 0.0
  %579 = vmatprep.subr.mxu0 0.0
  %580 = vmatpush1.msra.mxu0 0.0
  %581 = vmatprep.subr.mxu0 0.0
  %582 = vmatpush1.msra.mxu0 0.0
  %583 = vmatprep.subr.mxu0 0.0
  %584 = vmatpush1.msra.mxu0 0.0
  %585 = vmatprep.subr.mxu0 0.0
  %586 = vmatpush1.msra.mxu0 0.0
  %587 = vmatprep.subr.mxu0 0.0
  %588 = vmatpush1.msra.mxu0 0.0
  %589 = vmatprep.subr.mxu0 0.0
  %590 = vmatpush1.msra.mxu0 0.0
  %591 = vmatprep.subr.mxu0 0.0
  %592 = vmatpush1.msra.mxu0 0.0
  %593 = vmatprep.subr.mxu0 0.0
  %594 = vmatpush1.msra.mxu0 0.0
  %595 = vmatprep.subr.mxu0 0.0
  %596 = vmatpush1.msra.mxu0 0.0
  %597 = vmatprep.subr.mxu0 0.0
  %598 = vmatpush1.msra.mxu0 0.0
  %599 = vmatprep.subr.mxu0 0.0
  %600 = vmatpush1.msra.mxu0 0.0
  %601 = vmatprep.subr.mxu0 0.0
  %602 = vmatpush1.msra.mxu0 0.0
  %603 = vmatprep.subr.mxu0 0.0
  %604 = vmatpush1.msra.mxu0 0.0
  %605 = vmatprep.subr.mxu0 0.0
  %606 = vmatpush1.msra.mxu0 0.0
  %607 = vmatprep.subr.mxu0 0.0
  %608 = vmatpush1.msra.mxu0 0.0
  %609 = vmatprep.mubr.f32.mxu0 0.0
  %610 = vmatmul.mubr.f32.gmra.mrb[0].mxu0 %v534
  %v611 = vpop.f32.mrb[0].mxu0
  %v612 = vadd.f32 %v515, %v611
  %v613 = vpop.f32.mrb[0].mxu0
  %614 = vmatprep.mubr.f32.mxu0 0.0
  %615 = vmatmul.mubr.f32.gmra.mrb[0].mxu0 %v537
  %v616 = vpop.f32.mrb[0].mxu0
  %v617 = vadd.f32 %v520, %v616
  %v618 = vpop.f32.mrb[0].mxu0
  %619 = vmatprep.mubr.f32.mxu0 0.0
  %620 = vmatmul.mubr.f32.gmra.mrb[0].mxu0 %v540
  %v621 = vpop.f32.mrb[0].mxu0
  %v622 = vadd.f32 %v525, %v621
  %v623 = vpop.f32.mrb[0].mxu0
  %624 = vmatprep.mubr.f32.mxu0 0.0
  %625 = vmatmul.mubr.f32.gmra.mrb[0].mxu0 %v543
  %v626 = vpop.f32.mrb[0].mxu0
  %v627 = vadd.f32 %v530, %v626
  %v628 = vpop.f32.mrb[0].mxu0
  %629 = vdwg.mxu0
  %s630 = scalar_lea.vmem %s3, 64
  %v631 = vld [vmem:[%s630] sm:$0xff]
  %v632 = vld [vmem:[%s630 + $0x8] sm:$0xff]
  %v633 = vld [vmem:[%s630 + $0x10] sm:$0xff]
  %v634 = vld [vmem:[%s630 + $0x18] sm:$0xff]
  %635 = vmatprep.subr.mxu0 0.0
  %636 = vmatpush1.msra.mxu0 %v231
  %637 = vmatprep.subr.mxu0 0.0
  %638 = vmatpush1.msra.mxu0 %v232
  %639 = vmatprep.subr.mxu0 0.0
  %640 = vmatpush1.msra.mxu0 %v233
  %641 = vmatprep.subr.mxu0 0.0
  %642 = vmatpush1.msra.mxu0 %v234
  %643 = vmatprep.subr.mxu0 0.0
  %644 = vmatpush1.msra.mxu0 %v235
  %645 = vmatprep.subr.mxu0 0.0
  %646 = vmatpush1.msra.mxu0 %v236
  %647 = vmatprep.subr.mxu0 0.0
  %648 = vmatpush1.msra.mxu0 %v237
  %649 = vmatprep.subr.mxu0 0.0
  %650 = vmatpush1.msra.mxu0 %v238
  %651 = vmatprep.subr.mxu0 0.0
  %652 = vmatpush1.msra.mxu0 %v239
  %653 = vmatprep.subr.mxu0 0.0
  %654 = vmatpush1.msra.mxu0 %v240
  %655 = vmatprep.subr.mxu0 0.0
  %656 = vmatpush1.msra.mxu0 %v241
  %657 = vmatprep.subr.mxu0 0.0
  %658 = vmatpush1.msra.mxu0 %v242
  %659 = vmatprep.subr.mxu0 0.0
  %660 = vmatpush1.msra.mxu0 %v243
  %661 = vmatprep.subr.mxu0 0.0
  %662 = vmatpush1.msra.mxu0 %v244
  %663 = vmatprep.subr.mxu0 0.0
  %664 = vmatpush1.msra.mxu0 %v245
  %665 = vmatprep.subr.mxu0 0.0
  %666 = vmatpush1.msra.mxu0 %v246
  %667 = vmatprep.subr.mxu0 0.0
  %668 = vmatpush1.msra.mxu0 0.0
  %669 = vmatprep.subr.mxu0 0.0
  %670 = vmatpush1.msra.mxu0 0.0
  %671 = vmatprep.subr.mxu0 0.0
  %672 = vmatpush1.msra.mxu0 0.0
  %673 = vmatprep.subr.mxu0 0.0
  %674 = vmatpush1.msra.mxu0 0.0
  %675 = vmatprep.subr.mxu0 0.0
  %676 = vmatpush1.msra.mxu0 0.0
  %677 = vmatprep.subr.mxu0 0.0
  %678 = vmatpush1.msra.mxu0 0.0
  %679 = vmatprep.subr.mxu0 0.0
  %680 = vmatpush1.msra.mxu0 0.0
  %681 = vmatprep.subr.mxu0 0.0
  %682 = vmatpush1.msra.mxu0 0.0
  %683 = vmatprep.subr.mxu0 0.0
  %684 = vmatpush1.msra.mxu0 0.0
  %685 = vmatprep.subr.mxu0 0.0
  %686 = vmatpush1.msra.mxu0 0.0
  %687 = vmatprep.subr.mxu0 0.0
  %688 = vmatpush1.msra.mxu0 0.0
  %689 = vmatprep.subr.mxu0 0.0
  %690 = vmatpush1.msra.mxu0 0.0
  %691 = vmatprep.subr.mxu0 0.0
  %692 = vmatpush1.msra.mxu0 0.0
  %693 = vmatprep.subr.mxu0 0.0
  %694 = vmatpush1.msra.mxu0 0.0
  %695 = vmatprep.subr.mxu0 0.0
  %696 = vmatpush1.msra.mxu0 0.0
  %697 = vmatprep.subr.mxu0 0.0
  %698 = vmatpush1.msra.mxu0 0.0
  %699 = vmatprep.mubr.f32.mxu0 0.0
  %700 = vmatmul.mubr.f32.gmra.mrb[0].mxu0 %v631
  %v701 = vpop.f32.mrb[0].mxu0
  %v702 = vadd.f32 0.0, %v701
  %v703 = vpop.f32.mrb[0].mxu0
  %704 = vmatprep.mubr.f32.mxu0 0.0
  %705 = vmatmul.mubr.f32.gmra.mrb[0].mxu0 %v632
  %v706 = vpop.f32.mrb[0].mxu0
  %v707 = vadd.f32 0.0, %v706
  %v708 = vpop.f32.mrb[0].mxu0
  %709 = vmatprep.mubr.f32.mxu0 0.0
  %710 = vmatmul.mubr.f32.gmra.mrb[0].mxu0 %v633
  %v711 = vpop.f32.mrb[0].mxu0
  %v712 = vadd.f32 0.0, %v711
  %v713 = vpop.f32.mrb[0].mxu0
  %714 = vmatprep.mubr.f32.mxu0 0.0
  %715 = vmatmul.mubr.f32.gmra.mrb[0].mxu0 %v634
  %v716 = vpop.f32.mrb[0].mxu0
  %v717 = vadd.f32 0.0, %v716
  %v718 = vpop.f32.mrb[0].mxu0
  %719 = vdwg.mxu0
  %s720 = scalar_lea.vmem %s4, 64
  %v721 = vld [vmem:[%s720] sm:$0xff]
  %v722 = vld [vmem:[%s720 + $0x8] sm:$0xff]
  %v723 = vld [vmem:[%s720 + $0x10] sm:$0xff]
  %v724 = vld [vmem:[%s720 + $0x18] sm:$0xff]
  %v726 = vsel %vm435, %v702, 0
  %v729 = vsel %vm435, %v707, 0
  %v732 = vsel %vm435, %v712, 0
  %v735 = vsel %vm435, %v717, 0
  %737 = vmatprep.subr.mxu0 0.0
  %738 = vmatpush1.msra.mxu0 %v721
  %739 = vmatprep.subr.mxu0 0.0
  %740 = vmatpush1.msra.mxu0 %v722
  %741 = vmatprep.subr.mxu0 0.0
  %742 = vmatpush1.msra.mxu0 %v723
  %743 = vmatprep.subr.mxu0 0.0
  %744 = vmatpush1.msra.mxu0 %v724
  %745 = vmatprep.subr.mxu0 0.0
  %746 = vmatpush1.msra.mxu0 0.0
  %747 = vmatprep.subr.mxu0 0.0
  %748 = vmatpush1.msra.mxu0 0.0
  %749 = vmatprep.subr.mxu0 0.0
  %750 = vmatpush1.msra.mxu0 0.0
  %751 = vmatprep.subr.mxu0 0.0
  %752 = vmatpush1.msra.mxu0 0.0
  %753 = vmatprep.subr.mxu0 0.0
  %754 = vmatpush1.msra.mxu0 0.0
  %755 = vmatprep.subr.mxu0 0.0
  %756 = vmatpush1.msra.mxu0 0.0
  %757 = vmatprep.subr.mxu0 0.0
  %758 = vmatpush1.msra.mxu0 0.0
  %759 = vmatprep.subr.mxu0 0.0
  %760 = vmatpush1.msra.mxu0 0.0
  %761 = vmatprep.subr.mxu0 0.0
  %762 = vmatpush1.msra.mxu0 0.0
  %763 = vmatprep.subr.mxu0 0.0
  %764 = vmatpush1.msra.mxu0 0.0
  %765 = vmatprep.subr.mxu0 0.0
  %766 = vmatpush1.msra.mxu0 0.0
  %767 = vmatprep.subr.mxu0 0.0
  %768 = vmatpush1.msra.mxu0 0.0
  %769 = vmatprep.subr.mxu0 0.0
  %770 = vmatpush1.msra.mxu0 0.0
  %771 = vmatprep.subr.mxu0 0.0
  %772 = vmatpush1.msra.mxu0 0.0
  %773 = vmatprep.subr.mxu0 0.0
  %774 = vmatpush1.msra.mxu0 0.0
  %775 = vmatprep.subr.mxu0 0.0
  %776 = vmatpush1.msra.mxu0 0.0
  %777 = vmatprep.subr.mxu0 0.0
  %778 = vmatpush1.msra.mxu0 0.0
  %779 = vmatprep.subr.mxu0 0.0
  %780 = vmatpush1.msra.mxu0 0.0
  %781 = vmatprep.subr.mxu0 0.0
  %782 = vmatpush1.msra.mxu0 0.0
  %783 = vmatprep.subr.mxu0 0.0
  %784 = vmatpush1.msra.mxu0 0.0
  %785 = vmatprep.subr.mxu0 0.0
  %786 = vmatpush1.msra.mxu0 0.0
  %787 = vmatprep.subr.mxu0 0.0
  %788 = vmatpush1.msra.mxu0 0.0
  %789 = vmatprep.subr.mxu0 0.0
  %790 = vmatpush1.msra.mxu0 0.0
  %791 = vmatprep.subr.mxu0 0.0
  %792 = vmatpush1.msra.mxu0 0.0
  %793 = vmatprep.subr.mxu0 0.0
  %794 = vmatpush1.msra.mxu0 0.0
  %795 = vmatprep.subr.mxu0 0.0
  %796 = vmatpush1.msra.mxu0 0.0
  %797 = vmatprep.subr.mxu0 0.0
  %798 = vmatpush1.msra.mxu0 0.0
  %799 = vmatprep.subr.mxu0 0.0
  %800 = vmatpush1.msra.mxu0 0.0
  %801 = vmatprep.mubr.f32.mxu0 0.0
  %802 = vmatmul.mubr.f32.gmra.mrb[0].mxu0 %v726
  %v803 = vpop.f32.mrb[0].mxu0
  %v804 = vadd.f32 0.0, %v803
  %v805 = vpop.f32.mrb[0].mxu0
  %806 = vmatprep.mubr.f32.mxu0 0.0
  %807 = vmatmul.mubr.f32.gmra.mrb[0].mxu0 %v729
  %v808 = vpop.f32.mrb[0].mxu0
  %v809 = vadd.f32 0.0, %v808
  %v810 = vpop.f32.mrb[0].mxu0
  %811 = vmatprep.mubr.f32.mxu0 0.0
  %812 = vmatmul.mubr.f32.gmra.mrb[0].mxu0 %v732
  %v813 = vpop.f32.mrb[0].mxu0
  %v814 = vadd.f32 0.0, %v813
  %v815 = vpop.f32.mrb[0].mxu0
  %816 = vmatprep.mubr.f32.mxu0 0.0
  %817 = vmatmul.mubr.f32.gmra.mrb[0].mxu0 %v735
  %v818 = vpop.f32.mrb[0].mxu0
  %v819 = vadd.f32 0.0, %v818
  %v820 = vpop.f32.mrb[0].mxu0
  %821 = vdwg.mxu0
  %v822 = vadd.f32 %v612, %v804
  %v823 = vadd.f32 %v617, %v809
  %v824 = vadd.f32 %v622, %v814
  %v825 = vadd.f32 %v627, %v819
  %s826 = scalar_lea.vmem %s3, 96
  %v827 = vld [vmem:[%s826] sm:$0xff]
  %v828 = vld [vmem:[%s826 + $0x8] sm:$0xff]
  %v829 = vld [vmem:[%s826 + $0x10] sm:$0xff]
  %v830 = vld [vmem:[%s826 + $0x18] sm:$0xff]
  %831 = vmatprep.subr.mxu0 0.0
  %832 = vmatpush1.msra.mxu0 %v231
  %833 = vmatprep.subr.mxu0 0.0
  %834 = vmatpush1.msra.mxu0 %v232
  %835 = vmatprep.subr.mxu0 0.0
  %836 = vmatpush1.msra.mxu0 %v233
  %837 = vmatprep.subr.mxu0 0.0
  %838 = vmatpush1.msra.mxu0 %v234
  %839 = vmatprep.subr.mxu0 0.0
  %840 = vmatpush1.msra.mxu0 %v235
  %841 = vmatprep.subr.mxu0 0.0
  %842 = vmatpush1.msra.mxu0 %v236
  %843 = vmatprep.subr.mxu0 0.0
  %844 = vmatpush1.msra.mxu0 %v237
  %845 = vmatprep.subr.mxu0 0.0
  %846 = vmatpush1.msra.mxu0 %v238
  %847 = vmatprep.subr.mxu0 0.0
  %848 = vmatpush1.msra.mxu0 %v239
  %849 = vmatprep.subr.mxu0 0.0
  %850 = vmatpush1.msra.mxu0 %v240
  %851 = vmatprep.subr.mxu0 0.0
  %852 = vmatpush1.msra.mxu0 %v241
  %853 = vmatprep.subr.mxu0 0.0
  %854 = vmatpush1.msra.mxu0 %v242
  %855 = vmatprep.subr.mxu0 0.0
  %856 = vmatpush1.msra.mxu0 %v243
  %857 = vmatprep.subr.mxu0 0.0
  %858 = vmatpush1.msra.mxu0 %v244
  %859 = vmatprep.subr.mxu0 0.0
  %860 = vmatpush1.msra.mxu0 %v245
  %861 = vmatprep.subr.mxu0 0.0
  %862 = vmatpush1.msra.mxu0 %v246
  %863 = vmatprep.subr.mxu0 0.0
  %864 = vmatpush1.msra.mxu0 0.0
  %865 = vmatprep.subr.mxu0 0.0
  %866 = vmatpush1.msra.mxu0 0.0
  %867 = vmatprep.subr.mxu0 0.0
  %868 = vmatpush1.msra.mxu0 0.0
  %869 = vmatprep.subr.mxu0 0.0
  %870 = vmatpush1.msra.mxu0 0.0
  %871 = vmatprep.subr.mxu0 0.0
  %872 = vmatpush1.msra.mxu0 0.0
  %873 = vmatprep.subr.mxu0 0.0
  %874 = vmatpush1.msra.mxu0 0.0
  %875 = vmatprep.subr.mxu0 0.0
  %876 = vmatpush1.msra.mxu0 0.0
  %877 = vmatprep.subr.mxu0 0.0
  %878 = vmatpush1.msra.mxu0 0.0
  %879 = vmatprep.subr.mxu0 0.0
  %880 = vmatpush1.msra.mxu0 0.0
  %881 = vmatprep.subr.mxu0 0.0
  %882 = vmatpush1.msra.mxu0 0.0
  %883 = vmatprep.subr.mxu0 0.0
  %884 = vmatpush1.msra.mxu0 0.0
  %885 = vmatprep.subr.mxu0 0.0
  %886 = vmatpush1.msra.mxu0 0.0
  %887 = vmatprep.subr.mxu0 0.0
  %888 = vmatpush1.msra.mxu0 0.0
  %889 = vmatprep.subr.mxu0 0.0
  %890 = vmatpush1.msra.mxu0 0.0
  %891 = vmatprep.subr.mxu0 0.0
  %892 = vmatpush1.msra.mxu0 0.0
  %893 = vmatprep.subr.mxu0 0.0
  %894 = vmatpush1.msra.mxu0 0.0
  %895 = vmatprep.mubr.f32.mxu0 0.0
  %896 = vmatmul.mubr.f32.gmra.mrb[0].mxu0 %v827
  %v897 = vpop.f32.mrb[0].mxu0
  %v898 = vadd.f32 0.0, %v897
  %v899 = vpop.f32.mrb[0].mxu0
  %900 = vmatprep.mubr.f32.mxu0 0.0
  %901 = vmatmul.mubr.f32.gmra.mrb[0].mxu0 %v828
  %v902 = vpop.f32.mrb[0].mxu0
  %v903 = vadd.f32 0.0, %v902
  %v904 = vpop.f32.mrb[0].mxu0
  %905 = vmatprep.mubr.f32.mxu0 0.0
  %906 = vmatmul.mubr.f32.gmra.mrb[0].mxu0 %v829
  %v907 = vpop.f32.mrb[0].mxu0
  %v908 = vadd.f32 0.0, %v907
  %v909 = vpop.f32.mrb[0].mxu0
  %910 = vmatprep.mubr.f32.mxu0 0.0
  %911 = vmatmul.mubr.f32.gmra.mrb[0].mxu0 %v830
  %v912 = vpop.f32.mrb[0].mxu0
  %v913 = vadd.f32 0.0, %v912
  %v914 = vpop.f32.mrb[0].mxu0
  %915 = vdwg.mxu0
  %s916 = scalar_lea.vmem %s4, 96
  %v917 = vld [vmem:[%s916] sm:$0xff]
  %v918 = vld [vmem:[%s916 + $0x8] sm:$0xff]
  %v919 = vld [vmem:[%s916 + $0x10] sm:$0xff]
  %v920 = vld [vmem:[%s916 + $0x18] sm:$0xff]
  %v922 = vsel %vm435, %v898, 0
  %v925 = vsel %vm435, %v903, 0
  %v928 = vsel %vm435, %v908, 0
  %v931 = vsel %vm435, %v913, 0
  %933 = vmatprep.subr.mxu0 0.0
  %934 = vmatpush1.msra.mxu0 %v917
  %935 = vmatprep.subr.mxu0 0.0
  %936 = vmatpush1.msra.mxu0 %v918
  %937 = vmatprep.subr.mxu0 0.0
  %938 = vmatpush1.msra.mxu0 %v919
  %939 = vmatprep.subr.mxu0 0.0
  %940 = vmatpush1.msra.mxu0 %v920
  %941 = vmatprep.subr.mxu0 0.0
  %942 = vmatpush1.msra.mxu0 0.0
  %943 = vmatprep.subr.mxu0 0.0
  %944 = vmatpush1.msra.mxu0 0.0
  %945 = vmatprep.subr.mxu0 0.0
  %946 = vmatpush1.msra.mxu0 0.0
  %947 = vmatprep.subr.mxu0 0.0
  %948 = vmatpush1.msra.mxu0 0.0
  %949 = vmatprep.subr.mxu0 0.0
  %950 = vmatpush1.msra.mxu0 0.0
  %951 = vmatprep.subr.mxu0 0.0
  %952 = vmatpush1.msra.mxu0 0.0
  %953 = vmatprep.subr.mxu0 0.0
  %954 = vmatpush1.msra.mxu0 0.0
  %955 = vmatprep.subr.mxu0 0.0
  %956 = vmatpush1.msra.mxu0 0.0
  %957 = vmatprep.subr.mxu0 0.0
  %958 = vmatpush1.msra.mxu0 0.0
  %959 = vmatprep.subr.mxu0 0.0
  %960 = vmatpush1.msra.mxu0 0.0
  %961 = vmatprep.subr.mxu0 0.0
  %962 = vmatpush1.msra.mxu0 0.0
  %963 = vmatprep.subr.mxu0 0.0
  %964 = vmatpush1.msra.mxu0 0.0
  %965 = vmatprep.subr.mxu0 0.0
  %966 = vmatpush1.msra.mxu0 0.0
  %967 = vmatprep.subr.mxu0 0.0
  %968 = vmatpush1.msra.mxu0 0.0
  %969 = vmatprep.subr.mxu0 0.0
  %970 = vmatpush1.msra.mxu0 0.0
  %971 = vmatprep.subr.mxu0 0.0
  %972 = vmatpush1.msra.mxu0 0.0
  %973 = vmatprep.subr.mxu0 0.0
  %974 = vmatpush1.msra.mxu0 0.0
  %975 = vmatprep.subr.mxu0 0.0
  %976 = vmatpush1.msra.mxu0 0.0
  %977 = vmatprep.subr.mxu0 0.0
  %978 = vmatpush1.msra.mxu0 0.0
  %979 = vmatprep.subr.mxu0 0.0
  %980 = vmatpush1.msra.mxu0 0.0
  %981 = vmatprep.subr.mxu0 0.0
  %982 = vmatpush1.msra.mxu0 0.0
  %983 = vmatprep.subr.mxu0 0.0
  %984 = vmatpush1.msra.mxu0 0.0
  %985 = vmatprep.subr.mxu0 0.0
  %986 = vmatpush1.msra.mxu0 0.0
  %987 = vmatprep.subr.mxu0 0.0
  %988 = vmatpush1.msra.mxu0 0.0
  %989 = vmatprep.subr.mxu0 0.0
  %990 = vmatpush1.msra.mxu0 0.0
  %991 = vmatprep.subr.mxu0 0.0
  %992 = vmatpush1.msra.mxu0 0.0
  %993 = vmatprep.subr.mxu0 0.0
  %994 = vmatpush1.msra.mxu0 0.0
  %995 = vmatprep.subr.mxu0 0.0
  %996 = vmatpush1.msra.mxu0 0.0
  %997 = vmatprep.mubr.f32.mxu0 0.0
  %998 = vmatmul.mubr.f32.gmra.mrb[0].mxu0 %v922
  %v999 = vpop.f32.mrb[0].mxu0
  %v1000 = vadd.f32 0.0, %v999
  %v1001 = vpop.f32.mrb[0].mxu0
  %1002 = vmatprep.mubr.f32.mxu0 0.0
  %1003 = vmatmul.mubr.f32.gmra.mrb[0].mxu0 %v925
  %v1004 = vpop.f32.mrb[0].mxu0
  %v1005 = vadd.f32 0.0, %v1004
  %v1006 = vpop.f32.mrb[0].mxu0
  %1007 = vmatprep.mubr.f32.mxu0 0.0
  %1008 = vmatmul.mubr.f32.gmra.mrb[0].mxu0 %v928
  %v1009 = vpop.f32.mrb[0].mxu0
  %v1010 = vadd.f32 0.0, %v1009
  %v1011 = vpop.f32.mrb[0].mxu0
  %1012 = vmatprep.mubr.f32.mxu0 0.0
  %1013 = vmatmul.mubr.f32.gmra.mrb[0].mxu0 %v931
  %v1014 = vpop.f32.mrb[0].mxu0
  %v1015 = vadd.f32 0.0, %v1014
  %v1016 = vpop.f32.mrb[0].mxu0
  %1017 = vdwg.mxu0
  %v1018 = vadd.f32 %v822, %v1000
  %v1019 = vadd.f32 %v823, %v1005
  %v1020 = vadd.f32 %v824, %v1010
  %v1021 = vadd.f32 %v825, %v1015
  %s1022 = scalar_lea.vmem %s3, 128
  %v1023 = vld [vmem:[%s1022] sm:$0xff]
  %v1024 = vld [vmem:[%s1022 + $0x8] sm:$0xff]
  %v1025 = vld [vmem:[%s1022 + $0x10] sm:$0xff]
  %v1026 = vld [vmem:[%s1022 + $0x18] sm:$0xff]
  %1027 = vmatprep.subr.mxu0 0.0
  %1028 = vmatpush1.msra.mxu0 %v231
  %1029 = vmatprep.subr.mxu0 0.0
  %1030 = vmatpush1.msra.mxu0 %v232
  %1031 = vmatprep.subr.mxu0 0.0
  %1032 = vmatpush1.msra.mxu0 %v233
  %1033 = vmatprep.subr.mxu0 0.0
  %1034 = vmatpush1.msra.mxu0 %v234
  %1035 = vmatprep.subr.mxu0 0.0
  %1036 = vmatpush1.msra.mxu0 %v235
  %1037 = vmatprep.subr.mxu0 0.0
  %1038 = vmatpush1.msra.mxu0 %v236
  %1039 = vmatprep.subr.mxu0 0.0
  %1040 = vmatpush1.msra.mxu0 %v237
  %1041 = vmatprep.subr.mxu0 0.0
  %1042 = vmatpush1.msra.mxu0 %v238
  %1043 = vmatprep.subr.mxu0 0.0
  %1044 = vmatpush1.msra.mxu0 %v239
  %1045 = vmatprep.subr.mxu0 0.0
  %1046 = vmatpush1.msra.mxu0 %v240
  %1047 = vmatprep.subr.mxu0 0.0
  %1048 = vmatpush1.msra.mxu0 %v241
  %1049 = vmatprep.subr.mxu0 0.0
  %1050 = vmatpush1.msra.mxu0 %v242
  %1051 = vmatprep.subr.mxu0 0.0
  %1052 = vmatpush1.msra.mxu0 %v243
  %1053 = vmatprep.subr.mxu0 0.0
  %1054 = vmatpush1.msra.mxu0 %v244
  %1055 = vmatprep.subr.mxu0 0.0
  %1056 = vmatpush1.msra.mxu0 %v245
  %1057 = vmatprep.subr.mxu0 0.0
  %1058 = vmatpush1.msra.mxu0 %v246
  %1059 = vmatprep.subr.mxu0 0.0
  %1060 = vmatpush1.msra.mxu0 0.0
  %1061 = vmatprep.subr.mxu0 0.0
  %1062 = vmatpush1.msra.mxu0 0.0
  %1063 = vmatprep.subr.mxu0 0.0
  %1064 = vmatpush1.msra.mxu0 0.0
  %1065 = vmatprep.subr.mxu0 0.0
  %1066 = vmatpush1.msra.mxu0 0.0
  %1067 = vmatprep.subr.mxu0 0.0
  %1068 = vmatpush1.msra.mxu0 0.0
  %1069 = vmatprep.subr.mxu0 0.0
  %1070 = vmatpush1.msra.mxu0 0.0
  %1071 = vmatprep.subr.mxu0 0.0
  %1072 = vmatpush1.msra.mxu0 0.0
  %1073 = vmatprep.subr.mxu0 0.0
  %1074 = vmatpush1.msra.mxu0 0.0
  %1075 = vmatprep.subr.mxu0 0.0
  %1076 = vmatpush1.msra.mxu0 0.0
  %1077 = vmatprep.subr.mxu0 0.0
  %1078 = vmatpush1.msra.mxu0 0.0
  %1079 = vmatprep.subr.mxu0 0.0
  %1080 = vmatpush1.msra.mxu0 0.0
  %1081 = vmatprep.subr.mxu0 0.0
  %1082 = vmatpush1.msra.mxu0 0.0
  %1083 = vmatprep.subr.mxu0 0.0
  %1084 = vmatpush1.msra.mxu0 0.0
  %1085 = vmatprep.subr.mxu0 0.0
  %1086 = vmatpush1.msra.mxu0 0.0
  %1087 = vmatprep.subr.mxu0 0.0
  %1088 = vmatpush1.msra.mxu0 0.0
  %1089 = vmatprep.subr.mxu0 0.0
  %1090 = vmatpush1.msra.mxu0 0.0
  %1091 = vmatprep.mubr.f32.mxu0 0.0
  %1092 = vmatmul.mubr.f32.gmra.mrb[0].mxu0 %v1023
  %v1093 = vpop.f32.mrb[0].mxu0
  %v1094 = vadd.f32 0.0, %v1093
  %v1095 = vpop.f32.mrb[0].mxu0
  %1096 = vmatprep.mubr.f32.mxu0 0.0
  %1097 = vmatmul.mubr.f32.gmra.mrb[0].mxu0 %v1024
  %v1098 = vpop.f32.mrb[0].mxu0
  %v1099 = vadd.f32 0.0, %v1098
  %v1100 = vpop.f32.mrb[0].mxu0
  %1101 = vmatprep.mubr.f32.mxu0 0.0
  %1102 = vmatmul.mubr.f32.gmra.mrb[0].mxu0 %v1025
  %v1103 = vpop.f32.mrb[0].mxu0
  %v1104 = vadd.f32 0.0, %v1103
  %v1105 = vpop.f32.mrb[0].mxu0
  %1106 = vmatprep.mubr.f32.mxu0 0.0
  %1107 = vmatmul.mubr.f32.gmra.mrb[0].mxu0 %v1026
  %v1108 = vpop.f32.mrb[0].mxu0
  %v1109 = vadd.f32 0.0, %v1108
  %v1110 = vpop.f32.mrb[0].mxu0
  %1111 = vdwg.mxu0
  %s1112 = scalar_lea.vmem %s4, 128
  %v1113 = vld [vmem:[%s1112] sm:$0xff]
  %v1114 = vld [vmem:[%s1112 + $0x8] sm:$0xff]
  %v1115 = vld [vmem:[%s1112 + $0x10] sm:$0xff]
  %v1116 = vld [vmem:[%s1112 + $0x18] sm:$0xff]
  %v1118 = vsel %vm435, %v1094, 0
  %v1121 = vsel %vm435, %v1099, 0
  %v1124 = vsel %vm435, %v1104, 0
  %v1127 = vsel %vm435, %v1109, 0
  %1129 = vmatprep.subr.mxu0 0.0
  %1130 = vmatpush1.msra.mxu0 %v1113
  %1131 = vmatprep.subr.mxu0 0.0
  %1132 = vmatpush1.msra.mxu0 %v1114
  %1133 = vmatprep.subr.mxu0 0.0
  %1134 = vmatpush1.msra.mxu0 %v1115
  %1135 = vmatprep.subr.mxu0 0.0
  %1136 = vmatpush1.msra.mxu0 %v1116
  %1137 = vmatprep.subr.mxu0 0.0
  %1138 = vmatpush1.msra.mxu0 0.0
  %1139 = vmatprep.subr.mxu0 0.0
  %1140 = vmatpush1.msra.mxu0 0.0
  %1141 = vmatprep.subr.mxu0 0.0
  %1142 = vmatpush1.msra.mxu0 0.0
  %1143 = vmatprep.subr.mxu0 0.0
  %1144 = vmatpush1.msra.mxu0 0.0
  %1145 = vmatprep.subr.mxu0 0.0
  %1146 = vmatpush1.msra.mxu0 0.0
  %1147 = vmatprep.subr.mxu0 0.0
  %1148 = vmatpush1.msra.mxu0 0.0
  %1149 = vmatprep.subr.mxu0 0.0
  %1150 = vmatpush1.msra.mxu0 0.0
  %1151 = vmatprep.subr.mxu0 0.0
  %1152 = vmatpush1.msra.mxu0 0.0
  %1153 = vmatprep.subr.mxu0 0.0
  %1154 = vmatpush1.msra.mxu0 0.0
  %1155 = vmatprep.subr.mxu0 0.0
  %1156 = vmatpush1.msra.mxu0 0.0
  %1157 = vmatprep.subr.mxu0 0.0
  %1158 = vmatpush1.msra.mxu0 0.0
  %1159 = vmatprep.subr.mxu0 0.0
  %1160 = vmatpush1.msra.mxu0 0.0
  %1161 = vmatprep.subr.mxu0 0.0
  %1162 = vmatpush1.msra.mxu0 0.0
  %1163 = vmatprep.subr.mxu0 0.0
  %1164 = vmatpush1.msra.mxu0 0.0
  %1165 = vmatprep.subr.mxu0 0.0
  %1166 = vmatpush1.msra.mxu0 0.0
  %1167 = vmatprep.subr.mxu0 0.0
  %1168 = vmatpush1.msra.mxu0 0.0
  %1169 = vmatprep.subr.mxu0 0.0
  %1170 = vmatpush1.msra.mxu0 0.0
  %1171 = vmatprep.subr.mxu0 0.0
  %1172 = vmatpush1.msra.mxu0 0.0
  %1173 = vmatprep.subr.mxu0 0.0
  %1174 = vmatpush1.msra.mxu0 0.0
  %1175 = vmatprep.subr.mxu0 0.0
  %1176 = vmatpush1.msra.mxu0 0.0
  %1177 = vmatprep.subr.mxu0 0.0
  %1178 = vmatpush1.msra.mxu0 0.0
  %1179 = vmatprep.subr.mxu0 0.0
  %1180 = vmatpush1.msra.mxu0 0.0
  %1181 = vmatprep.subr.mxu0 0.0
  %1182 = vmatpush1.msra.mxu0 0.0
  %1183 = vmatprep.subr.mxu0 0.0
  %1184 = vmatpush1.msra.mxu0 0.0
  %1185 = vmatprep.subr.mxu0 0.0
  %1186 = vmatpush1.msra.mxu0 0.0
  %1187 = vmatprep.subr.mxu0 0.0
  %1188 = vmatpush1.msra.mxu0 0.0
  %1189 = vmatprep.subr.mxu0 0.0
  %1190 = vmatpush1.msra.mxu0 0.0
  %1191 = vmatprep.subr.mxu0 0.0
  %1192 = vmatpush1.msra.mxu0 0.0
  %1193 = vmatprep.mubr.f32.mxu0 0.0
  %1194 = vmatmul.mubr.f32.gmra.mrb[0].mxu0 %v1118
  %v1195 = vpop.f32.mrb[0].mxu0
  %v1196 = vadd.f32 0.0, %v1195
  %v1197 = vpop.f32.mrb[0].mxu0
  %1198 = vmatprep.mubr.f32.mxu0 0.0
  %1199 = vmatmul.mubr.f32.gmra.mrb[0].mxu0 %v1121
  %v1200 = vpop.f32.mrb[0].mxu0
  %v1201 = vadd.f32 0.0, %v1200
  %v1202 = vpop.f32.mrb[0].mxu0
  %1203 = vmatprep.mubr.f32.mxu0 0.0
  %1204 = vmatmul.mubr.f32.gmra.mrb[0].mxu0 %v1124
  %v1205 = vpop.f32.mrb[0].mxu0
  %v1206 = vadd.f32 0.0, %v1205
  %v1207 = vpop.f32.mrb[0].mxu0
  %1208 = vmatprep.mubr.f32.mxu0 0.0
  %1209 = vmatmul.mubr.f32.gmra.mrb[0].mxu0 %v1127
  %v1210 = vpop.f32.mrb[0].mxu0
  %v1211 = vadd.f32 0.0, %v1210
  %v1212 = vpop.f32.mrb[0].mxu0
  %1213 = vdwg.mxu0
  %v1214 = vadd.f32 %v1018, %v1196
  %v1215 = vadd.f32 %v1019, %v1201
  %v1216 = vadd.f32 %v1020, %v1206
  %v1217 = vadd.f32 %v1021, %v1211
  %s1218 = scalar_lea.vmem %s3, 160
  %v1219 = vld [vmem:[%s1218] sm:$0xff]
  %v1220 = vld [vmem:[%s1218 + $0x8] sm:$0xff]
  %v1221 = vld [vmem:[%s1218 + $0x10] sm:$0xff]
  %v1222 = vld [vmem:[%s1218 + $0x18] sm:$0xff]
  %1223 = vmatprep.subr.mxu0 0.0
  %1224 = vmatpush1.msra.mxu0 %v231
  %1225 = vmatprep.subr.mxu0 0.0
  %1226 = vmatpush1.msra.mxu0 %v232
  %1227 = vmatprep.subr.mxu0 0.0
  %1228 = vmatpush1.msra.mxu0 %v233
  %1229 = vmatprep.subr.mxu0 0.0
  %1230 = vmatpush1.msra.mxu0 %v234
  %1231 = vmatprep.subr.mxu0 0.0
  %1232 = vmatpush1.msra.mxu0 %v235
  %1233 = vmatprep.subr.mxu0 0.0
  %1234 = vmatpush1.msra.mxu0 %v236
  %1235 = vmatprep.subr.mxu0 0.0
  %1236 = vmatpush1.msra.mxu0 %v237
  %1237 = vmatprep.subr.mxu0 0.0
  %1238 = vmatpush1.msra.mxu0 %v238
  %1239 = vmatprep.subr.mxu0 0.0
  %1240 = vmatpush1.msra.mxu0 %v239
  %1241 = vmatprep.subr.mxu0 0.0
  %1242 = vmatpush1.msra.mxu0 %v240
  %1243 = vmatprep.subr.mxu0 0.0
  %1244 = vmatpush1.msra.mxu0 %v241
  %1245 = vmatprep.subr.mxu0 0.0
  %1246 = vmatpush1.msra.mxu0 %v242
  %1247 = vmatprep.subr.mxu0 0.0
  %1248 = vmatpush1.msra.mxu0 %v243
  %1249 = vmatprep.subr.mxu0 0.0
  %1250 = vmatpush1.msra.mxu0 %v244
  %1251 = vmatprep.subr.mxu0 0.0
  %1252 = vmatpush1.msra.mxu0 %v245
  %1253 = vmatprep.subr.mxu0 0.0
  %1254 = vmatpush1.msra.mxu0 %v246
  %1255 = vmatprep.subr.mxu0 0.0
  %1256 = vmatpush1.msra.mxu0 0.0
  %1257 = vmatprep.subr.mxu0 0.0
  %1258 = vmatpush1.msra.mxu0 0.0
  %1259 = vmatprep.subr.mxu0 0.0
  %1260 = vmatpush1.msra.mxu0 0.0
  %1261 = vmatprep.subr.mxu0 0.0
  %1262 = vmatpush1.msra.mxu0 0.0
  %1263 = vmatprep.subr.mxu0 0.0
  %1264 = vmatpush1.msra.mxu0 0.0
  %1265 = vmatprep.subr.mxu0 0.0
  %1266 = vmatpush1.msra.mxu0 0.0
  %1267 = vmatprep.subr.mxu0 0.0
  %1268 = vmatpush1.msra.mxu0 0.0
  %1269 = vmatprep.subr.mxu0 0.0
  %1270 = vmatpush1.msra.mxu0 0.0
  %1271 = vmatprep.subr.mxu0 0.0
  %1272 = vmatpush1.msra.mxu0 0.0
  %1273 = vmatprep.subr.mxu0 0.0
  %1274 = vmatpush1.msra.mxu0 0.0
  %1275 = vmatprep.subr.mxu0 0.0
  %1276 = vmatpush1.msra.mxu0 0.0
  %1277 = vmatprep.subr.mxu0 0.0
  %1278 = vmatpush1.msra.mxu0 0.0
  %1279 = vmatprep.subr.mxu0 0.0
  %1280 = vmatpush1.msra.mxu0 0.0
  %1281 = vmatprep.subr.mxu0 0.0
  %1282 = vmatpush1.msra.mxu0 0.0
  %1283 = vmatprep.subr.mxu0 0.0
  %1284 = vmatpush1.msra.mxu0 0.0
  %1285 = vmatprep.subr.mxu0 0.0
  %1286 = vmatpush1.msra.mxu0 0.0
  %1287 = vmatprep.mubr.f32.mxu0 0.0
  %1288 = vmatmul.mubr.f32.gmra.mrb[0].mxu0 %v1219
  %v1289 = vpop.f32.mrb[0].mxu0
  %v1290 = vadd.f32 0.0, %v1289
  %v1291 = vpop.f32.mrb[0].mxu0
  %1292 = vmatprep.mubr.f32.mxu0 0.0
  %1293 = vmatmul.mubr.f32.gmra.mrb[0].mxu0 %v1220
  %v1294 = vpop.f32.mrb[0].mxu0
  %v1295 = vadd.f32 0.0, %v1294
  %v1296 = vpop.f32.mrb[0].mxu0
  %1297 = vmatprep.mubr.f32.mxu0 0.0
  %1298 = vmatmul.mubr.f32.gmra.mrb[0].mxu0 %v1221
  %v1299 = vpop.f32.mrb[0].mxu0
  %v1300 = vadd.f32 0.0, %v1299
  %v1301 = vpop.f32.mrb[0].mxu0
  %1302 = vmatprep.mubr.f32.mxu0 0.0
  %1303 = vmatmul.mubr.f32.gmra.mrb[0].mxu0 %v1222
  %v1304 = vpop.f32.mrb[0].mxu0
  %v1305 = vadd.f32 0.0, %v1304
  %v1306 = vpop.f32.mrb[0].mxu0
  %1307 = vdwg.mxu0
  %s1308 = scalar_lea.vmem %s4, 160
  %v1309 = vld [vmem:[%s1308] sm:$0xff]
  %v1310 = vld [vmem:[%s1308 + $0x8] sm:$0xff]
  %v1311 = vld [vmem:[%s1308 + $0x10] sm:$0xff]
  %v1312 = vld [vmem:[%s1308 + $0x18] sm:$0xff]
  %v1314 = vsel %vm435, %v1290, 0
  %v1317 = vsel %vm435, %v1295, 0
  %v1320 = vsel %vm435, %v1300, 0
  %v1323 = vsel %vm435, %v1305, 0
  %1325 = vmatprep.subr.mxu0 0.0
  %1326 = vmatpush1.msra.mxu0 %v1309
  %1327 = vmatprep.subr.mxu0 0.0
  %1328 = vmatpush1.msra.mxu0 %v1310
  %1329 = vmatprep.subr.mxu0 0.0
  %1330 = vmatpush1.msra.mxu0 %v1311
  %1331 = vmatprep.subr.mxu0 0.0
  %1332 = vmatpush1.msra.mxu0 %v1312
  %1333 = vmatprep.subr.mxu0 0.0
  %1334 = vmatpush1.msra.mxu0 0.0
  %1335 = vmatprep.subr.mxu0 0.0
  %1336 = vmatpush1.msra.mxu0 0.0
  %1337 = vmatprep.subr.mxu0 0.0
  %1338 = vmatpush1.msra.mxu0 0.0
  %1339 = vmatprep.subr.mxu0 0.0
  %1340 = vmatpush1.msra.mxu0 0.0
  %1341 = vmatprep.subr.mxu0 0.0
  %1342 = vmatpush1.msra.mxu0 0.0
  %1343 = vmatprep.subr.mxu0 0.0
  %1344 = vmatpush1.msra.mxu0 0.0
  %1345 = vmatprep.subr.mxu0 0.0
  %1346 = vmatpush1.msra.mxu0 0.0
  %1347 = vmatprep.subr.mxu0 0.0
  %1348 = vmatpush1.msra.mxu0 0.0
  %1349 = vmatprep.subr.mxu0 0.0
  %1350 = vmatpush1.msra.mxu0 0.0
  %1351 = vmatprep.subr.mxu0 0.0
  %1352 = vmatpush1.msra.mxu0 0.0
  %1353 = vmatprep.subr.mxu0 0.0
  %1354 = vmatpush1.msra.mxu0 0.0
  %1355 = vmatprep.subr.mxu0 0.0
  %1356 = vmatpush1.msra.mxu0 0.0
  %1357 = vmatprep.subr.mxu0 0.0
  %1358 = vmatpush1.msra.mxu0 0.0
  %1359 = vmatprep.subr.mxu0 0.0
  %1360 = vmatpush1.msra.mxu0 0.0
  %1361 = vmatprep.subr.mxu0 0.0
  %1362 = vmatpush1.msra.mxu0 0.0
  %1363 = vmatprep.subr.mxu0 0.0
  %1364 = vmatpush1.msra.mxu0 0.0
  %1365 = vmatprep.subr.mxu0 0.0
  %1366 = vmatpush1.msra.mxu0 0.0
  %1367 = vmatprep.subr.mxu0 0.0
  %1368 = vmatpush1.msra.mxu0 0.0
  %1369 = vmatprep.subr.mxu0 0.0
  %1370 = vmatpush1.msra.mxu0 0.0
  %1371 = vmatprep.subr.mxu0 0.0
  %1372 = vmatpush1.msra.mxu0 0.0
  %1373 = vmatprep.subr.mxu0 0.0
  %1374 = vmatpush1.msra.mxu0 0.0
  %1375 = vmatprep.subr.mxu0 0.0
  %1376 = vmatpush1.msra.mxu0 0.0
  %1377 = vmatprep.subr.mxu0 0.0
  %1378 = vmatpush1.msra.mxu0 0.0
  %1379 = vmatprep.subr.mxu0 0.0
  %1380 = vmatpush1.msra.mxu0 0.0
  %1381 = vmatprep.subr.mxu0 0.0
  %1382 = vmatpush1.msra.mxu0 0.0
  %1383 = vmatprep.subr.mxu0 0.0
  %1384 = vmatpush1.msra.mxu0 0.0
  %1385 = vmatprep.subr.mxu0 0.0
  %1386 = vmatpush1.msra.mxu0 0.0
  %1387 = vmatprep.subr.mxu0 0.0
  %1388 = vmatpush1.msra.mxu0 0.0
  %1389 = vmatprep.mubr.f32.mxu0 0.0
  %1390 = vmatmul.mubr.f32.gmra.mrb[0].mxu0 %v1314
  %v1391 = vpop.f32.mrb[0].mxu0
  %v1392 = vadd.f32 0.0, %v1391
  %v1393 = vpop.f32.mrb[0].mxu0
  %1394 = vmatprep.mubr.f32.mxu0 0.0
  %1395 = vmatmul.mubr.f32.gmra.mrb[0].mxu0 %v1317
  %v1396 = vpop.f32.mrb[0].mxu0
  %v1397 = vadd.f32 0.0, %v1396
  %v1398 = vpop.f32.mrb[0].mxu0
  %1399 = vmatprep.mubr.f32.mxu0 0.0
  %1400 = vmatmul.mubr.f32.gmra.mrb[0].mxu0 %v1320
  %v1401 = vpop.f32.mrb[0].mxu0
  %v1402 = vadd.f32 0.0, %v1401
  %v1403 = vpop.f32.mrb[0].mxu0
  %1404 = vmatprep.mubr.f32.mxu0 0.0
  %1405 = vmatmul.mubr.f32.gmra.mrb[0].mxu0 %v1323
  %v1406 = vpop.f32.mrb[0].mxu0
  %v1407 = vadd.f32 0.0, %v1406
  %v1408 = vpop.f32.mrb[0].mxu0
  %1409 = vdwg.mxu0
  %v1410 = vadd.f32 %v1214, %v1392
  %v1411 = vadd.f32 %v1215, %v1397
  %v1412 = vadd.f32 %v1216, %v1402
  %v1413 = vadd.f32 %v1217, %v1407
  %s1414 = scalar_lea.vmem %s3, 192
  %v1415 = vld [vmem:[%s1414] sm:$0xff]
  %v1416 = vld [vmem:[%s1414 + $0x8] sm:$0xff]
  %v1417 = vld [vmem:[%s1414 + $0x10] sm:$0xff]
  %v1418 = vld [vmem:[%s1414 + $0x18] sm:$0xff]
  %1419 = vmatprep.subr.mxu0 0.0
  %1420 = vmatpush1.msra.mxu0 %v231
  %1421 = vmatprep.subr.mxu0 0.0
  %1422 = vmatpush1.msra.mxu0 %v232
  %1423 = vmatprep.subr.mxu0 0.0
  %1424 = vmatpush1.msra.mxu0 %v233
  %1425 = vmatprep.subr.mxu0 0.0
  %1426 = vmatpush1.msra.mxu0 %v234
  %1427 = vmatprep.subr.mxu0 0.0
  %1428 = vmatpush1.msra.mxu0 %v235
  %1429 = vmatprep.subr.mxu0 0.0
  %1430 = vmatpush1.msra.mxu0 %v236
  %1431 = vmatprep.subr.mxu0 0.0
  %1432 = vmatpush1.msra.mxu0 %v237
  %1433 = vmatprep.subr.mxu0 0.0
  %1434 = vmatpush1.msra.mxu0 %v238
  %1435 = vmatprep.subr.mxu0 0.0
  %1436 = vmatpush1.msra.mxu0 %v239
  %1437 = vmatprep.subr.mxu0 0.0
  %1438 = vmatpush1.msra.mxu0 %v240
  %1439 = vmatprep.subr.mxu0 0.0
  %1440 = vmatpush1.msra.mxu0 %v241
  %1441 = vmatprep.subr.mxu0 0.0
  %1442 = vmatpush1.msra.mxu0 %v242
  %1443 = vmatprep.subr.mxu0 0.0
  %1444 = vmatpush1.msra.mxu0 %v243
  %1445 = vmatprep.subr.mxu0 0.0
  %1446 = vmatpush1.msra.mxu0 %v244
  %1447 = vmatprep.subr.mxu0 0.0
  %1448 = vmatpush1.msra.mxu0 %v245
  %1449 = vmatprep.subr.mxu0 0.0
  %1450 = vmatpush1.msra.mxu0 %v246
  %1451 = vmatprep.subr.mxu0 0.0
  %1452 = vmatpush1.msra.mxu0 0.0
  %1453 = vmatprep.subr.mxu0 0.0
  %1454 = vmatpush1.msra.mxu0 0.0
  %1455 = vmatprep.subr.mxu0 0.0
  %1456 = vmatpush1.msra.mxu0 0.0
  %1457 = vmatprep.subr.mxu0 0.0
  %1458 = vmatpush1.msra.mxu0 0.0
  %1459 = vmatprep.subr.mxu0 0.0
  %1460 = vmatpush1.msra.mxu0 0.0
  %1461 = vmatprep.subr.mxu0 0.0
  %1462 = vmatpush1.msra.mxu0 0.0
  %1463 = vmatprep.subr.mxu0 0.0
  %1464 = vmatpush1.msra.mxu0 0.0
  %1465 = vmatprep.subr.mxu0 0.0
  %1466 = vmatpush1.msra.mxu0 0.0
  %1467 = vmatprep.subr.mxu0 0.0
  %1468 = vmatpush1.msra.mxu0 0.0
  %1469 = vmatprep.subr.mxu0 0.0
  %1470 = vmatpush1.msra.mxu0 0.0
  %1471 = vmatprep.subr.mxu0 0.0
  %1472 = vmatpush1.msra.mxu0 0.0
  %1473 = vmatprep.subr.mxu0 0.0
  %1474 = vmatpush1.msra.mxu0 0.0
  %1475 = vmatprep.subr.mxu0 0.0
  %1476 = vmatpush1.msra.mxu0 0.0
  %1477 = vmatprep.subr.mxu0 0.0
  %1478 = vmatpush1.msra.mxu0 0.0
  %1479 = vmatprep.subr.mxu0 0.0
  %1480 = vmatpush1.msra.mxu0 0.0
  %1481 = vmatprep.subr.mxu0 0.0
  %1482 = vmatpush1.msra.mxu0 0.0
  %1483 = vmatprep.mubr.f32.mxu0 0.0
  %1484 = vmatmul.mubr.f32.gmra.mrb[0].mxu0 %v1415
  %v1485 = vpop.f32.mrb[0].mxu0
  %v1486 = vadd.f32 0.0, %v1485
  %v1487 = vpop.f32.mrb[0].mxu0
  %1488 = vmatprep.mubr.f32.mxu0 0.0
  %1489 = vmatmul.mubr.f32.gmra.mrb[0].mxu0 %v1416
  %v1490 = vpop.f32.mrb[0].mxu0
  %v1491 = vadd.f32 0.0, %v1490
  %v1492 = vpop.f32.mrb[0].mxu0
  %1493 = vmatprep.mubr.f32.mxu0 0.0
  %1494 = vmatmul.mubr.f32.gmra.mrb[0].mxu0 %v1417
  %v1495 = vpop.f32.mrb[0].mxu0
  %v1496 = vadd.f32 0.0, %v1495
  %v1497 = vpop.f32.mrb[0].mxu0
  %1498 = vmatprep.mubr.f32.mxu0 0.0
  %1499 = vmatmul.mubr.f32.gmra.mrb[0].mxu0 %v1418
  %v1500 = vpop.f32.mrb[0].mxu0
  %v1501 = vadd.f32 0.0, %v1500
  %v1502 = vpop.f32.mrb[0].mxu0
  %1503 = vdwg.mxu0
  %s1504 = scalar_lea.vmem %s4, 192
  %v1505 = vld [vmem:[%s1504] sm:$0xff]
  %v1506 = vld [vmem:[%s1504 + $0x8] sm:$0xff]
  %v1507 = vld [vmem:[%s1504 + $0x10] sm:$0xff]
  %v1508 = vld [vmem:[%s1504 + $0x18] sm:$0xff]
  %v1510 = vsel %vm435, %v1486, 0
  %v1513 = vsel %vm435, %v1491, 0
  %v1516 = vsel %vm435, %v1496, 0
  %v1519 = vsel %vm435, %v1501, 0
  %1521 = vmatprep.subr.mxu0 0.0
  %1522 = vmatpush1.msra.mxu0 %v1505
  %1523 = vmatprep.subr.mxu0 0.0
  %1524 = vmatpush1.msra.mxu0 %v1506
  %1525 = vmatprep.subr.mxu0 0.0
  %1526 = vmatpush1.msra.mxu0 %v1507
  %1527 = vmatprep.subr.mxu0 0.0
  %1528 = vmatpush1.msra.mxu0 %v1508
  %1529 = vmatprep.subr.mxu0 0.0
  %1530 = vmatpush1.msra.mxu0 0.0
  %1531 = vmatprep.subr.mxu0 0.0
  %1532 = vmatpush1.msra.mxu0 0.0
  %1533 = vmatprep.subr.mxu0 0.0
  %1534 = vmatpush1.msra.mxu0 0.0
  %1535 = vmatprep.subr.mxu0 0.0
  %1536 = vmatpush1.msra.mxu0 0.0
  %1537 = vmatprep.subr.mxu0 0.0
  %1538 = vmatpush1.msra.mxu0 0.0
  %1539 = vmatprep.subr.mxu0 0.0
  %1540 = vmatpush1.msra.mxu0 0.0
  %1541 = vmatprep.subr.mxu0 0.0
  %1542 = vmatpush1.msra.mxu0 0.0
  %1543 = vmatprep.subr.mxu0 0.0
  %1544 = vmatpush1.msra.mxu0 0.0
  %1545 = vmatprep.subr.mxu0 0.0
  %1546 = vmatpush1.msra.mxu0 0.0
  %1547 = vmatprep.subr.mxu0 0.0
  %1548 = vmatpush1.msra.mxu0 0.0
  %1549 = vmatprep.subr.mxu0 0.0
  %1550 = vmatpush1.msra.mxu0 0.0
  %1551 = vmatprep.subr.mxu0 0.0
  %1552 = vmatpush1.msra.mxu0 0.0
  %1553 = vmatprep.subr.mxu0 0.0
  %1554 = vmatpush1.msra.mxu0 0.0
  %1555 = vmatprep.subr.mxu0 0.0
  %1556 = vmatpush1.msra.mxu0 0.0
  %1557 = vmatprep.subr.mxu0 0.0
  %1558 = vmatpush1.msra.mxu0 0.0
  %1559 = vmatprep.subr.mxu0 0.0
  %1560 = vmatpush1.msra.mxu0 0.0
  %1561 = vmatprep.subr.mxu0 0.0
  %1562 = vmatpush1.msra.mxu0 0.0
  %1563 = vmatprep.subr.mxu0 0.0
  %1564 = vmatpush1.msra.mxu0 0.0
  %1565 = vmatprep.subr.mxu0 0.0
  %1566 = vmatpush1.msra.mxu0 0.0
  %1567 = vmatprep.subr.mxu0 0.0
  %1568 = vmatpush1.msra.mxu0 0.0
  %1569 = vmatprep.subr.mxu0 0.0
  %1570 = vmatpush1.msra.mxu0 0.0
  %1571 = vmatprep.subr.mxu0 0.0
  %1572 = vmatpush1.msra.mxu0 0.0
  %1573 = vmatprep.subr.mxu0 0.0
  %1574 = vmatpush1.msra.mxu0 0.0
  %1575 = vmatprep.subr.mxu0 0.0
  %1576 = vmatpush1.msra.mxu0 0.0
  %1577 = vmatprep.subr.mxu0 0.0
  %1578 = vmatpush1.msra.mxu0 0.0
  %1579 = vmatprep.subr.mxu0 0.0
  %1580 = vmatpush1.msra.mxu0 0.0
  %1581 = vmatprep.subr.mxu0 0.0
  %1582 = vmatpush1.msra.mxu0 0.0
  %1583 = vmatprep.subr.mxu0 0.0
  %1584 = vmatpush1.msra.mxu0 0.0
  %1585 = vmatprep.mubr.f32.mxu0 0.0
  %1586 = vmatmul.mubr.f32.gmra.mrb[0].mxu0 %v1510
  %v1587 = vpop.f32.mrb[0].mxu0
  %v1588 = vadd.f32 0.0, %v1587
  %v1589 = vpop.f32.mrb[0].mxu0
  %1590 = vmatprep.mubr.f32.mxu0 0.0
  %1591 = vmatmul.mubr.f32.gmra.mrb[0].mxu0 %v1513
  %v1592 = vpop.f32.mrb[0].mxu0
  %v1593 = vadd.f32 0.0, %v1592
  %v1594 = vpop.f32.mrb[0].mxu0
  %1595 = vmatprep.mubr.f32.mxu0 0.0
  %1596 = vmatmul.mubr.f32.gmra.mrb[0].mxu0 %v1516
  %v1597 = vpop.f32.mrb[0].mxu0
  %v1598 = vadd.f32 0.0, %v1597
  %v1599 = vpop.f32.mrb[0].mxu0
  %1600 = vmatprep.mubr.f32.mxu0 0.0
  %1601 = vmatmul.mubr.f32.gmra.mrb[0].mxu0 %v1519
  %v1602 = vpop.f32.mrb[0].mxu0
  %v1603 = vadd.f32 0.0, %v1602
  %v1604 = vpop.f32.mrb[0].mxu0
  %1605 = vdwg.mxu0
  %v1606 = vadd.f32 %v1410, %v1588
  %v1607 = vadd.f32 %v1411, %v1593
  %v1608 = vadd.f32 %v1412, %v1598
  %v1609 = vadd.f32 %v1413, %v1603
  %s1610 = scalar_lea.vmem %s3, 224
  %v1611 = vld [vmem:[%s1610] sm:$0xff]
  %v1612 = vld [vmem:[%s1610 + $0x8] sm:$0xff]
  %v1613 = vld [vmem:[%s1610 + $0x10] sm:$0xff]
  %v1614 = vld [vmem:[%s1610 + $0x18] sm:$0xff]
  %1615 = vmatprep.subr.mxu0 0.0
  %1616 = vmatpush1.msra.mxu0 %v231
  %1617 = vmatprep.subr.mxu0 0.0
  %1618 = vmatpush1.msra.mxu0 %v232
  %1619 = vmatprep.subr.mxu0 0.0
  %1620 = vmatpush1.msra.mxu0 %v233
  %1621 = vmatprep.subr.mxu0 0.0
  %1622 = vmatpush1.msra.mxu0 %v234
  %1623 = vmatprep.subr.mxu0 0.0
  %1624 = vmatpush1.msra.mxu0 %v235
  %1625 = vmatprep.subr.mxu0 0.0
  %1626 = vmatpush1.msra.mxu0 %v236
  %1627 = vmatprep.subr.mxu0 0.0
  %1628 = vmatpush1.msra.mxu0 %v237
  %1629 = vmatprep.subr.mxu0 0.0
  %1630 = vmatpush1.msra.mxu0 %v238
  %1631 = vmatprep.subr.mxu0 0.0
  %1632 = vmatpush1.msra.mxu0 %v239
  %1633 = vmatprep.subr.mxu0 0.0
  %1634 = vmatpush1.msra.mxu0 %v240
  %1635 = vmatprep.subr.mxu0 0.0
  %1636 = vmatpush1.msra.mxu0 %v241
  %1637 = vmatprep.subr.mxu0 0.0
  %1638 = vmatpush1.msra.mxu0 %v242
  %1639 = vmatprep.subr.mxu0 0.0
  %1640 = vmatpush1.msra.mxu0 %v243
  %1641 = vmatprep.subr.mxu0 0.0
  %1642 = vmatpush1.msra.mxu0 %v244
  %1643 = vmatprep.subr.mxu0 0.0
  %1644 = vmatpush1.msra.mxu0 %v245
  %1645 = vmatprep.subr.mxu0 0.0
  %1646 = vmatpush1.msra.mxu0 %v246
  %1647 = vmatprep.subr.mxu0 0.0
  %1648 = vmatpush1.msra.mxu0 0.0
  %1649 = vmatprep.subr.mxu0 0.0
  %1650 = vmatpush1.msra.mxu0 0.0
  %1651 = vmatprep.subr.mxu0 0.0
  %1652 = vmatpush1.msra.mxu0 0.0
  %1653 = vmatprep.subr.mxu0 0.0
  %1654 = vmatpush1.msra.mxu0 0.0
  %1655 = vmatprep.subr.mxu0 0.0
  %1656 = vmatpush1.msra.mxu0 0.0
  %1657 = vmatprep.subr.mxu0 0.0
  %1658 = vmatpush1.msra.mxu0 0.0
  %1659 = vmatprep.subr.mxu0 0.0
  %1660 = vmatpush1.msra.mxu0 0.0
  %1661 = vmatprep.subr.mxu0 0.0
  %1662 = vmatpush1.msra.mxu0 0.0
  %1663 = vmatprep.subr.mxu0 0.0
  %1664 = vmatpush1.msra.mxu0 0.0
  %1665 = vmatprep.subr.mxu0 0.0
  %1666 = vmatpush1.msra.mxu0 0.0
  %1667 = vmatprep.subr.mxu0 0.0
  %1668 = vmatpush1.msra.mxu0 0.0
  %1669 = vmatprep.subr.mxu0 0.0
  %1670 = vmatpush1.msra.mxu0 0.0
  %1671 = vmatprep.subr.mxu0 0.0
  %1672 = vmatpush1.msra.mxu0 0.0
  %1673 = vmatprep.subr.mxu0 0.0
  %1674 = vmatpush1.msra.mxu0 0.0
  %1675 = vmatprep.subr.mxu0 0.0
  %1676 = vmatpush1.msra.mxu0 0.0
  %1677 = vmatprep.subr.mxu0 0.0
  %1678 = vmatpush1.msra.mxu0 0.0
  %1679 = vmatprep.mubr.f32.mxu0 0.0
  %1680 = vmatmul.mubr.f32.gmra.mrb[0].mxu0 %v1611
  %v1681 = vpop.f32.mrb[0].mxu0
  %v1682 = vadd.f32 0.0, %v1681
  %v1683 = vpop.f32.mrb[0].mxu0
  %1684 = vmatprep.mubr.f32.mxu0 0.0
  %1685 = vmatmul.mubr.f32.gmra.mrb[0].mxu0 %v1612
  %v1686 = vpop.f32.mrb[0].mxu0
  %v1687 = vadd.f32 0.0, %v1686
  %v1688 = vpop.f32.mrb[0].mxu0
  %1689 = vmatprep.mubr.f32.mxu0 0.0
  %1690 = vmatmul.mubr.f32.gmra.mrb[0].mxu0 %v1613
  %v1691 = vpop.f32.mrb[0].mxu0
  %v1692 = vadd.f32 0.0, %v1691
  %v1693 = vpop.f32.mrb[0].mxu0
  %1694 = vmatprep.mubr.f32.mxu0 0.0
  %1695 = vmatmul.mubr.f32.gmra.mrb[0].mxu0 %v1614
  %v1696 = vpop.f32.mrb[0].mxu0
  %v1697 = vadd.f32 0.0, %v1696
  %v1698 = vpop.f32.mrb[0].mxu0
  %1699 = vdwg.mxu0
  %s1700 = scalar_lea.vmem %s4, 224
  %v1701 = vld [vmem:[%s1700] sm:$0xff]
  %v1702 = vld [vmem:[%s1700 + $0x8] sm:$0xff]
  %v1703 = vld [vmem:[%s1700 + $0x10] sm:$0xff]
  %v1704 = vld [vmem:[%s1700 + $0x18] sm:$0xff]
  %v1706 = vsel %vm435, %v1682, 0
  %v1709 = vsel %vm435, %v1687, 0
  %v1712 = vsel %vm435, %v1692, 0
  %v1715 = vsel %vm435, %v1697, 0
  %1717 = vmatprep.subr.mxu0 0.0
  %1718 = vmatpush1.msra.mxu0 %v1701
  %1719 = vmatprep.subr.mxu0 0.0
  %1720 = vmatpush1.msra.mxu0 %v1702
  %1721 = vmatprep.subr.mxu0 0.0
  %1722 = vmatpush1.msra.mxu0 %v1703
  %1723 = vmatprep.subr.mxu0 0.0
  %1724 = vmatpush1.msra.mxu0 %v1704
  %1725 = vmatprep.subr.mxu0 0.0
  %1726 = vmatpush1.msra.mxu0 0.0
  %1727 = vmatprep.subr.mxu0 0.0
  %1728 = vmatpush1.msra.mxu0 0.0
  %1729 = vmatprep.subr.mxu0 0.0
  %1730 = vmatpush1.msra.mxu0 0.0
  %1731 = vmatprep.subr.mxu0 0.0
  %1732 = vmatpush1.msra.mxu0 0.0
  %1733 = vmatprep.subr.mxu0 0.0
  %1734 = vmatpush1.msra.mxu0 0.0
  %1735 = vmatprep.subr.mxu0 0.0
  %1736 = vmatpush1.msra.mxu0 0.0
  %1737 = vmatprep.subr.mxu0 0.0
  %1738 = vmatpush1.msra.mxu0 0.0
  %1739 = vmatprep.subr.mxu0 0.0
  %1740 = vmatpush1.msra.mxu0 0.0
  %1741 = vmatprep.subr.mxu0 0.0
  %1742 = vmatpush1.msra.mxu0 0.0
  %1743 = vmatprep.subr.mxu0 0.0
  %1744 = vmatpush1.msra.mxu0 0.0
  %1745 = vmatprep.subr.mxu0 0.0
  %1746 = vmatpush1.msra.mxu0 0.0
  %1747 = vmatprep.subr.mxu0 0.0
  %1748 = vmatpush1.msra.mxu0 0.0
  %1749 = vmatprep.subr.mxu0 0.0
  %1750 = vmatpush1.msra.mxu0 0.0
  %1751 = vmatprep.subr.mxu0 0.0
  %1752 = vmatpush1.msra.mxu0 0.0
  %1753 = vmatprep.subr.mxu0 0.0
  %1754 = vmatpush1.msra.mxu0 0.0
  %1755 = vmatprep.subr.mxu0 0.0
  %1756 = vmatpush1.msra.mxu0 0.0
  %1757 = vmatprep.subr.mxu0 0.0
  %1758 = vmatpush1.msra.mxu0 0.0
  %1759 = vmatprep.subr.mxu0 0.0
  %1760 = vmatpush1.msra.mxu0 0.0
  %1761 = vmatprep.subr.mxu0 0.0
  %1762 = vmatpush1.msra.mxu0 0.0
  %1763 = vmatprep.subr.mxu0 0.0
  %1764 = vmatpush1.msra.mxu0 0.0
  %1765 = vmatprep.subr.mxu0 0.0
  %1766 = vmatpush1.msra.mxu0 0.0
  %1767 = vmatprep.subr.mxu0 0.0
  %1768 = vmatpush1.msra.mxu0 0.0
  %1769 = vmatprep.subr.mxu0 0.0
  %1770 = vmatpush1.msra.mxu0 0.0
  %1771 = vmatprep.subr.mxu0 0.0
  %1772 = vmatpush1.msra.mxu0 0.0
  %1773 = vmatprep.subr.mxu0 0.0
  %1774 = vmatpush1.msra.mxu0 0.0
  %1775 = vmatprep.subr.mxu0 0.0
  %1776 = vmatpush1.msra.mxu0 0.0
  %1777 = vmatprep.subr.mxu0 0.0
  %1778 = vmatpush1.msra.mxu0 0.0
  %1779 = vmatprep.subr.mxu0 0.0
  %1780 = vmatpush1.msra.mxu0 0.0
  %1781 = vmatprep.mubr.f32.mxu0 0.0
  %1782 = vmatmul.mubr.f32.gmra.mrb[0].mxu0 %v1706
  %v1783 = vpop.f32.mrb[0].mxu0
  %v1784 = vadd.f32 0.0, %v1783
  %v1785 = vpop.f32.mrb[0].mxu0
  %1786 = vmatprep.mubr.f32.mxu0 0.0
  %1787 = vmatmul.mubr.f32.gmra.mrb[0].mxu0 %v1709
  %v1788 = vpop.f32.mrb[0].mxu0
  %v1789 = vadd.f32 0.0, %v1788
  %v1790 = vpop.f32.mrb[0].mxu0
  %1791 = vmatprep.mubr.f32.mxu0 0.0
  %1792 = vmatmul.mubr.f32.gmra.mrb[0].mxu0 %v1712
  %v1793 = vpop.f32.mrb[0].mxu0
  %v1794 = vadd.f32 0.0, %v1793
  %v1795 = vpop.f32.mrb[0].mxu0
  %1796 = vmatprep.mubr.f32.mxu0 0.0
  %1797 = vmatmul.mubr.f32.gmra.mrb[0].mxu0 %v1715
  %v1798 = vpop.f32.mrb[0].mxu0
  %v1799 = vadd.f32 0.0, %v1798
  %v1800 = vpop.f32.mrb[0].mxu0
  %1801 = vdwg.mxu0
  %v1802 = vadd.f32 %v1606, %v1784
  %v1803 = vadd.f32 %v1607, %v1789
  %v1804 = vadd.f32 %v1608, %v1794
  %v1805 = vadd.f32 %v1609, %v1799
  %s1806 = scalar_lea.vmem %s3, 256
  %v1807 = vld [vmem:[%s1806] sm:$0xff]
  %v1808 = vld [vmem:[%s1806 + $0x8] sm:$0xff]
  %v1809 = vld [vmem:[%s1806 + $0x10] sm:$0xff]
  %v1810 = vld [vmem:[%s1806 + $0x18] sm:$0xff]
  %1811 = vmatprep.subr.mxu0 0.0
  %1812 = vmatpush1.msra.mxu0 %v231
  %1813 = vmatprep.subr.mxu0 0.0
  %1814 = vmatpush1.msra.mxu0 %v232
  %1815 = vmatprep.subr.mxu0 0.0
  %1816 = vmatpush1.msra.mxu0 %v233
  %1817 = vmatprep.subr.mxu0 0.0
  %1818 = vmatpush1.msra.mxu0 %v234
  %1819 = vmatprep.subr.mxu0 0.0
  %1820 = vmatpush1.msra.mxu0 %v235
  %1821 = vmatprep.subr.mxu0 0.0
  %1822 = vmatpush1.msra.mxu0 %v236
  %1823 = vmatprep.subr.mxu0 0.0
  %1824 = vmatpush1.msra.mxu0 %v237
  %1825 = vmatprep.subr.mxu0 0.0
  %1826 = vmatpush1.msra.mxu0 %v238
  %1827 = vmatprep.subr.mxu0 0.0
  %1828 = vmatpush1.msra.mxu0 %v239
  %1829 = vmatprep.subr.mxu0 0.0
  %1830 = vmatpush1.msra.mxu0 %v240
  %1831 = vmatprep.subr.mxu0 0.0
  %1832 = vmatpush1.msra.mxu0 %v241
  %1833 = vmatprep.subr.mxu0 0.0
  %1834 = vmatpush1.msra.mxu0 %v242
  %1835 = vmatprep.subr.mxu0 0.0
  %1836 = vmatpush1.msra.mxu0 %v243
  %1837 = vmatprep.subr.mxu0 0.0
  %1838 = vmatpush1.msra.mxu0 %v244
  %1839 = vmatprep.subr.mxu0 0.0
  %1840 = vmatpush1.msra.mxu0 %v245
  %1841 = vmatprep.subr.mxu0 0.0
  %1842 = vmatpush1.msra.mxu0 %v246
  %1843 = vmatprep.subr.mxu0 0.0
  %1844 = vmatpush1.msra.mxu0 0.0
  %1845 = vmatprep.subr.mxu0 0.0
  %1846 = vmatpush1.msra.mxu0 0.0
  %1847 = vmatprep.subr.mxu0 0.0
  %1848 = vmatpush1.msra.mxu0 0.0
  %1849 = vmatprep.subr.mxu0 0.0
  %1850 = vmatpush1.msra.mxu0 0.0
  %1851 = vmatprep.subr.mxu0 0.0
  %1852 = vmatpush1.msra.mxu0 0.0
  %1853 = vmatprep.subr.mxu0 0.0
  %1854 = vmatpush1.msra.mxu0 0.0
  %1855 = vmatprep.subr.mxu0 0.0
  %1856 = vmatpush1.msra.mxu0 0.0
  %1857 = vmatprep.subr.mxu0 0.0
  %1858 = vmatpush1.msra.mxu0 0.0
  %1859 = vmatprep.subr.mxu0 0.0
  %1860 = vmatpush1.msra.mxu0 0.0
  %1861 = vmatprep.subr.mxu0 0.0
  %1862 = vmatpush1.msra.mxu0 0.0
  %1863 = vmatprep.subr.mxu0 0.0
  %1864 = vmatpush1.msra.mxu0 0.0
  %1865 = vmatprep.subr.mxu0 0.0
  %1866 = vmatpush1.msra.mxu0 0.0
  %1867 = vmatprep.subr.mxu0 0.0
  %1868 = vmatpush1.msra.mxu0 0.0
  %1869 = vmatprep.subr.mxu0 0.0
  %1870 = vmatpush1.msra.mxu0 0.0
  %1871 = vmatprep.subr.mxu0 0.0
  %1872 = vmatpush1.msra.mxu0 0.0
  %1873 = vmatprep.subr.mxu0 0.0
  %1874 = vmatpush1.msra.mxu0 0.0
  %1875 = vmatprep.mubr.f32.mxu0 0.0
  %1876 = vmatmul.mubr.f32.gmra.mrb[0].mxu0 %v1807
  %v1877 = vpop.f32.mrb[0].mxu0
  %v1878 = vadd.f32 0.0, %v1877
  %v1879 = vpop.f32.mrb[0].mxu0
  %1880 = vmatprep.mubr.f32.mxu0 0.0
  %1881 = vmatmul.mubr.f32.gmra.mrb[0].mxu0 %v1808
  %v1882 = vpop.f32.mrb[0].mxu0
  %v1883 = vadd.f32 0.0, %v1882
  %v1884 = vpop.f32.mrb[0].mxu0
  %1885 = vmatprep.mubr.f32.mxu0 0.0
  %1886 = vmatmul.mubr.f32.gmra.mrb[0].mxu0 %v1809
  %v1887 = vpop.f32.mrb[0].mxu0
  %v1888 = vadd.f32 0.0, %v1887
  %v1889 = vpop.f32.mrb[0].mxu0
  %1890 = vmatprep.mubr.f32.mxu0 0.0
  %1891 = vmatmul.mubr.f32.gmra.mrb[0].mxu0 %v1810
  %v1892 = vpop.f32.mrb[0].mxu0
  %v1893 = vadd.f32 0.0, %v1892
  %v1894 = vpop.f32.mrb[0].mxu0
  %1895 = vdwg.mxu0
  %s1896 = scalar_lea.vmem %s4, 256
  %v1897 = vld [vmem:[%s1896] sm:$0xff]
  %v1898 = vld [vmem:[%s1896 + $0x8] sm:$0xff]
  %v1899 = vld [vmem:[%s1896 + $0x10] sm:$0xff]
  %v1900 = vld [vmem:[%s1896 + $0x18] sm:$0xff]
  %v1902 = vsel %vm435, %v1878, 0
  %v1905 = vsel %vm435, %v1883, 0
  %v1908 = vsel %vm435, %v1888, 0
  %v1911 = vsel %vm435, %v1893, 0
  %1913 = vmatprep.subr.mxu0 0.0
  %1914 = vmatpush1.msra.mxu0 %v1897
  %1915 = vmatprep.subr.mxu0 0.0
  %1916 = vmatpush1.msra.mxu0 %v1898
  %1917 = vmatprep.subr.mxu0 0.0
  %1918 = vmatpush1.msra.mxu0 %v1899
  %1919 = vmatprep.subr.mxu0 0.0
  %1920 = vmatpush1.msra.mxu0 %v1900
  %1921 = vmatprep.subr.mxu0 0.0
  %1922 = vmatpush1.msra.mxu0 0.0
  %1923 = vmatprep.subr.mxu0 0.0
  %1924 = vmatpush1.msra.mxu0 0.0
  %1925 = vmatprep.subr.mxu0 0.0
  %1926 = vmatpush1.msra.mxu0 0.0
  %1927 = vmatprep.subr.mxu0 0.0
  %1928 = vmatpush1.msra.mxu0 0.0
  %1929 = vmatprep.subr.mxu0 0.0
  %1930 = vmatpush1.msra.mxu0 0.0
  %1931 = vmatprep.subr.mxu0 0.0
  %1932 = vmatpush1.msra.mxu0 0.0
  %1933 = vmatprep.subr.mxu0 0.0
  %1934 = vmatpush1.msra.mxu0 0.0
  %1935 = vmatprep.subr.mxu0 0.0
  %1936 = vmatpush1.msra.mxu0 0.0
  %1937 = vmatprep.subr.mxu0 0.0
  %1938 = vmatpush1.msra.mxu0 0.0
  %1939 = vmatprep.subr.mxu0 0.0
  %1940 = vmatpush1.msra.mxu0 0.0
  %1941 = vmatprep.subr.mxu0 0.0
  %1942 = vmatpush1.msra.mxu0 0.0
  %1943 = vmatprep.subr.mxu0 0.0
  %1944 = vmatpush1.msra.mxu0 0.0
  %1945 = vmatprep.subr.mxu0 0.0
  %1946 = vmatpush1.msra.mxu0 0.0
  %1947 = vmatprep.subr.mxu0 0.0
  %1948 = vmatpush1.msra.mxu0 0.0
  %1949 = vmatprep.subr.mxu0 0.0
  %1950 = vmatpush1.msra.mxu0 0.0
  %1951 = vmatprep.subr.mxu0 0.0
  %1952 = vmatpush1.msra.mxu0 0.0
  %1953 = vmatprep.subr.mxu0 0.0
  %1954 = vmatpush1.msra.mxu0 0.0
  %1955 = vmatprep.subr.mxu0 0.0
  %1956 = vmatpush1.msra.mxu0 0.0
  %1957 = vmatprep.subr.mxu0 0.0
  %1958 = vmatpush1.msra.mxu0 0.0
  %1959 = vmatprep.subr.mxu0 0.0
  %1960 = vmatpush1.msra.mxu0 0.0
  %1961 = vmatprep.subr.mxu0 0.0
  %1962 = vmatpush1.msra.mxu0 0.0
  %1963 = vmatprep.subr.mxu0 0.0
  %1964 = vmatpush1.msra.mxu0 0.0
  %1965 = vmatprep.subr.mxu0 0.0
  %1966 = vmatpush1.msra.mxu0 0.0
  %1967 = vmatprep.subr.mxu0 0.0
  %1968 = vmatpush1.msra.mxu0 0.0
  %1969 = vmatprep.subr.mxu0 0.0
  %1970 = vmatpush1.msra.mxu0 0.0
  %1971 = vmatprep.subr.mxu0 0.0
  %1972 = vmatpush1.msra.mxu0 0.0
  %1973 = vmatprep.subr.mxu0 0.0
  %1974 = vmatpush1.msra.mxu0 0.0
  %1975 = vmatprep.subr.mxu0 0.0
  %1976 = vmatpush1.msra.mxu0 0.0
  %1977 = vmatprep.mubr.f32.mxu0 0.0
  %1978 = vmatmul.mubr.f32.gmra.mrb[0].mxu0 %v1902
  %v1979 = vpop.f32.mrb[0].mxu0
  %v1980 = vadd.f32 0.0, %v1979
  %v1981 = vpop.f32.mrb[0].mxu0
  %1982 = vmatprep.mubr.f32.mxu0 0.0
  %1983 = vmatmul.mubr.f32.gmra.mrb[0].mxu0 %v1905
  %v1984 = vpop.f32.mrb[0].mxu0
  %v1985 = vadd.f32 0.0, %v1984
  %v1986 = vpop.f32.mrb[0].mxu0
  %1987 = vmatprep.mubr.f32.mxu0 0.0
  %1988 = vmatmul.mubr.f32.gmra.mrb[0].mxu0 %v1908
  %v1989 = vpop.f32.mrb[0].mxu0
  %v1990 = vadd.f32 0.0, %v1989
  %v1991 = vpop.f32.mrb[0].mxu0
  %1992 = vmatprep.mubr.f32.mxu0 0.0
  %1993 = vmatmul.mubr.f32.gmra.mrb[0].mxu0 %v1911
  %v1994 = vpop.f32.mrb[0].mxu0
  %v1995 = vadd.f32 0.0, %v1994
  %v1996 = vpop.f32.mrb[0].mxu0
  %1997 = vdwg.mxu0
  %v1998 = vadd.f32 %v1802, %v1980
  %v1999 = vadd.f32 %v1803, %v1985
  %v2000 = vadd.f32 %v1804, %v1990
  %v2001 = vadd.f32 %v1805, %v1995
  %v2002 = vld [vmem:[%s5] sm:$0x1]
  %v2004 = vlaneseq
  %v2005 = vshrl.u32 %v2004, 7
  %v2006 = vsub.s32 0, %v2005
  %v2007 = vrot.slane %v2002, %v2006
  %v2009 = vadd.f32 %v1998, %v2007
  %v2010 = vadd.f32 %v1999, %v2007
  %v2011 = vadd.f32 %v2000, %v2007
  %v2012 = vadd.f32 %v2001, %v2007
  %v2013 = vmax.f32 %v2009, 0.0
  %v2014 = vmax.f32 %v2010, 0.0
  %v2015 = vmax.f32 %v2011, 0.0
  %v2016 = vmax.f32 %v2012, 0.0
  %v2017 = vld [vmem:[%s6] sm:$0xff]
  %v2019 = vsel %vm435, %v2017, 0
  %2021 = vmatprep.subr.mxu0 0.0
  %2022 = vmatpush1.msra.mxu0 %v2013
  %2023 = vmatprep.subr.mxu0 0.0
  %2024 = vmatpush1.msra.mxu0 %v2014
  %2025 = vmatprep.subr.mxu0 0.0
  %2026 = vmatpush1.msra.mxu0 %v2015
  %2027 = vmatprep.subr.mxu0 0.0
  %2028 = vmatpush1.msra.mxu0 %v2016
  %2029 = vmatprep.subr.mxu0 0.0
  %2030 = vmatpush1.msra.mxu0 0.0
  %2031 = vmatprep.subr.mxu0 0.0
  %2032 = vmatpush1.msra.mxu0 0.0
  %2033 = vmatprep.subr.mxu0 0.0
  %2034 = vmatpush1.msra.mxu0 0.0
  %2035 = vmatprep.subr.mxu0 0.0
  %2036 = vmatpush1.msra.mxu0 0.0
  %2037 = vmatprep.subr.mxu0 0.0
  %2038 = vmatpush1.msra.mxu0 0.0
  %2039 = vmatprep.subr.mxu0 0.0
  %2040 = vmatpush1.msra.mxu0 0.0
  %2041 = vmatprep.subr.mxu0 0.0
  %2042 = vmatpush1.msra.mxu0 0.0
  %2043 = vmatprep.subr.mxu0 0.0
  %2044 = vmatpush1.msra.mxu0 0.0
  %2045 = vmatprep.subr.mxu0 0.0
  %2046 = vmatpush1.msra.mxu0 0.0
  %2047 = vmatprep.subr.mxu0 0.0
  %2048 = vmatpush1.msra.mxu0 0.0
  %2049 = vmatprep.subr.mxu0 0.0
  %2050 = vmatpush1.msra.mxu0 0.0
  %2051 = vmatprep.subr.mxu0 0.0
  %2052 = vmatpush1.msra.mxu0 0.0
  %2053 = vmatprep.subr.mxu0 0.0
  %2054 = vmatpush1.msra.mxu0 0.0
  %2055 = vmatprep.subr.mxu0 0.0
  %2056 = vmatpush1.msra.mxu0 0.0
  %2057 = vmatprep.subr.mxu0 0.0
  %2058 = vmatpush1.msra.mxu0 0.0
  %2059 = vmatprep.subr.mxu0 0.0
  %2060 = vmatpush1.msra.mxu0 0.0
  %2061 = vmatprep.subr.mxu0 0.0
  %2062 = vmatpush1.msra.mxu0 0.0
  %2063 = vmatprep.subr.mxu0 0.0
  %2064 = vmatpush1.msra.mxu0 0.0
  %2065 = vmatprep.subr.mxu0 0.0
  %2066 = vmatpush1.msra.mxu0 0.0
  %2067 = vmatprep.subr.mxu0 0.0
  %2068 = vmatpush1.msra.mxu0 0.0
  %2069 = vmatprep.subr.mxu0 0.0
  %2070 = vmatpush1.msra.mxu0 0.0
  %2071 = vmatprep.subr.mxu0 0.0
  %2072 = vmatpush1.msra.mxu0 0.0
  %2073 = vmatprep.subr.mxu0 0.0
  %2074 = vmatpush1.msra.mxu0 0.0
  %2075 = vmatprep.subr.mxu0 0.0
  %2076 = vmatpush1.msra.mxu0 0.0
  %2077 = vmatprep.subr.mxu0 0.0
  %2078 = vmatpush1.msra.mxu0 0.0
  %2079 = vmatprep.subr.mxu0 0.0
  %2080 = vmatpush1.msra.mxu0 0.0
  %2081 = vmatprep.subr.mxu0 0.0
  %2082 = vmatpush1.msra.mxu0 0.0
  %2083 = vmatprep.subr.mxu0 0.0
  %2084 = vmatpush1.msra.mxu0 0.0
  %2085 = vmatprep.mubr.f32.mxu0 0.0
  %2086 = vmatmul.mubr.f32.gmra.mrb[0].mxu0 %v2019
  %v2087 = vpop.f32.mrb[0].mxu0
  %v2088 = vadd.f32 0.0, %v2087
  %v2089 = vpop.f32.mrb[0].mxu0
  %2090 = vdwg.mxu0
  %v2091 = vld [vmem:[%s7] sm:$0xff]
  %v2092 = vld [vmem:[%s7 + $0x8] sm:$0xff]
  %v2093 = vld [vmem:[%s7 + $0x10] sm:$0xff]
  %v2094 = vld [vmem:[%s7 + $0x18] sm:$0xff]
  %s2095 = scalar_lea.vmem %s6, 8
  %v2096 = vld [vmem:[%s2095] sm:$0xff]
  %v2098 = vsel %vm435, %v2096, 0
  %2100 = vmatprep.subr.mxu0 0.0
  %2101 = vmatpush1.msra.mxu0 %v2013
  %2102 = vmatprep.subr.mxu0 0.0
  %2103 = vmatpush1.msra.mxu0 %v2014
  %2104 = vmatprep.subr.mxu0 0.0
  %2105 = vmatpush1.msra.mxu0 %v2015
  %2106 = vmatprep.subr.mxu0 0.0
  %2107 = vmatpush1.msra.mxu0 %v2016
  %2108 = vmatprep.subr.mxu0 0.0
  %2109 = vmatpush1.msra.mxu0 0.0
  %2110 = vmatprep.subr.mxu0 0.0
  %2111 = vmatpush1.msra.mxu0 0.0
  %2112 = vmatprep.subr.mxu0 0.0
  %2113 = vmatpush1.msra.mxu0 0.0
  %2114 = vmatprep.subr.mxu0 0.0
  %2115 = vmatpush1.msra.mxu0 0.0
  %2116 = vmatprep.subr.mxu0 0.0
  %2117 = vmatpush1.msra.mxu0 0.0
  %2118 = vmatprep.subr.mxu0 0.0
  %2119 = vmatpush1.msra.mxu0 0.0
  %2120 = vmatprep.subr.mxu0 0.0
  %2121 = vmatpush1.msra.mxu0 0.0
  %2122 = vmatprep.subr.mxu0 0.0
  %2123 = vmatpush1.msra.mxu0 0.0
  %2124 = vmatprep.subr.mxu0 0.0
  %2125 = vmatpush1.msra.mxu0 0.0
  %2126 = vmatprep.subr.mxu0 0.0
  %2127 = vmatpush1.msra.mxu0 0.0
  %2128 = vmatprep.subr.mxu0 0.0
  %2129 = vmatpush1.msra.mxu0 0.0
  %2130 = vmatprep.subr.mxu0 0.0
  %2131 = vmatpush1.msra.mxu0 0.0
  %2132 = vmatprep.subr.mxu0 0.0
  %2133 = vmatpush1.msra.mxu0 0.0
  %2134 = vmatprep.subr.mxu0 0.0
  %2135 = vmatpush1.msra.mxu0 0.0
  %2136 = vmatprep.subr.mxu0 0.0
  %2137 = vmatpush1.msra.mxu0 0.0
  %2138 = vmatprep.subr.mxu0 0.0
  %2139 = vmatpush1.msra.mxu0 0.0
  %2140 = vmatprep.subr.mxu0 0.0
  %2141 = vmatpush1.msra.mxu0 0.0
  %2142 = vmatprep.subr.mxu0 0.0
  %2143 = vmatpush1.msra.mxu0 0.0
  %2144 = vmatprep.subr.mxu0 0.0
  %2145 = vmatpush1.msra.mxu0 0.0
  %2146 = vmatprep.subr.mxu0 0.0
  %2147 = vmatpush1.msra.mxu0 0.0
  %2148 = vmatprep.subr.mxu0 0.0
  %2149 = vmatpush1.msra.mxu0 0.0
  %2150 = vmatprep.subr.mxu0 0.0
  %2151 = vmatpush1.msra.mxu0 0.0
  %2152 = vmatprep.subr.mxu0 0.0
  %2153 = vmatpush1.msra.mxu0 0.0
  %2154 = vmatprep.subr.mxu0 0.0
  %2155 = vmatpush1.msra.mxu0 0.0
  %2156 = vmatprep.subr.mxu0 0.0
  %2157 = vmatpush1.msra.mxu0 0.0
  %2158 = vmatprep.subr.mxu0 0.0
  %2159 = vmatpush1.msra.mxu0 0.0
  %2160 = vmatprep.subr.mxu0 0.0
  %2161 = vmatpush1.msra.mxu0 0.0
  %2162 = vmatprep.subr.mxu0 0.0
  %2163 = vmatpush1.msra.mxu0 0.0
  %2164 = vmatprep.mubr.f32.mxu0 0.0
  %2165 = vmatmul.mubr.f32.gmra.mrb[0].mxu0 %v2098
  %v2166 = vpop.f32.mrb[0].mxu0
  %v2167 = vadd.f32 0.0, %v2166
  %v2168 = vpop.f32.mrb[0].mxu0
  %2169 = vdwg.mxu0
  %s2170 = scalar_lea.vmem %s7, 32
  %v2171 = vld [vmem:[%s2170] sm:$0xff]
  %v2172 = vld [vmem:[%s2170 + $0x8] sm:$0xff]
  %v2173 = vld [vmem:[%s2170 + $0x10] sm:$0xff]
  %v2174 = vld [vmem:[%s2170 + $0x18] sm:$0xff]
  %v2176 = vsel %vm435, %v2167, 0
  %2178 = vmatprep.subr.mxu0 0.0
  %2179 = vmatpush1.msra.mxu0 %v2171
  %2180 = vmatprep.subr.mxu0 0.0
  %2181 = vmatpush1.msra.mxu0 %v2172
  %2182 = vmatprep.subr.mxu0 0.0
  %2183 = vmatpush1.msra.mxu0 %v2173
  %2184 = vmatprep.subr.mxu0 0.0
  %2185 = vmatpush1.msra.mxu0 %v2174
  %2186 = vmatprep.subr.mxu0 0.0
  %2187 = vmatpush1.msra.mxu0 0.0
  %2188 = vmatprep.subr.mxu0 0.0
  %2189 = vmatpush1.msra.mxu0 0.0
  %2190 = vmatprep.subr.mxu0 0.0
  %2191 = vmatpush1.msra.mxu0 0.0
  %2192 = vmatprep.subr.mxu0 0.0
  %2193 = vmatpush1.msra.mxu0 0.0
  %2194 = vmatprep.subr.mxu0 0.0
  %2195 = vmatpush1.msra.mxu0 0.0
  %2196 = vmatprep.subr.mxu0 0.0
  %2197 = vmatpush1.msra.mxu0 0.0
  %2198 = vmatprep.subr.mxu0 0.0
  %2199 = vmatpush1.msra.mxu0 0.0
  %2200 = vmatprep.subr.mxu0 0.0
  %2201 = vmatpush1.msra.mxu0 0.0
  %2202 = vmatprep.subr.mxu0 0.0
  %2203 = vmatpush1.msra.mxu0 0.0
  %2204 = vmatprep.subr.mxu0 0.0
  %2205 = vmatpush1.msra.mxu0 0.0
  %2206 = vmatprep.subr.mxu0 0.0
  %2207 = vmatpush1.msra.mxu0 0.0
  %2208 = vmatprep.subr.mxu0 0.0
  %2209 = vmatpush1.msra.mxu0 0.0
  %2210 = vmatprep.subr.mxu0 0.0
  %2211 = vmatpush1.msra.mxu0 0.0
  %2212 = vmatprep.subr.mxu0 0.0
  %2213 = vmatpush1.msra.mxu0 0.0
  %2214 = vmatprep.subr.mxu0 0.0
  %2215 = vmatpush1.msra.mxu0 0.0
  %2216 = vmatprep.subr.mxu0 0.0
  %2217 = vmatpush1.msra.mxu0 0.0
  %2218 = vmatprep.subr.mxu0 0.0
  %2219 = vmatpush1.msra.mxu0 0.0
  %2220 = vmatprep.subr.mxu0 0.0
  %2221 = vmatpush1.msra.mxu0 0.0
  %2222 = vmatprep.subr.mxu0 0.0
  %2223 = vmatpush1.msra.mxu0 0.0
  %2224 = vmatprep.subr.mxu0 0.0
  %2225 = vmatpush1.msra.mxu0 0.0
  %2226 = vmatprep.subr.mxu0 0.0
  %2227 = vmatpush1.msra.mxu0 0.0
  %2228 = vmatprep.subr.mxu0 0.0
  %2229 = vmatpush1.msra.mxu0 0.0
  %2230 = vmatprep.subr.mxu0 0.0
  %2231 = vmatpush1.msra.mxu0 0.0
  %2232 = vmatprep.subr.mxu0 0.0
  %2233 = vmatpush1.msra.mxu0 0.0
  %2234 = vmatprep.subr.mxu0 0.0
  %2235 = vmatpush1.msra.mxu0 0.0
  %2236 = vmatprep.subr.mxu0 0.0
  %2237 = vmatpush1.msra.mxu0 0.0
  %2238 = vmatprep.subr.mxu0 0.0
  %2239 = vmatpush1.msra.mxu0 0.0
  %2240 = vmatprep.subr.mxu0 0.0
  %2241 = vmatpush1.msra.mxu0 0.0
  %2242 = vmatprep.mubr.f32.mxu0 0.0
  %2243 = vmatmul.mubr.f32.gmra.mrb[0].mxu0 %v2176
  %v2244 = vpop.f32.mrb[0].mxu0
  %v2245 = vadd.f32 0.0, %v2244
  %v2246 = vpop.f32.mrb[0].mxu0
  %2247 = vdwg.mxu0
  %v2249 = vsel %vm435, %v2088, 0
  %2251 = vmatprep.subr.mxu0 0.0
  %2252 = vmatpush1.msra.mxu0 %v2091
  %2253 = vmatprep.subr.mxu0 0.0
  %2254 = vmatpush1.msra.mxu0 %v2092
  %2255 = vmatprep.subr.mxu0 0.0
  %2256 = vmatpush1.msra.mxu0 %v2093
  %2257 = vmatprep.subr.mxu0 0.0
  %2258 = vmatpush1.msra.mxu0 %v2094
  %2259 = vmatprep.subr.mxu0 0.0
  %2260 = vmatpush1.msra.mxu0 0.0
  %2261 = vmatprep.subr.mxu0 0.0
  %2262 = vmatpush1.msra.mxu0 0.0
  %2263 = vmatprep.subr.mxu0 0.0
  %2264 = vmatpush1.msra.mxu0 0.0
  %2265 = vmatprep.subr.mxu0 0.0
  %2266 = vmatpush1.msra.mxu0 0.0
  %2267 = vmatprep.subr.mxu0 0.0
  %2268 = vmatpush1.msra.mxu0 0.0
  %2269 = vmatprep.subr.mxu0 0.0
  %2270 = vmatpush1.msra.mxu0 0.0
  %2271 = vmatprep.subr.mxu0 0.0
  %2272 = vmatpush1.msra.mxu0 0.0
  %2273 = vmatprep.subr.mxu0 0.0
  %2274 = vmatpush1.msra.mxu0 0.0
  %2275 = vmatprep.subr.mxu0 0.0
  %2276 = vmatpush1.msra.mxu0 0.0
  %2277 = vmatprep.subr.mxu0 0.0
  %2278 = vmatpush1.msra.mxu0 0.0
  %2279 = vmatprep.subr.mxu0 0.0
  %2280 = vmatpush1.msra.mxu0 0.0
  %2281 = vmatprep.subr.mxu0 0.0
  %2282 = vmatpush1.msra.mxu0 0.0
  %2283 = vmatprep.subr.mxu0 0.0
  %2284 = vmatpush1.msra.mxu0 0.0
  %2285 = vmatprep.subr.mxu0 0.0
  %2286 = vmatpush1.msra.mxu0 0.0
  %2287 = vmatprep.subr.mxu0 0.0
  %2288 = vmatpush1.msra.mxu0 0.0
  %2289 = vmatprep.subr.mxu0 0.0
  %2290 = vmatpush1.msra.mxu0 0.0
  %2291 = vmatprep.subr.mxu0 0.0
  %2292 = vmatpush1.msra.mxu0 0.0
  %2293 = vmatprep.subr.mxu0 0.0
  %2294 = vmatpush1.msra.mxu0 0.0
  %2295 = vmatprep.subr.mxu0 0.0
  %2296 = vmatpush1.msra.mxu0 0.0
  %2297 = vmatprep.subr.mxu0 0.0
  %2298 = vmatpush1.msra.mxu0 0.0
  %2299 = vmatprep.subr.mxu0 0.0
  %2300 = vmatpush1.msra.mxu0 0.0
  %2301 = vmatprep.subr.mxu0 0.0
  %2302 = vmatpush1.msra.mxu0 0.0
  %2303 = vmatprep.subr.mxu0 0.0
  %2304 = vmatpush1.msra.mxu0 0.0
  %2305 = vmatprep.subr.mxu0 0.0
  %2306 = vmatpush1.msra.mxu0 0.0
  %2307 = vmatprep.subr.mxu0 0.0
  %2308 = vmatpush1.msra.mxu0 0.0
  %2309 = vmatprep.subr.mxu0 0.0
  %2310 = vmatpush1.msra.mxu0 0.0
  %2311 = vmatprep.subr.mxu0 0.0
  %2312 = vmatpush1.msra.mxu0 0.0
  %2313 = vmatprep.subr.mxu0 0.0
  %2314 = vmatpush1.msra.mxu0 0.0
  %2315 = vmatprep.mubr.f32.mxu0 0.0
  %2316 = vmatmul.mubr.f32.gmra.mrb[0].mxu0 %v2249
  %v2317 = vpop.f32.mrb[0].mxu0
  %v2318 = vadd.f32 %v2245, %v2317
  %v2319 = vpop.f32.mrb[0].mxu0
  %2320 = vdwg.mxu0
  %s2321 = scalar_lea.vmem %s6, 16
  %v2322 = vld [vmem:[%s2321] sm:$0xff]
  %v2324 = vsel %vm435, %v2322, 0
  %2326 = vmatprep.subr.mxu0 0.0
  %2327 = vmatpush1.msra.mxu0 %v2013
  %2328 = vmatprep.subr.mxu0 0.0
  %2329 = vmatpush1.msra.mxu0 %v2014
  %2330 = vmatprep.subr.mxu0 0.0
  %2331 = vmatpush1.msra.mxu0 %v2015
  %2332 = vmatprep.subr.mxu0 0.0
  %2333 = vmatpush1.msra.mxu0 %v2016
  %2334 = vmatprep.subr.mxu0 0.0
  %2335 = vmatpush1.msra.mxu0 0.0
  %2336 = vmatprep.subr.mxu0 0.0
  %2337 = vmatpush1.msra.mxu0 0.0
  %2338 = vmatprep.subr.mxu0 0.0
  %2339 = vmatpush1.msra.mxu0 0.0
  %2340 = vmatprep.subr.mxu0 0.0
  %2341 = vmatpush1.msra.mxu0 0.0
  %2342 = vmatprep.subr.mxu0 0.0
  %2343 = vmatpush1.msra.mxu0 0.0
  %2344 = vmatprep.subr.mxu0 0.0
  %2345 = vmatpush1.msra.mxu0 0.0
  %2346 = vmatprep.subr.mxu0 0.0
  %2347 = vmatpush1.msra.mxu0 0.0
  %2348 = vmatprep.subr.mxu0 0.0
  %2349 = vmatpush1.msra.mxu0 0.0
  %2350 = vmatprep.subr.mxu0 0.0
  %2351 = vmatpush1.msra.mxu0 0.0
  %2352 = vmatprep.subr.mxu0 0.0
  %2353 = vmatpush1.msra.mxu0 0.0
  %2354 = vmatprep.subr.mxu0 0.0
  %2355 = vmatpush1.msra.mxu0 0.0
  %2356 = vmatprep.subr.mxu0 0.0
  %2357 = vmatpush1.msra.mxu0 0.0
  %2358 = vmatprep.subr.mxu0 0.0
  %2359 = vmatpush1.msra.mxu0 0.0
  %2360 = vmatprep.subr.mxu0 0.0
  %2361 = vmatpush1.msra.mxu0 0.0
  %2362 = vmatprep.subr.mxu0 0.0
  %2363 = vmatpush1.msra.mxu0 0.0
  %2364 = vmatprep.subr.mxu0 0.0
  %2365 = vmatpush1.msra.mxu0 0.0
  %2366 = vmatprep.subr.mxu0 0.0
  %2367 = vmatpush1.msra.mxu0 0.0
  %2368 = vmatprep.subr.mxu0 0.0
  %2369 = vmatpush1.msra.mxu0 0.0
  %2370 = vmatprep.subr.mxu0 0.0
  %2371 = vmatpush1.msra.mxu0 0.0
  %2372 = vmatprep.subr.mxu0 0.0
  %2373 = vmatpush1.msra.mxu0 0.0
  %2374 = vmatprep.subr.mxu0 0.0
  %2375 = vmatpush1.msra.mxu0 0.0
  %2376 = vmatprep.subr.mxu0 0.0
  %2377 = vmatpush1.msra.mxu0 0.0
  %2378 = vmatprep.subr.mxu0 0.0
  %2379 = vmatpush1.msra.mxu0 0.0
  %2380 = vmatprep.subr.mxu0 0.0
  %2381 = vmatpush1.msra.mxu0 0.0
  %2382 = vmatprep.subr.mxu0 0.0
  %2383 = vmatpush1.msra.mxu0 0.0
  %2384 = vmatprep.subr.mxu0 0.0
  %2385 = vmatpush1.msra.mxu0 0.0
  %2386 = vmatprep.subr.mxu0 0.0
  %2387 = vmatpush1.msra.mxu0 0.0
  %2388 = vmatprep.subr.mxu0 0.0
  %2389 = vmatpush1.msra.mxu0 0.0
  %2390 = vmatprep.mubr.f32.mxu0 0.0
  %2391 = vmatmul.mubr.f32.gmra.mrb[0].mxu0 %v2324
  %v2392 = vpop.f32.mrb[0].mxu0
  %v2393 = vadd.f32 0.0, %v2392
  %v2394 = vpop.f32.mrb[0].mxu0
  %2395 = vdwg.mxu0
  %s2396 = scalar_lea.vmem %s7, 64
  %v2397 = vld [vmem:[%s2396] sm:$0xff]
  %v2398 = vld [vmem:[%s2396 + $0x8] sm:$0xff]
  %v2399 = vld [vmem:[%s2396 + $0x10] sm:$0xff]
  %v2400 = vld [vmem:[%s2396 + $0x18] sm:$0xff]
  %v2402 = vsel %vm435, %v2393, 0
  %2404 = vmatprep.subr.mxu0 0.0
  %2405 = vmatpush1.msra.mxu0 %v2397
  %2406 = vmatprep.subr.mxu0 0.0
  %2407 = vmatpush1.msra.mxu0 %v2398
  %2408 = vmatprep.subr.mxu0 0.0
  %2409 = vmatpush1.msra.mxu0 %v2399
  %2410 = vmatprep.subr.mxu0 0.0
  %2411 = vmatpush1.msra.mxu0 %v2400
  %2412 = vmatprep.subr.mxu0 0.0
  %2413 = vmatpush1.msra.mxu0 0.0
  %2414 = vmatprep.subr.mxu0 0.0
  %2415 = vmatpush1.msra.mxu0 0.0
  %2416 = vmatprep.subr.mxu0 0.0
  %2417 = vmatpush1.msra.mxu0 0.0
  %2418 = vmatprep.subr.mxu0 0.0
  %2419 = vmatpush1.msra.mxu0 0.0
  %2420 = vmatprep.subr.mxu0 0.0
  %2421 = vmatpush1.msra.mxu0 0.0
  %2422 = vmatprep.subr.mxu0 0.0
  %2423 = vmatpush1.msra.mxu0 0.0
  %2424 = vmatprep.subr.mxu0 0.0
  %2425 = vmatpush1.msra.mxu0 0.0
  %2426 = vmatprep.subr.mxu0 0.0
  %2427 = vmatpush1.msra.mxu0 0.0
  %2428 = vmatprep.subr.mxu0 0.0
  %2429 = vmatpush1.msra.mxu0 0.0
  %2430 = vmatprep.subr.mxu0 0.0
  %2431 = vmatpush1.msra.mxu0 0.0
  %2432 = vmatprep.subr.mxu0 0.0
  %2433 = vmatpush1.msra.mxu0 0.0
  %2434 = vmatprep.subr.mxu0 0.0
  %2435 = vmatpush1.msra.mxu0 0.0
  %2436 = vmatprep.subr.mxu0 0.0
  %2437 = vmatpush1.msra.mxu0 0.0
  %2438 = vmatprep.subr.mxu0 0.0
  %2439 = vmatpush1.msra.mxu0 0.0
  %2440 = vmatprep.subr.mxu0 0.0
  %2441 = vmatpush1.msra.mxu0 0.0
  %2442 = vmatprep.subr.mxu0 0.0
  %2443 = vmatpush1.msra.mxu0 0.0
  %2444 = vmatprep.subr.mxu0 0.0
  %2445 = vmatpush1.msra.mxu0 0.0
  %2446 = vmatprep.subr.mxu0 0.0
  %2447 = vmatpush1.msra.mxu0 0.0
  %2448 = vmatprep.subr.mxu0 0.0
  %2449 = vmatpush1.msra.mxu0 0.0
  %2450 = vmatprep.subr.mxu0 0.0
  %2451 = vmatpush1.msra.mxu0 0.0
  %2452 = vmatprep.subr.mxu0 0.0
  %2453 = vmatpush1.msra.mxu0 0.0
  %2454 = vmatprep.subr.mxu0 0.0
  %2455 = vmatpush1.msra.mxu0 0.0
  %2456 = vmatprep.subr.mxu0 0.0
  %2457 = vmatpush1.msra.mxu0 0.0
  %2458 = vmatprep.subr.mxu0 0.0
  %2459 = vmatpush1.msra.mxu0 0.0
  %2460 = vmatprep.subr.mxu0 0.0
  %2461 = vmatpush1.msra.mxu0 0.0
  %2462 = vmatprep.subr.mxu0 0.0
  %2463 = vmatpush1.msra.mxu0 0.0
  %2464 = vmatprep.subr.mxu0 0.0
  %2465 = vmatpush1.msra.mxu0 0.0
  %2466 = vmatprep.subr.mxu0 0.0
  %2467 = vmatpush1.msra.mxu0 0.0
  %2468 = vmatprep.mubr.f32.mxu0 0.0
  %2469 = vmatmul.mubr.f32.gmra.mrb[0].mxu0 %v2402
  %v2470 = vpop.f32.mrb[0].mxu0
  %v2471 = vadd.f32 0.0, %v2470
  %v2472 = vpop.f32.mrb[0].mxu0
  %2473 = vdwg.mxu0
  %v2474 = vadd.f32 %v2318, %v2471
  %s2475 = scalar_lea.vmem %s6, 24
  %v2476 = vld [vmem:[%s2475] sm:$0xff]
  %v2478 = vsel %vm435, %v2476, 0
  %2480 = vmatprep.subr.mxu0 0.0
  %2481 = vmatpush1.msra.mxu0 %v2013
  %2482 = vmatprep.subr.mxu0 0.0
  %2483 = vmatpush1.msra.mxu0 %v2014
  %2484 = vmatprep.subr.mxu0 0.0
  %2485 = vmatpush1.msra.mxu0 %v2015
  %2486 = vmatprep.subr.mxu0 0.0
  %2487 = vmatpush1.msra.mxu0 %v2016
  %2488 = vmatprep.subr.mxu0 0.0
  %2489 = vmatpush1.msra.mxu0 0.0
  %2490 = vmatprep.subr.mxu0 0.0
  %2491 = vmatpush1.msra.mxu0 0.0
  %2492 = vmatprep.subr.mxu0 0.0
  %2493 = vmatpush1.msra.mxu0 0.0
  %2494 = vmatprep.subr.mxu0 0.0
  %2495 = vmatpush1.msra.mxu0 0.0
  %2496 = vmatprep.subr.mxu0 0.0
  %2497 = vmatpush1.msra.mxu0 0.0
  %2498 = vmatprep.subr.mxu0 0.0
  %2499 = vmatpush1.msra.mxu0 0.0
  %2500 = vmatprep.subr.mxu0 0.0
  %2501 = vmatpush1.msra.mxu0 0.0
  %2502 = vmatprep.subr.mxu0 0.0
  %2503 = vmatpush1.msra.mxu0 0.0
  %2504 = vmatprep.subr.mxu0 0.0
  %2505 = vmatpush1.msra.mxu0 0.0
  %2506 = vmatprep.subr.mxu0 0.0
  %2507 = vmatpush1.msra.mxu0 0.0
  %2508 = vmatprep.subr.mxu0 0.0
  %2509 = vmatpush1.msra.mxu0 0.0
  %2510 = vmatprep.subr.mxu0 0.0
  %2511 = vmatpush1.msra.mxu0 0.0
  %2512 = vmatprep.subr.mxu0 0.0
  %2513 = vmatpush1.msra.mxu0 0.0
  %2514 = vmatprep.subr.mxu0 0.0
  %2515 = vmatpush1.msra.mxu0 0.0
  %2516 = vmatprep.subr.mxu0 0.0
  %2517 = vmatpush1.msra.mxu0 0.0
  %2518 = vmatprep.subr.mxu0 0.0
  %2519 = vmatpush1.msra.mxu0 0.0
  %2520 = vmatprep.subr.mxu0 0.0
  %2521 = vmatpush1.msra.mxu0 0.0
  %2522 = vmatprep.subr.mxu0 0.0
  %2523 = vmatpush1.msra.mxu0 0.0
  %2524 = vmatprep.subr.mxu0 0.0
  %2525 = vmatpush1.msra.mxu0 0.0
  %2526 = vmatprep.subr.mxu0 0.0
  %2527 = vmatpush1.msra.mxu0 0.0
  %2528 = vmatprep.subr.mxu0 0.0
  %2529 = vmatpush1.msra.mxu0 0.0
  %2530 = vmatprep.subr.mxu0 0.0
  %2531 = vmatpush1.msra.mxu0 0.0
  %2532 = vmatprep.subr.mxu0 0.0
  %2533 = vmatpush1.msra.mxu0 0.0
  %2534 = vmatprep.subr.mxu0 0.0
  %2535 = vmatpush1.msra.mxu0 0.0
  %2536 = vmatprep.subr.mxu0 0.0
  %2537 = vmatpush1.msra.mxu0 0.0
  %2538 = vmatprep.subr.mxu0 0.0
  %2539 = vmatpush1.msra.mxu0 0.0
  %2540 = vmatprep.subr.mxu0 0.0
  %2541 = vmatpush1.msra.mxu0 0.0
  %2542 = vmatprep.subr.mxu0 0.0
  %2543 = vmatpush1.msra.mxu0 0.0
  %2544 = vmatprep.mubr.f32.mxu0 0.0
  %2545 = vmatmul.mubr.f32.gmra.mrb[0].mxu0 %v2478
  %v2546 = vpop.f32.mrb[0].mxu0
  %v2547 = vadd.f32 0.0, %v2546
  %v2548 = vpop.f32.mrb[0].mxu0
  %2549 = vdwg.mxu0
  %s2550 = scalar_lea.vmem %s7, 96
  %v2551 = vld [vmem:[%s2550] sm:$0xff]
  %v2552 = vld [vmem:[%s2550 + $0x8] sm:$0xff]
  %v2553 = vld [vmem:[%s2550 + $0x10] sm:$0xff]
  %v2554 = vld [vmem:[%s2550 + $0x18] sm:$0xff]
  %v2556 = vsel %vm435, %v2547, 0
  %2558 = vmatprep.subr.mxu0 0.0
  %2559 = vmatpush1.msra.mxu0 %v2551
  %2560 = vmatprep.subr.mxu0 0.0
  %2561 = vmatpush1.msra.mxu0 %v2552
  %2562 = vmatprep.subr.mxu0 0.0
  %2563 = vmatpush1.msra.mxu0 %v2553
  %2564 = vmatprep.subr.mxu0 0.0
  %2565 = vmatpush1.msra.mxu0 %v2554
  %2566 = vmatprep.subr.mxu0 0.0
  %2567 = vmatpush1.msra.mxu0 0.0
  %2568 = vmatprep.subr.mxu0 0.0
  %2569 = vmatpush1.msra.mxu0 0.0
  %2570 = vmatprep.subr.mxu0 0.0
  %2571 = vmatpush1.msra.mxu0 0.0
  %2572 = vmatprep.subr.mxu0 0.0
  %2573 = vmatpush1.msra.mxu0 0.0
  %2574 = vmatprep.subr.mxu0 0.0
  %2575 = vmatpush1.msra.mxu0 0.0
  %2576 = vmatprep.subr.mxu0 0.0
  %2577 = vmatpush1.msra.mxu0 0.0
  %2578 = vmatprep.subr.mxu0 0.0
  %2579 = vmatpush1.msra.mxu0 0.0
  %2580 = vmatprep.subr.mxu0 0.0
  %2581 = vmatpush1.msra.mxu0 0.0
  %2582 = vmatprep.subr.mxu0 0.0
  %2583 = vmatpush1.msra.mxu0 0.0
  %2584 = vmatprep.subr.mxu0 0.0
  %2585 = vmatpush1.msra.mxu0 0.0
  %2586 = vmatprep.subr.mxu0 0.0
  %2587 = vmatpush1.msra.mxu0 0.0
  %2588 = vmatprep.subr.mxu0 0.0
  %2589 = vmatpush1.msra.mxu0 0.0
  %2590 = vmatprep.subr.mxu0 0.0
  %2591 = vmatpush1.msra.mxu0 0.0
  %2592 = vmatprep.subr.mxu0 0.0
  %2593 = vmatpush1.msra.mxu0 0.0
  %2594 = vmatprep.subr.mxu0 0.0
  %2595 = vmatpush1.msra.mxu0 0.0
  %2596 = vmatprep.subr.mxu0 0.0
  %2597 = vmatpush1.msra.mxu0 0.0
  %2598 = vmatprep.subr.mxu0 0.0
  %2599 = vmatpush1.msra.mxu0 0.0
  %2600 = vmatprep.subr.mxu0 0.0
  %2601 = vmatpush1.msra.mxu0 0.0
  %2602 = vmatprep.subr.mxu0 0.0
  %2603 = vmatpush1.msra.mxu0 0.0
  %2604 = vmatprep.subr.mxu0 0.0
  %2605 = vmatpush1.msra.mxu0 0.0
  %2606 = vmatprep.subr.mxu0 0.0
  %2607 = vmatpush1.msra.mxu0 0.0
  %2608 = vmatprep.subr.mxu0 0.0
  %2609 = vmatpush1.msra.mxu0 0.0
  %2610 = vmatprep.subr.mxu0 0.0
  %2611 = vmatpush1.msra.mxu0 0.0
  %2612 = vmatprep.subr.mxu0 0.0
  %2613 = vmatpush1.msra.mxu0 0.0
  %2614 = vmatprep.subr.mxu0 0.0
  %2615 = vmatpush1.msra.mxu0 0.0
  %2616 = vmatprep.subr.mxu0 0.0
  %2617 = vmatpush1.msra.mxu0 0.0
  %2618 = vmatprep.subr.mxu0 0.0
  %2619 = vmatpush1.msra.mxu0 0.0
  %2620 = vmatprep.subr.mxu0 0.0
  %2621 = vmatpush1.msra.mxu0 0.0
  %2622 = vmatprep.mubr.f32.mxu0 0.0
  %2623 = vmatmul.mubr.f32.gmra.mrb[0].mxu0 %v2556
  %v2624 = vpop.f32.mrb[0].mxu0
  %v2625 = vadd.f32 0.0, %v2624
  %v2626 = vpop.f32.mrb[0].mxu0
  %2627 = vdwg.mxu0
  %v2628 = vadd.f32 %v2474, %v2625
  %s2629 = scalar_lea.vmem %s6, 32
  %v2630 = vld [vmem:[%s2629] sm:$0xff]
  %v2632 = vsel %vm435, %v2630, 0
  %2634 = vmatprep.subr.mxu0 0.0
  %2635 = vmatpush1.msra.mxu0 %v2013
  %2636 = vmatprep.subr.mxu0 0.0
  %2637 = vmatpush1.msra.mxu0 %v2014
  %2638 = vmatprep.subr.mxu0 0.0
  %2639 = vmatpush1.msra.mxu0 %v2015
  %2640 = vmatprep.subr.mxu0 0.0
  %2641 = vmatpush1.msra.mxu0 %v2016
  %2642 = vmatprep.subr.mxu0 0.0
  %2643 = vmatpush1.msra.mxu0 0.0
  %2644 = vmatprep.subr.mxu0 0.0
  %2645 = vmatpush1.msra.mxu0 0.0
  %2646 = vmatprep.subr.mxu0 0.0
  %2647 = vmatpush1.msra.mxu0 0.0
  %2648 = vmatprep.subr.mxu0 0.0
  %2649 = vmatpush1.msra.mxu0 0.0
  %2650 = vmatprep.subr.mxu0 0.0
  %2651 = vmatpush1.msra.mxu0 0.0
  %2652 = vmatprep.subr.mxu0 0.0
  %2653 = vmatpush1.msra.mxu0 0.0
  %2654 = vmatprep.subr.mxu0 0.0
  %2655 = vmatpush1.msra.mxu0 0.0
  %2656 = vmatprep.subr.mxu0 0.0
  %2657 = vmatpush1.msra.mxu0 0.0
  %2658 = vmatprep.subr.mxu0 0.0
  %2659 = vmatpush1.msra.mxu0 0.0
  %2660 = vmatprep.subr.mxu0 0.0
  %2661 = vmatpush1.msra.mxu0 0.0
  %2662 = vmatprep.subr.mxu0 0.0
  %2663 = vmatpush1.msra.mxu0 0.0
  %2664 = vmatprep.subr.mxu0 0.0
  %2665 = vmatpush1.msra.mxu0 0.0
  %2666 = vmatprep.subr.mxu0 0.0
  %2667 = vmatpush1.msra.mxu0 0.0
  %2668 = vmatprep.subr.mxu0 0.0
  %2669 = vmatpush1.msra.mxu0 0.0
  %2670 = vmatprep.subr.mxu0 0.0
  %2671 = vmatpush1.msra.mxu0 0.0
  %2672 = vmatprep.subr.mxu0 0.0
  %2673 = vmatpush1.msra.mxu0 0.0
  %2674 = vmatprep.subr.mxu0 0.0
  %2675 = vmatpush1.msra.mxu0 0.0
  %2676 = vmatprep.subr.mxu0 0.0
  %2677 = vmatpush1.msra.mxu0 0.0
  %2678 = vmatprep.subr.mxu0 0.0
  %2679 = vmatpush1.msra.mxu0 0.0
  %2680 = vmatprep.subr.mxu0 0.0
  %2681 = vmatpush1.msra.mxu0 0.0
  %2682 = vmatprep.subr.mxu0 0.0
  %2683 = vmatpush1.msra.mxu0 0.0
  %2684 = vmatprep.subr.mxu0 0.0
  %2685 = vmatpush1.msra.mxu0 0.0
  %2686 = vmatprep.subr.mxu0 0.0
  %2687 = vmatpush1.msra.mxu0 0.0
  %2688 = vmatprep.subr.mxu0 0.0
  %2689 = vmatpush1.msra.mxu0 0.0
  %2690 = vmatprep.subr.mxu0 0.0
  %2691 = vmatpush1.msra.mxu0 0.0
  %2692 = vmatprep.subr.mxu0 0.0
  %2693 = vmatpush1.msra.mxu0 0.0
  %2694 = vmatprep.subr.mxu0 0.0
  %2695 = vmatpush1.msra.mxu0 0.0
  %2696 = vmatprep.subr.mxu0 0.0
  %2697 = vmatpush1.msra.mxu0 0.0
  %2698 = vmatprep.mubr.f32.mxu0 0.0
  %2699 = vmatmul.mubr.f32.gmra.mrb[0].mxu0 %v2632
  %v2700 = vpop.f32.mrb[0].mxu0
  %v2701 = vadd.f32 0.0, %v2700
  %v2702 = vpop.f32.mrb[0].mxu0
  %2703 = vdwg.mxu0
  %s2704 = scalar_lea.vmem %s7, 128
  %v2705 = vld [vmem:[%s2704] sm:$0xff]
  %v2706 = vld [vmem:[%s2704 + $0x8] sm:$0xff]
  %v2707 = vld [vmem:[%s2704 + $0x10] sm:$0xff]
  %v2708 = vld [vmem:[%s2704 + $0x18] sm:$0xff]
  %v2710 = vsel %vm435, %v2701, 0
  %2712 = vmatprep.subr.mxu0 0.0
  %2713 = vmatpush1.msra.mxu0 %v2705
  %2714 = vmatprep.subr.mxu0 0.0
  %2715 = vmatpush1.msra.mxu0 %v2706
  %2716 = vmatprep.subr.mxu0 0.0
  %2717 = vmatpush1.msra.mxu0 %v2707
  %2718 = vmatprep.subr.mxu0 0.0
  %2719 = vmatpush1.msra.mxu0 %v2708
  %2720 = vmatprep.subr.mxu0 0.0
  %2721 = vmatpush1.msra.mxu0 0.0
  %2722 = vmatprep.subr.mxu0 0.0
  %2723 = vmatpush1.msra.mxu0 0.0
  %2724 = vmatprep.subr.mxu0 0.0
  %2725 = vmatpush1.msra.mxu0 0.0
  %2726 = vmatprep.subr.mxu0 0.0
  %2727 = vmatpush1.msra.mxu0 0.0
  %2728 = vmatprep.subr.mxu0 0.0
  %2729 = vmatpush1.msra.mxu0 0.0
  %2730 = vmatprep.subr.mxu0 0.0
  %2731 = vmatpush1.msra.mxu0 0.0
  %2732 = vmatprep.subr.mxu0 0.0
  %2733 = vmatpush1.msra.mxu0 0.0
  %2734 = vmatprep.subr.mxu0 0.0
  %2735 = vmatpush1.msra.mxu0 0.0
  %2736 = vmatprep.subr.mxu0 0.0
  %2737 = vmatpush1.msra.mxu0 0.0
  %2738 = vmatprep.subr.mxu0 0.0
  %2739 = vmatpush1.msra.mxu0 0.0
  %2740 = vmatprep.subr.mxu0 0.0
  %2741 = vmatpush1.msra.mxu0 0.0
  %2742 = vmatprep.subr.mxu0 0.0
  %2743 = vmatpush1.msra.mxu0 0.0
  %2744 = vmatprep.subr.mxu0 0.0
  %2745 = vmatpush1.msra.mxu0 0.0
  %2746 = vmatprep.subr.mxu0 0.0
  %2747 = vmatpush1.msra.mxu0 0.0
  %2748 = vmatprep.subr.mxu0 0.0
  %2749 = vmatpush1.msra.mxu0 0.0
  %2750 = vmatprep.subr.mxu0 0.0
  %2751 = vmatpush1.msra.mxu0 0.0
  %2752 = vmatprep.subr.mxu0 0.0
  %2753 = vmatpush1.msra.mxu0 0.0
  %2754 = vmatprep.subr.mxu0 0.0
  %2755 = vmatpush1.msra.mxu0 0.0
  %2756 = vmatprep.subr.mxu0 0.0
  %2757 = vmatpush1.msra.mxu0 0.0
  %2758 = vmatprep.subr.mxu0 0.0
  %2759 = vmatpush1.msra.mxu0 0.0
  %2760 = vmatprep.subr.mxu0 0.0
  %2761 = vmatpush1.msra.mxu0 0.0
  %2762 = vmatprep.subr.mxu0 0.0
  %2763 = vmatpush1.msra.mxu0 0.0
  %2764 = vmatprep.subr.mxu0 0.0
  %2765 = vmatpush1.msra.mxu0 0.0
  %2766 = vmatprep.subr.mxu0 0.0
  %2767 = vmatpush1.msra.mxu0 0.0
  %2768 = vmatprep.subr.mxu0 0.0
  %2769 = vmatpush1.msra.mxu0 0.0
  %2770 = vmatprep.subr.mxu0 0.0
  %2771 = vmatpush1.msra.mxu0 0.0
  %2772 = vmatprep.subr.mxu0 0.0
  %2773 = vmatpush1.msra.mxu0 0.0
  %2774 = vmatprep.subr.mxu0 0.0
  %2775 = vmatpush1.msra.mxu0 0.0
  %2776 = vmatprep.mubr.f32.mxu0 0.0
  %2777 = vmatmul.mubr.f32.gmra.mrb[0].mxu0 %v2710
  %v2778 = vpop.f32.mrb[0].mxu0
  %v2779 = vadd.f32 0.0, %v2778
  %v2780 = vpop.f32.mrb[0].mxu0
  %2781 = vdwg.mxu0
  %v2782 = vadd.f32 %v2628, %v2779
  %s2783 = scalar_lea.vmem %s6, 40
  %v2784 = vld [vmem:[%s2783] sm:$0xff]
  %v2786 = vsel %vm435, %v2784, 0
  %2788 = vmatprep.subr.mxu0 0.0
  %2789 = vmatpush1.msra.mxu0 %v2013
  %2790 = vmatprep.subr.mxu0 0.0
  %2791 = vmatpush1.msra.mxu0 %v2014
  %2792 = vmatprep.subr.mxu0 0.0
  %2793 = vmatpush1.msra.mxu0 %v2015
  %2794 = vmatprep.subr.mxu0 0.0
  %2795 = vmatpush1.msra.mxu0 %v2016
  %2796 = vmatprep.subr.mxu0 0.0
  %2797 = vmatpush1.msra.mxu0 0.0
  %2798 = vmatprep.subr.mxu0 0.0
  %2799 = vmatpush1.msra.mxu0 0.0
  %2800 = vmatprep.subr.mxu0 0.0
  %2801 = vmatpush1.msra.mxu0 0.0
  %2802 = vmatprep.subr.mxu0 0.0
  %2803 = vmatpush1.msra.mxu0 0.0
  %2804 = vmatprep.subr.mxu0 0.0
  %2805 = vmatpush1.msra.mxu0 0.0
  %2806 = vmatprep.subr.mxu0 0.0
  %2807 = vmatpush1.msra.mxu0 0.0
  %2808 = vmatprep.subr.mxu0 0.0
  %2809 = vmatpush1.msra.mxu0 0.0
  %2810 = vmatprep.subr.mxu0 0.0
  %2811 = vmatpush1.msra.mxu0 0.0
  %2812 = vmatprep.subr.mxu0 0.0
  %2813 = vmatpush1.msra.mxu0 0.0
  %2814 = vmatprep.subr.mxu0 0.0
  %2815 = vmatpush1.msra.mxu0 0.0
  %2816 = vmatprep.subr.mxu0 0.0
  %2817 = vmatpush1.msra.mxu0 0.0
  %2818 = vmatprep.subr.mxu0 0.0
  %2819 = vmatpush1.msra.mxu0 0.0
  %2820 = vmatprep.subr.mxu0 0.0
  %2821 = vmatpush1.msra.mxu0 0.0
  %2822 = vmatprep.subr.mxu0 0.0
  %2823 = vmatpush1.msra.mxu0 0.0
  %2824 = vmatprep.subr.mxu0 0.0
  %2825 = vmatpush1.msra.mxu0 0.0
  %2826 = vmatprep.subr.mxu0 0.0
  %2827 = vmatpush1.msra.mxu0 0.0
  %2828 = vmatprep.subr.mxu0 0.0
  %2829 = vmatpush1.msra.mxu0 0.0
  %2830 = vmatprep.subr.mxu0 0.0
  %2831 = vmatpush1.msra.mxu0 0.0
  %2832 = vmatprep.subr.mxu0 0.0
  %2833 = vmatpush1.msra.mxu0 0.0
  %2834 = vmatprep.subr.mxu0 0.0
  %2835 = vmatpush1.msra.mxu0 0.0
  %2836 = vmatprep.subr.mxu0 0.0
  %2837 = vmatpush1.msra.mxu0 0.0
  %2838 = vmatprep.subr.mxu0 0.0
  %2839 = vmatpush1.msra.mxu0 0.0
  %2840 = vmatprep.subr.mxu0 0.0
  %2841 = vmatpush1.msra.mxu0 0.0
  %2842 = vmatprep.subr.mxu0 0.0
  %2843 = vmatpush1.msra.mxu0 0.0
  %2844 = vmatprep.subr.mxu0 0.0
  %2845 = vmatpush1.msra.mxu0 0.0
  %2846 = vmatprep.subr.mxu0 0.0
  %2847 = vmatpush1.msra.mxu0 0.0
  %2848 = vmatprep.subr.mxu0 0.0
  %2849 = vmatpush1.msra.mxu0 0.0
  %2850 = vmatprep.subr.mxu0 0.0
  %2851 = vmatpush1.msra.mxu0 0.0
  %2852 = vmatprep.mubr.f32.mxu0 0.0
  %2853 = vmatmul.mubr.f32.gmra.mrb[0].mxu0 %v2786
  %v2854 = vpop.f32.mrb[0].mxu0
  %v2855 = vadd.f32 0.0, %v2854
  %v2856 = vpop.f32.mrb[0].mxu0
  %2857 = vdwg.mxu0
  %s2858 = scalar_lea.vmem %s7, 160
  %v2859 = vld [vmem:[%s2858] sm:$0xff]
  %v2860 = vld [vmem:[%s2858 + $0x8] sm:$0xff]
  %v2861 = vld [vmem:[%s2858 + $0x10] sm:$0xff]
  %v2862 = vld [vmem:[%s2858 + $0x18] sm:$0xff]
  %v2864 = vsel %vm435, %v2855, 0
  %2866 = vmatprep.subr.mxu0 0.0
  %2867 = vmatpush1.msra.mxu0 %v2859
  %2868 = vmatprep.subr.mxu0 0.0
  %2869 = vmatpush1.msra.mxu0 %v2860
  %2870 = vmatprep.subr.mxu0 0.0
  %2871 = vmatpush1.msra.mxu0 %v2861
  %2872 = vmatprep.subr.mxu0 0.0
  %2873 = vmatpush1.msra.mxu0 %v2862
  %2874 = vmatprep.subr.mxu0 0.0
  %2875 = vmatpush1.msra.mxu0 0.0
  %2876 = vmatprep.subr.mxu0 0.0
  %2877 = vmatpush1.msra.mxu0 0.0
  %2878 = vmatprep.subr.mxu0 0.0
  %2879 = vmatpush1.msra.mxu0 0.0
  %2880 = vmatprep.subr.mxu0 0.0
  %2881 = vmatpush1.msra.mxu0 0.0
  %2882 = vmatprep.subr.mxu0 0.0
  %2883 = vmatpush1.msra.mxu0 0.0
  %2884 = vmatprep.subr.mxu0 0.0
  %2885 = vmatpush1.msra.mxu0 0.0
  %2886 = vmatprep.subr.mxu0 0.0
  %2887 = vmatpush1.msra.mxu0 0.0
  %2888 = vmatprep.subr.mxu0 0.0
  %2889 = vmatpush1.msra.mxu0 0.0
  %2890 = vmatprep.subr.mxu0 0.0
  %2891 = vmatpush1.msra.mxu0 0.0
  %2892 = vmatprep.subr.mxu0 0.0
  %2893 = vmatpush1.msra.mxu0 0.0
  %2894 = vmatprep.subr.mxu0 0.0
  %2895 = vmatpush1.msra.mxu0 0.0
  %2896 = vmatprep.subr.mxu0 0.0
  %2897 = vmatpush1.msra.mxu0 0.0
  %2898 = vmatprep.subr.mxu0 0.0
  %2899 = vmatpush1.msra.mxu0 0.0
  %2900 = vmatprep.subr.mxu0 0.0
  %2901 = vmatpush1.msra.mxu0 0.0
  %2902 = vmatprep.subr.mxu0 0.0
  %2903 = vmatpush1.msra.mxu0 0.0
  %2904 = vmatprep.subr.mxu0 0.0
  %2905 = vmatpush1.msra.mxu0 0.0
  %2906 = vmatprep.subr.mxu0 0.0
  %2907 = vmatpush1.msra.mxu0 0.0
  %2908 = vmatprep.subr.mxu0 0.0
  %2909 = vmatpush1.msra.mxu0 0.0
  %2910 = vmatprep.subr.mxu0 0.0
  %2911 = vmatpush1.msra.mxu0 0.0
  %2912 = vmatprep.subr.mxu0 0.0
  %2913 = vmatpush1.msra.mxu0 0.0
  %2914 = vmatprep.subr.mxu0 0.0
  %2915 = vmatpush1.msra.mxu0 0.0
  %2916 = vmatprep.subr.mxu0 0.0
  %2917 = vmatpush1.msra.mxu0 0.0
  %2918 = vmatprep.subr.mxu0 0.0
  %2919 = vmatpush1.msra.mxu0 0.0
  %2920 = vmatprep.subr.mxu0 0.0
  %2921 = vmatpush1.msra.mxu0 0.0
  %2922 = vmatprep.subr.mxu0 0.0
  %2923 = vmatpush1.msra.mxu0 0.0
  %2924 = vmatprep.subr.mxu0 0.0
  %2925 = vmatpush1.msra.mxu0 0.0
  %2926 = vmatprep.subr.mxu0 0.0
  %2927 = vmatpush1.msra.mxu0 0.0
  %2928 = vmatprep.subr.mxu0 0.0
  %2929 = vmatpush1.msra.mxu0 0.0
  %2930 = vmatprep.mubr.f32.mxu0 0.0
  %2931 = vmatmul.mubr.f32.gmra.mrb[0].mxu0 %v2864
  %v2932 = vpop.f32.mrb[0].mxu0
  %v2933 = vadd.f32 0.0, %v2932
  %v2934 = vpop.f32.mrb[0].mxu0
  %2935 = vdwg.mxu0
  %v2936 = vadd.f32 %v2782, %v2933
  %s2937 = scalar_lea.vmem %s6, 48
  %v2938 = vld [vmem:[%s2937] sm:$0xff]
  %v2940 = vsel %vm435, %v2938, 0
  %2942 = vmatprep.subr.mxu0 0.0
  %2943 = vmatpush1.msra.mxu0 %v2013
  %2944 = vmatprep.subr.mxu0 0.0
  %2945 = vmatpush1.msra.mxu0 %v2014
  %2946 = vmatprep.subr.mxu0 0.0
  %2947 = vmatpush1.msra.mxu0 %v2015
  %2948 = vmatprep.subr.mxu0 0.0
  %2949 = vmatpush1.msra.mxu0 %v2016
  %2950 = vmatprep.subr.mxu0 0.0
  %2951 = vmatpush1.msra.mxu0 0.0
  %2952 = vmatprep.subr.mxu0 0.0
  %2953 = vmatpush1.msra.mxu0 0.0
  %2954 = vmatprep.subr.mxu0 0.0
  %2955 = vmatpush1.msra.mxu0 0.0
  %2956 = vmatprep.subr.mxu0 0.0
  %2957 = vmatpush1.msra.mxu0 0.0
  %2958 = vmatprep.subr.mxu0 0.0
  %2959 = vmatpush1.msra.mxu0 0.0
  %2960 = vmatprep.subr.mxu0 0.0
  %2961 = vmatpush1.msra.mxu0 0.0
  %2962 = vmatprep.subr.mxu0 0.0
  %2963 = vmatpush1.msra.mxu0 0.0
  %2964 = vmatprep.subr.mxu0 0.0
  %2965 = vmatpush1.msra.mxu0 0.0
  %2966 = vmatprep.subr.mxu0 0.0
  %2967 = vmatpush1.msra.mxu0 0.0
  %2968 = vmatprep.subr.mxu0 0.0
  %2969 = vmatpush1.msra.mxu0 0.0
  %2970 = vmatprep.subr.mxu0 0.0
  %2971 = vmatpush1.msra.mxu0 0.0
  %2972 = vmatprep.subr.mxu0 0.0
  %2973 = vmatpush1.msra.mxu0 0.0
  %2974 = vmatprep.subr.mxu0 0.0
  %2975 = vmatpush1.msra.mxu0 0.0
  %2976 = vmatprep.subr.mxu0 0.0
  %2977 = vmatpush1.msra.mxu0 0.0
  %2978 = vmatprep.subr.mxu0 0.0
  %2979 = vmatpush1.msra.mxu0 0.0
  %2980 = vmatprep.subr.mxu0 0.0
  %2981 = vmatpush1.msra.mxu0 0.0
  %2982 = vmatprep.subr.mxu0 0.0
  %2983 = vmatpush1.msra.mxu0 0.0
  %2984 = vmatprep.subr.mxu0 0.0
  %2985 = vmatpush1.msra.mxu0 0.0
  %2986 = vmatprep.subr.mxu0 0.0
  %2987 = vmatpush1.msra.mxu0 0.0
  %2988 = vmatprep.subr.mxu0 0.0
  %2989 = vmatpush1.msra.mxu0 0.0
  %2990 = vmatprep.subr.mxu0 0.0
  %2991 = vmatpush1.msra.mxu0 0.0
  %2992 = vmatprep.subr.mxu0 0.0
  %2993 = vmatpush1.msra.mxu0 0.0
  %2994 = vmatprep.subr.mxu0 0.0
  %2995 = vmatpush1.msra.mxu0 0.0
  %2996 = vmatprep.subr.mxu0 0.0
  %2997 = vmatpush1.msra.mxu0 0.0
  %2998 = vmatprep.subr.mxu0 0.0
  %2999 = vmatpush1.msra.mxu0 0.0
  %3000 = vmatprep.subr.mxu0 0.0
  %3001 = vmatpush1.msra.mxu0 0.0
  %3002 = vmatprep.subr.mxu0 0.0
  %3003 = vmatpush1.msra.mxu0 0.0
  %3004 = vmatprep.subr.mxu0 0.0
  %3005 = vmatpush1.msra.mxu0 0.0
  %3006 = vmatprep.mubr.f32.mxu0 0.0
  %3007 = vmatmul.mubr.f32.gmra.mrb[0].mxu0 %v2940
  %v3008 = vpop.f32.mrb[0].mxu0
  %v3009 = vadd.f32 0.0, %v3008
  %v3010 = vpop.f32.mrb[0].mxu0
  %3011 = vdwg.mxu0
  %s3012 = scalar_lea.vmem %s7, 192
  %v3013 = vld [vmem:[%s3012] sm:$0xff]
  %v3014 = vld [vmem:[%s3012 + $0x8] sm:$0xff]
  %v3015 = vld [vmem:[%s3012 + $0x10] sm:$0xff]
  %v3016 = vld [vmem:[%s3012 + $0x18] sm:$0xff]
  %v3018 = vsel %vm435, %v3009, 0
  %3020 = vmatprep.subr.mxu0 0.0
  %3021 = vmatpush1.msra.mxu0 %v3013
  %3022 = vmatprep.subr.mxu0 0.0
  %3023 = vmatpush1.msra.mxu0 %v3014
  %3024 = vmatprep.subr.mxu0 0.0
  %3025 = vmatpush1.msra.mxu0 %v3015
  %3026 = vmatprep.subr.mxu0 0.0
  %3027 = vmatpush1.msra.mxu0 %v3016
  %3028 = vmatprep.subr.mxu0 0.0
  %3029 = vmatpush1.msra.mxu0 0.0
  %3030 = vmatprep.subr.mxu0 0.0
  %3031 = vmatpush1.msra.mxu0 0.0
  %3032 = vmatprep.subr.mxu0 0.0
  %3033 = vmatpush1.msra.mxu0 0.0
  %3034 = vmatprep.subr.mxu0 0.0
  %3035 = vmatpush1.msra.mxu0 0.0
  %3036 = vmatprep.subr.mxu0 0.0
  %3037 = vmatpush1.msra.mxu0 0.0
  %3038 = vmatprep.subr.mxu0 0.0
  %3039 = vmatpush1.msra.mxu0 0.0
  %3040 = vmatprep.subr.mxu0 0.0
  %3041 = vmatpush1.msra.mxu0 0.0
  %3042 = vmatprep.subr.mxu0 0.0
  %3043 = vmatpush1.msra.mxu0 0.0
  %3044 = vmatprep.subr.mxu0 0.0
  %3045 = vmatpush1.msra.mxu0 0.0
  %3046 = vmatprep.subr.mxu0 0.0
  %3047 = vmatpush1.msra.mxu0 0.0
  %3048 = vmatprep.subr.mxu0 0.0
  %3049 = vmatpush1.msra.mxu0 0.0
  %3050 = vmatprep.subr.mxu0 0.0
  %3051 = vmatpush1.msra.mxu0 0.0
  %3052 = vmatprep.subr.mxu0 0.0
  %3053 = vmatpush1.msra.mxu0 0.0
  %3054 = vmatprep.subr.mxu0 0.0
  %3055 = vmatpush1.msra.mxu0 0.0
  %3056 = vmatprep.subr.mxu0 0.0
  %3057 = vmatpush1.msra.mxu0 0.0
  %3058 = vmatprep.subr.mxu0 0.0
  %3059 = vmatpush1.msra.mxu0 0.0
  %3060 = vmatprep.subr.mxu0 0.0
  %3061 = vmatpush1.msra.mxu0 0.0
  %3062 = vmatprep.subr.mxu0 0.0
  %3063 = vmatpush1.msra.mxu0 0.0
  %3064 = vmatprep.subr.mxu0 0.0
  %3065 = vmatpush1.msra.mxu0 0.0
  %3066 = vmatprep.subr.mxu0 0.0
  %3067 = vmatpush1.msra.mxu0 0.0
  %3068 = vmatprep.subr.mxu0 0.0
  %3069 = vmatpush1.msra.mxu0 0.0
  %3070 = vmatprep.subr.mxu0 0.0
  %3071 = vmatpush1.msra.mxu0 0.0
  %3072 = vmatprep.subr.mxu0 0.0
  %3073 = vmatpush1.msra.mxu0 0.0
  %3074 = vmatprep.subr.mxu0 0.0
  %3075 = vmatpush1.msra.mxu0 0.0
  %3076 = vmatprep.subr.mxu0 0.0
  %3077 = vmatpush1.msra.mxu0 0.0
  %3078 = vmatprep.subr.mxu0 0.0
  %3079 = vmatpush1.msra.mxu0 0.0
  %3080 = vmatprep.subr.mxu0 0.0
  %3081 = vmatpush1.msra.mxu0 0.0
  %3082 = vmatprep.subr.mxu0 0.0
  %3083 = vmatpush1.msra.mxu0 0.0
  %3084 = vmatprep.mubr.f32.mxu0 0.0
  %3085 = vmatmul.mubr.f32.gmra.mrb[0].mxu0 %v3018
  %v3086 = vpop.f32.mrb[0].mxu0
  %v3087 = vadd.f32 0.0, %v3086
  %v3088 = vpop.f32.mrb[0].mxu0
  %3089 = vdwg.mxu0
  %v3090 = vadd.f32 %v2936, %v3087
  %s3091 = scalar_lea.vmem %s6, 56
  %v3092 = vld [vmem:[%s3091] sm:$0xff]
  %v3094 = vsel %vm435, %v3092, 0
  %3096 = vmatprep.subr.mxu0 0.0
  %3097 = vmatpush1.msra.mxu0 %v2013
  %3098 = vmatprep.subr.mxu0 0.0
  %3099 = vmatpush1.msra.mxu0 %v2014
  %3100 = vmatprep.subr.mxu0 0.0
  %3101 = vmatpush1.msra.mxu0 %v2015
  %3102 = vmatprep.subr.mxu0 0.0
  %3103 = vmatpush1.msra.mxu0 %v2016
  %3104 = vmatprep.subr.mxu0 0.0
  %3105 = vmatpush1.msra.mxu0 0.0
  %3106 = vmatprep.subr.mxu0 0.0
  %3107 = vmatpush1.msra.mxu0 0.0
  %3108 = vmatprep.subr.mxu0 0.0
  %3109 = vmatpush1.msra.mxu0 0.0
  %3110 = vmatprep.subr.mxu0 0.0
  %3111 = vmatpush1.msra.mxu0 0.0
  %3112 = vmatprep.subr.mxu0 0.0
  %3113 = vmatpush1.msra.mxu0 0.0
  %3114 = vmatprep.subr.mxu0 0.0
  %3115 = vmatpush1.msra.mxu0 0.0
  %3116 = vmatprep.subr.mxu0 0.0
  %3117 = vmatpush1.msra.mxu0 0.0
  %3118 = vmatprep.subr.mxu0 0.0
  %3119 = vmatpush1.msra.mxu0 0.0
  %3120 = vmatprep.subr.mxu0 0.0
  %3121 = vmatpush1.msra.mxu0 0.0
  %3122 = vmatprep.subr.mxu0 0.0
  %3123 = vmatpush1.msra.mxu0 0.0
  %3124 = vmatprep.subr.mxu0 0.0
  %3125 = vmatpush1.msra.mxu0 0.0
  %3126 = vmatprep.subr.mxu0 0.0
  %3127 = vmatpush1.msra.mxu0 0.0
  %3128 = vmatprep.subr.mxu0 0.0
  %3129 = vmatpush1.msra.mxu0 0.0
  %3130 = vmatprep.subr.mxu0 0.0
  %3131 = vmatpush1.msra.mxu0 0.0
  %3132 = vmatprep.subr.mxu0 0.0
  %3133 = vmatpush1.msra.mxu0 0.0
  %3134 = vmatprep.subr.mxu0 0.0
  %3135 = vmatpush1.msra.mxu0 0.0
  %3136 = vmatprep.subr.mxu0 0.0
  %3137 = vmatpush1.msra.mxu0 0.0
  %3138 = vmatprep.subr.mxu0 0.0
  %3139 = vmatpush1.msra.mxu0 0.0
  %3140 = vmatprep.subr.mxu0 0.0
  %3141 = vmatpush1.msra.mxu0 0.0
  %3142 = vmatprep.subr.mxu0 0.0
  %3143 = vmatpush1.msra.mxu0 0.0
  %3144 = vmatprep.subr.mxu0 0.0
  %3145 = vmatpush1.msra.mxu0 0.0
  %3146 = vmatprep.subr.mxu0 0.0
  %3147 = vmatpush1.msra.mxu0 0.0
  %3148 = vmatprep.subr.mxu0 0.0
  %3149 = vmatpush1.msra.mxu0 0.0
  %3150 = vmatprep.subr.mxu0 0.0
  %3151 = vmatpush1.msra.mxu0 0.0
  %3152 = vmatprep.subr.mxu0 0.0
  %3153 = vmatpush1.msra.mxu0 0.0
  %3154 = vmatprep.subr.mxu0 0.0
  %3155 = vmatpush1.msra.mxu0 0.0
  %3156 = vmatprep.subr.mxu0 0.0
  %3157 = vmatpush1.msra.mxu0 0.0
  %3158 = vmatprep.subr.mxu0 0.0
  %3159 = vmatpush1.msra.mxu0 0.0
  %3160 = vmatprep.mubr.f32.mxu0 0.0
  %3161 = vmatmul.mubr.f32.gmra.mrb[0].mxu0 %v3094
  %v3162 = vpop.f32.mrb[0].mxu0
  %v3163 = vadd.f32 0.0, %v3162
  %v3164 = vpop.f32.mrb[0].mxu0
  %3165 = vdwg.mxu0
  %s3166 = scalar_lea.vmem %s7, 224
  %v3167 = vld [vmem:[%s3166] sm:$0xff]
  %v3168 = vld [vmem:[%s3166 + $0x8] sm:$0xff]
  %v3169 = vld [vmem:[%s3166 + $0x10] sm:$0xff]
  %v3170 = vld [vmem:[%s3166 + $0x18] sm:$0xff]
  %v3172 = vsel %vm435, %v3163, 0
  %3174 = vmatprep.subr.mxu0 0.0
  %3175 = vmatpush1.msra.mxu0 %v3167
  %3176 = vmatprep.subr.mxu0 0.0
  %3177 = vmatpush1.msra.mxu0 %v3168
  %3178 = vmatprep.subr.mxu0 0.0
  %3179 = vmatpush1.msra.mxu0 %v3169
  %3180 = vmatprep.subr.mxu0 0.0
  %3181 = vmatpush1.msra.mxu0 %v3170
  %3182 = vmatprep.subr.mxu0 0.0
  %3183 = vmatpush1.msra.mxu0 0.0
  %3184 = vmatprep.subr.mxu0 0.0
  %3185 = vmatpush1.msra.mxu0 0.0
  %3186 = vmatprep.subr.mxu0 0.0
  %3187 = vmatpush1.msra.mxu0 0.0
  %3188 = vmatprep.subr.mxu0 0.0
  %3189 = vmatpush1.msra.mxu0 0.0
  %3190 = vmatprep.subr.mxu0 0.0
  %3191 = vmatpush1.msra.mxu0 0.0
  %3192 = vmatprep.subr.mxu0 0.0
  %3193 = vmatpush1.msra.mxu0 0.0
  %3194 = vmatprep.subr.mxu0 0.0
  %3195 = vmatpush1.msra.mxu0 0.0
  %3196 = vmatprep.subr.mxu0 0.0
  %3197 = vmatpush1.msra.mxu0 0.0
  %3198 = vmatprep.subr.mxu0 0.0
  %3199 = vmatpush1.msra.mxu0 0.0
  %3200 = vmatprep.subr.mxu0 0.0
  %3201 = vmatpush1.msra.mxu0 0.0
  %3202 = vmatprep.subr.mxu0 0.0
  %3203 = vmatpush1.msra.mxu0 0.0
  %3204 = vmatprep.subr.mxu0 0.0
  %3205 = vmatpush1.msra.mxu0 0.0
  %3206 = vmatprep.subr.mxu0 0.0
  %3207 = vmatpush1.msra.mxu0 0.0
  %3208 = vmatprep.subr.mxu0 0.0
  %3209 = vmatpush1.msra.mxu0 0.0
  %3210 = vmatprep.subr.mxu0 0.0
  %3211 = vmatpush1.msra.mxu0 0.0
  %3212 = vmatprep.subr.mxu0 0.0
  %3213 = vmatpush1.msra.mxu0 0.0
  %3214 = vmatprep.subr.mxu0 0.0
  %3215 = vmatpush1.msra.mxu0 0.0
  %3216 = vmatprep.subr.mxu0 0.0
  %3217 = vmatpush1.msra.mxu0 0.0
  %3218 = vmatprep.subr.mxu0 0.0
  %3219 = vmatpush1.msra.mxu0 0.0
  %3220 = vmatprep.subr.mxu0 0.0
  %3221 = vmatpush1.msra.mxu0 0.0
  %3222 = vmatprep.subr.mxu0 0.0
  %3223 = vmatpush1.msra.mxu0 0.0
  %3224 = vmatprep.subr.mxu0 0.0
  %3225 = vmatpush1.msra.mxu0 0.0
  %3226 = vmatprep.subr.mxu0 0.0
  %3227 = vmatpush1.msra.mxu0 0.0
  %3228 = vmatprep.subr.mxu0 0.0
  %3229 = vmatpush1.msra.mxu0 0.0
  %3230 = vmatprep.subr.mxu0 0.0
  %3231 = vmatpush1.msra.mxu0 0.0
  %3232 = vmatprep.subr.mxu0 0.0
  %3233 = vmatpush1.msra.mxu0 0.0
  %3234 = vmatprep.subr.mxu0 0.0
  %3235 = vmatpush1.msra.mxu0 0.0
  %3236 = vmatprep.subr.mxu0 0.0
  %3237 = vmatpush1.msra.mxu0 0.0
  %3238 = vmatprep.mubr.f32.mxu0 0.0
  %3239 = vmatmul.mubr.f32.gmra.mrb[0].mxu0 %v3172
  %v3240 = vpop.f32.mrb[0].mxu0
  %v3241 = vadd.f32 0.0, %v3240
  %v3242 = vpop.f32.mrb[0].mxu0
  %3243 = vdwg.mxu0
  %v3244 = vadd.f32 %v3090, %v3241
  %s3245 = scalar_lea.vmem %s6, 64
  %v3246 = vld [vmem:[%s3245] sm:$0xff]
  %v3248 = vsel %vm435, %v3246, 0
  %3250 = vmatprep.subr.mxu0 0.0
  %3251 = vmatpush1.msra.mxu0 %v2013
  %3252 = vmatprep.subr.mxu0 0.0
  %3253 = vmatpush1.msra.mxu0 %v2014
  %3254 = vmatprep.subr.mxu0 0.0
  %3255 = vmatpush1.msra.mxu0 %v2015
  %3256 = vmatprep.subr.mxu0 0.0
  %3257 = vmatpush1.msra.mxu0 %v2016
  %3258 = vmatprep.subr.mxu0 0.0
  %3259 = vmatpush1.msra.mxu0 0.0
  %3260 = vmatprep.subr.mxu0 0.0
  %3261 = vmatpush1.msra.mxu0 0.0
  %3262 = vmatprep.subr.mxu0 0.0
  %3263 = vmatpush1.msra.mxu0 0.0
  %3264 = vmatprep.subr.mxu0 0.0
  %3265 = vmatpush1.msra.mxu0 0.0
  %3266 = vmatprep.subr.mxu0 0.0
  %3267 = vmatpush1.msra.mxu0 0.0
  %3268 = vmatprep.subr.mxu0 0.0
  %3269 = vmatpush1.msra.mxu0 0.0
  %3270 = vmatprep.subr.mxu0 0.0
  %3271 = vmatpush1.msra.mxu0 0.0
  %3272 = vmatprep.subr.mxu0 0.0
  %3273 = vmatpush1.msra.mxu0 0.0
  %3274 = vmatprep.subr.mxu0 0.0
  %3275 = vmatpush1.msra.mxu0 0.0
  %3276 = vmatprep.subr.mxu0 0.0
  %3277 = vmatpush1.msra.mxu0 0.0
  %3278 = vmatprep.subr.mxu0 0.0
  %3279 = vmatpush1.msra.mxu0 0.0
  %3280 = vmatprep.subr.mxu0 0.0
  %3281 = vmatpush1.msra.mxu0 0.0
  %3282 = vmatprep.subr.mxu0 0.0
  %3283 = vmatpush1.msra.mxu0 0.0
  %3284 = vmatprep.subr.mxu0 0.0
  %3285 = vmatpush1.msra.mxu0 0.0
  %3286 = vmatprep.subr.mxu0 0.0
  %3287 = vmatpush1.msra.mxu0 0.0
  %3288 = vmatprep.subr.mxu0 0.0
  %3289 = vmatpush1.msra.mxu0 0.0
  %3290 = vmatprep.subr.mxu0 0.0
  %3291 = vmatpush1.msra.mxu0 0.0
  %3292 = vmatprep.subr.mxu0 0.0
  %3293 = vmatpush1.msra.mxu0 0.0
  %3294 = vmatprep.subr.mxu0 0.0
  %3295 = vmatpush1.msra.mxu0 0.0
  %3296 = vmatprep.subr.mxu0 0.0
  %3297 = vmatpush1.msra.mxu0 0.0
  %3298 = vmatprep.subr.mxu0 0.0
  %3299 = vmatpush1.msra.mxu0 0.0
  %3300 = vmatprep.subr.mxu0 0.0
  %3301 = vmatpush1.msra.mxu0 0.0
  %3302 = vmatprep.subr.mxu0 0.0
  %3303 = vmatpush1.msra.mxu0 0.0
  %3304 = vmatprep.subr.mxu0 0.0
  %3305 = vmatpush1.msra.mxu0 0.0
  %3306 = vmatprep.subr.mxu0 0.0
  %3307 = vmatpush1.msra.mxu0 0.0
  %3308 = vmatprep.subr.mxu0 0.0
  %3309 = vmatpush1.msra.mxu0 0.0
  %3310 = vmatprep.subr.mxu0 0.0
  %3311 = vmatpush1.msra.mxu0 0.0
  %3312 = vmatprep.subr.mxu0 0.0
  %3313 = vmatpush1.msra.mxu0 0.0
  %3314 = vmatprep.mubr.f32.mxu0 0.0
  %3315 = vmatmul.mubr.f32.gmra.mrb[0].mxu0 %v3248
  %v3316 = vpop.f32.mrb[0].mxu0
  %v3317 = vadd.f32 0.0, %v3316
  %v3318 = vpop.f32.mrb[0].mxu0
  %3319 = vdwg.mxu0
  %s3320 = scalar_lea.vmem %s7, 256
  %v3321 = vld [vmem:[%s3320] sm:$0xff]
  %v3322 = vld [vmem:[%s3320 + $0x8] sm:$0xff]
  %v3323 = vld [vmem:[%s3320 + $0x10] sm:$0xff]
  %v3324 = vld [vmem:[%s3320 + $0x18] sm:$0xff]
  %v3326 = vsel %vm435, %v3317, 0
  %3328 = vmatprep.subr.mxu0 0.0
  %3329 = vmatpush1.msra.mxu0 %v3321
  %3330 = vmatprep.subr.mxu0 0.0
  %3331 = vmatpush1.msra.mxu0 %v3322
  %3332 = vmatprep.subr.mxu0 0.0
  %3333 = vmatpush1.msra.mxu0 %v3323
  %3334 = vmatprep.subr.mxu0 0.0
  %3335 = vmatpush1.msra.mxu0 %v3324
  %3336 = vmatprep.subr.mxu0 0.0
  %3337 = vmatpush1.msra.mxu0 0.0
  %3338 = vmatprep.subr.mxu0 0.0
  %3339 = vmatpush1.msra.mxu0 0.0
  %3340 = vmatprep.subr.mxu0 0.0
  %3341 = vmatpush1.msra.mxu0 0.0
  %3342 = vmatprep.subr.mxu0 0.0
  %3343 = vmatpush1.msra.mxu0 0.0
  %3344 = vmatprep.subr.mxu0 0.0
  %3345 = vmatpush1.msra.mxu0 0.0
  %3346 = vmatprep.subr.mxu0 0.0
  %3347 = vmatpush1.msra.mxu0 0.0
  %3348 = vmatprep.subr.mxu0 0.0
  %3349 = vmatpush1.msra.mxu0 0.0
  %3350 = vmatprep.subr.mxu0 0.0
  %3351 = vmatpush1.msra.mxu0 0.0
  %3352 = vmatprep.subr.mxu0 0.0
  %3353 = vmatpush1.msra.mxu0 0.0
  %3354 = vmatprep.subr.mxu0 0.0
  %3355 = vmatpush1.msra.mxu0 0.0
  %3356 = vmatprep.subr.mxu0 0.0
  %3357 = vmatpush1.msra.mxu0 0.0
  %3358 = vmatprep.subr.mxu0 0.0
  %3359 = vmatpush1.msra.mxu0 0.0
  %3360 = vmatprep.subr.mxu0 0.0
  %3361 = vmatpush1.msra.mxu0 0.0
  %3362 = vmatprep.subr.mxu0 0.0
  %3363 = vmatpush1.msra.mxu0 0.0
  %3364 = vmatprep.subr.mxu0 0.0
  %3365 = vmatpush1.msra.mxu0 0.0
  %3366 = vmatprep.subr.mxu0 0.0
  %3367 = vmatpush1.msra.mxu0 0.0
  %3368 = vmatprep.subr.mxu0 0.0
  %3369 = vmatpush1.msra.mxu0 0.0
  %3370 = vmatprep.subr.mxu0 0.0
  %3371 = vmatpush1.msra.mxu0 0.0
  %3372 = vmatprep.subr.mxu0 0.0
  %3373 = vmatpush1.msra.mxu0 0.0
  %3374 = vmatprep.subr.mxu0 0.0
  %3375 = vmatpush1.msra.mxu0 0.0
  %3376 = vmatprep.subr.mxu0 0.0
  %3377 = vmatpush1.msra.mxu0 0.0
  %3378 = vmatprep.subr.mxu0 0.0
  %3379 = vmatpush1.msra.mxu0 0.0
  %3380 = vmatprep.subr.mxu0 0.0
  %3381 = vmatpush1.msra.mxu0 0.0
  %3382 = vmatprep.subr.mxu0 0.0
  %3383 = vmatpush1.msra.mxu0 0.0
  %3384 = vmatprep.subr.mxu0 0.0
  %3385 = vmatpush1.msra.mxu0 0.0
  %3386 = vmatprep.subr.mxu0 0.0
  %3387 = vmatpush1.msra.mxu0 0.0
  %3388 = vmatprep.subr.mxu0 0.0
  %3389 = vmatpush1.msra.mxu0 0.0
  %3390 = vmatprep.subr.mxu0 0.0
  %3391 = vmatpush1.msra.mxu0 0.0
  %3392 = vmatprep.mubr.f32.mxu0 0.0
  %3393 = vmatmul.mubr.f32.gmra.mrb[0].mxu0 %v3326
  %v3394 = vpop.f32.mrb[0].mxu0
  %v3395 = vadd.f32 0.0, %v3394
  %v3396 = vpop.f32.mrb[0].mxu0
  %3397 = vdwg.mxu0
  %v3398 = vadd.f32 %v3244, %v3395
  %v3399 = vld [vmem:[%s8] sm:$0x1]
  %v3401 = vlaneseq
  %v3402 = vshrl.u32 %v3401, 7
  %v3403 = vsub.s32 0, %v3402
  %v3404 = vrot.slane %v3399, %v3403
  %v3406 = vadd.f32 %v3398, %v3404
  %v3407 = vmax.f32 %v3406, 0.0
  %v3408 = vld [vmem:[%s9] sm:$0xff]
  %vm3409 = vcmask 64512
  %v3411 = vsel %vm3409, %v3408, 0
  %3413 = vmatprep.subr.mxu0 0.0
  %3414 = vmatpush1.msra.mxu0 %v3407
  %3415 = vmatprep.subr.mxu0 0.0
  %3416 = vmatpush1.msra.mxu0 0.0
  %3417 = vmatprep.subr.mxu0 0.0
  %3418 = vmatpush1.msra.mxu0 0.0
  %3419 = vmatprep.subr.mxu0 0.0
  %3420 = vmatpush1.msra.mxu0 0.0
  %3421 = vmatprep.subr.mxu0 0.0
  %3422 = vmatpush1.msra.mxu0 0.0
  %3423 = vmatprep.subr.mxu0 0.0
  %3424 = vmatpush1.msra.mxu0 0.0
  %3425 = vmatprep.subr.mxu0 0.0
  %3426 = vmatpush1.msra.mxu0 0.0
  %3427 = vmatprep.subr.mxu0 0.0
  %3428 = vmatpush1.msra.mxu0 0.0
  %3429 = vmatprep.subr.mxu0 0.0
  %3430 = vmatpush1.msra.mxu0 0.0
  %3431 = vmatprep.subr.mxu0 0.0
  %3432 = vmatpush1.msra.mxu0 0.0
  %3433 = vmatprep.subr.mxu0 0.0
  %3434 = vmatpush1.msra.mxu0 0.0
  %3435 = vmatprep.subr.mxu0 0.0
  %3436 = vmatpush1.msra.mxu0 0.0
  %3437 = vmatprep.subr.mxu0 0.0
  %3438 = vmatpush1.msra.mxu0 0.0
  %3439 = vmatprep.subr.mxu0 0.0
  %3440 = vmatpush1.msra.mxu0 0.0
  %3441 = vmatprep.subr.mxu0 0.0
  %3442 = vmatpush1.msra.mxu0 0.0
  %3443 = vmatprep.subr.mxu0 0.0
  %3444 = vmatpush1.msra.mxu0 0.0
  %3445 = vmatprep.subr.mxu0 0.0
  %3446 = vmatpush1.msra.mxu0 0.0
  %3447 = vmatprep.subr.mxu0 0.0
  %3448 = vmatpush1.msra.mxu0 0.0
  %3449 = vmatprep.subr.mxu0 0.0
  %3450 = vmatpush1.msra.mxu0 0.0
  %3451 = vmatprep.subr.mxu0 0.0
  %3452 = vmatpush1.msra.mxu0 0.0
  %3453 = vmatprep.subr.mxu0 0.0
  %3454 = vmatpush1.msra.mxu0 0.0
  %3455 = vmatprep.subr.mxu0 0.0
  %3456 = vmatpush1.msra.mxu0 0.0
  %3457 = vmatprep.subr.mxu0 0.0
  %3458 = vmatpush1.msra.mxu0 0.0
  %3459 = vmatprep.subr.mxu0 0.0
  %3460 = vmatpush1.msra.mxu0 0.0
  %3461 = vmatprep.subr.mxu0 0.0
  %3462 = vmatpush1.msra.mxu0 0.0
  %3463 = vmatprep.subr.mxu0 0.0
  %3464 = vmatpush1.msra.mxu0 0.0
  %3465 = vmatprep.subr.mxu0 0.0
  %3466 = vmatpush1.msra.mxu0 0.0
  %3467 = vmatprep.subr.mxu0 0.0
  %3468 = vmatpush1.msra.mxu0 0.0
  %3469 = vmatprep.subr.mxu0 0.0
  %3470 = vmatpush1.msra.mxu0 0.0
  %3471 = vmatprep.subr.mxu0 0.0
  %3472 = vmatpush1.msra.mxu0 0.0
  %3473 = vmatprep.subr.mxu0 0.0
  %3474 = vmatpush1.msra.mxu0 0.0
  %3475 = vmatprep.subr.mxu0 0.0
  %3476 = vmatpush1.msra.mxu0 0.0
  %3477 = vmatprep.mubr.f32.mxu0 0.0
  %3478 = vmatmul.mubr.f32.gmra.mrb[0].mxu0 %v3411
  %v3479 = vpop.f32.mrb[0].mxu0
  %v3480 = vadd.f32 0.0, %v3479
  %v3481 = vpop.f32.mrb[0].mxu0
  %3482 = vdwg.mxu0
  %v3483 = vld [vmem:[%s10] sm:$0xff]
  %v3484 = vld [vmem:[%s10 + $0x8] sm:$0xff]
  %v3485 = vld [vmem:[%s10 + $0x10] sm:$0xff]
  %v3486 = vld [vmem:[%s10 + $0x18] sm:$0xff]
  %s3487 = scalar_lea.vmem %s9, 8
  %v3488 = vld [vmem:[%s3487] sm:$0xff]
  %v3490 = vsel %vm3409, %v3488, 0
  %3492 = vmatprep.subr.mxu0 0.0
  %3493 = vmatpush1.msra.mxu0 %v3407
  %3494 = vmatprep.subr.mxu0 0.0
  %3495 = vmatpush1.msra.mxu0 0.0
  %3496 = vmatprep.subr.mxu0 0.0
  %3497 = vmatpush1.msra.mxu0 0.0
  %3498 = vmatprep.subr.mxu0 0.0
  %3499 = vmatpush1.msra.mxu0 0.0
  %3500 = vmatprep.subr.mxu0 0.0
  %3501 = vmatpush1.msra.mxu0 0.0
  %3502 = vmatprep.subr.mxu0 0.0
  %3503 = vmatpush1.msra.mxu0 0.0
  %3504 = vmatprep.subr.mxu0 0.0
  %3505 = vmatpush1.msra.mxu0 0.0
  %3506 = vmatprep.subr.mxu0 0.0
  %3507 = vmatpush1.msra.mxu0 0.0
  %3508 = vmatprep.subr.mxu0 0.0
  %3509 = vmatpush1.msra.mxu0 0.0
  %3510 = vmatprep.subr.mxu0 0.0
  %3511 = vmatpush1.msra.mxu0 0.0
  %3512 = vmatprep.subr.mxu0 0.0
  %3513 = vmatpush1.msra.mxu0 0.0
  %3514 = vmatprep.subr.mxu0 0.0
  %3515 = vmatpush1.msra.mxu0 0.0
  %3516 = vmatprep.subr.mxu0 0.0
  %3517 = vmatpush1.msra.mxu0 0.0
  %3518 = vmatprep.subr.mxu0 0.0
  %3519 = vmatpush1.msra.mxu0 0.0
  %3520 = vmatprep.subr.mxu0 0.0
  %3521 = vmatpush1.msra.mxu0 0.0
  %3522 = vmatprep.subr.mxu0 0.0
  %3523 = vmatpush1.msra.mxu0 0.0
  %3524 = vmatprep.subr.mxu0 0.0
  %3525 = vmatpush1.msra.mxu0 0.0
  %3526 = vmatprep.subr.mxu0 0.0
  %3527 = vmatpush1.msra.mxu0 0.0
  %3528 = vmatprep.subr.mxu0 0.0
  %3529 = vmatpush1.msra.mxu0 0.0
  %3530 = vmatprep.subr.mxu0 0.0
  %3531 = vmatpush1.msra.mxu0 0.0
  %3532 = vmatprep.subr.mxu0 0.0
  %3533 = vmatpush1.msra.mxu0 0.0
  %3534 = vmatprep.subr.mxu0 0.0
  %3535 = vmatpush1.msra.mxu0 0.0
  %3536 = vmatprep.subr.mxu0 0.0
  %3537 = vmatpush1.msra.mxu0 0.0
  %3538 = vmatprep.subr.mxu0 0.0
  %3539 = vmatpush1.msra.mxu0 0.0
  %3540 = vmatprep.subr.mxu0 0.0
  %3541 = vmatpush1.msra.mxu0 0.0
  %3542 = vmatprep.subr.mxu0 0.0
  %3543 = vmatpush1.msra.mxu0 0.0
  %3544 = vmatprep.subr.mxu0 0.0
  %3545 = vmatpush1.msra.mxu0 0.0
  %3546 = vmatprep.subr.mxu0 0.0
  %3547 = vmatpush1.msra.mxu0 0.0
  %3548 = vmatprep.subr.mxu0 0.0
  %3549 = vmatpush1.msra.mxu0 0.0
  %3550 = vmatprep.subr.mxu0 0.0
  %3551 = vmatpush1.msra.mxu0 0.0
  %3552 = vmatprep.subr.mxu0 0.0
  %3553 = vmatpush1.msra.mxu0 0.0
  %3554 = vmatprep.subr.mxu0 0.0
  %3555 = vmatpush1.msra.mxu0 0.0
  %3556 = vmatprep.mubr.f32.mxu0 0.0
  %3557 = vmatmul.mubr.f32.gmra.mrb[0].mxu0 %v3490
  %v3558 = vpop.f32.mrb[0].mxu0
  %v3559 = vadd.f32 0.0, %v3558
  %v3560 = vpop.f32.mrb[0].mxu0
  %3561 = vdwg.mxu0
  %s3562 = scalar_lea.vmem %s10, 32
  %v3563 = vld [vmem:[%s3562] sm:$0xff]
  %v3564 = vld [vmem:[%s3562 + $0x8] sm:$0xff]
  %v3565 = vld [vmem:[%s3562 + $0x10] sm:$0xff]
  %v3566 = vld [vmem:[%s3562 + $0x18] sm:$0xff]
  %v3568 = vsel %vm435, %v3559, 0
  %3570 = vmatprep.subr.mxu0 0.0
  %3571 = vmatpush1.msra.mxu0 %v3563
  %3572 = vmatprep.subr.mxu0 0.0
  %3573 = vmatpush1.msra.mxu0 %v3564
  %3574 = vmatprep.subr.mxu0 0.0
  %3575 = vmatpush1.msra.mxu0 %v3565
  %3576 = vmatprep.subr.mxu0 0.0
  %3577 = vmatpush1.msra.mxu0 %v3566
  %3578 = vmatprep.subr.mxu0 0.0
  %3579 = vmatpush1.msra.mxu0 0.0
  %3580 = vmatprep.subr.mxu0 0.0
  %3581 = vmatpush1.msra.mxu0 0.0
  %3582 = vmatprep.subr.mxu0 0.0
  %3583 = vmatpush1.msra.mxu0 0.0
  %3584 = vmatprep.subr.mxu0 0.0
  %3585 = vmatpush1.msra.mxu0 0.0
  %3586 = vmatprep.subr.mxu0 0.0
  %3587 = vmatpush1.msra.mxu0 0.0
  %3588 = vmatprep.subr.mxu0 0.0
  %3589 = vmatpush1.msra.mxu0 0.0
  %3590 = vmatprep.subr.mxu0 0.0
  %3591 = vmatpush1.msra.mxu0 0.0
  %3592 = vmatprep.subr.mxu0 0.0
  %3593 = vmatpush1.msra.mxu0 0.0
  %3594 = vmatprep.subr.mxu0 0.0
  %3595 = vmatpush1.msra.mxu0 0.0
  %3596 = vmatprep.subr.mxu0 0.0
  %3597 = vmatpush1.msra.mxu0 0.0
  %3598 = vmatprep.subr.mxu0 0.0
  %3599 = vmatpush1.msra.mxu0 0.0
  %3600 = vmatprep.subr.mxu0 0.0
  %3601 = vmatpush1.msra.mxu0 0.0
  %3602 = vmatprep.subr.mxu0 0.0
  %3603 = vmatpush1.msra.mxu0 0.0
  %3604 = vmatprep.subr.mxu0 0.0
  %3605 = vmatpush1.msra.mxu0 0.0
  %3606 = vmatprep.subr.mxu0 0.0
  %3607 = vmatpush1.msra.mxu0 0.0
  %3608 = vmatprep.subr.mxu0 0.0
  %3609 = vmatpush1.msra.mxu0 0.0
  %3610 = vmatprep.subr.mxu0 0.0
  %3611 = vmatpush1.msra.mxu0 0.0
  %3612 = vmatprep.subr.mxu0 0.0
  %3613 = vmatpush1.msra.mxu0 0.0
  %3614 = vmatprep.subr.mxu0 0.0
  %3615 = vmatpush1.msra.mxu0 0.0
  %3616 = vmatprep.subr.mxu0 0.0
  %3617 = vmatpush1.msra.mxu0 0.0
  %3618 = vmatprep.subr.mxu0 0.0
  %3619 = vmatpush1.msra.mxu0 0.0
  %3620 = vmatprep.subr.mxu0 0.0
  %3621 = vmatpush1.msra.mxu0 0.0
  %3622 = vmatprep.subr.mxu0 0.0
  %3623 = vmatpush1.msra.mxu0 0.0
  %3624 = vmatprep.subr.mxu0 0.0
  %3625 = vmatpush1.msra.mxu0 0.0
  %3626 = vmatprep.subr.mxu0 0.0
  %3627 = vmatpush1.msra.mxu0 0.0
  %3628 = vmatprep.subr.mxu0 0.0
  %3629 = vmatpush1.msra.mxu0 0.0
  %3630 = vmatprep.subr.mxu0 0.0
  %3631 = vmatpush1.msra.mxu0 0.0
  %3632 = vmatprep.subr.mxu0 0.0
  %3633 = vmatpush1.msra.mxu0 0.0
  %3634 = vmatprep.mubr.f32.mxu0 0.0
  %3635 = vmatmul.mubr.f32.gmra.mrb[0].mxu0 %v3568
  %v3636 = vpop.f32.mrb[0].mxu0
  %v3637 = vadd.f32 0.0, %v3636
  %v3638 = vpop.f32.mrb[0].mxu0
  %3639 = vdwg.mxu0
  %v3641 = vsel %vm435, %v3480, 0
  %3643 = vmatprep.subr.mxu0 0.0
  %3644 = vmatpush1.msra.mxu0 %v3483
  %3645 = vmatprep.subr.mxu0 0.0
  %3646 = vmatpush1.msra.mxu0 %v3484
  %3647 = vmatprep.subr.mxu0 0.0
  %3648 = vmatpush1.msra.mxu0 %v3485
  %3649 = vmatprep.subr.mxu0 0.0
  %3650 = vmatpush1.msra.mxu0 %v3486
  %3651 = vmatprep.subr.mxu0 0.0
  %3652 = vmatpush1.msra.mxu0 0.0
  %3653 = vmatprep.subr.mxu0 0.0
  %3654 = vmatpush1.msra.mxu0 0.0
  %3655 = vmatprep.subr.mxu0 0.0
  %3656 = vmatpush1.msra.mxu0 0.0
  %3657 = vmatprep.subr.mxu0 0.0
  %3658 = vmatpush1.msra.mxu0 0.0
  %3659 = vmatprep.subr.mxu0 0.0
  %3660 = vmatpush1.msra.mxu0 0.0
  %3661 = vmatprep.subr.mxu0 0.0
  %3662 = vmatpush1.msra.mxu0 0.0
  %3663 = vmatprep.subr.mxu0 0.0
  %3664 = vmatpush1.msra.mxu0 0.0
  %3665 = vmatprep.subr.mxu0 0.0
  %3666 = vmatpush1.msra.mxu0 0.0
  %3667 = vmatprep.subr.mxu0 0.0
  %3668 = vmatpush1.msra.mxu0 0.0
  %3669 = vmatprep.subr.mxu0 0.0
  %3670 = vmatpush1.msra.mxu0 0.0
  %3671 = vmatprep.subr.mxu0 0.0
  %3672 = vmatpush1.msra.mxu0 0.0
  %3673 = vmatprep.subr.mxu0 0.0
  %3674 = vmatpush1.msra.mxu0 0.0
  %3675 = vmatprep.subr.mxu0 0.0
  %3676 = vmatpush1.msra.mxu0 0.0
  %3677 = vmatprep.subr.mxu0 0.0
  %3678 = vmatpush1.msra.mxu0 0.0
  %3679 = vmatprep.subr.mxu0 0.0
  %3680 = vmatpush1.msra.mxu0 0.0
  %3681 = vmatprep.subr.mxu0 0.0
  %3682 = vmatpush1.msra.mxu0 0.0
  %3683 = vmatprep.subr.mxu0 0.0
  %3684 = vmatpush1.msra.mxu0 0.0
  %3685 = vmatprep.subr.mxu0 0.0
  %3686 = vmatpush1.msra.mxu0 0.0
  %3687 = vmatprep.subr.mxu0 0.0
  %3688 = vmatpush1.msra.mxu0 0.0
  %3689 = vmatprep.subr.mxu0 0.0
  %3690 = vmatpush1.msra.mxu0 0.0
  %3691 = vmatprep.subr.mxu0 0.0
  %3692 = vmatpush1.msra.mxu0 0.0
  %3693 = vmatprep.subr.mxu0 0.0
  %3694 = vmatpush1.msra.mxu0 0.0
  %3695 = vmatprep.subr.mxu0 0.0
  %3696 = vmatpush1.msra.mxu0 0.0
  %3697 = vmatprep.subr.mxu0 0.0
  %3698 = vmatpush1.msra.mxu0 0.0
  %3699 = vmatprep.subr.mxu0 0.0
  %3700 = vmatpush1.msra.mxu0 0.0
  %3701 = vmatprep.subr.mxu0 0.0
  %3702 = vmatpush1.msra.mxu0 0.0
  %3703 = vmatprep.subr.mxu0 0.0
  %3704 = vmatpush1.msra.mxu0 0.0
  %3705 = vmatprep.subr.mxu0 0.0
  %3706 = vmatpush1.msra.mxu0 0.0
  %3707 = vmatprep.mubr.f32.mxu0 0.0
  %3708 = vmatmul.mubr.f32.gmra.mrb[0].mxu0 %v3641
  %v3709 = vpop.f32.mrb[0].mxu0
  %v3710 = vadd.f32 %v3637, %v3709
  %v3711 = vpop.f32.mrb[0].mxu0
  %3712 = vdwg.mxu0
  %s3713 = scalar_lea.vmem %s9, 16
  %v3714 = vld [vmem:[%s3713] sm:$0xff]
  %v3716 = vsel %vm3409, %v3714, 0
  %3718 = vmatprep.subr.mxu0 0.0
  %3719 = vmatpush1.msra.mxu0 %v3407
  %3720 = vmatprep.subr.mxu0 0.0
  %3721 = vmatpush1.msra.mxu0 0.0
  %3722 = vmatprep.subr.mxu0 0.0
  %3723 = vmatpush1.msra.mxu0 0.0
  %3724 = vmatprep.subr.mxu0 0.0
  %3725 = vmatpush1.msra.mxu0 0.0
  %3726 = vmatprep.subr.mxu0 0.0
  %3727 = vmatpush1.msra.mxu0 0.0
  %3728 = vmatprep.subr.mxu0 0.0
  %3729 = vmatpush1.msra.mxu0 0.0
  %3730 = vmatprep.subr.mxu0 0.0
  %3731 = vmatpush1.msra.mxu0 0.0
  %3732 = vmatprep.subr.mxu0 0.0
  %3733 = vmatpush1.msra.mxu0 0.0
  %3734 = vmatprep.subr.mxu0 0.0
  %3735 = vmatpush1.msra.mxu0 0.0
  %3736 = vmatprep.subr.mxu0 0.0
  %3737 = vmatpush1.msra.mxu0 0.0
  %3738 = vmatprep.subr.mxu0 0.0
  %3739 = vmatpush1.msra.mxu0 0.0
  %3740 = vmatprep.subr.mxu0 0.0
  %3741 = vmatpush1.msra.mxu0 0.0
  %3742 = vmatprep.subr.mxu0 0.0
  %3743 = vmatpush1.msra.mxu0 0.0
  %3744 = vmatprep.subr.mxu0 0.0
  %3745 = vmatpush1.msra.mxu0 0.0
  %3746 = vmatprep.subr.mxu0 0.0
  %3747 = vmatpush1.msra.mxu0 0.0
  %3748 = vmatprep.subr.mxu0 0.0
  %3749 = vmatpush1.msra.mxu0 0.0
  %3750 = vmatprep.subr.mxu0 0.0
  %3751 = vmatpush1.msra.mxu0 0.0
  %3752 = vmatprep.subr.mxu0 0.0
  %3753 = vmatpush1.msra.mxu0 0.0
  %3754 = vmatprep.subr.mxu0 0.0
  %3755 = vmatpush1.msra.mxu0 0.0
  %3756 = vmatprep.subr.mxu0 0.0
  %3757 = vmatpush1.msra.mxu0 0.0
  %3758 = vmatprep.subr.mxu0 0.0
  %3759 = vmatpush1.msra.mxu0 0.0
  %3760 = vmatprep.subr.mxu0 0.0
  %3761 = vmatpush1.msra.mxu0 0.0
  %3762 = vmatprep.subr.mxu0 0.0
  %3763 = vmatpush1.msra.mxu0 0.0
  %3764 = vmatprep.subr.mxu0 0.0
  %3765 = vmatpush1.msra.mxu0 0.0
  %3766 = vmatprep.subr.mxu0 0.0
  %3767 = vmatpush1.msra.mxu0 0.0
  %3768 = vmatprep.subr.mxu0 0.0
  %3769 = vmatpush1.msra.mxu0 0.0
  %3770 = vmatprep.subr.mxu0 0.0
  %3771 = vmatpush1.msra.mxu0 0.0
  %3772 = vmatprep.subr.mxu0 0.0
  %3773 = vmatpush1.msra.mxu0 0.0
  %3774 = vmatprep.subr.mxu0 0.0
  %3775 = vmatpush1.msra.mxu0 0.0
  %3776 = vmatprep.subr.mxu0 0.0
  %3777 = vmatpush1.msra.mxu0 0.0
  %3778 = vmatprep.subr.mxu0 0.0
  %3779 = vmatpush1.msra.mxu0 0.0
  %3780 = vmatprep.subr.mxu0 0.0
  %3781 = vmatpush1.msra.mxu0 0.0
  %3782 = vmatprep.mubr.f32.mxu0 0.0
  %3783 = vmatmul.mubr.f32.gmra.mrb[0].mxu0 %v3716
  %v3784 = vpop.f32.mrb[0].mxu0
  %v3785 = vadd.f32 0.0, %v3784
  %v3786 = vpop.f32.mrb[0].mxu0
  %3787 = vdwg.mxu0
  %s3788 = scalar_lea.vmem %s10, 64
  %v3789 = vld [vmem:[%s3788] sm:$0xff]
  %v3790 = vld [vmem:[%s3788 + $0x8] sm:$0xff]
  %v3791 = vld [vmem:[%s3788 + $0x10] sm:$0xff]
  %v3792 = vld [vmem:[%s3788 + $0x18] sm:$0xff]
  %v3794 = vsel %vm435, %v3785, 0
  %3796 = vmatprep.subr.mxu0 0.0
  %3797 = vmatpush1.msra.mxu0 %v3789
  %3798 = vmatprep.subr.mxu0 0.0
  %3799 = vmatpush1.msra.mxu0 %v3790
  %3800 = vmatprep.subr.mxu0 0.0
  %3801 = vmatpush1.msra.mxu0 %v3791
  %3802 = vmatprep.subr.mxu0 0.0
  %3803 = vmatpush1.msra.mxu0 %v3792
  %3804 = vmatprep.subr.mxu0 0.0
  %3805 = vmatpush1.msra.mxu0 0.0
  %3806 = vmatprep.subr.mxu0 0.0
  %3807 = vmatpush1.msra.mxu0 0.0
  %3808 = vmatprep.subr.mxu0 0.0
  %3809 = vmatpush1.msra.mxu0 0.0
  %3810 = vmatprep.subr.mxu0 0.0
  %3811 = vmatpush1.msra.mxu0 0.0
  %3812 = vmatprep.subr.mxu0 0.0
  %3813 = vmatpush1.msra.mxu0 0.0
  %3814 = vmatprep.subr.mxu0 0.0
  %3815 = vmatpush1.msra.mxu0 0.0
  %3816 = vmatprep.subr.mxu0 0.0
  %3817 = vmatpush1.msra.mxu0 0.0
  %3818 = vmatprep.subr.mxu0 0.0
  %3819 = vmatpush1.msra.mxu0 0.0
  %3820 = vmatprep.subr.mxu0 0.0
  %3821 = vmatpush1.msra.mxu0 0.0
  %3822 = vmatprep.subr.mxu0 0.0
  %3823 = vmatpush1.msra.mxu0 0.0
  %3824 = vmatprep.subr.mxu0 0.0
  %3825 = vmatpush1.msra.mxu0 0.0
  %3826 = vmatprep.subr.mxu0 0.0
  %3827 = vmatpush1.msra.mxu0 0.0
  %3828 = vmatprep.subr.mxu0 0.0
  %3829 = vmatpush1.msra.mxu0 0.0
  %3830 = vmatprep.subr.mxu0 0.0
  %3831 = vmatpush1.msra.mxu0 0.0
  %3832 = vmatprep.subr.mxu0 0.0
  %3833 = vmatpush1.msra.mxu0 0.0
  %3834 = vmatprep.subr.mxu0 0.0
  %3835 = vmatpush1.msra.mxu0 0.0
  %3836 = vmatprep.subr.mxu0 0.0
  %3837 = vmatpush1.msra.mxu0 0.0
  %3838 = vmatprep.subr.mxu0 0.0
  %3839 = vmatpush1.msra.mxu0 0.0
  %3840 = vmatprep.subr.mxu0 0.0
  %3841 = vmatpush1.msra.mxu0 0.0
  %3842 = vmatprep.subr.mxu0 0.0
  %3843 = vmatpush1.msra.mxu0 0.0
  %3844 = vmatprep.subr.mxu0 0.0
  %3845 = vmatpush1.msra.mxu0 0.0
  %3846 = vmatprep.subr.mxu0 0.0
  %3847 = vmatpush1.msra.mxu0 0.0
  %3848 = vmatprep.subr.mxu0 0.0
  %3849 = vmatpush1.msra.mxu0 0.0
  %3850 = vmatprep.subr.mxu0 0.0
  %3851 = vmatpush1.msra.mxu0 0.0
  %3852 = vmatprep.subr.mxu0 0.0
  %3853 = vmatpush1.msra.mxu0 0.0
  %3854 = vmatprep.subr.mxu0 0.0
  %3855 = vmatpush1.msra.mxu0 0.0
  %3856 = vmatprep.subr.mxu0 0.0
  %3857 = vmatpush1.msra.mxu0 0.0
  %3858 = vmatprep.subr.mxu0 0.0
  %3859 = vmatpush1.msra.mxu0 0.0
  %3860 = vmatprep.mubr.f32.mxu0 0.0
  %3861 = vmatmul.mubr.f32.gmra.mrb[0].mxu0 %v3794
  %v3862 = vpop.f32.mrb[0].mxu0
  %v3863 = vadd.f32 0.0, %v3862
  %v3864 = vpop.f32.mrb[0].mxu0
  %3865 = vdwg.mxu0
  %v3866 = vadd.f32 %v3710, %v3863
  %s3867 = scalar_lea.vmem %s9, 24
  %v3868 = vld [vmem:[%s3867] sm:$0xff]
  %v3870 = vsel %vm3409, %v3868, 0
  %3872 = vmatprep.subr.mxu0 0.0
  %3873 = vmatpush1.msra.mxu0 %v3407
  %3874 = vmatprep.subr.mxu0 0.0
  %3875 = vmatpush1.msra.mxu0 0.0
  %3876 = vmatprep.subr.mxu0 0.0
  %3877 = vmatpush1.msra.mxu0 0.0
  %3878 = vmatprep.subr.mxu0 0.0
  %3879 = vmatpush1.msra.mxu0 0.0
  %3880 = vmatprep.subr.mxu0 0.0
  %3881 = vmatpush1.msra.mxu0 0.0
  %3882 = vmatprep.subr.mxu0 0.0
  %3883 = vmatpush1.msra.mxu0 0.0
  %3884 = vmatprep.subr.mxu0 0.0
  %3885 = vmatpush1.msra.mxu0 0.0
  %3886 = vmatprep.subr.mxu0 0.0
  %3887 = vmatpush1.msra.mxu0 0.0
  %3888 = vmatprep.subr.mxu0 0.0
  %3889 = vmatpush1.msra.mxu0 0.0
  %3890 = vmatprep.subr.mxu0 0.0
  %3891 = vmatpush1.msra.mxu0 0.0
  %3892 = vmatprep.subr.mxu0 0.0
  %3893 = vmatpush1.msra.mxu0 0.0
  %3894 = vmatprep.subr.mxu0 0.0
  %3895 = vmatpush1.msra.mxu0 0.0
  %3896 = vmatprep.subr.mxu0 0.0
  %3897 = vmatpush1.msra.mxu0 0.0
  %3898 = vmatprep.subr.mxu0 0.0
  %3899 = vmatpush1.msra.mxu0 0.0
  %3900 = vmatprep.subr.mxu0 0.0
  %3901 = vmatpush1.msra.mxu0 0.0
  %3902 = vmatprep.subr.mxu0 0.0
  %3903 = vmatpush1.msra.mxu0 0.0
  %3904 = vmatprep.subr.mxu0 0.0
  %3905 = vmatpush1.msra.mxu0 0.0
  %3906 = vmatprep.subr.mxu0 0.0
  %3907 = vmatpush1.msra.mxu0 0.0
  %3908 = vmatprep.subr.mxu0 0.0
  %3909 = vmatpush1.msra.mxu0 0.0
  %3910 = vmatprep.subr.mxu0 0.0
  %3911 = vmatpush1.msra.mxu0 0.0
  %3912 = vmatprep.subr.mxu0 0.0
  %3913 = vmatpush1.msra.mxu0 0.0
  %3914 = vmatprep.subr.mxu0 0.0
  %3915 = vmatpush1.msra.mxu0 0.0
  %3916 = vmatprep.subr.mxu0 0.0
  %3917 = vmatpush1.msra.mxu0 0.0
  %3918 = vmatprep.subr.mxu0 0.0
  %3919 = vmatpush1.msra.mxu0 0.0
  %3920 = vmatprep.subr.mxu0 0.0
  %3921 = vmatpush1.msra.mxu0 0.0
  %3922 = vmatprep.subr.mxu0 0.0
  %3923 = vmatpush1.msra.mxu0 0.0
  %3924 = vmatprep.subr.mxu0 0.0
  %3925 = vmatpush1.msra.mxu0 0.0
  %3926 = vmatprep.subr.mxu0 0.0
  %3927 = vmatpush1.msra.mxu0 0.0
  %3928 = vmatprep.subr.mxu0 0.0
  %3929 = vmatpush1.msra.mxu0 0.0
  %3930 = vmatprep.subr.mxu0 0.0
  %3931 = vmatpush1.msra.mxu0 0.0
  %3932 = vmatprep.subr.mxu0 0.0
  %3933 = vmatpush1.msra.mxu0 0.0
  %3934 = vmatprep.subr.mxu0 0.0
  %3935 = vmatpush1.msra.mxu0 0.0
  %3936 = vmatprep.mubr.f32.mxu0 0.0
  %3937 = vmatmul.mubr.f32.gmra.mrb[0].mxu0 %v3870
  %v3938 = vpop.f32.mrb[0].mxu0
  %v3939 = vadd.f32 0.0, %v3938
  %v3940 = vpop.f32.mrb[0].mxu0
  %3941 = vdwg.mxu0
  %s3942 = scalar_lea.vmem %s10, 96
  %v3943 = vld [vmem:[%s3942] sm:$0xff]
  %v3944 = vld [vmem:[%s3942 + $0x8] sm:$0xff]
  %v3945 = vld [vmem:[%s3942 + $0x10] sm:$0xff]
  %v3946 = vld [vmem:[%s3942 + $0x18] sm:$0xff]
  %v3948 = vsel %vm435, %v3939, 0
  %3950 = vmatprep.subr.mxu0 0.0
  %3951 = vmatpush1.msra.mxu0 %v3943
  %3952 = vmatprep.subr.mxu0 0.0
  %3953 = vmatpush1.msra.mxu0 %v3944
  %3954 = vmatprep.subr.mxu0 0.0
  %3955 = vmatpush1.msra.mxu0 %v3945
  %3956 = vmatprep.subr.mxu0 0.0
  %3957 = vmatpush1.msra.mxu0 %v3946
  %3958 = vmatprep.subr.mxu0 0.0
  %3959 = vmatpush1.msra.mxu0 0.0
  %3960 = vmatprep.subr.mxu0 0.0
  %3961 = vmatpush1.msra.mxu0 0.0
  %3962 = vmatprep.subr.mxu0 0.0
  %3963 = vmatpush1.msra.mxu0 0.0
  %3964 = vmatprep.subr.mxu0 0.0
  %3965 = vmatpush1.msra.mxu0 0.0
  %3966 = vmatprep.subr.mxu0 0.0
  %3967 = vmatpush1.msra.mxu0 0.0
  %3968 = vmatprep.subr.mxu0 0.0
  %3969 = vmatpush1.msra.mxu0 0.0
  %3970 = vmatprep.subr.mxu0 0.0
  %3971 = vmatpush1.msra.mxu0 0.0
  %3972 = vmatprep.subr.mxu0 0.0
  %3973 = vmatpush1.msra.mxu0 0.0
  %3974 = vmatprep.subr.mxu0 0.0
  %3975 = vmatpush1.msra.mxu0 0.0
  %3976 = vmatprep.subr.mxu0 0.0
  %3977 = vmatpush1.msra.mxu0 0.0
  %3978 = vmatprep.subr.mxu0 0.0
  %3979 = vmatpush1.msra.mxu0 0.0
  %3980 = vmatprep.subr.mxu0 0.0
  %3981 = vmatpush1.msra.mxu0 0.0
  %3982 = vmatprep.subr.mxu0 0.0
  %3983 = vmatpush1.msra.mxu0 0.0
  %3984 = vmatprep.subr.mxu0 0.0
  %3985 = vmatpush1.msra.mxu0 0.0
  %3986 = vmatprep.subr.mxu0 0.0
  %3987 = vmatpush1.msra.mxu0 0.0
  %3988 = vmatprep.subr.mxu0 0.0
  %3989 = vmatpush1.msra.mxu0 0.0
  %3990 = vmatprep.subr.mxu0 0.0
  %3991 = vmatpush1.msra.mxu0 0.0
  %3992 = vmatprep.subr.mxu0 0.0
  %3993 = vmatpush1.msra.mxu0 0.0
  %3994 = vmatprep.subr.mxu0 0.0
  %3995 = vmatpush1.msra.mxu0 0.0
  %3996 = vmatprep.subr.mxu0 0.0
  %3997 = vmatpush1.msra.mxu0 0.0
  %3998 = vmatprep.subr.mxu0 0.0
  %3999 = vmatpush1.msra.mxu0 0.0
  %4000 = vmatprep.subr.mxu0 0.0
  %4001 = vmatpush1.msra.mxu0 0.0
  %4002 = vmatprep.subr.mxu0 0.0
  %4003 = vmatpush1.msra.mxu0 0.0
  %4004 = vmatprep.subr.mxu0 0.0
  %4005 = vmatpush1.msra.mxu0 0.0
  %4006 = vmatprep.subr.mxu0 0.0
  %4007 = vmatpush1.msra.mxu0 0.0
  %4008 = vmatprep.subr.mxu0 0.0
  %4009 = vmatpush1.msra.mxu0 0.0
  %4010 = vmatprep.subr.mxu0 0.0
  %4011 = vmatpush1.msra.mxu0 0.0
  %4012 = vmatprep.subr.mxu0 0.0
  %4013 = vmatpush1.msra.mxu0 0.0
  %4014 = vmatprep.mubr.f32.mxu0 0.0
  %4015 = vmatmul.mubr.f32.gmra.mrb[0].mxu0 %v3948
  %v4016 = vpop.f32.mrb[0].mxu0
  %v4017 = vadd.f32 0.0, %v4016
  %v4018 = vpop.f32.mrb[0].mxu0
  %4019 = vdwg.mxu0
  %v4020 = vadd.f32 %v3866, %v4017
  %s4021 = scalar_lea.vmem %s9, 32
  %v4022 = vld [vmem:[%s4021] sm:$0xff]
  %v4024 = vsel %vm3409, %v4022, 0
  %4026 = vmatprep.subr.mxu0 0.0
  %4027 = vmatpush1.msra.mxu0 %v3407
  %4028 = vmatprep.subr.mxu0 0.0
  %4029 = vmatpush1.msra.mxu0 0.0
  %4030 = vmatprep.subr.mxu0 0.0
  %4031 = vmatpush1.msra.mxu0 0.0
  %4032 = vmatprep.subr.mxu0 0.0
  %4033 = vmatpush1.msra.mxu0 0.0
  %4034 = vmatprep.subr.mxu0 0.0
  %4035 = vmatpush1.msra.mxu0 0.0
  %4036 = vmatprep.subr.mxu0 0.0
  %4037 = vmatpush1.msra.mxu0 0.0
  %4038 = vmatprep.subr.mxu0 0.0
  %4039 = vmatpush1.msra.mxu0 0.0
  %4040 = vmatprep.subr.mxu0 0.0
  %4041 = vmatpush1.msra.mxu0 0.0
  %4042 = vmatprep.subr.mxu0 0.0
  %4043 = vmatpush1.msra.mxu0 0.0
  %4044 = vmatprep.subr.mxu0 0.0
  %4045 = vmatpush1.msra.mxu0 0.0
  %4046 = vmatprep.subr.mxu0 0.0
  %4047 = vmatpush1.msra.mxu0 0.0
  %4048 = vmatprep.subr.mxu0 0.0
  %4049 = vmatpush1.msra.mxu0 0.0
  %4050 = vmatprep.subr.mxu0 0.0
  %4051 = vmatpush1.msra.mxu0 0.0
  %4052 = vmatprep.subr.mxu0 0.0
  %4053 = vmatpush1.msra.mxu0 0.0
  %4054 = vmatprep.subr.mxu0 0.0
  %4055 = vmatpush1.msra.mxu0 0.0
  %4056 = vmatprep.subr.mxu0 0.0
  %4057 = vmatpush1.msra.mxu0 0.0
  %4058 = vmatprep.subr.mxu0 0.0
  %4059 = vmatpush1.msra.mxu0 0.0
  %4060 = vmatprep.subr.mxu0 0.0
  %4061 = vmatpush1.msra.mxu0 0.0
  %4062 = vmatprep.subr.mxu0 0.0
  %4063 = vmatpush1.msra.mxu0 0.0
  %4064 = vmatprep.subr.mxu0 0.0
  %4065 = vmatpush1.msra.mxu0 0.0
  %4066 = vmatprep.subr.mxu0 0.0
  %4067 = vmatpush1.msra.mxu0 0.0
  %4068 = vmatprep.subr.mxu0 0.0
  %4069 = vmatpush1.msra.mxu0 0.0
  %4070 = vmatprep.subr.mxu0 0.0
  %4071 = vmatpush1.msra.mxu0 0.0
  %4072 = vmatprep.subr.mxu0 0.0
  %4073 = vmatpush1.msra.mxu0 0.0
  %4074 = vmatprep.subr.mxu0 0.0
  %4075 = vmatpush1.msra.mxu0 0.0
  %4076 = vmatprep.subr.mxu0 0.0
  %4077 = vmatpush1.msra.mxu0 0.0
  %4078 = vmatprep.subr.mxu0 0.0
  %4079 = vmatpush1.msra.mxu0 0.0
  %4080 = vmatprep.subr.mxu0 0.0
  %4081 = vmatpush1.msra.mxu0 0.0
  %4082 = vmatprep.subr.mxu0 0.0
  %4083 = vmatpush1.msra.mxu0 0.0
  %4084 = vmatprep.subr.mxu0 0.0
  %4085 = vmatpush1.msra.mxu0 0.0
  %4086 = vmatprep.subr.mxu0 0.0
  %4087 = vmatpush1.msra.mxu0 0.0
  %4088 = vmatprep.subr.mxu0 0.0
  %4089 = vmatpush1.msra.mxu0 0.0
  %4090 = vmatprep.mubr.f32.mxu0 0.0
  %4091 = vmatmul.mubr.f32.gmra.mrb[0].mxu0 %v4024
  %v4092 = vpop.f32.mrb[0].mxu0
  %v4093 = vadd.f32 0.0, %v4092
  %v4094 = vpop.f32.mrb[0].mxu0
  %4095 = vdwg.mxu0
  %s4096 = scalar_lea.vmem %s10, 128
  %v4097 = vld [vmem:[%s4096] sm:$0xff]
  %v4098 = vld [vmem:[%s4096 + $0x8] sm:$0xff]
  %v4099 = vld [vmem:[%s4096 + $0x10] sm:$0xff]
  %v4100 = vld [vmem:[%s4096 + $0x18] sm:$0xff]
  %v4102 = vsel %vm435, %v4093, 0
  %4104 = vmatprep.subr.mxu0 0.0
  %4105 = vmatpush1.msra.mxu0 %v4097
  %4106 = vmatprep.subr.mxu0 0.0
  %4107 = vmatpush1.msra.mxu0 %v4098
  %4108 = vmatprep.subr.mxu0 0.0
  %4109 = vmatpush1.msra.mxu0 %v4099
  %4110 = vmatprep.subr.mxu0 0.0
  %4111 = vmatpush1.msra.mxu0 %v4100
  %4112 = vmatprep.subr.mxu0 0.0
  %4113 = vmatpush1.msra.mxu0 0.0
  %4114 = vmatprep.subr.mxu0 0.0
  %4115 = vmatpush1.msra.mxu0 0.0
  %4116 = vmatprep.subr.mxu0 0.0
  %4117 = vmatpush1.msra.mxu0 0.0
  %4118 = vmatprep.subr.mxu0 0.0
  %4119 = vmatpush1.msra.mxu0 0.0
  %4120 = vmatprep.subr.mxu0 0.0
  %4121 = vmatpush1.msra.mxu0 0.0
  %4122 = vmatprep.subr.mxu0 0.0
  %4123 = vmatpush1.msra.mxu0 0.0
  %4124 = vmatprep.subr.mxu0 0.0
  %4125 = vmatpush1.msra.mxu0 0.0
  %4126 = vmatprep.subr.mxu0 0.0
  %4127 = vmatpush1.msra.mxu0 0.0
  %4128 = vmatprep.subr.mxu0 0.0
  %4129 = vmatpush1.msra.mxu0 0.0
  %4130 = vmatprep.subr.mxu0 0.0
  %4131 = vmatpush1.msra.mxu0 0.0
  %4132 = vmatprep.subr.mxu0 0.0
  %4133 = vmatpush1.msra.mxu0 0.0
  %4134 = vmatprep.subr.mxu0 0.0
  %4135 = vmatpush1.msra.mxu0 0.0
  %4136 = vmatprep.subr.mxu0 0.0
  %4137 = vmatpush1.msra.mxu0 0.0
  %4138 = vmatprep.subr.mxu0 0.0
  %4139 = vmatpush1.msra.mxu0 0.0
  %4140 = vmatprep.subr.mxu0 0.0
  %4141 = vmatpush1.msra.mxu0 0.0
  %4142 = vmatprep.subr.mxu0 0.0
  %4143 = vmatpush1.msra.mxu0 0.0
  %4144 = vmatprep.subr.mxu0 0.0
  %4145 = vmatpush1.msra.mxu0 0.0
  %4146 = vmatprep.subr.mxu0 0.0
  %4147 = vmatpush1.msra.mxu0 0.0
  %4148 = vmatprep.subr.mxu0 0.0
  %4149 = vmatpush1.msra.mxu0 0.0
  %4150 = vmatprep.subr.mxu0 0.0
  %4151 = vmatpush1.msra.mxu0 0.0
  %4152 = vmatprep.subr.mxu0 0.0
  %4153 = vmatpush1.msra.mxu0 0.0
  %4154 = vmatprep.subr.mxu0 0.0
  %4155 = vmatpush1.msra.mxu0 0.0
  %4156 = vmatprep.subr.mxu0 0.0
  %4157 = vmatpush1.msra.mxu0 0.0
  %4158 = vmatprep.subr.mxu0 0.0
  %4159 = vmatpush1.msra.mxu0 0.0
  %4160 = vmatprep.subr.mxu0 0.0
  %4161 = vmatpush1.msra.mxu0 0.0
  %4162 = vmatprep.subr.mxu0 0.0
  %4163 = vmatpush1.msra.mxu0 0.0
  %4164 = vmatprep.subr.mxu0 0.0
  %4165 = vmatpush1.msra.mxu0 0.0
  %4166 = vmatprep.subr.mxu0 0.0
  %4167 = vmatpush1.msra.mxu0 0.0
  %4168 = vmatprep.mubr.f32.mxu0 0.0
  %4169 = vmatmul.mubr.f32.gmra.mrb[0].mxu0 %v4102
  %v4170 = vpop.f32.mrb[0].mxu0
  %v4171 = vadd.f32 0.0, %v4170
  %v4172 = vpop.f32.mrb[0].mxu0
  %4173 = vdwg.mxu0
  %v4174 = vadd.f32 %v4020, %v4171
  %s4175 = scalar_lea.vmem %s9, 40
  %v4176 = vld [vmem:[%s4175] sm:$0xff]
  %v4178 = vsel %vm3409, %v4176, 0
  %4180 = vmatprep.subr.mxu0 0.0
  %4181 = vmatpush1.msra.mxu0 %v3407
  %4182 = vmatprep.subr.mxu0 0.0
  %4183 = vmatpush1.msra.mxu0 0.0
  %4184 = vmatprep.subr.mxu0 0.0
  %4185 = vmatpush1.msra.mxu0 0.0
  %4186 = vmatprep.subr.mxu0 0.0
  %4187 = vmatpush1.msra.mxu0 0.0
  %4188 = vmatprep.subr.mxu0 0.0
  %4189 = vmatpush1.msra.mxu0 0.0
  %4190 = vmatprep.subr.mxu0 0.0
  %4191 = vmatpush1.msra.mxu0 0.0
  %4192 = vmatprep.subr.mxu0 0.0
  %4193 = vmatpush1.msra.mxu0 0.0
  %4194 = vmatprep.subr.mxu0 0.0
  %4195 = vmatpush1.msra.mxu0 0.0
  %4196 = vmatprep.subr.mxu0 0.0
  %4197 = vmatpush1.msra.mxu0 0.0
  %4198 = vmatprep.subr.mxu0 0.0
  %4199 = vmatpush1.msra.mxu0 0.0
  %4200 = vmatprep.subr.mxu0 0.0
  %4201 = vmatpush1.msra.mxu0 0.0
  %4202 = vmatprep.subr.mxu0 0.0
  %4203 = vmatpush1.msra.mxu0 0.0
  %4204 = vmatprep.subr.mxu0 0.0
  %4205 = vmatpush1.msra.mxu0 0.0
  %4206 = vmatprep.subr.mxu0 0.0
  %4207 = vmatpush1.msra.mxu0 0.0
  %4208 = vmatprep.subr.mxu0 0.0
  %4209 = vmatpush1.msra.mxu0 0.0
  %4210 = vmatprep.subr.mxu0 0.0
  %4211 = vmatpush1.msra.mxu0 0.0
  %4212 = vmatprep.subr.mxu0 0.0
  %4213 = vmatpush1.msra.mxu0 0.0
  %4214 = vmatprep.subr.mxu0 0.0
  %4215 = vmatpush1.msra.mxu0 0.0
  %4216 = vmatprep.subr.mxu0 0.0
  %4217 = vmatpush1.msra.mxu0 0.0
  %4218 = vmatprep.subr.mxu0 0.0
  %4219 = vmatpush1.msra.mxu0 0.0
  %4220 = vmatprep.subr.mxu0 0.0
  %4221 = vmatpush1.msra.mxu0 0.0
  %4222 = vmatprep.subr.mxu0 0.0
  %4223 = vmatpush1.msra.mxu0 0.0
  %4224 = vmatprep.subr.mxu0 0.0
  %4225 = vmatpush1.msra.mxu0 0.0
  %4226 = vmatprep.subr.mxu0 0.0
  %4227 = vmatpush1.msra.mxu0 0.0
  %4228 = vmatprep.subr.mxu0 0.0
  %4229 = vmatpush1.msra.mxu0 0.0
  %4230 = vmatprep.subr.mxu0 0.0
  %4231 = vmatpush1.msra.mxu0 0.0
  %4232 = vmatprep.subr.mxu0 0.0
  %4233 = vmatpush1.msra.mxu0 0.0
  %4234 = vmatprep.subr.mxu0 0.0
  %4235 = vmatpush1.msra.mxu0 0.0
  %4236 = vmatprep.subr.mxu0 0.0
  %4237 = vmatpush1.msra.mxu0 0.0
  %4238 = vmatprep.subr.mxu0 0.0
  %4239 = vmatpush1.msra.mxu0 0.0
  %4240 = vmatprep.subr.mxu0 0.0
  %4241 = vmatpush1.msra.mxu0 0.0
  %4242 = vmatprep.subr.mxu0 0.0
  %4243 = vmatpush1.msra.mxu0 0.0
  %4244 = vmatprep.mubr.f32.mxu0 0.0
  %4245 = vmatmul.mubr.f32.gmra.mrb[0].mxu0 %v4178
  %v4246 = vpop.f32.mrb[0].mxu0
  %v4247 = vadd.f32 0.0, %v4246
  %v4248 = vpop.f32.mrb[0].mxu0
  %4249 = vdwg.mxu0
  %s4250 = scalar_lea.vmem %s10, 160
  %v4251 = vld [vmem:[%s4250] sm:$0xff]
  %v4252 = vld [vmem:[%s4250 + $0x8] sm:$0xff]
  %v4253 = vld [vmem:[%s4250 + $0x10] sm:$0xff]
  %v4254 = vld [vmem:[%s4250 + $0x18] sm:$0xff]
  %v4256 = vsel %vm435, %v4247, 0
  %4258 = vmatprep.subr.mxu0 0.0
  %4259 = vmatpush1.msra.mxu0 %v4251
  %4260 = vmatprep.subr.mxu0 0.0
  %4261 = vmatpush1.msra.mxu0 %v4252
  %4262 = vmatprep.subr.mxu0 0.0
  %4263 = vmatpush1.msra.mxu0 %v4253
  %4264 = vmatprep.subr.mxu0 0.0
  %4265 = vmatpush1.msra.mxu0 %v4254
  %4266 = vmatprep.subr.mxu0 0.0
  %4267 = vmatpush1.msra.mxu0 0.0
  %4268 = vmatprep.subr.mxu0 0.0
  %4269 = vmatpush1.msra.mxu0 0.0
  %4270 = vmatprep.subr.mxu0 0.0
  %4271 = vmatpush1.msra.mxu0 0.0
  %4272 = vmatprep.subr.mxu0 0.0
  %4273 = vmatpush1.msra.mxu0 0.0
  %4274 = vmatprep.subr.mxu0 0.0
  %4275 = vmatpush1.msra.mxu0 0.0
  %4276 = vmatprep.subr.mxu0 0.0
  %4277 = vmatpush1.msra.mxu0 0.0
  %4278 = vmatprep.subr.mxu0 0.0
  %4279 = vmatpush1.msra.mxu0 0.0
  %4280 = vmatprep.subr.mxu0 0.0
  %4281 = vmatpush1.msra.mxu0 0.0
  %4282 = vmatprep.subr.mxu0 0.0
  %4283 = vmatpush1.msra.mxu0 0.0
  %4284 = vmatprep.subr.mxu0 0.0
  %4285 = vmatpush1.msra.mxu0 0.0
  %4286 = vmatprep.subr.mxu0 0.0
  %4287 = vmatpush1.msra.mxu0 0.0
  %4288 = vmatprep.subr.mxu0 0.0
  %4289 = vmatpush1.msra.mxu0 0.0
  %4290 = vmatprep.subr.mxu0 0.0
  %4291 = vmatpush1.msra.mxu0 0.0
  %4292 = vmatprep.subr.mxu0 0.0
  %4293 = vmatpush1.msra.mxu0 0.0
  %4294 = vmatprep.subr.mxu0 0.0
  %4295 = vmatpush1.msra.mxu0 0.0
  %4296 = vmatprep.subr.mxu0 0.0
  %4297 = vmatpush1.msra.mxu0 0.0
  %4298 = vmatprep.subr.mxu0 0.0
  %4299 = vmatpush1.msra.mxu0 0.0
  %4300 = vmatprep.subr.mxu0 0.0
  %4301 = vmatpush1.msra.mxu0 0.0
  %4302 = vmatprep.subr.mxu0 0.0
  %4303 = vmatpush1.msra.mxu0 0.0
  %4304 = vmatprep.subr.mxu0 0.0
  %4305 = vmatpush1.msra.mxu0 0.0
  %4306 = vmatprep.subr.mxu0 0.0
  %4307 = vmatpush1.msra.mxu0 0.0
  %4308 = vmatprep.subr.mxu0 0.0
  %4309 = vmatpush1.msra.mxu0 0.0
  %4310 = vmatprep.subr.mxu0 0.0
  %4311 = vmatpush1.msra.mxu0 0.0
  %4312 = vmatprep.subr.mxu0 0.0
  %4313 = vmatpush1.msra.mxu0 0.0
  %4314 = vmatprep.subr.mxu0 0.0
  %4315 = vmatpush1.msra.mxu0 0.0
  %4316 = vmatprep.subr.mxu0 0.0
  %4317 = vmatpush1.msra.mxu0 0.0
  %4318 = vmatprep.subr.mxu0 0.0
  %4319 = vmatpush1.msra.mxu0 0.0
  %4320 = vmatprep.subr.mxu0 0.0
  %4321 = vmatpush1.msra.mxu0 0.0
  %4322 = vmatprep.mubr.f32.mxu0 0.0
  %4323 = vmatmul.mubr.f32.gmra.mrb[0].mxu0 %v4256
  %v4324 = vpop.f32.mrb[0].mxu0
  %v4325 = vadd.f32 0.0, %v4324
  %v4326 = vpop.f32.mrb[0].mxu0
  %4327 = vdwg.mxu0
  %v4328 = vadd.f32 %v4174, %v4325
  %s4329 = scalar_lea.vmem %s9, 48
  %v4330 = vld [vmem:[%s4329] sm:$0xff]
  %v4332 = vsel %vm3409, %v4330, 0
  %4334 = vmatprep.subr.mxu0 0.0
  %4335 = vmatpush1.msra.mxu0 %v3407
  %4336 = vmatprep.subr.mxu0 0.0
  %4337 = vmatpush1.msra.mxu0 0.0
  %4338 = vmatprep.subr.mxu0 0.0
  %4339 = vmatpush1.msra.mxu0 0.0
  %4340 = vmatprep.subr.mxu0 0.0
  %4341 = vmatpush1.msra.mxu0 0.0
  %4342 = vmatprep.subr.mxu0 0.0
  %4343 = vmatpush1.msra.mxu0 0.0
  %4344 = vmatprep.subr.mxu0 0.0
  %4345 = vmatpush1.msra.mxu0 0.0
  %4346 = vmatprep.subr.mxu0 0.0
  %4347 = vmatpush1.msra.mxu0 0.0
  %4348 = vmatprep.subr.mxu0 0.0
  %4349 = vmatpush1.msra.mxu0 0.0
  %4350 = vmatprep.subr.mxu0 0.0
  %4351 = vmatpush1.msra.mxu0 0.0
  %4352 = vmatprep.subr.mxu0 0.0
  %4353 = vmatpush1.msra.mxu0 0.0
  %4354 = vmatprep.subr.mxu0 0.0
  %4355 = vmatpush1.msra.mxu0 0.0
  %4356 = vmatprep.subr.mxu0 0.0
  %4357 = vmatpush1.msra.mxu0 0.0
  %4358 = vmatprep.subr.mxu0 0.0
  %4359 = vmatpush1.msra.mxu0 0.0
  %4360 = vmatprep.subr.mxu0 0.0
  %4361 = vmatpush1.msra.mxu0 0.0
  %4362 = vmatprep.subr.mxu0 0.0
  %4363 = vmatpush1.msra.mxu0 0.0
  %4364 = vmatprep.subr.mxu0 0.0
  %4365 = vmatpush1.msra.mxu0 0.0
  %4366 = vmatprep.subr.mxu0 0.0
  %4367 = vmatpush1.msra.mxu0 0.0
  %4368 = vmatprep.subr.mxu0 0.0
  %4369 = vmatpush1.msra.mxu0 0.0
  %4370 = vmatprep.subr.mxu0 0.0
  %4371 = vmatpush1.msra.mxu0 0.0
  %4372 = vmatprep.subr.mxu0 0.0
  %4373 = vmatpush1.msra.mxu0 0.0
  %4374 = vmatprep.subr.mxu0 0.0
  %4375 = vmatpush1.msra.mxu0 0.0
  %4376 = vmatprep.subr.mxu0 0.0
  %4377 = vmatpush1.msra.mxu0 0.0
  %4378 = vmatprep.subr.mxu0 0.0
  %4379 = vmatpush1.msra.mxu0 0.0
  %4380 = vmatprep.subr.mxu0 0.0
  %4381 = vmatpush1.msra.mxu0 0.0
  %4382 = vmatprep.subr.mxu0 0.0
  %4383 = vmatpush1.msra.mxu0 0.0
  %4384 = vmatprep.subr.mxu0 0.0
  %4385 = vmatpush1.msra.mxu0 0.0
  %4386 = vmatprep.subr.mxu0 0.0
  %4387 = vmatpush1.msra.mxu0 0.0
  %4388 = vmatprep.subr.mxu0 0.0
  %4389 = vmatpush1.msra.mxu0 0.0
  %4390 = vmatprep.subr.mxu0 0.0
  %4391 = vmatpush1.msra.mxu0 0.0
  %4392 = vmatprep.subr.mxu0 0.0
  %4393 = vmatpush1.msra.mxu0 0.0
  %4394 = vmatprep.subr.mxu0 0.0
  %4395 = vmatpush1.msra.mxu0 0.0
  %4396 = vmatprep.subr.mxu0 0.0
  %4397 = vmatpush1.msra.mxu0 0.0
  %4398 = vmatprep.mubr.f32.mxu0 0.0
  %4399 = vmatmul.mubr.f32.gmra.mrb[0].mxu0 %v4332
  %v4400 = vpop.f32.mrb[0].mxu0
  %v4401 = vadd.f32 0.0, %v4400
  %v4402 = vpop.f32.mrb[0].mxu0
  %4403 = vdwg.mxu0
  %s4404 = scalar_lea.vmem %s10, 192
  %v4405 = vld [vmem:[%s4404] sm:$0xff]
  %v4406 = vld [vmem:[%s4404 + $0x8] sm:$0xff]
  %v4407 = vld [vmem:[%s4404 + $0x10] sm:$0xff]
  %v4408 = vld [vmem:[%s4404 + $0x18] sm:$0xff]
  %v4410 = vsel %vm435, %v4401, 0
  %4412 = vmatprep.subr.mxu0 0.0
  %4413 = vmatpush1.msra.mxu0 %v4405
  %4414 = vmatprep.subr.mxu0 0.0
  %4415 = vmatpush1.msra.mxu0 %v4406
  %4416 = vmatprep.subr.mxu0 0.0
  %4417 = vmatpush1.msra.mxu0 %v4407
  %4418 = vmatprep.subr.mxu0 0.0
  %4419 = vmatpush1.msra.mxu0 %v4408
  %4420 = vmatprep.subr.mxu0 0.0
  %4421 = vmatpush1.msra.mxu0 0.0
  %4422 = vmatprep.subr.mxu0 0.0
  %4423 = vmatpush1.msra.mxu0 0.0
  %4424 = vmatprep.subr.mxu0 0.0
  %4425 = vmatpush1.msra.mxu0 0.0
  %4426 = vmatprep.subr.mxu0 0.0
  %4427 = vmatpush1.msra.mxu0 0.0
  %4428 = vmatprep.subr.mxu0 0.0
  %4429 = vmatpush1.msra.mxu0 0.0
  %4430 = vmatprep.subr.mxu0 0.0
  %4431 = vmatpush1.msra.mxu0 0.0
  %4432 = vmatprep.subr.mxu0 0.0
  %4433 = vmatpush1.msra.mxu0 0.0
  %4434 = vmatprep.subr.mxu0 0.0
  %4435 = vmatpush1.msra.mxu0 0.0
  %4436 = vmatprep.subr.mxu0 0.0
  %4437 = vmatpush1.msra.mxu0 0.0
  %4438 = vmatprep.subr.mxu0 0.0
  %4439 = vmatpush1.msra.mxu0 0.0
  %4440 = vmatprep.subr.mxu0 0.0
  %4441 = vmatpush1.msra.mxu0 0.0
  %4442 = vmatprep.subr.mxu0 0.0
  %4443 = vmatpush1.msra.mxu0 0.0
  %4444 = vmatprep.subr.mxu0 0.0
  %4445 = vmatpush1.msra.mxu0 0.0
  %4446 = vmatprep.subr.mxu0 0.0
  %4447 = vmatpush1.msra.mxu0 0.0
  %4448 = vmatprep.subr.mxu0 0.0
  %4449 = vmatpush1.msra.mxu0 0.0
  %4450 = vmatprep.subr.mxu0 0.0
  %4451 = vmatpush1.msra.mxu0 0.0
  %4452 = vmatprep.subr.mxu0 0.0
  %4453 = vmatpush1.msra.mxu0 0.0
  %4454 = vmatprep.subr.mxu0 0.0
  %4455 = vmatpush1.msra.mxu0 0.0
  %4456 = vmatprep.subr.mxu0 0.0
  %4457 = vmatpush1.msra.mxu0 0.0
  %4458 = vmatprep.subr.mxu0 0.0
  %4459 = vmatpush1.msra.mxu0 0.0
  %4460 = vmatprep.subr.mxu0 0.0
  %4461 = vmatpush1.msra.mxu0 0.0
  %4462 = vmatprep.subr.mxu0 0.0
  %4463 = vmatpush1.msra.mxu0 0.0
  %4464 = vmatprep.subr.mxu0 0.0
  %4465 = vmatpush1.msra.mxu0 0.0
  %4466 = vmatprep.subr.mxu0 0.0
  %4467 = vmatpush1.msra.mxu0 0.0
  %4468 = vmatprep.subr.mxu0 0.0
  %4469 = vmatpush1.msra.mxu0 0.0
  %4470 = vmatprep.subr.mxu0 0.0
  %4471 = vmatpush1.msra.mxu0 0.0
  %4472 = vmatprep.subr.mxu0 0.0
  %4473 = vmatpush1.msra.mxu0 0.0
  %4474 = vmatprep.subr.mxu0 0.0
  %4475 = vmatpush1.msra.mxu0 0.0
  %4476 = vmatprep.mubr.f32.mxu0 0.0
  %4477 = vmatmul.mubr.f32.gmra.mrb[0].mxu0 %v4410
  %v4478 = vpop.f32.mrb[0].mxu0
  %v4479 = vadd.f32 0.0, %v4478
  %v4480 = vpop.f32.mrb[0].mxu0
  %4481 = vdwg.mxu0
  %v4482 = vadd.f32 %v4328, %v4479
  %s4483 = scalar_lea.vmem %s9, 56
  %v4484 = vld [vmem:[%s4483] sm:$0xff]
  %v4486 = vsel %vm3409, %v4484, 0
  %4488 = vmatprep.subr.mxu0 0.0
  %4489 = vmatpush1.msra.mxu0 %v3407
  %4490 = vmatprep.subr.mxu0 0.0
  %4491 = vmatpush1.msra.mxu0 0.0
  %4492 = vmatprep.subr.mxu0 0.0
  %4493 = vmatpush1.msra.mxu0 0.0
  %4494 = vmatprep.subr.mxu0 0.0
  %4495 = vmatpush1.msra.mxu0 0.0
  %4496 = vmatprep.subr.mxu0 0.0
  %4497 = vmatpush1.msra.mxu0 0.0
  %4498 = vmatprep.subr.mxu0 0.0
  %4499 = vmatpush1.msra.mxu0 0.0
  %4500 = vmatprep.subr.mxu0 0.0
  %4501 = vmatpush1.msra.mxu0 0.0
  %4502 = vmatprep.subr.mxu0 0.0
  %4503 = vmatpush1.msra.mxu0 0.0
  %4504 = vmatprep.subr.mxu0 0.0
  %4505 = vmatpush1.msra.mxu0 0.0
  %4506 = vmatprep.subr.mxu0 0.0
  %4507 = vmatpush1.msra.mxu0 0.0
  %4508 = vmatprep.subr.mxu0 0.0
  %4509 = vmatpush1.msra.mxu0 0.0
  %4510 = vmatprep.subr.mxu0 0.0
  %4511 = vmatpush1.msra.mxu0 0.0
  %4512 = vmatprep.subr.mxu0 0.0
  %4513 = vmatpush1.msra.mxu0 0.0
  %4514 = vmatprep.subr.mxu0 0.0
  %4515 = vmatpush1.msra.mxu0 0.0
  %4516 = vmatprep.subr.mxu0 0.0
  %4517 = vmatpush1.msra.mxu0 0.0
  %4518 = vmatprep.subr.mxu0 0.0
  %4519 = vmatpush1.msra.mxu0 0.0
  %4520 = vmatprep.subr.mxu0 0.0
  %4521 = vmatpush1.msra.mxu0 0.0
  %4522 = vmatprep.subr.mxu0 0.0
  %4523 = vmatpush1.msra.mxu0 0.0
  %4524 = vmatprep.subr.mxu0 0.0
  %4525 = vmatpush1.msra.mxu0 0.0
  %4526 = vmatprep.subr.mxu0 0.0
  %4527 = vmatpush1.msra.mxu0 0.0
  %4528 = vmatprep.subr.mxu0 0.0
  %4529 = vmatpush1.msra.mxu0 0.0
  %4530 = vmatprep.subr.mxu0 0.0
  %4531 = vmatpush1.msra.mxu0 0.0
  %4532 = vmatprep.subr.mxu0 0.0
  %4533 = vmatpush1.msra.mxu0 0.0
  %4534 = vmatprep.subr.mxu0 0.0
  %4535 = vmatpush1.msra.mxu0 0.0
  %4536 = vmatprep.subr.mxu0 0.0
  %4537 = vmatpush1.msra.mxu0 0.0
  %4538 = vmatprep.subr.mxu0 0.0
  %4539 = vmatpush1.msra.mxu0 0.0
  %4540 = vmatprep.subr.mxu0 0.0
  %4541 = vmatpush1.msra.mxu0 0.0
  %4542 = vmatprep.subr.mxu0 0.0
  %4543 = vmatpush1.msra.mxu0 0.0
  %4544 = vmatprep.subr.mxu0 0.0
  %4545 = vmatpush1.msra.mxu0 0.0
  %4546 = vmatprep.subr.mxu0 0.0
  %4547 = vmatpush1.msra.mxu0 0.0
  %4548 = vmatprep.subr.mxu0 0.0
  %4549 = vmatpush1.msra.mxu0 0.0
  %4550 = vmatprep.subr.mxu0 0.0
  %4551 = vmatpush1.msra.mxu0 0.0
  %4552 = vmatprep.mubr.f32.mxu0 0.0
  %4553 = vmatmul.mubr.f32.gmra.mrb[0].mxu0 %v4486
  %v4554 = vpop.f32.mrb[0].mxu0
  %v4555 = vadd.f32 0.0, %v4554
  %v4556 = vpop.f32.mrb[0].mxu0
  %4557 = vdwg.mxu0
  %s4558 = scalar_lea.vmem %s10, 224
  %v4559 = vld [vmem:[%s4558] sm:$0xff]
  %v4560 = vld [vmem:[%s4558 + $0x8] sm:$0xff]
  %v4561 = vld [vmem:[%s4558 + $0x10] sm:$0xff]
  %v4562 = vld [vmem:[%s4558 + $0x18] sm:$0xff]
  %v4564 = vsel %vm435, %v4555, 0
  %4566 = vmatprep.subr.mxu0 0.0
  %4567 = vmatpush1.msra.mxu0 %v4559
  %4568 = vmatprep.subr.mxu0 0.0
  %4569 = vmatpush1.msra.mxu0 %v4560
  %4570 = vmatprep.subr.mxu0 0.0
  %4571 = vmatpush1.msra.mxu0 %v4561
  %4572 = vmatprep.subr.mxu0 0.0
  %4573 = vmatpush1.msra.mxu0 %v4562
  %4574 = vmatprep.subr.mxu0 0.0
  %4575 = vmatpush1.msra.mxu0 0.0
  %4576 = vmatprep.subr.mxu0 0.0
  %4577 = vmatpush1.msra.mxu0 0.0
  %4578 = vmatprep.subr.mxu0 0.0
  %4579 = vmatpush1.msra.mxu0 0.0
  %4580 = vmatprep.subr.mxu0 0.0
  %4581 = vmatpush1.msra.mxu0 0.0
  %4582 = vmatprep.subr.mxu0 0.0
  %4583 = vmatpush1.msra.mxu0 0.0
  %4584 = vmatprep.subr.mxu0 0.0
  %4585 = vmatpush1.msra.mxu0 0.0
  %4586 = vmatprep.subr.mxu0 0.0
  %4587 = vmatpush1.msra.mxu0 0.0
  %4588 = vmatprep.subr.mxu0 0.0
  %4589 = vmatpush1.msra.mxu0 0.0
  %4590 = vmatprep.subr.mxu0 0.0
  %4591 = vmatpush1.msra.mxu0 0.0
  %4592 = vmatprep.subr.mxu0 0.0
  %4593 = vmatpush1.msra.mxu0 0.0
  %4594 = vmatprep.subr.mxu0 0.0
  %4595 = vmatpush1.msra.mxu0 0.0
  %4596 = vmatprep.subr.mxu0 0.0
  %4597 = vmatpush1.msra.mxu0 0.0
  %4598 = vmatprep.subr.mxu0 0.0
  %4599 = vmatpush1.msra.mxu0 0.0
  %4600 = vmatprep.subr.mxu0 0.0
  %4601 = vmatpush1.msra.mxu0 0.0
  %4602 = vmatprep.subr.mxu0 0.0
  %4603 = vmatpush1.msra.mxu0 0.0
  %4604 = vmatprep.subr.mxu0 0.0
  %4605 = vmatpush1.msra.mxu0 0.0
  %4606 = vmatprep.subr.mxu0 0.0
  %4607 = vmatpush1.msra.mxu0 0.0
  %4608 = vmatprep.subr.mxu0 0.0
  %4609 = vmatpush1.msra.mxu0 0.0
  %4610 = vmatprep.subr.mxu0 0.0
  %4611 = vmatpush1.msra.mxu0 0.0
  %4612 = vmatprep.subr.mxu0 0.0
  %4613 = vmatpush1.msra.mxu0 0.0
  %4614 = vmatprep.subr.mxu0 0.0
  %4615 = vmatpush1.msra.mxu0 0.0
  %4616 = vmatprep.subr.mxu0 0.0
  %4617 = vmatpush1.msra.mxu0 0.0
  %4618 = vmatprep.subr.mxu0 0.0
  %4619 = vmatpush1.msra.mxu0 0.0
  %4620 = vmatprep.subr.mxu0 0.0
  %4621 = vmatpush1.msra.mxu0 0.0
  %4622 = vmatprep.subr.mxu0 0.0
  %4623 = vmatpush1.msra.mxu0 0.0
  %4624 = vmatprep.subr.mxu0 0.0
  %4625 = vmatpush1.msra.mxu0 0.0
  %4626 = vmatprep.subr.mxu0 0.0
  %4627 = vmatpush1.msra.mxu0 0.0
  %4628 = vmatprep.subr.mxu0 0.0
  %4629 = vmatpush1.msra.mxu0 0.0
  %4630 = vmatprep.mubr.f32.mxu0 0.0
  %4631 = vmatmul.mubr.f32.gmra.mrb[0].mxu0 %v4564
  %v4632 = vpop.f32.mrb[0].mxu0
  %v4633 = vadd.f32 0.0, %v4632
  %v4634 = vpop.f32.mrb[0].mxu0
  %4635 = vdwg.mxu0
  %v4636 = vadd.f32 %v4482, %v4633
  %s4637 = scalar_lea.vmem %s9, 64
  %v4638 = vld [vmem:[%s4637] sm:$0xff]
  %v4640 = vsel %vm3409, %v4638, 0
  %4642 = vmatprep.subr.mxu0 0.0
  %4643 = vmatpush1.msra.mxu0 %v3407
  %4644 = vmatprep.subr.mxu0 0.0
  %4645 = vmatpush1.msra.mxu0 0.0
  %4646 = vmatprep.subr.mxu0 0.0
  %4647 = vmatpush1.msra.mxu0 0.0
  %4648 = vmatprep.subr.mxu0 0.0
  %4649 = vmatpush1.msra.mxu0 0.0
  %4650 = vmatprep.subr.mxu0 0.0
  %4651 = vmatpush1.msra.mxu0 0.0
  %4652 = vmatprep.subr.mxu0 0.0
  %4653 = vmatpush1.msra.mxu0 0.0
  %4654 = vmatprep.subr.mxu0 0.0
  %4655 = vmatpush1.msra.mxu0 0.0
  %4656 = vmatprep.subr.mxu0 0.0
  %4657 = vmatpush1.msra.mxu0 0.0
  %4658 = vmatprep.subr.mxu0 0.0
  %4659 = vmatpush1.msra.mxu0 0.0
  %4660 = vmatprep.subr.mxu0 0.0
  %4661 = vmatpush1.msra.mxu0 0.0
  %4662 = vmatprep.subr.mxu0 0.0
  %4663 = vmatpush1.msra.mxu0 0.0
  %4664 = vmatprep.subr.mxu0 0.0
  %4665 = vmatpush1.msra.mxu0 0.0
  %4666 = vmatprep.subr.mxu0 0.0
  %4667 = vmatpush1.msra.mxu0 0.0
  %4668 = vmatprep.subr.mxu0 0.0
  %4669 = vmatpush1.msra.mxu0 0.0
  %4670 = vmatprep.subr.mxu0 0.0
  %4671 = vmatpush1.msra.mxu0 0.0
  %4672 = vmatprep.subr.mxu0 0.0
  %4673 = vmatpush1.msra.mxu0 0.0
  %4674 = vmatprep.subr.mxu0 0.0
  %4675 = vmatpush1.msra.mxu0 0.0
  %4676 = vmatprep.subr.mxu0 0.0
  %4677 = vmatpush1.msra.mxu0 0.0
  %4678 = vmatprep.subr.mxu0 0.0
  %4679 = vmatpush1.msra.mxu0 0.0
  %4680 = vmatprep.subr.mxu0 0.0
  %4681 = vmatpush1.msra.mxu0 0.0
  %4682 = vmatprep.subr.mxu0 0.0
  %4683 = vmatpush1.msra.mxu0 0.0
  %4684 = vmatprep.subr.mxu0 0.0
  %4685 = vmatpush1.msra.mxu0 0.0
  %4686 = vmatprep.subr.mxu0 0.0
  %4687 = vmatpush1.msra.mxu0 0.0
  %4688 = vmatprep.subr.mxu0 0.0
  %4689 = vmatpush1.msra.mxu0 0.0
  %4690 = vmatprep.subr.mxu0 0.0
  %4691 = vmatpush1.msra.mxu0 0.0
  %4692 = vmatprep.subr.mxu0 0.0
  %4693 = vmatpush1.msra.mxu0 0.0
  %4694 = vmatprep.subr.mxu0 0.0
  %4695 = vmatpush1.msra.mxu0 0.0
  %4696 = vmatprep.subr.mxu0 0.0
  %4697 = vmatpush1.msra.mxu0 0.0
  %4698 = vmatprep.subr.mxu0 0.0
  %4699 = vmatpush1.msra.mxu0 0.0
  %4700 = vmatprep.subr.mxu0 0.0
  %4701 = vmatpush1.msra.mxu0 0.0
  %4702 = vmatprep.subr.mxu0 0.0
  %4703 = vmatpush1.msra.mxu0 0.0
  %4704 = vmatprep.subr.mxu0 0.0
  %4705 = vmatpush1.msra.mxu0 0.0
  %4706 = vmatprep.mubr.f32.mxu0 0.0
  %4707 = vmatmul.mubr.f32.gmra.mrb[0].mxu0 %v4640
  %v4708 = vpop.f32.mrb[0].mxu0
  %v4709 = vadd.f32 0.0, %v4708
  %v4710 = vpop.f32.mrb[0].mxu0
  %4711 = vdwg.mxu0
  %s4712 = scalar_lea.vmem %s10, 256
  %v4713 = vld [vmem:[%s4712] sm:$0xff]
  %v4714 = vld [vmem:[%s4712 + $0x8] sm:$0xff]
  %v4715 = vld [vmem:[%s4712 + $0x10] sm:$0xff]
  %v4716 = vld [vmem:[%s4712 + $0x18] sm:$0xff]
  %v4718 = vsel %vm435, %v4709, 0
  %4720 = vmatprep.subr.mxu0 0.0
  %4721 = vmatpush1.msra.mxu0 %v4713
  %4722 = vmatprep.subr.mxu0 0.0
  %4723 = vmatpush1.msra.mxu0 %v4714
  %4724 = vmatprep.subr.mxu0 0.0
  %4725 = vmatpush1.msra.mxu0 %v4715
  %4726 = vmatprep.subr.mxu0 0.0
  %4727 = vmatpush1.msra.mxu0 %v4716
  %4728 = vmatprep.subr.mxu0 0.0
  %4729 = vmatpush1.msra.mxu0 0.0
  %4730 = vmatprep.subr.mxu0 0.0
  %4731 = vmatpush1.msra.mxu0 0.0
  %4732 = vmatprep.subr.mxu0 0.0
  %4733 = vmatpush1.msra.mxu0 0.0
  %4734 = vmatprep.subr.mxu0 0.0
  %4735 = vmatpush1.msra.mxu0 0.0
  %4736 = vmatprep.subr.mxu0 0.0
  %4737 = vmatpush1.msra.mxu0 0.0
  %4738 = vmatprep.subr.mxu0 0.0
  %4739 = vmatpush1.msra.mxu0 0.0
  %4740 = vmatprep.subr.mxu0 0.0
  %4741 = vmatpush1.msra.mxu0 0.0
  %4742 = vmatprep.subr.mxu0 0.0
  %4743 = vmatpush1.msra.mxu0 0.0
  %4744 = vmatprep.subr.mxu0 0.0
  %4745 = vmatpush1.msra.mxu0 0.0
  %4746 = vmatprep.subr.mxu0 0.0
  %4747 = vmatpush1.msra.mxu0 0.0
  %4748 = vmatprep.subr.mxu0 0.0
  %4749 = vmatpush1.msra.mxu0 0.0
  %4750 = vmatprep.subr.mxu0 0.0
  %4751 = vmatpush1.msra.mxu0 0.0
  %4752 = vmatprep.subr.mxu0 0.0
  %4753 = vmatpush1.msra.mxu0 0.0
  %4754 = vmatprep.subr.mxu0 0.0
  %4755 = vmatpush1.msra.mxu0 0.0
  %4756 = vmatprep.subr.mxu0 0.0
  %4757 = vmatpush1.msra.mxu0 0.0
  %4758 = vmatprep.subr.mxu0 0.0
  %4759 = vmatpush1.msra.mxu0 0.0
  %4760 = vmatprep.subr.mxu0 0.0
  %4761 = vmatpush1.msra.mxu0 0.0
  %4762 = vmatprep.subr.mxu0 0.0
  %4763 = vmatpush1.msra.mxu0 0.0
  %4764 = vmatprep.subr.mxu0 0.0
  %4765 = vmatpush1.msra.mxu0 0.0
  %4766 = vmatprep.subr.mxu0 0.0
  %4767 = vmatpush1.msra.mxu0 0.0
  %4768 = vmatprep.subr.mxu0 0.0
  %4769 = vmatpush1.msra.mxu0 0.0
  %4770 = vmatprep.subr.mxu0 0.0
  %4771 = vmatpush1.msra.mxu0 0.0
  %4772 = vmatprep.subr.mxu0 0.0
  %4773 = vmatpush1.msra.mxu0 0.0
  %4774 = vmatprep.subr.mxu0 0.0
  %4775 = vmatpush1.msra.mxu0 0.0
  %4776 = vmatprep.subr.mxu0 0.0
  %4777 = vmatpush1.msra.mxu0 0.0
  %4778 = vmatprep.subr.mxu0 0.0
  %4779 = vmatpush1.msra.mxu0 0.0
  %4780 = vmatprep.subr.mxu0 0.0
  %4781 = vmatpush1.msra.mxu0 0.0
  %4782 = vmatprep.subr.mxu0 0.0
  %4783 = vmatpush1.msra.mxu0 0.0
  %4784 = vmatprep.mubr.f32.mxu0 0.0
  %4785 = vmatmul.mubr.f32.gmra.mrb[0].mxu0 %v4718
  %v4786 = vpop.f32.mrb[0].mxu0
  %v4787 = vadd.f32 0.0, %v4786
  %v4788 = vpop.f32.mrb[0].mxu0
  %4789 = vdwg.mxu0
  %v4790 = vadd.f32 %v4636, %v4787
  %v4791 = vld [vmem:[%s11] sm:$0x1]
  %v4793 = vlaneseq
  %v4794 = vshrl.u32 %v4793, 7
  %v4795 = vsub.s32 0, %v4794
  %v4796 = vrot.slane %v4791, %v4795
  %v4798 = vadd.f32 %v4790, %v4796
  %v4799 = vmax.f32 %v4798, 0.0
  %v4800 = vld [vmem:[%s12] sm:$0xff]
  %v4801 = vld [vmem:[%s12 + $0x8] sm:$0xff]
  %v4802 = vld [vmem:[%s12 + $0x10] sm:$0xff]
  %v4803 = vld [vmem:[%s12 + $0x18] sm:$0xff]
  %v4804 = vld [vmem:[%s13] sm:$0x1]
  %v4806 = vlaneseq
  %v4807 = vshrl.u32 %v4806, 7
  %v4808 = vsub.s32 0, %v4807
  %v4809 = vrot.slane %v4804, %v4808
  %v4812 = vsel %vm435, %v4799, 0
  %4814 = vmatprep.subr.mxu0 0.0
  %4815 = vmatpush1.msra.mxu0 %v4800
  %4816 = vmatprep.subr.mxu0 0.0
  %4817 = vmatpush1.msra.mxu0 %v4801
  %4818 = vmatprep.subr.mxu0 0.0
  %4819 = vmatpush1.msra.mxu0 %v4802
  %4820 = vmatprep.subr.mxu0 0.0
  %4821 = vmatpush1.msra.mxu0 %v4803
  %4822 = vmatprep.subr.mxu0 0.0
  %4823 = vmatpush1.msra.mxu0 0.0
  %4824 = vmatprep.subr.mxu0 0.0
  %4825 = vmatpush1.msra.mxu0 0.0
  %4826 = vmatprep.subr.mxu0 0.0
  %4827 = vmatpush1.msra.mxu0 0.0
  %4828 = vmatprep.subr.mxu0 0.0
  %4829 = vmatpush1.msra.mxu0 0.0
  %4830 = vmatprep.subr.mxu0 0.0
  %4831 = vmatpush1.msra.mxu0 0.0
  %4832 = vmatprep.subr.mxu0 0.0
  %4833 = vmatpush1.msra.mxu0 0.0
  %4834 = vmatprep.subr.mxu0 0.0
  %4835 = vmatpush1.msra.mxu0 0.0
  %4836 = vmatprep.subr.mxu0 0.0
  %4837 = vmatpush1.msra.mxu0 0.0
  %4838 = vmatprep.subr.mxu0 0.0
  %4839 = vmatpush1.msra.mxu0 0.0
  %4840 = vmatprep.subr.mxu0 0.0
  %4841 = vmatpush1.msra.mxu0 0.0
  %4842 = vmatprep.subr.mxu0 0.0
  %4843 = vmatpush1.msra.mxu0 0.0
  %4844 = vmatprep.subr.mxu0 0.0
  %4845 = vmatpush1.msra.mxu0 0.0
  %4846 = vmatprep.subr.mxu0 0.0
  %4847 = vmatpush1.msra.mxu0 0.0
  %4848 = vmatprep.subr.mxu0 0.0
  %4849 = vmatpush1.msra.mxu0 0.0
  %4850 = vmatprep.subr.mxu0 0.0
  %4851 = vmatpush1.msra.mxu0 0.0
  %4852 = vmatprep.subr.mxu0 0.0
  %4853 = vmatpush1.msra.mxu0 0.0
  %4854 = vmatprep.subr.mxu0 0.0
  %4855 = vmatpush1.msra.mxu0 0.0
  %4856 = vmatprep.subr.mxu0 0.0
  %4857 = vmatpush1.msra.mxu0 0.0
  %4858 = vmatprep.subr.mxu0 0.0
  %4859 = vmatpush1.msra.mxu0 0.0
  %4860 = vmatprep.subr.mxu0 0.0
  %4861 = vmatpush1.msra.mxu0 0.0
  %4862 = vmatprep.subr.mxu0 0.0
  %4863 = vmatpush1.msra.mxu0 0.0
  %4864 = vmatprep.subr.mxu0 0.0
  %4865 = vmatpush1.msra.mxu0 0.0
  %4866 = vmatprep.subr.mxu0 0.0
  %4867 = vmatpush1.msra.mxu0 0.0
  %4868 = vmatprep.subr.mxu0 0.0
  %4869 = vmatpush1.msra.mxu0 0.0
  %4870 = vmatprep.subr.mxu0 0.0
  %4871 = vmatpush1.msra.mxu0 0.0
  %4872 = vmatprep.subr.mxu0 0.0
  %4873 = vmatpush1.msra.mxu0 0.0
  %4874 = vmatprep.subr.mxu0 0.0
  %4875 = vmatpush1.msra.mxu0 0.0
  %4876 = vmatprep.subr.mxu0 0.0
  %4877 = vmatpush1.msra.mxu0 0.0
  %4878 = vmatprep.mubr.f32.mxu0 0.0
  %4879 = vmatmul.mubr.f32.gmra.mrb[0].mxu0 %v4812
  %v4880 = vpop.f32.mrb[0].mxu0
  %v4881 = vadd.f32 %v4809, %v4880
  %v4882 = vpop.f32.mrb[0].mxu0
  %4883 = vdwg.mxu0
  %v4884 = vmax.f32 %v4881, 0.0
  %s4885 = scalar_lea.vmem %s12, 32
  %v4886 = vld [vmem:[%s4885] sm:$0xff]
  %v4887 = vld [vmem:[%s4885 + $0x8] sm:$0xff]
  %v4888 = vld [vmem:[%s4885 + $0x10] sm:$0xff]
  %v4889 = vld [vmem:[%s4885 + $0x18] sm:$0xff]
  %s4890 = scalar_lea.vmem %s13, 1
  %v4891 = vld [vmem:[%s4890] sm:$0x1]
  %v4893 = vlaneseq
  %v4894 = vshrl.u32 %v4893, 7
  %v4895 = vsub.s32 0, %v4894
  %v4896 = vrot.slane %v4891, %v4895
  %v4899 = vsel %vm435, %v4884, 0
  %4901 = vmatprep.subr.mxu0 0.0
  %4902 = vmatpush1.msra.mxu0 %v4886
  %4903 = vmatprep.subr.mxu0 0.0
  %4904 = vmatpush1.msra.mxu0 %v4887
  %4905 = vmatprep.subr.mxu0 0.0
  %4906 = vmatpush1.msra.mxu0 %v4888
  %4907 = vmatprep.subr.mxu0 0.0
  %4908 = vmatpush1.msra.mxu0 %v4889
  %4909 = vmatprep.subr.mxu0 0.0
  %4910 = vmatpush1.msra.mxu0 0.0
  %4911 = vmatprep.subr.mxu0 0.0
  %4912 = vmatpush1.msra.mxu0 0.0
  %4913 = vmatprep.subr.mxu0 0.0
  %4914 = vmatpush1.msra.mxu0 0.0
  %4915 = vmatprep.subr.mxu0 0.0
  %4916 = vmatpush1.msra.mxu0 0.0
  %4917 = vmatprep.subr.mxu0 0.0
  %4918 = vmatpush1.msra.mxu0 0.0
  %4919 = vmatprep.subr.mxu0 0.0
  %4920 = vmatpush1.msra.mxu0 0.0
  %4921 = vmatprep.subr.mxu0 0.0
  %4922 = vmatpush1.msra.mxu0 0.0
  %4923 = vmatprep.subr.mxu0 0.0
  %4924 = vmatpush1.msra.mxu0 0.0
  %4925 = vmatprep.subr.mxu0 0.0
  %4926 = vmatpush1.msra.mxu0 0.0
  %4927 = vmatprep.subr.mxu0 0.0
  %4928 = vmatpush1.msra.mxu0 0.0
  %4929 = vmatprep.subr.mxu0 0.0
  %4930 = vmatpush1.msra.mxu0 0.0
  %4931 = vmatprep.subr.mxu0 0.0
  %4932 = vmatpush1.msra.mxu0 0.0
  %4933 = vmatprep.subr.mxu0 0.0
  %4934 = vmatpush1.msra.mxu0 0.0
  %4935 = vmatprep.subr.mxu0 0.0
  %4936 = vmatpush1.msra.mxu0 0.0
  %4937 = vmatprep.subr.mxu0 0.0
  %4938 = vmatpush1.msra.mxu0 0.0
  %4939 = vmatprep.subr.mxu0 0.0
  %4940 = vmatpush1.msra.mxu0 0.0
  %4941 = vmatprep.subr.mxu0 0.0
  %4942 = vmatpush1.msra.mxu0 0.0
  %4943 = vmatprep.subr.mxu0 0.0
  %4944 = vmatpush1.msra.mxu0 0.0
  %4945 = vmatprep.subr.mxu0 0.0
  %4946 = vmatpush1.msra.mxu0 0.0
  %4947 = vmatprep.subr.mxu0 0.0
  %4948 = vmatpush1.msra.mxu0 0.0
  %4949 = vmatprep.subr.mxu0 0.0
  %4950 = vmatpush1.msra.mxu0 0.0
  %4951 = vmatprep.subr.mxu0 0.0
  %4952 = vmatpush1.msra.mxu0 0.0
  %4953 = vmatprep.subr.mxu0 0.0
  %4954 = vmatpush1.msra.mxu0 0.0
  %4955 = vmatprep.subr.mxu0 0.0
  %4956 = vmatpush1.msra.mxu0 0.0
  %4957 = vmatprep.subr.mxu0 0.0
  %4958 = vmatpush1.msra.mxu0 0.0
  %4959 = vmatprep.subr.mxu0 0.0
  %4960 = vmatpush1.msra.mxu0 0.0
  %4961 = vmatprep.subr.mxu0 0.0
  %4962 = vmatpush1.msra.mxu0 0.0
  %4963 = vmatprep.subr.mxu0 0.0
  %4964 = vmatpush1.msra.mxu0 0.0
  %4965 = vmatprep.mubr.f32.mxu0 0.0
  %4966 = vmatmul.mubr.f32.gmra.mrb[0].mxu0 %v4899
  %v4967 = vpop.f32.mrb[0].mxu0
  %v4968 = vadd.f32 %v4896, %v4967
  %v4969 = vpop.f32.mrb[0].mxu0
  %4970 = vdwg.mxu0
  %v4971 = vmax.f32 %v4968, 0.0
  %s4972 = scalar_lea.vmem %s12, 64
  %v4973 = vld [vmem:[%s4972] sm:$0xff]
  %v4974 = vld [vmem:[%s4972 + $0x8] sm:$0xff]
  %v4975 = vld [vmem:[%s4972 + $0x10] sm:$0xff]
  %v4976 = vld [vmem:[%s4972 + $0x18] sm:$0xff]
  %s4977 = scalar_lea.vmem %s13, 2
  %v4978 = vld [vmem:[%s4977] sm:$0x1]
  %v4980 = vlaneseq
  %v4981 = vshrl.u32 %v4980, 7
  %v4982 = vsub.s32 0, %v4981
  %v4983 = vrot.slane %v4978, %v4982
  %v4986 = vsel %vm435, %v4971, 0
  %4988 = vmatprep.subr.mxu0 0.0
  %4989 = vmatpush1.msra.mxu0 %v4973
  %4990 = vmatprep.subr.mxu0 0.0
  %4991 = vmatpush1.msra.mxu0 %v4974
  %4992 = vmatprep.subr.mxu0 0.0
  %4993 = vmatpush1.msra.mxu0 %v4975
  %4994 = vmatprep.subr.mxu0 0.0
  %4995 = vmatpush1.msra.mxu0 %v4976
  %4996 = vmatprep.subr.mxu0 0.0
  %4997 = vmatpush1.msra.mxu0 0.0
  %4998 = vmatprep.subr.mxu0 0.0
  %4999 = vmatpush1.msra.mxu0 0.0
  %5000 = vmatprep.subr.mxu0 0.0
  %5001 = vmatpush1.msra.mxu0 0.0
  %5002 = vmatprep.subr.mxu0 0.0
  %5003 = vmatpush1.msra.mxu0 0.0
  %5004 = vmatprep.subr.mxu0 0.0
  %5005 = vmatpush1.msra.mxu0 0.0
  %5006 = vmatprep.subr.mxu0 0.0
  %5007 = vmatpush1.msra.mxu0 0.0
  %5008 = vmatprep.subr.mxu0 0.0
  %5009 = vmatpush1.msra.mxu0 0.0
  %5010 = vmatprep.subr.mxu0 0.0
  %5011 = vmatpush1.msra.mxu0 0.0
  %5012 = vmatprep.subr.mxu0 0.0
  %5013 = vmatpush1.msra.mxu0 0.0
  %5014 = vmatprep.subr.mxu0 0.0
  %5015 = vmatpush1.msra.mxu0 0.0
  %5016 = vmatprep.subr.mxu0 0.0
  %5017 = vmatpush1.msra.mxu0 0.0
  %5018 = vmatprep.subr.mxu0 0.0
  %5019 = vmatpush1.msra.mxu0 0.0
  %5020 = vmatprep.subr.mxu0 0.0
  %5021 = vmatpush1.msra.mxu0 0.0
  %5022 = vmatprep.subr.mxu0 0.0
  %5023 = vmatpush1.msra.mxu0 0.0
  %5024 = vmatprep.subr.mxu0 0.0
  %5025 = vmatpush1.msra.mxu0 0.0
  %5026 = vmatprep.subr.mxu0 0.0
  %5027 = vmatpush1.msra.mxu0 0.0
  %5028 = vmatprep.subr.mxu0 0.0
  %5029 = vmatpush1.msra.mxu0 0.0
  %5030 = vmatprep.subr.mxu0 0.0
  %5031 = vmatpush1.msra.mxu0 0.0
  %5032 = vmatprep.subr.mxu0 0.0
  %5033 = vmatpush1.msra.mxu0 0.0
  %5034 = vmatprep.subr.mxu0 0.0
  %5035 = vmatpush1.msra.mxu0 0.0
  %5036 = vmatprep.subr.mxu0 0.0
  %5037 = vmatpush1.msra.mxu0 0.0
  %5038 = vmatprep.subr.mxu0 0.0
  %5039 = vmatpush1.msra.mxu0 0.0
  %5040 = vmatprep.subr.mxu0 0.0
  %5041 = vmatpush1.msra.mxu0 0.0
  %5042 = vmatprep.subr.mxu0 0.0
  %5043 = vmatpush1.msra.mxu0 0.0
  %5044 = vmatprep.subr.mxu0 0.0
  %5045 = vmatpush1.msra.mxu0 0.0
  %5046 = vmatprep.subr.mxu0 0.0
  %5047 = vmatpush1.msra.mxu0 0.0
  %5048 = vmatprep.subr.mxu0 0.0
  %5049 = vmatpush1.msra.mxu0 0.0
  %5050 = vmatprep.subr.mxu0 0.0
  %5051 = vmatpush1.msra.mxu0 0.0
  %5052 = vmatprep.mubr.f32.mxu0 0.0
  %5053 = vmatmul.mubr.f32.gmra.mrb[0].mxu0 %v4986
  %v5054 = vpop.f32.mrb[0].mxu0
  %v5055 = vadd.f32 %v4983, %v5054
  %v5056 = vpop.f32.mrb[0].mxu0
  %5057 = vdwg.mxu0
  %v5058 = vmax.f32 %v5055, 0.0
  %s5059 = scalar_lea.vmem %s12, 96
  %v5060 = vld [vmem:[%s5059] sm:$0xff]
  %v5061 = vld [vmem:[%s5059 + $0x8] sm:$0xff]
  %v5062 = vld [vmem:[%s5059 + $0x10] sm:$0xff]
  %v5063 = vld [vmem:[%s5059 + $0x18] sm:$0xff]
  %s5064 = scalar_lea.vmem %s13, 3
  %v5065 = vld [vmem:[%s5064] sm:$0x1]
  %v5067 = vlaneseq
  %v5068 = vshrl.u32 %v5067, 7
  %v5069 = vsub.s32 0, %v5068
  %v5070 = vrot.slane %v5065, %v5069
  %v5073 = vsel %vm435, %v5058, 0
  %5075 = vmatprep.subr.mxu0 0.0
  %5076 = vmatpush1.msra.mxu0 %v5060
  %5077 = vmatprep.subr.mxu0 0.0
  %5078 = vmatpush1.msra.mxu0 %v5061
  %5079 = vmatprep.subr.mxu0 0.0
  %5080 = vmatpush1.msra.mxu0 %v5062
  %5081 = vmatprep.subr.mxu0 0.0
  %5082 = vmatpush1.msra.mxu0 %v5063
  %5083 = vmatprep.subr.mxu0 0.0
  %5084 = vmatpush1.msra.mxu0 0.0
  %5085 = vmatprep.subr.mxu0 0.0
  %5086 = vmatpush1.msra.mxu0 0.0
  %5087 = vmatprep.subr.mxu0 0.0
  %5088 = vmatpush1.msra.mxu0 0.0
  %5089 = vmatprep.subr.mxu0 0.0
  %5090 = vmatpush1.msra.mxu0 0.0
  %5091 = vmatprep.subr.mxu0 0.0
  %5092 = vmatpush1.msra.mxu0 0.0
  %5093 = vmatprep.subr.mxu0 0.0
  %5094 = vmatpush1.msra.mxu0 0.0
  %5095 = vmatprep.subr.mxu0 0.0
  %5096 = vmatpush1.msra.mxu0 0.0
  %5097 = vmatprep.subr.mxu0 0.0
  %5098 = vmatpush1.msra.mxu0 0.0
  %5099 = vmatprep.subr.mxu0 0.0
  %5100 = vmatpush1.msra.mxu0 0.0
  %5101 = vmatprep.subr.mxu0 0.0
  %5102 = vmatpush1.msra.mxu0 0.0
  %5103 = vmatprep.subr.mxu0 0.0
  %5104 = vmatpush1.msra.mxu0 0.0
  %5105 = vmatprep.subr.mxu0 0.0
  %5106 = vmatpush1.msra.mxu0 0.0
  %5107 = vmatprep.subr.mxu0 0.0
  %5108 = vmatpush1.msra.mxu0 0.0
  %5109 = vmatprep.subr.mxu0 0.0
  %5110 = vmatpush1.msra.mxu0 0.0
  %5111 = vmatprep.subr.mxu0 0.0
  %5112 = vmatpush1.msra.mxu0 0.0
  %5113 = vmatprep.subr.mxu0 0.0
  %5114 = vmatpush1.msra.mxu0 0.0
  %5115 = vmatprep.subr.mxu0 0.0
  %5116 = vmatpush1.msra.mxu0 0.0
  %5117 = vmatprep.subr.mxu0 0.0
  %5118 = vmatpush1.msra.mxu0 0.0
  %5119 = vmatprep.subr.mxu0 0.0
  %5120 = vmatpush1.msra.mxu0 0.0
  %5121 = vmatprep.subr.mxu0 0.0
  %5122 = vmatpush1.msra.mxu0 0.0
  %5123 = vmatprep.subr.mxu0 0.0
  %5124 = vmatpush1.msra.mxu0 0.0
  %5125 = vmatprep.subr.mxu0 0.0
  %5126 = vmatpush1.msra.mxu0 0.0
  %5127 = vmatprep.subr.mxu0 0.0
  %5128 = vmatpush1.msra.mxu0 0.0
  %5129 = vmatprep.subr.mxu0 0.0
  %5130 = vmatpush1.msra.mxu0 0.0
  %5131 = vmatprep.subr.mxu0 0.0
  %5132 = vmatpush1.msra.mxu0 0.0
  %5133 = vmatprep.subr.mxu0 0.0
  %5134 = vmatpush1.msra.mxu0 0.0
  %5135 = vmatprep.subr.mxu0 0.0
  %5136 = vmatpush1.msra.mxu0 0.0
  %5137 = vmatprep.subr.mxu0 0.0
  %5138 = vmatpush1.msra.mxu0 0.0
  %5139 = vmatprep.mubr.f32.mxu0 0.0
  %5140 = vmatmul.mubr.f32.gmra.mrb[0].mxu0 %v5073
  %v5141 = vpop.f32.mrb[0].mxu0
  %v5142 = vadd.f32 %v5070, %v5141
  %v5143 = vpop.f32.mrb[0].mxu0
  %5144 = vdwg.mxu0
  %v5145 = vmax.f32 %v5142, 0.0
  %s5146 = scalar_lea.vmem %s12, 128
  %v5147 = vld [vmem:[%s5146] sm:$0xff]
  %v5148 = vld [vmem:[%s5146 + $0x8] sm:$0xff]
  %v5149 = vld [vmem:[%s5146 + $0x10] sm:$0xff]
  %v5150 = vld [vmem:[%s5146 + $0x18] sm:$0xff]
  %s5151 = scalar_lea.vmem %s13, 4
  %v5152 = vld [vmem:[%s5151] sm:$0x1]
  %v5154 = vlaneseq
  %v5155 = vshrl.u32 %v5154, 7
  %v5156 = vsub.s32 0, %v5155
  %v5157 = vrot.slane %v5152, %v5156
  %v5160 = vsel %vm435, %v5145, 0
  %5162 = vmatprep.subr.mxu0 0.0
  %5163 = vmatpush1.msra.mxu0 %v5147
  %5164 = vmatprep.subr.mxu0 0.0
  %5165 = vmatpush1.msra.mxu0 %v5148
  %5166 = vmatprep.subr.mxu0 0.0
  %5167 = vmatpush1.msra.mxu0 %v5149
  %5168 = vmatprep.subr.mxu0 0.0
  %5169 = vmatpush1.msra.mxu0 %v5150
  %5170 = vmatprep.subr.mxu0 0.0
  %5171 = vmatpush1.msra.mxu0 0.0
  %5172 = vmatprep.subr.mxu0 0.0
  %5173 = vmatpush1.msra.mxu0 0.0
  %5174 = vmatprep.subr.mxu0 0.0
  %5175 = vmatpush1.msra.mxu0 0.0
  %5176 = vmatprep.subr.mxu0 0.0
  %5177 = vmatpush1.msra.mxu0 0.0
  %5178 = vmatprep.subr.mxu0 0.0
  %5179 = vmatpush1.msra.mxu0 0.0
  %5180 = vmatprep.subr.mxu0 0.0
  %5181 = vmatpush1.msra.mxu0 0.0
  %5182 = vmatprep.subr.mxu0 0.0
  %5183 = vmatpush1.msra.mxu0 0.0
  %5184 = vmatprep.subr.mxu0 0.0
  %5185 = vmatpush1.msra.mxu0 0.0
  %5186 = vmatprep.subr.mxu0 0.0
  %5187 = vmatpush1.msra.mxu0 0.0
  %5188 = vmatprep.subr.mxu0 0.0
  %5189 = vmatpush1.msra.mxu0 0.0
  %5190 = vmatprep.subr.mxu0 0.0
  %5191 = vmatpush1.msra.mxu0 0.0
  %5192 = vmatprep.subr.mxu0 0.0
  %5193 = vmatpush1.msra.mxu0 0.0
  %5194 = vmatprep.subr.mxu0 0.0
  %5195 = vmatpush1.msra.mxu0 0.0
  %5196 = vmatprep.subr.mxu0 0.0
  %5197 = vmatpush1.msra.mxu0 0.0
  %5198 = vmatprep.subr.mxu0 0.0
  %5199 = vmatpush1.msra.mxu0 0.0
  %5200 = vmatprep.subr.mxu0 0.0
  %5201 = vmatpush1.msra.mxu0 0.0
  %5202 = vmatprep.subr.mxu0 0.0
  %5203 = vmatpush1.msra.mxu0 0.0
  %5204 = vmatprep.subr.mxu0 0.0
  %5205 = vmatpush1.msra.mxu0 0.0
  %5206 = vmatprep.subr.mxu0 0.0
  %5207 = vmatpush1.msra.mxu0 0.0
  %5208 = vmatprep.subr.mxu0 0.0
  %5209 = vmatpush1.msra.mxu0 0.0
  %5210 = vmatprep.subr.mxu0 0.0
  %5211 = vmatpush1.msra.mxu0 0.0
  %5212 = vmatprep.subr.mxu0 0.0
  %5213 = vmatpush1.msra.mxu0 0.0
  %5214 = vmatprep.subr.mxu0 0.0
  %5215 = vmatpush1.msra.mxu0 0.0
  %5216 = vmatprep.subr.mxu0 0.0
  %5217 = vmatpush1.msra.mxu0 0.0
  %5218 = vmatprep.subr.mxu0 0.0
  %5219 = vmatpush1.msra.mxu0 0.0
  %5220 = vmatprep.subr.mxu0 0.0
  %5221 = vmatpush1.msra.mxu0 0.0
  %5222 = vmatprep.subr.mxu0 0.0
  %5223 = vmatpush1.msra.mxu0 0.0
  %5224 = vmatprep.subr.mxu0 0.0
  %5225 = vmatpush1.msra.mxu0 0.0
  %5226 = vmatprep.mubr.f32.mxu0 0.0
  %5227 = vmatmul.mubr.f32.gmra.mrb[0].mxu0 %v5160
  %v5228 = vpop.f32.mrb[0].mxu0
  %v5229 = vadd.f32 %v5157, %v5228
  %v5230 = vpop.f32.mrb[0].mxu0
  %5231 = vdwg.mxu0
  %v5232 = vmax.f32 %v5229, 0.0
  %s5233 = scalar_lea.vmem %s12, 160
  %v5234 = vld [vmem:[%s5233] sm:$0xff]
  %v5235 = vld [vmem:[%s5233 + $0x8] sm:$0xff]
  %v5236 = vld [vmem:[%s5233 + $0x10] sm:$0xff]
  %v5237 = vld [vmem:[%s5233 + $0x18] sm:$0xff]
  %s5238 = scalar_lea.vmem %s13, 5
  %v5239 = vld [vmem:[%s5238] sm:$0x1]
  %v5241 = vlaneseq
  %v5242 = vshrl.u32 %v5241, 7
  %v5243 = vsub.s32 0, %v5242
  %v5244 = vrot.slane %v5239, %v5243
  %v5247 = vsel %vm435, %v5232, 0
  %5249 = vmatprep.subr.mxu0 0.0
  %5250 = vmatpush1.msra.mxu0 %v5234
  %5251 = vmatprep.subr.mxu0 0.0
  %5252 = vmatpush1.msra.mxu0 %v5235
  %5253 = vmatprep.subr.mxu0 0.0
  %5254 = vmatpush1.msra.mxu0 %v5236
  %5255 = vmatprep.subr.mxu0 0.0
  %5256 = vmatpush1.msra.mxu0 %v5237
  %5257 = vmatprep.subr.mxu0 0.0
  %5258 = vmatpush1.msra.mxu0 0.0
  %5259 = vmatprep.subr.mxu0 0.0
  %5260 = vmatpush1.msra.mxu0 0.0
  %5261 = vmatprep.subr.mxu0 0.0
  %5262 = vmatpush1.msra.mxu0 0.0
  %5263 = vmatprep.subr.mxu0 0.0
  %5264 = vmatpush1.msra.mxu0 0.0
  %5265 = vmatprep.subr.mxu0 0.0
  %5266 = vmatpush1.msra.mxu0 0.0
  %5267 = vmatprep.subr.mxu0 0.0
  %5268 = vmatpush1.msra.mxu0 0.0
  %5269 = vmatprep.subr.mxu0 0.0
  %5270 = vmatpush1.msra.mxu0 0.0
  %5271 = vmatprep.subr.mxu0 0.0
  %5272 = vmatpush1.msra.mxu0 0.0
  %5273 = vmatprep.subr.mxu0 0.0
  %5274 = vmatpush1.msra.mxu0 0.0
  %5275 = vmatprep.subr.mxu0 0.0
  %5276 = vmatpush1.msra.mxu0 0.0
  %5277 = vmatprep.subr.mxu0 0.0
  %5278 = vmatpush1.msra.mxu0 0.0
  %5279 = vmatprep.subr.mxu0 0.0
  %5280 = vmatpush1.msra.mxu0 0.0
  %5281 = vmatprep.subr.mxu0 0.0
  %5282 = vmatpush1.msra.mxu0 0.0
  %5283 = vmatprep.subr.mxu0 0.0
  %5284 = vmatpush1.msra.mxu0 0.0
  %5285 = vmatprep.subr.mxu0 0.0
  %5286 = vmatpush1.msra.mxu0 0.0
  %5287 = vmatprep.subr.mxu0 0.0
  %5288 = vmatpush1.msra.mxu0 0.0
  %5289 = vmatprep.subr.mxu0 0.0
  %5290 = vmatpush1.msra.mxu0 0.0
  %5291 = vmatprep.subr.mxu0 0.0
  %5292 = vmatpush1.msra.mxu0 0.0
  %5293 = vmatprep.subr.mxu0 0.0
  %5294 = vmatpush1.msra.mxu0 0.0
  %5295 = vmatprep.subr.mxu0 0.0
  %5296 = vmatpush1.msra.mxu0 0.0
  %5297 = vmatprep.subr.mxu0 0.0
  %5298 = vmatpush1.msra.mxu0 0.0
  %5299 = vmatprep.subr.mxu0 0.0
  %5300 = vmatpush1.msra.mxu0 0.0
  %5301 = vmatprep.subr.mxu0 0.0
  %5302 = vmatpush1.msra.mxu0 0.0
  %5303 = vmatprep.subr.mxu0 0.0
  %5304 = vmatpush1.msra.mxu0 0.0
  %5305 = vmatprep.subr.mxu0 0.0
  %5306 = vmatpush1.msra.mxu0 0.0
  %5307 = vmatprep.subr.mxu0 0.0
  %5308 = vmatpush1.msra.mxu0 0.0
  %5309 = vmatprep.subr.mxu0 0.0
  %5310 = vmatpush1.msra.mxu0 0.0
  %5311 = vmatprep.subr.mxu0 0.0
  %5312 = vmatpush1.msra.mxu0 0.0
  %5313 = vmatprep.mubr.f32.mxu0 0.0
  %5314 = vmatmul.mubr.f32.gmra.mrb[0].mxu0 %v5247
  %v5315 = vpop.f32.mrb[0].mxu0
  %v5316 = vadd.f32 %v5244, %v5315
  %v5317 = vpop.f32.mrb[0].mxu0
  %5318 = vdwg.mxu0
  %v5319 = vmax.f32 %v5316, 0.0
  %s5320 = scalar_lea.vmem %s12, 192
  %v5321 = vld [vmem:[%s5320] sm:$0xff]
  %v5322 = vld [vmem:[%s5320 + $0x8] sm:$0xff]
  %v5323 = vld [vmem:[%s5320 + $0x10] sm:$0xff]
  %v5324 = vld [vmem:[%s5320 + $0x18] sm:$0xff]
  %s5325 = scalar_lea.vmem %s13, 6
  %v5326 = vld [vmem:[%s5325] sm:$0x1]
  %v5328 = vlaneseq
  %v5329 = vshrl.u32 %v5328, 7
  %v5330 = vsub.s32 0, %v5329
  %v5331 = vrot.slane %v5326, %v5330
  %v5334 = vsel %vm435, %v5319, 0
  %5336 = vmatprep.subr.mxu0 0.0
  %5337 = vmatpush1.msra.mxu0 %v5321
  %5338 = vmatprep.subr.mxu0 0.0
  %5339 = vmatpush1.msra.mxu0 %v5322
  %5340 = vmatprep.subr.mxu0 0.0
  %5341 = vmatpush1.msra.mxu0 %v5323
  %5342 = vmatprep.subr.mxu0 0.0
  %5343 = vmatpush1.msra.mxu0 %v5324
  %5344 = vmatprep.subr.mxu0 0.0
  %5345 = vmatpush1.msra.mxu0 0.0
  %5346 = vmatprep.subr.mxu0 0.0
  %5347 = vmatpush1.msra.mxu0 0.0
  %5348 = vmatprep.subr.mxu0 0.0
  %5349 = vmatpush1.msra.mxu0 0.0
  %5350 = vmatprep.subr.mxu0 0.0
  %5351 = vmatpush1.msra.mxu0 0.0
  %5352 = vmatprep.subr.mxu0 0.0
  %5353 = vmatpush1.msra.mxu0 0.0
  %5354 = vmatprep.subr.mxu0 0.0
  %5355 = vmatpush1.msra.mxu0 0.0
  %5356 = vmatprep.subr.mxu0 0.0
  %5357 = vmatpush1.msra.mxu0 0.0
  %5358 = vmatprep.subr.mxu0 0.0
  %5359 = vmatpush1.msra.mxu0 0.0
  %5360 = vmatprep.subr.mxu0 0.0
  %5361 = vmatpush1.msra.mxu0 0.0
  %5362 = vmatprep.subr.mxu0 0.0
  %5363 = vmatpush1.msra.mxu0 0.0
  %5364 = vmatprep.subr.mxu0 0.0
  %5365 = vmatpush1.msra.mxu0 0.0
  %5366 = vmatprep.subr.mxu0 0.0
  %5367 = vmatpush1.msra.mxu0 0.0
  %5368 = vmatprep.subr.mxu0 0.0
  %5369 = vmatpush1.msra.mxu0 0.0
  %5370 = vmatprep.subr.mxu0 0.0
  %5371 = vmatpush1.msra.mxu0 0.0
  %5372 = vmatprep.subr.mxu0 0.0
  %5373 = vmatpush1.msra.mxu0 0.0
  %5374 = vmatprep.subr.mxu0 0.0
  %5375 = vmatpush1.msra.mxu0 0.0
  %5376 = vmatprep.subr.mxu0 0.0
  %5377 = vmatpush1.msra.mxu0 0.0
  %5378 = vmatprep.subr.mxu0 0.0
  %5379 = vmatpush1.msra.mxu0 0.0
  %5380 = vmatprep.subr.mxu0 0.0
  %5381 = vmatpush1.msra.mxu0 0.0
  %5382 = vmatprep.subr.mxu0 0.0
  %5383 = vmatpush1.msra.mxu0 0.0
  %5384 = vmatprep.subr.mxu0 0.0
  %5385 = vmatpush1.msra.mxu0 0.0
  %5386 = vmatprep.subr.mxu0 0.0
  %5387 = vmatpush1.msra.mxu0 0.0
  %5388 = vmatprep.subr.mxu0 0.0
  %5389 = vmatpush1.msra.mxu0 0.0
  %5390 = vmatprep.subr.mxu0 0.0
  %5391 = vmatpush1.msra.mxu0 0.0
  %5392 = vmatprep.subr.mxu0 0.0
  %5393 = vmatpush1.msra.mxu0 0.0
  %5394 = vmatprep.subr.mxu0 0.0
  %5395 = vmatpush1.msra.mxu0 0.0
  %5396 = vmatprep.subr.mxu0 0.0
  %5397 = vmatpush1.msra.mxu0 0.0
  %5398 = vmatprep.subr.mxu0 0.0
  %5399 = vmatpush1.msra.mxu0 0.0
  %5400 = vmatprep.mubr.f32.mxu0 0.0
  %5401 = vmatmul.mubr.f32.gmra.mrb[0].mxu0 %v5334
  %v5402 = vpop.f32.mrb[0].mxu0
  %v5403 = vadd.f32 %v5331, %v5402
  %v5404 = vpop.f32.mrb[0].mxu0
  %5405 = vdwg.mxu0
  %v5406 = vmax.f32 %v5403, 0.0
  %s5407 = scalar_lea.vmem %s12, 224
  %v5408 = vld [vmem:[%s5407] sm:$0xff]
  %v5409 = vld [vmem:[%s5407 + $0x8] sm:$0xff]
  %v5410 = vld [vmem:[%s5407 + $0x10] sm:$0xff]
  %v5411 = vld [vmem:[%s5407 + $0x18] sm:$0xff]
  %s5412 = scalar_lea.vmem %s13, 7
  %v5413 = vld [vmem:[%s5412] sm:$0x1]
  %v5415 = vlaneseq
  %v5416 = vshrl.u32 %v5415, 7
  %v5417 = vsub.s32 0, %v5416
  %v5418 = vrot.slane %v5413, %v5417
  %v5421 = vsel %vm435, %v5406, 0
  %5423 = vmatprep.subr.mxu0 0.0
  %5424 = vmatpush1.msra.mxu0 %v5408
  %5425 = vmatprep.subr.mxu0 0.0
  %5426 = vmatpush1.msra.mxu0 %v5409
  %5427 = vmatprep.subr.mxu0 0.0
  %5428 = vmatpush1.msra.mxu0 %v5410
  %5429 = vmatprep.subr.mxu0 0.0
  %5430 = vmatpush1.msra.mxu0 %v5411
  %5431 = vmatprep.subr.mxu0 0.0
  %5432 = vmatpush1.msra.mxu0 0.0
  %5433 = vmatprep.subr.mxu0 0.0
  %5434 = vmatpush1.msra.mxu0 0.0
  %5435 = vmatprep.subr.mxu0 0.0
  %5436 = vmatpush1.msra.mxu0 0.0
  %5437 = vmatprep.subr.mxu0 0.0
  %5438 = vmatpush1.msra.mxu0 0.0
  %5439 = vmatprep.subr.mxu0 0.0
  %5440 = vmatpush1.msra.mxu0 0.0
  %5441 = vmatprep.subr.mxu0 0.0
  %5442 = vmatpush1.msra.mxu0 0.0
  %5443 = vmatprep.subr.mxu0 0.0
  %5444 = vmatpush1.msra.mxu0 0.0
  %5445 = vmatprep.subr.mxu0 0.0
  %5446 = vmatpush1.msra.mxu0 0.0
  %5447 = vmatprep.subr.mxu0 0.0
  %5448 = vmatpush1.msra.mxu0 0.0
  %5449 = vmatprep.subr.mxu0 0.0
  %5450 = vmatpush1.msra.mxu0 0.0
  %5451 = vmatprep.subr.mxu0 0.0
  %5452 = vmatpush1.msra.mxu0 0.0
  %5453 = vmatprep.subr.mxu0 0.0
  %5454 = vmatpush1.msra.mxu0 0.0
  %5455 = vmatprep.subr.mxu0 0.0
  %5456 = vmatpush1.msra.mxu0 0.0
  %5457 = vmatprep.subr.mxu0 0.0
  %5458 = vmatpush1.msra.mxu0 0.0
  %5459 = vmatprep.subr.mxu0 0.0
  %5460 = vmatpush1.msra.mxu0 0.0
  %5461 = vmatprep.subr.mxu0 0.0
  %5462 = vmatpush1.msra.mxu0 0.0
  %5463 = vmatprep.subr.mxu0 0.0
  %5464 = vmatpush1.msra.mxu0 0.0
  %5465 = vmatprep.subr.mxu0 0.0
  %5466 = vmatpush1.msra.mxu0 0.0
  %5467 = vmatprep.subr.mxu0 0.0
  %5468 = vmatpush1.msra.mxu0 0.0
  %5469 = vmatprep.subr.mxu0 0.0
  %5470 = vmatpush1.msra.mxu0 0.0
  %5471 = vmatprep.subr.mxu0 0.0
  %5472 = vmatpush1.msra.mxu0 0.0
  %5473 = vmatprep.subr.mxu0 0.0
  %5474 = vmatpush1.msra.mxu0 0.0
  %5475 = vmatprep.subr.mxu0 0.0
  %5476 = vmatpush1.msra.mxu0 0.0
  %5477 = vmatprep.subr.mxu0 0.0
  %5478 = vmatpush1.msra.mxu0 0.0
  %5479 = vmatprep.subr.mxu0 0.0
  %5480 = vmatpush1.msra.mxu0 0.0
  %5481 = vmatprep.subr.mxu0 0.0
  %5482 = vmatpush1.msra.mxu0 0.0
  %5483 = vmatprep.subr.mxu0 0.0
  %5484 = vmatpush1.msra.mxu0 0.0
  %5485 = vmatprep.subr.mxu0 0.0
  %5486 = vmatpush1.msra.mxu0 0.0
  %5487 = vmatprep.mubr.f32.mxu0 0.0
  %5488 = vmatmul.mubr.f32.gmra.mrb[0].mxu0 %v5421
  %v5489 = vpop.f32.mrb[0].mxu0
  %v5490 = vadd.f32 %v5418, %v5489
  %v5491 = vpop.f32.mrb[0].mxu0
  %5492 = vdwg.mxu0
  %v5493 = vmax.f32 %v5490, 0.0
  %s5494 = scalar_lea.vmem %s12, 256
  %v5495 = vld [vmem:[%s5494] sm:$0xff]
  %v5496 = vld [vmem:[%s5494 + $0x8] sm:$0xff]
  %v5497 = vld [vmem:[%s5494 + $0x10] sm:$0xff]
  %v5498 = vld [vmem:[%s5494 + $0x18] sm:$0xff]
  %s5499 = scalar_lea.vmem %s13, 8
  %v5500 = vld [vmem:[%s5499] sm:$0x1]
  %v5502 = vlaneseq
  %v5503 = vshrl.u32 %v5502, 7
  %v5504 = vsub.s32 0, %v5503
  %v5505 = vrot.slane %v5500, %v5504
  %v5508 = vsel %vm435, %v5493, 0
  %5510 = vmatprep.subr.mxu0 0.0
  %5511 = vmatpush1.msra.mxu0 %v5495
  %5512 = vmatprep.subr.mxu0 0.0
  %5513 = vmatpush1.msra.mxu0 %v5496
  %5514 = vmatprep.subr.mxu0 0.0
  %5515 = vmatpush1.msra.mxu0 %v5497
  %5516 = vmatprep.subr.mxu0 0.0
  %5517 = vmatpush1.msra.mxu0 %v5498
  %5518 = vmatprep.subr.mxu0 0.0
  %5519 = vmatpush1.msra.mxu0 0.0
  %5520 = vmatprep.subr.mxu0 0.0
  %5521 = vmatpush1.msra.mxu0 0.0
  %5522 = vmatprep.subr.mxu0 0.0
  %5523 = vmatpush1.msra.mxu0 0.0
  %5524 = vmatprep.subr.mxu0 0.0
  %5525 = vmatpush1.msra.mxu0 0.0
  %5526 = vmatprep.subr.mxu0 0.0
  %5527 = vmatpush1.msra.mxu0 0.0
  %5528 = vmatprep.subr.mxu0 0.0
  %5529 = vmatpush1.msra.mxu0 0.0
  %5530 = vmatprep.subr.mxu0 0.0
  %5531 = vmatpush1.msra.mxu0 0.0
  %5532 = vmatprep.subr.mxu0 0.0
  %5533 = vmatpush1.msra.mxu0 0.0
  %5534 = vmatprep.subr.mxu0 0.0
  %5535 = vmatpush1.msra.mxu0 0.0
  %5536 = vmatprep.subr.mxu0 0.0
  %5537 = vmatpush1.msra.mxu0 0.0
  %5538 = vmatprep.subr.mxu0 0.0
  %5539 = vmatpush1.msra.mxu0 0.0
  %5540 = vmatprep.subr.mxu0 0.0
  %5541 = vmatpush1.msra.mxu0 0.0
  %5542 = vmatprep.subr.mxu0 0.0
  %5543 = vmatpush1.msra.mxu0 0.0
  %5544 = vmatprep.subr.mxu0 0.0
  %5545 = vmatpush1.msra.mxu0 0.0
  %5546 = vmatprep.subr.mxu0 0.0
  %5547 = vmatpush1.msra.mxu0 0.0
  %5548 = vmatprep.subr.mxu0 0.0
  %5549 = vmatpush1.msra.mxu0 0.0
  %5550 = vmatprep.subr.mxu0 0.0
  %5551 = vmatpush1.msra.mxu0 0.0
  %5552 = vmatprep.subr.mxu0 0.0
  %5553 = vmatpush1.msra.mxu0 0.0
  %5554 = vmatprep.subr.mxu0 0.0
  %5555 = vmatpush1.msra.mxu0 0.0
  %5556 = vmatprep.subr.mxu0 0.0
  %5557 = vmatpush1.msra.mxu0 0.0
  %5558 = vmatprep.subr.mxu0 0.0
  %5559 = vmatpush1.msra.mxu0 0.0
  %5560 = vmatprep.subr.mxu0 0.0
  %5561 = vmatpush1.msra.mxu0 0.0
  %5562 = vmatprep.subr.mxu0 0.0
  %5563 = vmatpush1.msra.mxu0 0.0
  %5564 = vmatprep.subr.mxu0 0.0
  %5565 = vmatpush1.msra.mxu0 0.0
  %5566 = vmatprep.subr.mxu0 0.0
  %5567 = vmatpush1.msra.mxu0 0.0
  %5568 = vmatprep.subr.mxu0 0.0
  %5569 = vmatpush1.msra.mxu0 0.0
  %5570 = vmatprep.subr.mxu0 0.0
  %5571 = vmatpush1.msra.mxu0 0.0
  %5572 = vmatprep.subr.mxu0 0.0
  %5573 = vmatpush1.msra.mxu0 0.0
  %5574 = vmatprep.mubr.f32.mxu0 0.0
  %5575 = vmatmul.mubr.f32.gmra.mrb[0].mxu0 %v5508
  %v5576 = vpop.f32.mrb[0].mxu0
  %v5577 = vadd.f32 %v5505, %v5576
  %v5578 = vpop.f32.mrb[0].mxu0
  %5579 = vdwg.mxu0
  %v5580 = vmax.f32 %v5577, 0.0
  %s5581 = scalar_lea.vmem %s12, 288
  %v5582 = vld [vmem:[%s5581] sm:$0xff]
  %v5583 = vld [vmem:[%s5581 + $0x8] sm:$0xff]
  %v5584 = vld [vmem:[%s5581 + $0x10] sm:$0xff]
  %v5585 = vld [vmem:[%s5581 + $0x18] sm:$0xff]
  %s5586 = scalar_lea.vmem %s13, 9
  %v5587 = vld [vmem:[%s5586] sm:$0x1]
  %v5589 = vlaneseq
  %v5590 = vshrl.u32 %v5589, 7
  %v5591 = vsub.s32 0, %v5590
  %v5592 = vrot.slane %v5587, %v5591
  %v5595 = vsel %vm435, %v5580, 0
  %5597 = vmatprep.subr.mxu0 0.0
  %5598 = vmatpush1.msra.mxu0 %v5582
  %5599 = vmatprep.subr.mxu0 0.0
  %5600 = vmatpush1.msra.mxu0 %v5583
  %5601 = vmatprep.subr.mxu0 0.0
  %5602 = vmatpush1.msra.mxu0 %v5584
  %5603 = vmatprep.subr.mxu0 0.0
  %5604 = vmatpush1.msra.mxu0 %v5585
  %5605 = vmatprep.subr.mxu0 0.0
  %5606 = vmatpush1.msra.mxu0 0.0
  %5607 = vmatprep.subr.mxu0 0.0
  %5608 = vmatpush1.msra.mxu0 0.0
  %5609 = vmatprep.subr.mxu0 0.0
  %5610 = vmatpush1.msra.mxu0 0.0
  %5611 = vmatprep.subr.mxu0 0.0
  %5612 = vmatpush1.msra.mxu0 0.0
  %5613 = vmatprep.subr.mxu0 0.0
  %5614 = vmatpush1.msra.mxu0 0.0
  %5615 = vmatprep.subr.mxu0 0.0
  %5616 = vmatpush1.msra.mxu0 0.0
  %5617 = vmatprep.subr.mxu0 0.0
  %5618 = vmatpush1.msra.mxu0 0.0
  %5619 = vmatprep.subr.mxu0 0.0
  %5620 = vmatpush1.msra.mxu0 0.0
  %5621 = vmatprep.subr.mxu0 0.0
  %5622 = vmatpush1.msra.mxu0 0.0
  %5623 = vmatprep.subr.mxu0 0.0
  %5624 = vmatpush1.msra.mxu0 0.0
  %5625 = vmatprep.subr.mxu0 0.0
  %5626 = vmatpush1.msra.mxu0 0.0
  %5627 = vmatprep.subr.mxu0 0.0
  %5628 = vmatpush1.msra.mxu0 0.0
  %5629 = vmatprep.subr.mxu0 0.0
  %5630 = vmatpush1.msra.mxu0 0.0
  %5631 = vmatprep.subr.mxu0 0.0
  %5632 = vmatpush1.msra.mxu0 0.0
  %5633 = vmatprep.subr.mxu0 0.0
  %5634 = vmatpush1.msra.mxu0 0.0
  %5635 = vmatprep.subr.mxu0 0.0
  %5636 = vmatpush1.msra.mxu0 0.0
  %5637 = vmatprep.subr.mxu0 0.0
  %5638 = vmatpush1.msra.mxu0 0.0
  %5639 = vmatprep.subr.mxu0 0.0
  %5640 = vmatpush1.msra.mxu0 0.0
  %5641 = vmatprep.subr.mxu0 0.0
  %5642 = vmatpush1.msra.mxu0 0.0
  %5643 = vmatprep.subr.mxu0 0.0
  %5644 = vmatpush1.msra.mxu0 0.0
  %5645 = vmatprep.subr.mxu0 0.0
  %5646 = vmatpush1.msra.mxu0 0.0
  %5647 = vmatprep.subr.mxu0 0.0
  %5648 = vmatpush1.msra.mxu0 0.0
  %5649 = vmatprep.subr.mxu0 0.0
  %5650 = vmatpush1.msra.mxu0 0.0
  %5651 = vmatprep.subr.mxu0 0.0
  %5652 = vmatpush1.msra.mxu0 0.0
  %5653 = vmatprep.subr.mxu0 0.0
  %5654 = vmatpush1.msra.mxu0 0.0
  %5655 = vmatprep.subr.mxu0 0.0
  %5656 = vmatpush1.msra.mxu0 0.0
  %5657 = vmatprep.subr.mxu0 0.0
  %5658 = vmatpush1.msra.mxu0 0.0
  %5659 = vmatprep.subr.mxu0 0.0
  %5660 = vmatpush1.msra.mxu0 0.0
  %5661 = vmatprep.mubr.f32.mxu0 0.0
  %5662 = vmatmul.mubr.f32.gmra.mrb[0].mxu0 %v5595
  %v5663 = vpop.f32.mrb[0].mxu0
  %v5664 = vadd.f32 %v5592, %v5663
  %v5665 = vpop.f32.mrb[0].mxu0
  %5666 = vdwg.mxu0
  %v5667 = vmax.f32 %v5664, 0.0
  %s5668 = scalar_lea.vmem %s12, 320
  %v5669 = vld [vmem:[%s5668] sm:$0xff]
  %v5670 = vld [vmem:[%s5668 + $0x8] sm:$0xff]
  %v5671 = vld [vmem:[%s5668 + $0x10] sm:$0xff]
  %v5672 = vld [vmem:[%s5668 + $0x18] sm:$0xff]
  %s5673 = scalar_lea.vmem %s13, 10
  %v5674 = vld [vmem:[%s5673] sm:$0x1]
  %v5676 = vlaneseq
  %v5677 = vshrl.u32 %v5676, 7
  %v5678 = vsub.s32 0, %v5677
  %v5679 = vrot.slane %v5674, %v5678
  %v5682 = vsel %vm435, %v5667, 0
  %5684 = vmatprep.subr.mxu0 0.0
  %5685 = vmatpush1.msra.mxu0 %v5669
  %5686 = vmatprep.subr.mxu0 0.0
  %5687 = vmatpush1.msra.mxu0 %v5670
  %5688 = vmatprep.subr.mxu0 0.0
  %5689 = vmatpush1.msra.mxu0 %v5671
  %5690 = vmatprep.subr.mxu0 0.0
  %5691 = vmatpush1.msra.mxu0 %v5672
  %5692 = vmatprep.subr.mxu0 0.0
  %5693 = vmatpush1.msra.mxu0 0.0
  %5694 = vmatprep.subr.mxu0 0.0
  %5695 = vmatpush1.msra.mxu0 0.0
  %5696 = vmatprep.subr.mxu0 0.0
  %5697 = vmatpush1.msra.mxu0 0.0
  %5698 = vmatprep.subr.mxu0 0.0
  %5699 = vmatpush1.msra.mxu0 0.0
  %5700 = vmatprep.subr.mxu0 0.0
  %5701 = vmatpush1.msra.mxu0 0.0
  %5702 = vmatprep.subr.mxu0 0.0
  %5703 = vmatpush1.msra.mxu0 0.0
  %5704 = vmatprep.subr.mxu0 0.0
  %5705 = vmatpush1.msra.mxu0 0.0
  %5706 = vmatprep.subr.mxu0 0.0
  %5707 = vmatpush1.msra.mxu0 0.0
  %5708 = vmatprep.subr.mxu0 0.0
  %5709 = vmatpush1.msra.mxu0 0.0
  %5710 = vmatprep.subr.mxu0 0.0
  %5711 = vmatpush1.msra.mxu0 0.0
  %5712 = vmatprep.subr.mxu0 0.0
  %5713 = vmatpush1.msra.mxu0 0.0
  %5714 = vmatprep.subr.mxu0 0.0
  %5715 = vmatpush1.msra.mxu0 0.0
  %5716 = vmatprep.subr.mxu0 0.0
  %5717 = vmatpush1.msra.mxu0 0.0
  %5718 = vmatprep.subr.mxu0 0.0
  %5719 = vmatpush1.msra.mxu0 0.0
  %5720 = vmatprep.subr.mxu0 0.0
  %5721 = vmatpush1.msra.mxu0 0.0
  %5722 = vmatprep.subr.mxu0 0.0
  %5723 = vmatpush1.msra.mxu0 0.0
  %5724 = vmatprep.subr.mxu0 0.0
  %5725 = vmatpush1.msra.mxu0 0.0
  %5726 = vmatprep.subr.mxu0 0.0
  %5727 = vmatpush1.msra.mxu0 0.0
  %5728 = vmatprep.subr.mxu0 0.0
  %5729 = vmatpush1.msra.mxu0 0.0
  %5730 = vmatprep.subr.mxu0 0.0
  %5731 = vmatpush1.msra.mxu0 0.0
  %5732 = vmatprep.subr.mxu0 0.0
  %5733 = vmatpush1.msra.mxu0 0.0
  %5734 = vmatprep.subr.mxu0 0.0
  %5735 = vmatpush1.msra.mxu0 0.0
  %5736 = vmatprep.subr.mxu0 0.0
  %5737 = vmatpush1.msra.mxu0 0.0
  %5738 = vmatprep.subr.mxu0 0.0
  %5739 = vmatpush1.msra.mxu0 0.0
  %5740 = vmatprep.subr.mxu0 0.0
  %5741 = vmatpush1.msra.mxu0 0.0
  %5742 = vmatprep.subr.mxu0 0.0
  %5743 = vmatpush1.msra.mxu0 0.0
  %5744 = vmatprep.subr.mxu0 0.0
  %5745 = vmatpush1.msra.mxu0 0.0
  %5746 = vmatprep.subr.mxu0 0.0
  %5747 = vmatpush1.msra.mxu0 0.0
  %5748 = vmatprep.mubr.f32.mxu0 0.0
  %5749 = vmatmul.mubr.f32.gmra.mrb[0].mxu0 %v5682
  %v5750 = vpop.f32.mrb[0].mxu0
  %v5751 = vadd.f32 %v5679, %v5750
  %v5752 = vpop.f32.mrb[0].mxu0
  %5753 = vdwg.mxu0
  %v5754 = vmax.f32 %v5751, 0.0
  %s5755 = scalar_lea.vmem %s12, 352
  %v5756 = vld [vmem:[%s5755] sm:$0xff]
  %v5757 = vld [vmem:[%s5755 + $0x8] sm:$0xff]
  %v5758 = vld [vmem:[%s5755 + $0x10] sm:$0xff]
  %v5759 = vld [vmem:[%s5755 + $0x18] sm:$0xff]
  %s5760 = scalar_lea.vmem %s13, 11
  %v5761 = vld [vmem:[%s5760] sm:$0x1]
  %v5763 = vlaneseq
  %v5764 = vshrl.u32 %v5763, 7
  %v5765 = vsub.s32 0, %v5764
  %v5766 = vrot.slane %v5761, %v5765
  %v5769 = vsel %vm435, %v5754, 0
  %5771 = vmatprep.subr.mxu0 0.0
  %5772 = vmatpush1.msra.mxu0 %v5756
  %5773 = vmatprep.subr.mxu0 0.0
  %5774 = vmatpush1.msra.mxu0 %v5757
  %5775 = vmatprep.subr.mxu0 0.0
  %5776 = vmatpush1.msra.mxu0 %v5758
  %5777 = vmatprep.subr.mxu0 0.0
  %5778 = vmatpush1.msra.mxu0 %v5759
  %5779 = vmatprep.subr.mxu0 0.0
  %5780 = vmatpush1.msra.mxu0 0.0
  %5781 = vmatprep.subr.mxu0 0.0
  %5782 = vmatpush1.msra.mxu0 0.0
  %5783 = vmatprep.subr.mxu0 0.0
  %5784 = vmatpush1.msra.mxu0 0.0
  %5785 = vmatprep.subr.mxu0 0.0
  %5786 = vmatpush1.msra.mxu0 0.0
  %5787 = vmatprep.subr.mxu0 0.0
  %5788 = vmatpush1.msra.mxu0 0.0
  %5789 = vmatprep.subr.mxu0 0.0
  %5790 = vmatpush1.msra.mxu0 0.0
  %5791 = vmatprep.subr.mxu0 0.0
  %5792 = vmatpush1.msra.mxu0 0.0
  %5793 = vmatprep.subr.mxu0 0.0
  %5794 = vmatpush1.msra.mxu0 0.0
  %5795 = vmatprep.subr.mxu0 0.0
  %5796 = vmatpush1.msra.mxu0 0.0
  %5797 = vmatprep.subr.mxu0 0.0
  %5798 = vmatpush1.msra.mxu0 0.0
  %5799 = vmatprep.subr.mxu0 0.0
  %5800 = vmatpush1.msra.mxu0 0.0
  %5801 = vmatprep.subr.mxu0 0.0
  %5802 = vmatpush1.msra.mxu0 0.0
  %5803 = vmatprep.subr.mxu0 0.0
  %5804 = vmatpush1.msra.mxu0 0.0
  %5805 = vmatprep.subr.mxu0 0.0
  %5806 = vmatpush1.msra.mxu0 0.0
  %5807 = vmatprep.subr.mxu0 0.0
  %5808 = vmatpush1.msra.mxu0 0.0
  %5809 = vmatprep.subr.mxu0 0.0
  %5810 = vmatpush1.msra.mxu0 0.0
  %5811 = vmatprep.subr.mxu0 0.0
  %5812 = vmatpush1.msra.mxu0 0.0
  %5813 = vmatprep.subr.mxu0 0.0
  %5814 = vmatpush1.msra.mxu0 0.0
  %5815 = vmatprep.subr.mxu0 0.0
  %5816 = vmatpush1.msra.mxu0 0.0
  %5817 = vmatprep.subr.mxu0 0.0
  %5818 = vmatpush1.msra.mxu0 0.0
  %5819 = vmatprep.subr.mxu0 0.0
  %5820 = vmatpush1.msra.mxu0 0.0
  %5821 = vmatprep.subr.mxu0 0.0
  %5822 = vmatpush1.msra.mxu0 0.0
  %5823 = vmatprep.subr.mxu0 0.0
  %5824 = vmatpush1.msra.mxu0 0.0
  %5825 = vmatprep.subr.mxu0 0.0
  %5826 = vmatpush1.msra.mxu0 0.0
  %5827 = vmatprep.subr.mxu0 0.0
  %5828 = vmatpush1.msra.mxu0 0.0
  %5829 = vmatprep.subr.mxu0 0.0
  %5830 = vmatpush1.msra.mxu0 0.0
  %5831 = vmatprep.subr.mxu0 0.0
  %5832 = vmatpush1.msra.mxu0 0.0
  %5833 = vmatprep.subr.mxu0 0.0
  %5834 = vmatpush1.msra.mxu0 0.0
  %5835 = vmatprep.mubr.f32.mxu0 0.0
  %5836 = vmatmul.mubr.f32.gmra.mrb[0].mxu0 %v5769
  %v5837 = vpop.f32.mrb[0].mxu0
  %v5838 = vadd.f32 %v5766, %v5837
  %v5839 = vpop.f32.mrb[0].mxu0
  %5840 = vdwg.mxu0
  %v5841 = vmax.f32 %v5838, 0.0
  %s5842 = scalar_lea.vmem %s12, 384
  %v5843 = vld [vmem:[%s5842] sm:$0xff]
  %v5844 = vld [vmem:[%s5842 + $0x8] sm:$0xff]
  %v5845 = vld [vmem:[%s5842 + $0x10] sm:$0xff]
  %v5846 = vld [vmem:[%s5842 + $0x18] sm:$0xff]
  %s5847 = scalar_lea.vmem %s13, 12
  %v5848 = vld [vmem:[%s5847] sm:$0x1]
  %v5850 = vlaneseq
  %v5851 = vshrl.u32 %v5850, 7
  %v5852 = vsub.s32 0, %v5851
  %v5853 = vrot.slane %v5848, %v5852
  %v5856 = vsel %vm435, %v5841, 0
  %5858 = vmatprep.subr.mxu0 0.0
  %5859 = vmatpush1.msra.mxu0 %v5843
  %5860 = vmatprep.subr.mxu0 0.0
  %5861 = vmatpush1.msra.mxu0 %v5844
  %5862 = vmatprep.subr.mxu0 0.0
  %5863 = vmatpush1.msra.mxu0 %v5845
  %5864 = vmatprep.subr.mxu0 0.0
  %5865 = vmatpush1.msra.mxu0 %v5846
  %5866 = vmatprep.subr.mxu0 0.0
  %5867 = vmatpush1.msra.mxu0 0.0
  %5868 = vmatprep.subr.mxu0 0.0
  %5869 = vmatpush1.msra.mxu0 0.0
  %5870 = vmatprep.subr.mxu0 0.0
  %5871 = vmatpush1.msra.mxu0 0.0
  %5872 = vmatprep.subr.mxu0 0.0
  %5873 = vmatpush1.msra.mxu0 0.0
  %5874 = vmatprep.subr.mxu0 0.0
  %5875 = vmatpush1.msra.mxu0 0.0
  %5876 = vmatprep.subr.mxu0 0.0
  %5877 = vmatpush1.msra.mxu0 0.0
  %5878 = vmatprep.subr.mxu0 0.0
  %5879 = vmatpush1.msra.mxu0 0.0
  %5880 = vmatprep.subr.mxu0 0.0
  %5881 = vmatpush1.msra.mxu0 0.0
  %5882 = vmatprep.subr.mxu0 0.0
  %5883 = vmatpush1.msra.mxu0 0.0
  %5884 = vmatprep.subr.mxu0 0.0
  %5885 = vmatpush1.msra.mxu0 0.0
  %5886 = vmatprep.subr.mxu0 0.0
  %5887 = vmatpush1.msra.mxu0 0.0
  %5888 = vmatprep.subr.mxu0 0.0
  %5889 = vmatpush1.msra.mxu0 0.0
  %5890 = vmatprep.subr.mxu0 0.0
  %5891 = vmatpush1.msra.mxu0 0.0
  %5892 = vmatprep.subr.mxu0 0.0
  %5893 = vmatpush1.msra.mxu0 0.0
  %5894 = vmatprep.subr.mxu0 0.0
  %5895 = vmatpush1.msra.mxu0 0.0
  %5896 = vmatprep.subr.mxu0 0.0
  %5897 = vmatpush1.msra.mxu0 0.0
  %5898 = vmatprep.subr.mxu0 0.0
  %5899 = vmatpush1.msra.mxu0 0.0
  %5900 = vmatprep.subr.mxu0 0.0
  %5901 = vmatpush1.msra.mxu0 0.0
  %5902 = vmatprep.subr.mxu0 0.0
  %5903 = vmatpush1.msra.mxu0 0.0
  %5904 = vmatprep.subr.mxu0 0.0
  %5905 = vmatpush1.msra.mxu0 0.0
  %5906 = vmatprep.subr.mxu0 0.0
  %5907 = vmatpush1.msra.mxu0 0.0
  %5908 = vmatprep.subr.mxu0 0.0
  %5909 = vmatpush1.msra.mxu0 0.0
  %5910 = vmatprep.subr.mxu0 0.0
  %5911 = vmatpush1.msra.mxu0 0.0
  %5912 = vmatprep.subr.mxu0 0.0
  %5913 = vmatpush1.msra.mxu0 0.0
  %5914 = vmatprep.subr.mxu0 0.0
  %5915 = vmatpush1.msra.mxu0 0.0
  %5916 = vmatprep.subr.mxu0 0.0
  %5917 = vmatpush1.msra.mxu0 0.0
  %5918 = vmatprep.subr.mxu0 0.0
  %5919 = vmatpush1.msra.mxu0 0.0
  %5920 = vmatprep.subr.mxu0 0.0
  %5921 = vmatpush1.msra.mxu0 0.0
  %5922 = vmatprep.mubr.f32.mxu0 0.0
  %5923 = vmatmul.mubr.f32.gmra.mrb[0].mxu0 %v5856
  %v5924 = vpop.f32.mrb[0].mxu0
  %v5925 = vadd.f32 %v5853, %v5924
  %v5926 = vpop.f32.mrb[0].mxu0
  %5927 = vdwg.mxu0
  %v5928 = vmax.f32 %v5925, 0.0
  %s5929 = scalar_lea.vmem %s12, 416
  %v5930 = vld [vmem:[%s5929] sm:$0xff]
  %v5931 = vld [vmem:[%s5929 + $0x8] sm:$0xff]
  %v5932 = vld [vmem:[%s5929 + $0x10] sm:$0xff]
  %v5933 = vld [vmem:[%s5929 + $0x18] sm:$0xff]
  %s5934 = scalar_lea.vmem %s13, 13
  %v5935 = vld [vmem:[%s5934] sm:$0x1]
  %v5937 = vlaneseq
  %v5938 = vshrl.u32 %v5937, 7
  %v5939 = vsub.s32 0, %v5938
  %v5940 = vrot.slane %v5935, %v5939
  %v5943 = vsel %vm435, %v5928, 0
  %5945 = vmatprep.subr.mxu0 0.0
  %5946 = vmatpush1.msra.mxu0 %v5930
  %5947 = vmatprep.subr.mxu0 0.0
  %5948 = vmatpush1.msra.mxu0 %v5931
  %5949 = vmatprep.subr.mxu0 0.0
  %5950 = vmatpush1.msra.mxu0 %v5932
  %5951 = vmatprep.subr.mxu0 0.0
  %5952 = vmatpush1.msra.mxu0 %v5933
  %5953 = vmatprep.subr.mxu0 0.0
  %5954 = vmatpush1.msra.mxu0 0.0
  %5955 = vmatprep.subr.mxu0 0.0
  %5956 = vmatpush1.msra.mxu0 0.0
  %5957 = vmatprep.subr.mxu0 0.0
  %5958 = vmatpush1.msra.mxu0 0.0
  %5959 = vmatprep.subr.mxu0 0.0
  %5960 = vmatpush1.msra.mxu0 0.0
  %5961 = vmatprep.subr.mxu0 0.0
  %5962 = vmatpush1.msra.mxu0 0.0
  %5963 = vmatprep.subr.mxu0 0.0
  %5964 = vmatpush1.msra.mxu0 0.0
  %5965 = vmatprep.subr.mxu0 0.0
  %5966 = vmatpush1.msra.mxu0 0.0
  %5967 = vmatprep.subr.mxu0 0.0
  %5968 = vmatpush1.msra.mxu0 0.0
  %5969 = vmatprep.subr.mxu0 0.0
  %5970 = vmatpush1.msra.mxu0 0.0
  %5971 = vmatprep.subr.mxu0 0.0
  %5972 = vmatpush1.msra.mxu0 0.0
  %5973 = vmatprep.subr.mxu0 0.0
  %5974 = vmatpush1.msra.mxu0 0.0
  %5975 = vmatprep.subr.mxu0 0.0
  %5976 = vmatpush1.msra.mxu0 0.0
  %5977 = vmatprep.subr.mxu0 0.0
  %5978 = vmatpush1.msra.mxu0 0.0
  %5979 = vmatprep.subr.mxu0 0.0
  %5980 = vmatpush1.msra.mxu0 0.0
  %5981 = vmatprep.subr.mxu0 0.0
  %5982 = vmatpush1.msra.mxu0 0.0
  %5983 = vmatprep.subr.mxu0 0.0
  %5984 = vmatpush1.msra.mxu0 0.0
  %5985 = vmatprep.subr.mxu0 0.0
  %5986 = vmatpush1.msra.mxu0 0.0
  %5987 = vmatprep.subr.mxu0 0.0
  %5988 = vmatpush1.msra.mxu0 0.0
  %5989 = vmatprep.subr.mxu0 0.0
  %5990 = vmatpush1.msra.mxu0 0.0
  %5991 = vmatprep.subr.mxu0 0.0
  %5992 = vmatpush1.msra.mxu0 0.0
  %5993 = vmatprep.subr.mxu0 0.0
  %5994 = vmatpush1.msra.mxu0 0.0
  %5995 = vmatprep.subr.mxu0 0.0
  %5996 = vmatpush1.msra.mxu0 0.0
  %5997 = vmatprep.subr.mxu0 0.0
  %5998 = vmatpush1.msra.mxu0 0.0
  %5999 = vmatprep.subr.mxu0 0.0
  %6000 = vmatpush1.msra.mxu0 0.0
  %6001 = vmatprep.subr.mxu0 0.0
  %6002 = vmatpush1.msra.mxu0 0.0
  %6003 = vmatprep.subr.mxu0 0.0
  %6004 = vmatpush1.msra.mxu0 0.0
  %6005 = vmatprep.subr.mxu0 0.0
  %6006 = vmatpush1.msra.mxu0 0.0
  %6007 = vmatprep.subr.mxu0 0.0
  %6008 = vmatpush1.msra.mxu0 0.0
  %6009 = vmatprep.mubr.f32.mxu0 0.0
  %6010 = vmatmul.mubr.f32.gmra.mrb[0].mxu0 %v5943
  %v6011 = vpop.f32.mrb[0].mxu0
  %v6012 = vadd.f32 %v5940, %v6011
  %v6013 = vpop.f32.mrb[0].mxu0
  %6014 = vdwg.mxu0
  %v6015 = vmax.f32 %v6012, 0.0
  %s6016 = scalar_lea.vmem %s12, 448
  %v6017 = vld [vmem:[%s6016] sm:$0xff]
  %v6018 = vld [vmem:[%s6016 + $0x8] sm:$0xff]
  %v6019 = vld [vmem:[%s6016 + $0x10] sm:$0xff]
  %v6020 = vld [vmem:[%s6016 + $0x18] sm:$0xff]
  %s6021 = scalar_lea.vmem %s13, 14
  %v6022 = vld [vmem:[%s6021] sm:$0x1]
  %v6024 = vlaneseq
  %v6025 = vshrl.u32 %v6024, 7
  %v6026 = vsub.s32 0, %v6025
  %v6027 = vrot.slane %v6022, %v6026
  %v6030 = vsel %vm435, %v6015, 0
  %6032 = vmatprep.subr.mxu0 0.0
  %6033 = vmatpush1.msra.mxu0 %v6017
  %6034 = vmatprep.subr.mxu0 0.0
  %6035 = vmatpush1.msra.mxu0 %v6018
  %6036 = vmatprep.subr.mxu0 0.0
  %6037 = vmatpush1.msra.mxu0 %v6019
  %6038 = vmatprep.subr.mxu0 0.0
  %6039 = vmatpush1.msra.mxu0 %v6020
  %6040 = vmatprep.subr.mxu0 0.0
  %6041 = vmatpush1.msra.mxu0 0.0
  %6042 = vmatprep.subr.mxu0 0.0
  %6043 = vmatpush1.msra.mxu0 0.0
  %6044 = vmatprep.subr.mxu0 0.0
  %6045 = vmatpush1.msra.mxu0 0.0
  %6046 = vmatprep.subr.mxu0 0.0
  %6047 = vmatpush1.msra.mxu0 0.0
  %6048 = vmatprep.subr.mxu0 0.0
  %6049 = vmatpush1.msra.mxu0 0.0
  %6050 = vmatprep.subr.mxu0 0.0
  %6051 = vmatpush1.msra.mxu0 0.0
  %6052 = vmatprep.subr.mxu0 0.0
  %6053 = vmatpush1.msra.mxu0 0.0
  %6054 = vmatprep.subr.mxu0 0.0
  %6055 = vmatpush1.msra.mxu0 0.0
  %6056 = vmatprep.subr.mxu0 0.0
  %6057 = vmatpush1.msra.mxu0 0.0
  %6058 = vmatprep.subr.mxu0 0.0
  %6059 = vmatpush1.msra.mxu0 0.0
  %6060 = vmatprep.subr.mxu0 0.0
  %6061 = vmatpush1.msra.mxu0 0.0
  %6062 = vmatprep.subr.mxu0 0.0
  %6063 = vmatpush1.msra.mxu0 0.0
  %6064 = vmatprep.subr.mxu0 0.0
  %6065 = vmatpush1.msra.mxu0 0.0
  %6066 = vmatprep.subr.mxu0 0.0
  %6067 = vmatpush1.msra.mxu0 0.0
  %6068 = vmatprep.subr.mxu0 0.0
  %6069 = vmatpush1.msra.mxu0 0.0
  %6070 = vmatprep.subr.mxu0 0.0
  %6071 = vmatpush1.msra.mxu0 0.0
  %6072 = vmatprep.subr.mxu0 0.0
  %6073 = vmatpush1.msra.mxu0 0.0
  %6074 = vmatprep.subr.mxu0 0.0
  %6075 = vmatpush1.msra.mxu0 0.0
  %6076 = vmatprep.subr.mxu0 0.0
  %6077 = vmatpush1.msra.mxu0 0.0
  %6078 = vmatprep.subr.mxu0 0.0
  %6079 = vmatpush1.msra.mxu0 0.0
  %6080 = vmatprep.subr.mxu0 0.0
  %6081 = vmatpush1.msra.mxu0 0.0
  %6082 = vmatprep.subr.mxu0 0.0
  %6083 = vmatpush1.msra.mxu0 0.0
  %6084 = vmatprep.subr.mxu0 0.0
  %6085 = vmatpush1.msra.mxu0 0.0
  %6086 = vmatprep.subr.mxu0 0.0
  %6087 = vmatpush1.msra.mxu0 0.0
  %6088 = vmatprep.subr.mxu0 0.0
  %6089 = vmatpush1.msra.mxu0 0.0
  %6090 = vmatprep.subr.mxu0 0.0
  %6091 = vmatpush1.msra.mxu0 0.0
  %6092 = vmatprep.subr.mxu0 0.0
  %6093 = vmatpush1.msra.mxu0 0.0
  %6094 = vmatprep.subr.mxu0 0.0
  %6095 = vmatpush1.msra.mxu0 0.0
  %6096 = vmatprep.mubr.f32.mxu0 0.0
  %6097 = vmatmul.mubr.f32.gmra.mrb[0].mxu0 %v6030
  %v6098 = vpop.f32.mrb[0].mxu0
  %v6099 = vadd.f32 %v6027, %v6098
  %v6100 = vpop.f32.mrb[0].mxu0
  %6101 = vdwg.mxu0
  %v6102 = vmax.f32 %v6099, 0.0
  %s6103 = scalar_lea.vmem %s12, 480
  %v6104 = vld [vmem:[%s6103] sm:$0xff]
  %v6105 = vld [vmem:[%s6103 + $0x8] sm:$0xff]
  %v6106 = vld [vmem:[%s6103 + $0x10] sm:$0xff]
  %v6107 = vld [vmem:[%s6103 + $0x18] sm:$0xff]
  %s6108 = scalar_lea.vmem %s13, 15
  %v6109 = vld [vmem:[%s6108] sm:$0x1]
  %v6111 = vlaneseq
  %v6112 = vshrl.u32 %v6111, 7
  %v6113 = vsub.s32 0, %v6112
  %v6114 = vrot.slane %v6109, %v6113
  %v6117 = vsel %vm435, %v6102, 0
  %6119 = vmatprep.subr.mxu0 0.0
  %6120 = vmatpush1.msra.mxu0 %v6104
  %6121 = vmatprep.subr.mxu0 0.0
  %6122 = vmatpush1.msra.mxu0 %v6105
  %6123 = vmatprep.subr.mxu0 0.0
  %6124 = vmatpush1.msra.mxu0 %v6106
  %6125 = vmatprep.subr.mxu0 0.0
  %6126 = vmatpush1.msra.mxu0 %v6107
  %6127 = vmatprep.subr.mxu0 0.0
  %6128 = vmatpush1.msra.mxu0 0.0
  %6129 = vmatprep.subr.mxu0 0.0
  %6130 = vmatpush1.msra.mxu0 0.0
  %6131 = vmatprep.subr.mxu0 0.0
  %6132 = vmatpush1.msra.mxu0 0.0
  %6133 = vmatprep.subr.mxu0 0.0
  %6134 = vmatpush1.msra.mxu0 0.0
  %6135 = vmatprep.subr.mxu0 0.0
  %6136 = vmatpush1.msra.mxu0 0.0
  %6137 = vmatprep.subr.mxu0 0.0
  %6138 = vmatpush1.msra.mxu0 0.0
  %6139 = vmatprep.subr.mxu0 0.0
  %6140 = vmatpush1.msra.mxu0 0.0
  %6141 = vmatprep.subr.mxu0 0.0
  %6142 = vmatpush1.msra.mxu0 0.0
  %6143 = vmatprep.subr.mxu0 0.0
  %6144 = vmatpush1.msra.mxu0 0.0
  %6145 = vmatprep.subr.mxu0 0.0
  %6146 = vmatpush1.msra.mxu0 0.0
  %6147 = vmatprep.subr.mxu0 0.0
  %6148 = vmatpush1.msra.mxu0 0.0
  %6149 = vmatprep.subr.mxu0 0.0
  %6150 = vmatpush1.msra.mxu0 0.0
  %6151 = vmatprep.subr.mxu0 0.0
  %6152 = vmatpush1.msra.mxu0 0.0
  %6153 = vmatprep.subr.mxu0 0.0
  %6154 = vmatpush1.msra.mxu0 0.0
  %6155 = vmatprep.subr.mxu0 0.0
  %6156 = vmatpush1.msra.mxu0 0.0
  %6157 = vmatprep.subr.mxu0 0.0
  %6158 = vmatpush1.msra.mxu0 0.0
  %6159 = vmatprep.subr.mxu0 0.0
  %6160 = vmatpush1.msra.mxu0 0.0
  %6161 = vmatprep.subr.mxu0 0.0
  %6162 = vmatpush1.msra.mxu0 0.0
  %6163 = vmatprep.subr.mxu0 0.0
  %6164 = vmatpush1.msra.mxu0 0.0
  %6165 = vmatprep.subr.mxu0 0.0
  %6166 = vmatpush1.msra.mxu0 0.0
  %6167 = vmatprep.subr.mxu0 0.0
  %6168 = vmatpush1.msra.mxu0 0.0
  %6169 = vmatprep.subr.mxu0 0.0
  %6170 = vmatpush1.msra.mxu0 0.0
  %6171 = vmatprep.subr.mxu0 0.0
  %6172 = vmatpush1.msra.mxu0 0.0
  %6173 = vmatprep.subr.mxu0 0.0
  %6174 = vmatpush1.msra.mxu0 0.0
  %6175 = vmatprep.subr.mxu0 0.0
  %6176 = vmatpush1.msra.mxu0 0.0
  %6177 = vmatprep.subr.mxu0 0.0
  %6178 = vmatpush1.msra.mxu0 0.0
  %6179 = vmatprep.subr.mxu0 0.0
  %6180 = vmatpush1.msra.mxu0 0.0
  %6181 = vmatprep.subr.mxu0 0.0
  %6182 = vmatpush1.msra.mxu0 0.0
  %6183 = vmatprep.mubr.f32.mxu0 0.0
  %6184 = vmatmul.mubr.f32.gmra.mrb[0].mxu0 %v6117
  %v6185 = vpop.f32.mrb[0].mxu0
  %v6186 = vadd.f32 %v6114, %v6185
  %v6187 = vpop.f32.mrb[0].mxu0
  %6188 = vdwg.mxu0
  %v6189 = vmax.f32 %v6186, 0.0
  %s6190 = scalar_lea.vmem %s12, 512
  %v6191 = vld [vmem:[%s6190] sm:$0xff]
  %v6192 = vld [vmem:[%s6190 + $0x8] sm:$0xff]
  %v6193 = vld [vmem:[%s6190 + $0x10] sm:$0xff]
  %v6194 = vld [vmem:[%s6190 + $0x18] sm:$0xff]
  %s6195 = scalar_lea.vmem %s13, 16
  %v6196 = vld [vmem:[%s6195] sm:$0x1]
  %v6198 = vlaneseq
  %v6199 = vshrl.u32 %v6198, 7
  %v6200 = vsub.s32 0, %v6199
  %v6201 = vrot.slane %v6196, %v6200
  %v6204 = vsel %vm435, %v6189, 0
  %6206 = vmatprep.subr.mxu0 0.0
  %6207 = vmatpush1.msra.mxu0 %v6191
  %6208 = vmatprep.subr.mxu0 0.0
  %6209 = vmatpush1.msra.mxu0 %v6192
  %6210 = vmatprep.subr.mxu0 0.0
  %6211 = vmatpush1.msra.mxu0 %v6193
  %6212 = vmatprep.subr.mxu0 0.0
  %6213 = vmatpush1.msra.mxu0 %v6194
  %6214 = vmatprep.subr.mxu0 0.0
  %6215 = vmatpush1.msra.mxu0 0.0
  %6216 = vmatprep.subr.mxu0 0.0
  %6217 = vmatpush1.msra.mxu0 0.0
  %6218 = vmatprep.subr.mxu0 0.0
  %6219 = vmatpush1.msra.mxu0 0.0
  %6220 = vmatprep.subr.mxu0 0.0
  %6221 = vmatpush1.msra.mxu0 0.0
  %6222 = vmatprep.subr.mxu0 0.0
  %6223 = vmatpush1.msra.mxu0 0.0
  %6224 = vmatprep.subr.mxu0 0.0
  %6225 = vmatpush1.msra.mxu0 0.0
  %6226 = vmatprep.subr.mxu0 0.0
  %6227 = vmatpush1.msra.mxu0 0.0
  %6228 = vmatprep.subr.mxu0 0.0
  %6229 = vmatpush1.msra.mxu0 0.0
  %6230 = vmatprep.subr.mxu0 0.0
  %6231 = vmatpush1.msra.mxu0 0.0
  %6232 = vmatprep.subr.mxu0 0.0
  %6233 = vmatpush1.msra.mxu0 0.0
  %6234 = vmatprep.subr.mxu0 0.0
  %6235 = vmatpush1.msra.mxu0 0.0
  %6236 = vmatprep.subr.mxu0 0.0
  %6237 = vmatpush1.msra.mxu0 0.0
  %6238 = vmatprep.subr.mxu0 0.0
  %6239 = vmatpush1.msra.mxu0 0.0
  %6240 = vmatprep.subr.mxu0 0.0
  %6241 = vmatpush1.msra.mxu0 0.0
  %6242 = vmatprep.subr.mxu0 0.0
  %6243 = vmatpush1.msra.mxu0 0.0
  %6244 = vmatprep.subr.mxu0 0.0
  %6245 = vmatpush1.msra.mxu0 0.0
  %6246 = vmatprep.subr.mxu0 0.0
  %6247 = vmatpush1.msra.mxu0 0.0
  %6248 = vmatprep.subr.mxu0 0.0
  %6249 = vmatpush1.msra.mxu0 0.0
  %6250 = vmatprep.subr.mxu0 0.0
  %6251 = vmatpush1.msra.mxu0 0.0
  %6252 = vmatprep.subr.mxu0 0.0
  %6253 = vmatpush1.msra.mxu0 0.0
  %6254 = vmatprep.subr.mxu0 0.0
  %6255 = vmatpush1.msra.mxu0 0.0
  %6256 = vmatprep.subr.mxu0 0.0
  %6257 = vmatpush1.msra.mxu0 0.0
  %6258 = vmatprep.subr.mxu0 0.0
  %6259 = vmatpush1.msra.mxu0 0.0
  %6260 = vmatprep.subr.mxu0 0.0
  %6261 = vmatpush1.msra.mxu0 0.0
  %6262 = vmatprep.subr.mxu0 0.0
  %6263 = vmatpush1.msra.mxu0 0.0
  %6264 = vmatprep.subr.mxu0 0.0
  %6265 = vmatpush1.msra.mxu0 0.0
  %6266 = vmatprep.subr.mxu0 0.0
  %6267 = vmatpush1.msra.mxu0 0.0
  %6268 = vmatprep.subr.mxu0 0.0
  %6269 = vmatpush1.msra.mxu0 0.0
  %6270 = vmatprep.mubr.f32.mxu0 0.0
  %6271 = vmatmul.mubr.f32.gmra.mrb[0].mxu0 %v6204
  %v6272 = vpop.f32.mrb[0].mxu0
  %v6273 = vadd.f32 %v6201, %v6272
  %v6274 = vpop.f32.mrb[0].mxu0
  %6275 = vdwg.mxu0
  %v6276 = vmax.f32 %v6273, 0.0
  %s6277 = scalar_lea.vmem %s12, 544
  %v6278 = vld [vmem:[%s6277] sm:$0xff]
  %v6279 = vld [vmem:[%s6277 + $0x8] sm:$0xff]
  %v6280 = vld [vmem:[%s6277 + $0x10] sm:$0xff]
  %v6281 = vld [vmem:[%s6277 + $0x18] sm:$0xff]
  %s6282 = scalar_lea.vmem %s13, 17
  %v6283 = vld [vmem:[%s6282] sm:$0x1]
  %v6285 = vlaneseq
  %v6286 = vshrl.u32 %v6285, 7
  %v6287 = vsub.s32 0, %v6286
  %v6288 = vrot.slane %v6283, %v6287
  %v6291 = vsel %vm435, %v6276, 0
  %6293 = vmatprep.subr.mxu0 0.0
  %6294 = vmatpush1.msra.mxu0 %v6278
  %6295 = vmatprep.subr.mxu0 0.0
  %6296 = vmatpush1.msra.mxu0 %v6279
  %6297 = vmatprep.subr.mxu0 0.0
  %6298 = vmatpush1.msra.mxu0 %v6280
  %6299 = vmatprep.subr.mxu0 0.0
  %6300 = vmatpush1.msra.mxu0 %v6281
  %6301 = vmatprep.subr.mxu0 0.0
  %6302 = vmatpush1.msra.mxu0 0.0
  %6303 = vmatprep.subr.mxu0 0.0
  %6304 = vmatpush1.msra.mxu0 0.0
  %6305 = vmatprep.subr.mxu0 0.0
  %6306 = vmatpush1.msra.mxu0 0.0
  %6307 = vmatprep.subr.mxu0 0.0
  %6308 = vmatpush1.msra.mxu0 0.0
  %6309 = vmatprep.subr.mxu0 0.0
  %6310 = vmatpush1.msra.mxu0 0.0
  %6311 = vmatprep.subr.mxu0 0.0
  %6312 = vmatpush1.msra.mxu0 0.0
  %6313 = vmatprep.subr.mxu0 0.0
  %6314 = vmatpush1.msra.mxu0 0.0
  %6315 = vmatprep.subr.mxu0 0.0
  %6316 = vmatpush1.msra.mxu0 0.0
  %6317 = vmatprep.subr.mxu0 0.0
  %6318 = vmatpush1.msra.mxu0 0.0
  %6319 = vmatprep.subr.mxu0 0.0
  %6320 = vmatpush1.msra.mxu0 0.0
  %6321 = vmatprep.subr.mxu0 0.0
  %6322 = vmatpush1.msra.mxu0 0.0
  %6323 = vmatprep.subr.mxu0 0.0
  %6324 = vmatpush1.msra.mxu0 0.0
  %6325 = vmatprep.subr.mxu0 0.0
  %6326 = vmatpush1.msra.mxu0 0.0
  %6327 = vmatprep.subr.mxu0 0.0
  %6328 = vmatpush1.msra.mxu0 0.0
  %6329 = vmatprep.subr.mxu0 0.0
  %6330 = vmatpush1.msra.mxu0 0.0
  %6331 = vmatprep.subr.mxu0 0.0
  %6332 = vmatpush1.msra.mxu0 0.0
  %6333 = vmatprep.subr.mxu0 0.0
  %6334 = vmatpush1.msra.mxu0 0.0
  %6335 = vmatprep.subr.mxu0 0.0
  %6336 = vmatpush1.msra.mxu0 0.0
  %6337 = vmatprep.subr.mxu0 0.0
  %6338 = vmatpush1.msra.mxu0 0.0
  %6339 = vmatprep.subr.mxu0 0.0
  %6340 = vmatpush1.msra.mxu0 0.0
  %6341 = vmatprep.subr.mxu0 0.0
  %6342 = vmatpush1.msra.mxu0 0.0
  %6343 = vmatprep.subr.mxu0 0.0
  %6344 = vmatpush1.msra.mxu0 0.0
  %6345 = vmatprep.subr.mxu0 0.0
  %6346 = vmatpush1.msra.mxu0 0.0
  %6347 = vmatprep.subr.mxu0 0.0
  %6348 = vmatpush1.msra.mxu0 0.0
  %6349 = vmatprep.subr.mxu0 0.0
  %6350 = vmatpush1.msra.mxu0 0.0
  %6351 = vmatprep.subr.mxu0 0.0
  %6352 = vmatpush1.msra.mxu0 0.0
  %6353 = vmatprep.subr.mxu0 0.0
  %6354 = vmatpush1.msra.mxu0 0.0
  %6355 = vmatprep.subr.mxu0 0.0
  %6356 = vmatpush1.msra.mxu0 0.0
  %6357 = vmatprep.mubr.f32.mxu0 0.0
  %6358 = vmatmul.mubr.f32.gmra.mrb[0].mxu0 %v6291
  %v6359 = vpop.f32.mrb[0].mxu0
  %v6360 = vadd.f32 %v6288, %v6359
  %v6361 = vpop.f32.mrb[0].mxu0
  %6362 = vdwg.mxu0
  %v6363 = vmax.f32 %v6360, 0.0
  %s6364 = scalar_lea.vmem %s12, 576
  %v6365 = vld [vmem:[%s6364] sm:$0xff]
  %v6366 = vld [vmem:[%s6364 + $0x8] sm:$0xff]
  %v6367 = vld [vmem:[%s6364 + $0x10] sm:$0xff]
  %v6368 = vld [vmem:[%s6364 + $0x18] sm:$0xff]
  %s6369 = scalar_lea.vmem %s13, 18
  %v6370 = vld [vmem:[%s6369] sm:$0x1]
  %v6372 = vlaneseq
  %v6373 = vshrl.u32 %v6372, 7
  %v6374 = vsub.s32 0, %v6373
  %v6375 = vrot.slane %v6370, %v6374
  %v6378 = vsel %vm435, %v6363, 0
  %6380 = vmatprep.subr.mxu0 0.0
  %6381 = vmatpush1.msra.mxu0 %v6365
  %6382 = vmatprep.subr.mxu0 0.0
  %6383 = vmatpush1.msra.mxu0 %v6366
  %6384 = vmatprep.subr.mxu0 0.0
  %6385 = vmatpush1.msra.mxu0 %v6367
  %6386 = vmatprep.subr.mxu0 0.0
  %6387 = vmatpush1.msra.mxu0 %v6368
  %6388 = vmatprep.subr.mxu0 0.0
  %6389 = vmatpush1.msra.mxu0 0.0
  %6390 = vmatprep.subr.mxu0 0.0
  %6391 = vmatpush1.msra.mxu0 0.0
  %6392 = vmatprep.subr.mxu0 0.0
  %6393 = vmatpush1.msra.mxu0 0.0
  %6394 = vmatprep.subr.mxu0 0.0
  %6395 = vmatpush1.msra.mxu0 0.0
  %6396 = vmatprep.subr.mxu0 0.0
  %6397 = vmatpush1.msra.mxu0 0.0
  %6398 = vmatprep.subr.mxu0 0.0
  %6399 = vmatpush1.msra.mxu0 0.0
  %6400 = vmatprep.subr.mxu0 0.0
  %6401 = vmatpush1.msra.mxu0 0.0
  %6402 = vmatprep.subr.mxu0 0.0
  %6403 = vmatpush1.msra.mxu0 0.0
  %6404 = vmatprep.subr.mxu0 0.0
  %6405 = vmatpush1.msra.mxu0 0.0
  %6406 = vmatprep.subr.mxu0 0.0
  %6407 = vmatpush1.msra.mxu0 0.0
  %6408 = vmatprep.subr.mxu0 0.0
  %6409 = vmatpush1.msra.mxu0 0.0
  %6410 = vmatprep.subr.mxu0 0.0
  %6411 = vmatpush1.msra.mxu0 0.0
  %6412 = vmatprep.subr.mxu0 0.0
  %6413 = vmatpush1.msra.mxu0 0.0
  %6414 = vmatprep.subr.mxu0 0.0
  %6415 = vmatpush1.msra.mxu0 0.0
  %6416 = vmatprep.subr.mxu0 0.0
  %6417 = vmatpush1.msra.mxu0 0.0
  %6418 = vmatprep.subr.mxu0 0.0
  %6419 = vmatpush1.msra.mxu0 0.0
  %6420 = vmatprep.subr.mxu0 0.0
  %6421 = vmatpush1.msra.mxu0 0.0
  %6422 = vmatprep.subr.mxu0 0.0
  %6423 = vmatpush1.msra.mxu0 0.0
  %6424 = vmatprep.subr.mxu0 0.0
  %6425 = vmatpush1.msra.mxu0 0.0
  %6426 = vmatprep.subr.mxu0 0.0
  %6427 = vmatpush1.msra.mxu0 0.0
  %6428 = vmatprep.subr.mxu0 0.0
  %6429 = vmatpush1.msra.mxu0 0.0
  %6430 = vmatprep.subr.mxu0 0.0
  %6431 = vmatpush1.msra.mxu0 0.0
  %6432 = vmatprep.subr.mxu0 0.0
  %6433 = vmatpush1.msra.mxu0 0.0
  %6434 = vmatprep.subr.mxu0 0.0
  %6435 = vmatpush1.msra.mxu0 0.0
  %6436 = vmatprep.subr.mxu0 0.0
  %6437 = vmatpush1.msra.mxu0 0.0
  %6438 = vmatprep.subr.mxu0 0.0
  %6439 = vmatpush1.msra.mxu0 0.0
  %6440 = vmatprep.subr.mxu0 0.0
  %6441 = vmatpush1.msra.mxu0 0.0
  %6442 = vmatprep.subr.mxu0 0.0
  %6443 = vmatpush1.msra.mxu0 0.0
  %6444 = vmatprep.mubr.f32.mxu0 0.0
  %6445 = vmatmul.mubr.f32.gmra.mrb[0].mxu0 %v6378
  %v6446 = vpop.f32.mrb[0].mxu0
  %v6447 = vadd.f32 %v6375, %v6446
  %v6448 = vpop.f32.mrb[0].mxu0
  %6449 = vdwg.mxu0
  %v6450 = vmax.f32 %v6447, 0.0
  %s6451 = scalar_lea.vmem %s12, 608
  %v6452 = vld [vmem:[%s6451] sm:$0xff]
  %v6453 = vld [vmem:[%s6451 + $0x8] sm:$0xff]
  %v6454 = vld [vmem:[%s6451 + $0x10] sm:$0xff]
  %v6455 = vld [vmem:[%s6451 + $0x18] sm:$0xff]
  %s6456 = scalar_lea.vmem %s13, 19
  %v6457 = vld [vmem:[%s6456] sm:$0x1]
  %v6459 = vlaneseq
  %v6460 = vshrl.u32 %v6459, 7
  %v6461 = vsub.s32 0, %v6460
  %v6462 = vrot.slane %v6457, %v6461
  %v6465 = vsel %vm435, %v6450, 0
  %6467 = vmatprep.subr.mxu0 0.0
  %6468 = vmatpush1.msra.mxu0 %v6452
  %6469 = vmatprep.subr.mxu0 0.0
  %6470 = vmatpush1.msra.mxu0 %v6453
  %6471 = vmatprep.subr.mxu0 0.0
  %6472 = vmatpush1.msra.mxu0 %v6454
  %6473 = vmatprep.subr.mxu0 0.0
  %6474 = vmatpush1.msra.mxu0 %v6455
  %6475 = vmatprep.subr.mxu0 0.0
  %6476 = vmatpush1.msra.mxu0 0.0
  %6477 = vmatprep.subr.mxu0 0.0
  %6478 = vmatpush1.msra.mxu0 0.0
  %6479 = vmatprep.subr.mxu0 0.0
  %6480 = vmatpush1.msra.mxu0 0.0
  %6481 = vmatprep.subr.mxu0 0.0
  %6482 = vmatpush1.msra.mxu0 0.0
  %6483 = vmatprep.subr.mxu0 0.0
  %6484 = vmatpush1.msra.mxu0 0.0
  %6485 = vmatprep.subr.mxu0 0.0
  %6486 = vmatpush1.msra.mxu0 0.0
  %6487 = vmatprep.subr.mxu0 0.0
  %6488 = vmatpush1.msra.mxu0 0.0
  %6489 = vmatprep.subr.mxu0 0.0
  %6490 = vmatpush1.msra.mxu0 0.0
  %6491 = vmatprep.subr.mxu0 0.0
  %6492 = vmatpush1.msra.mxu0 0.0
  %6493 = vmatprep.subr.mxu0 0.0
  %6494 = vmatpush1.msra.mxu0 0.0
  %6495 = vmatprep.subr.mxu0 0.0
  %6496 = vmatpush1.msra.mxu0 0.0
  %6497 = vmatprep.subr.mxu0 0.0
  %6498 = vmatpush1.msra.mxu0 0.0
  %6499 = vmatprep.subr.mxu0 0.0
  %6500 = vmatpush1.msra.mxu0 0.0
  %6501 = vmatprep.subr.mxu0 0.0
  %6502 = vmatpush1.msra.mxu0 0.0
  %6503 = vmatprep.subr.mxu0 0.0
  %6504 = vmatpush1.msra.mxu0 0.0
  %6505 = vmatprep.subr.mxu0 0.0
  %6506 = vmatpush1.msra.mxu0 0.0
  %6507 = vmatprep.subr.mxu0 0.0
  %6508 = vmatpush1.msra.mxu0 0.0
  %6509 = vmatprep.subr.mxu0 0.0
  %6510 = vmatpush1.msra.mxu0 0.0
  %6511 = vmatprep.subr.mxu0 0.0
  %6512 = vmatpush1.msra.mxu0 0.0
  %6513 = vmatprep.subr.mxu0 0.0
  %6514 = vmatpush1.msra.mxu0 0.0
  %6515 = vmatprep.subr.mxu0 0.0
  %6516 = vmatpush1.msra.mxu0 0.0
  %6517 = vmatprep.subr.mxu0 0.0
  %6518 = vmatpush1.msra.mxu0 0.0
  %6519 = vmatprep.subr.mxu0 0.0
  %6520 = vmatpush1.msra.mxu0 0.0
  %6521 = vmatprep.subr.mxu0 0.0
  %6522 = vmatpush1.msra.mxu0 0.0
  %6523 = vmatprep.subr.mxu0 0.0
  %6524 = vmatpush1.msra.mxu0 0.0
  %6525 = vmatprep.subr.mxu0 0.0
  %6526 = vmatpush1.msra.mxu0 0.0
  %6527 = vmatprep.subr.mxu0 0.0
  %6528 = vmatpush1.msra.mxu0 0.0
  %6529 = vmatprep.subr.mxu0 0.0
  %6530 = vmatpush1.msra.mxu0 0.0
  %6531 = vmatprep.mubr.f32.mxu0 0.0
  %6532 = vmatmul.mubr.f32.gmra.mrb[0].mxu0 %v6465
  %v6533 = vpop.f32.mrb[0].mxu0
  %v6534 = vadd.f32 %v6462, %v6533
  %v6535 = vpop.f32.mrb[0].mxu0
  %6536 = vdwg.mxu0
  %v6537 = vmax.f32 %v6534, 0.0
  %s6538 = scalar_lea.vmem %s12, 640
  %v6539 = vld [vmem:[%s6538] sm:$0xff]
  %v6540 = vld [vmem:[%s6538 + $0x8] sm:$0xff]
  %v6541 = vld [vmem:[%s6538 + $0x10] sm:$0xff]
  %v6542 = vld [vmem:[%s6538 + $0x18] sm:$0xff]
  %s6543 = scalar_lea.vmem %s13, 20
  %v6544 = vld [vmem:[%s6543] sm:$0x1]
  %v6546 = vlaneseq
  %v6547 = vshrl.u32 %v6546, 7
  %v6548 = vsub.s32 0, %v6547
  %v6549 = vrot.slane %v6544, %v6548
  %v6552 = vsel %vm435, %v6537, 0
  %6554 = vmatprep.subr.mxu0 0.0
  %6555 = vmatpush1.msra.mxu0 %v6539
  %6556 = vmatprep.subr.mxu0 0.0
  %6557 = vmatpush1.msra.mxu0 %v6540
  %6558 = vmatprep.subr.mxu0 0.0
  %6559 = vmatpush1.msra.mxu0 %v6541
  %6560 = vmatprep.subr.mxu0 0.0
  %6561 = vmatpush1.msra.mxu0 %v6542
  %6562 = vmatprep.subr.mxu0 0.0
  %6563 = vmatpush1.msra.mxu0 0.0
  %6564 = vmatprep.subr.mxu0 0.0
  %6565 = vmatpush1.msra.mxu0 0.0
  %6566 = vmatprep.subr.mxu0 0.0
  %6567 = vmatpush1.msra.mxu0 0.0
  %6568 = vmatprep.subr.mxu0 0.0
  %6569 = vmatpush1.msra.mxu0 0.0
  %6570 = vmatprep.subr.mxu0 0.0
  %6571 = vmatpush1.msra.mxu0 0.0
  %6572 = vmatprep.subr.mxu0 0.0
  %6573 = vmatpush1.msra.mxu0 0.0
  %6574 = vmatprep.subr.mxu0 0.0
  %6575 = vmatpush1.msra.mxu0 0.0
  %6576 = vmatprep.subr.mxu0 0.0
  %6577 = vmatpush1.msra.mxu0 0.0
  %6578 = vmatprep.subr.mxu0 0.0
  %6579 = vmatpush1.msra.mxu0 0.0
  %6580 = vmatprep.subr.mxu0 0.0
  %6581 = vmatpush1.msra.mxu0 0.0
  %6582 = vmatprep.subr.mxu0 0.0
  %6583 = vmatpush1.msra.mxu0 0.0
  %6584 = vmatprep.subr.mxu0 0.0
  %6585 = vmatpush1.msra.mxu0 0.0
  %6586 = vmatprep.subr.mxu0 0.0
  %6587 = vmatpush1.msra.mxu0 0.0
  %6588 = vmatprep.subr.mxu0 0.0
  %6589 = vmatpush1.msra.mxu0 0.0
  %6590 = vmatprep.subr.mxu0 0.0
  %6591 = vmatpush1.msra.mxu0 0.0
  %6592 = vmatprep.subr.mxu0 0.0
  %6593 = vmatpush1.msra.mxu0 0.0
  %6594 = vmatprep.subr.mxu0 0.0
  %6595 = vmatpush1.msra.mxu0 0.0
  %6596 = vmatprep.subr.mxu0 0.0
  %6597 = vmatpush1.msra.mxu0 0.0
  %6598 = vmatprep.subr.mxu0 0.0
  %6599 = vmatpush1.msra.mxu0 0.0
  %6600 = vmatprep.subr.mxu0 0.0
  %6601 = vmatpush1.msra.mxu0 0.0
  %6602 = vmatprep.subr.mxu0 0.0
  %6603 = vmatpush1.msra.mxu0 0.0
  %6604 = vmatprep.subr.mxu0 0.0
  %6605 = vmatpush1.msra.mxu0 0.0
  %6606 = vmatprep.subr.mxu0 0.0
  %6607 = vmatpush1.msra.mxu0 0.0
  %6608 = vmatprep.subr.mxu0 0.0
  %6609 = vmatpush1.msra.mxu0 0.0
  %6610 = vmatprep.subr.mxu0 0.0
  %6611 = vmatpush1.msra.mxu0 0.0
  %6612 = vmatprep.subr.mxu0 0.0
  %6613 = vmatpush1.msra.mxu0 0.0
  %6614 = vmatprep.subr.mxu0 0.0
  %6615 = vmatpush1.msra.mxu0 0.0
  %6616 = vmatprep.subr.mxu0 0.0
  %6617 = vmatpush1.msra.mxu0 0.0
  %6618 = vmatprep.mubr.f32.mxu0 0.0
  %6619 = vmatmul.mubr.f32.gmra.mrb[0].mxu0 %v6552
  %v6620 = vpop.f32.mrb[0].mxu0
  %v6621 = vadd.f32 %v6549, %v6620
  %v6622 = vpop.f32.mrb[0].mxu0
  %6623 = vdwg.mxu0
  %v6624 = vmax.f32 %v6621, 0.0
  %6625 = vst.msk [vmem:[%s14] sm:$0xff] %vm435, %v6624
  // Predicated region
  $region58: #{map_encoder_forward.1} parent=0 // pred_check
    _
  $region59: #{map_encoder_forward.1} parent=0 // pred_check_branch
    %6627 = sbr.rel (0) target = $region61
  $region60: #{map_encoder_forward.1} parent=0 // pred_region
    _
  $region61: #{map_encoder_forward.1} parent=0 // pred_fallthru
    _
  // Predicated region
  $region62: #{map_encoder_forward.1} parent=0 // pred_check
    _
  $region63: #{map_encoder_forward.1} parent=0 // pred_check_branch
    %6629 = sbr.rel (0) target = $region65
  $region64: #{map_encoder_forward.1} parent=0 // pred_region
    _
  $region65: #{map_encoder_forward.1} parent=0 // pred_fallthru
    _

</llo_original>
